<compile_context>
chip_gen: v7x
topology: tpu7x:2x2x1
jax: 0.10.0
libtpu: 0.0.40
codegen_flags: <defaults>
</compile_context>

<pallas_src>
import functools

import jax
import jax.numpy as jnp
from jax.experimental import pallas as pl
from jax.experimental.pallas import tpu as pltpu


# ----------------------------------------------------------------------------
# Fused Conv3d (banded tap matmul) + bias + BN(batch stats) [+ SE] [+ residual]
# [+ ReLU] kernel.
# Band layout: rows M = N*Do*Ho, columns NC = Wo*Cout (channel-minor).
# ----------------------------------------------------------------------------
def conv_bn_kernel(*refs, group, cout, cmid, eps, apply_se, add_residual,
                   apply_relu):
    it = iter(refs)
    lhs_ref = next(it)       # (group, M, K)   bf16  shifted-input taps
    wband_ref = next(it)     # (group, K, NC)  bf16  banded weights
    bias_ref = next(it)      # (1, NC)  f32
    gamma_ref = next(it)     # (1, NC)  f32
    beta_ref = next(it)      # (1, NC)  f32
    mixa_ref = next(it)      # (NC, NC) f32  per-channel mix / broadcast matrix
    if apply_se:
        rowsel_ref = next(it)    # (Nb, M)  f32
        rowselt_ref = next(it)   # (M, Nb)  f32
        colsel_ref = next(it)    # (NC, C)  f32  (includes 1/(Do*Ho*Wo))
        chanb_ref = next(it)     # (C, NC)  f32
        w1_ref = next(it)
        b1_ref = next(it)
        w2_ref = next(it)
        b2_ref = next(it)
    if add_residual:
        resid_ref = next(it)     # (M, NC)  f32
    o_ref = next(it)             # (M, NC)  f32
    acc_ref = next(it)           # (M, NC)  f32 scratch accumulator

    t = pl.program_id(0)

    @pl.when(t == 0)
    def _():
        acc_ref[...] = jnp.zeros_like(acc_ref)

    # Accumulate this step's group of (kd, kh) taps on the MXU (bf16 -> f32).
    part = jnp.dot(lhs_ref[0], wband_ref[0],
                   preferred_element_type=jnp.float32)
    for j in range(1, group):
        part += jnp.dot(lhs_ref[j], wband_ref[j],
                        preferred_element_type=jnp.float32)
    acc_ref[...] += part

    @pl.when(t == pl.num_programs(0) - 1)
    def _():
        y = acc_ref[...] + bias_ref[...]                     # conv + bias
        m_rows, nc = y.shape
        inv_cnt = 1.0 / float(m_rows * (nc // cout))

        # Training-mode BatchNorm: per-channel batch stats via MXU matmuls.
        ones_row = jnp.ones((1, m_rows), jnp.float32)
        s1 = jnp.dot(ones_row, y, preferred_element_type=jnp.float32)
        s2 = jnp.dot(ones_row, y * y, preferred_element_type=jnp.float32)
        mean = jnp.dot(s1, mixa_ref[...],
                       preferred_element_type=jnp.float32) * inv_cnt
        msq = jnp.dot(s2, mixa_ref[...],
                      preferred_element_type=jnp.float32) * inv_cnt
        var = msq - mean * mean
        y = (y - mean) * jax.lax.rsqrt(var + eps) * gamma_ref[...] \
            + beta_ref[...]

        if apply_se:
            # Global average pool per (batch, channel).
            psum = jnp.dot(rowsel_ref[...], y,
                           preferred_element_type=jnp.float32)     # (Nb, NC)
            pool = jnp.dot(psum, colsel_ref[...],
                           preferred_element_type=jnp.float32)     # (Nb, C)
            if cmid == 1:
                # Degenerate 1-column FCs on the VPU (per review).
                h = jnp.maximum(
                    jnp.sum(pool * w1_ref[...], axis=-1, keepdims=True)
                    + b1_ref[...], 0.0)                             # (Nb, 1)
                gate = jax.nn.sigmoid(h * w2_ref[...] + b2_ref[...])  # (Nb, C)
            else:
                h = jnp.maximum(
                    jnp.dot(pool, w1_ref[...],
                            preferred_element_type=jnp.float32) + b1_ref[...],
                    0.0)
                gate = jax.nn.sigmoid(
                    jnp.dot(h, w2_ref[...],
                            preferred_element_type=jnp.float32) + b2_ref[...])
            gate_cols = jnp.dot(gate, chanb_ref[...],
                                preferred_element_type=jnp.float32)  # (Nb, NC)
            y = y * jnp.dot(rowselt_ref[...], gate_cols,
                            preferred_element_type=jnp.float32)      # (M, NC)

        if add_residual:
            y = y + resid_ref[...]
        if apply_relu:
            y = jnp.maximum(y, 0.0)
        o_ref[...] = y


# ----------------------------------------------------------------------------
# Host-side weight / input preparation (small, done under jit)
# ----------------------------------------------------------------------------
def _band_weights(w_pt, wp, wo):
    """PyTorch Conv3d weight (Cout,Cin,k,k,k) -> per-(kd,kh) banded matmul
    weights of shape (k*k, Wp*Cin, Wo*Cout), bf16."""
    cout, cin, k, _, _ = w_pt.shape
    wt = jnp.transpose(w_pt, (2, 3, 4, 1, 0)).astype(jnp.float32)  # k,k,k,Ci,Co
    band = jnp.zeros((k, k, wp, cin, wo, cout), jnp.float32)
    for kw in range(k):
        for wo_i in range(wo):
            band = band.at[:, :, wo_i + kw, :, wo_i, :].set(wt[:, :, kw])
    return band.reshape(k * k, wp * cin, wo * cout).astype(jnp.bfloat16)


def _tap_stack(x, k, pad):
    """NDHWC input -> per-(kd,kh) shifted LHS stack (k*k, N*Do*Ho, Wp*C) bf16."""
    n, d, h, w, c = x.shape
    xp = jnp.pad(x, ((0, 0), (pad, pad), (pad, pad), (pad, pad), (0, 0)))
    dp, hp, wp = d + 2 * pad, h + 2 * pad, w + 2 * pad
    do, ho, wo = dp - k + 1, hp - k + 1, wp - k + 1
    slabs = []
    for kd in range(k):
        for kh in range(k):
            s = xp[:, kd:kd + do, kh:kh + ho, :, :]       # (N, Do, Ho, Wp, C)
            slabs.append(s.reshape(n * do * ho, wp * c))
    lhs = jnp.stack(slabs, axis=0).astype(jnp.bfloat16)   # (k*k, M, Wp*C)
    return lhs, (n, do, ho, wo, wp)


def conv_bn(x, w_pt, bias, gamma, beta, *, pad, relu, se=None, resid=None,
            eps=1e-5):
    """Fused Conv3d(stride 1) + bias + BatchNorm3d(batch stats) [+ SELayer]
    [+ residual add] [+ ReLU].  x, resid and the output are NDHWC."""
    cout, cin, k = w_pt.shape[0], w_pt.shape[1], w_pt.shape[2]
    lhs, (n, do, ho, wo, wp) = _tap_stack(x, k, pad)
    taps, m, kdim = lhs.shape
    nc = wo * cout
    group = k                      # k taps per grid step -> grid of k steps

    wband = _band_weights(w_pt, wp, wo)
    bias_b = jnp.tile(bias.astype(jnp.float32), wo).reshape(1, nc)
    gamma_b = jnp.tile(gamma.astype(jnp.float32), wo).reshape(1, nc)
    beta_b = jnp.tile(beta.astype(jnp.float32), wo).reshape(1, nc)
    cols = jnp.arange(nc)
    mixa = (cols[:, None] % cout == cols[None, :] % cout).astype(jnp.float32)

    operands = [lhs, wband, bias_b, gamma_b, beta_b, mixa]
    in_specs = [
        pl.BlockSpec((group, m, kdim), lambda i: (i, 0, 0)),
        pl.BlockSpec((group, kdim, nc), lambda i: (i, 0, 0)),
        pl.BlockSpec((1, nc), lambda i: (0, 0)),
        pl.BlockSpec((1, nc), lambda i: (0, 0)),
        pl.BlockSpec((1, nc), lambda i: (0, 0)),
        pl.BlockSpec((nc, nc), lambda i: (0, 0)),
    ]

    apply_se = se is not None
    cmid = 1
    if apply_se:
        fc1_w, fc1_b, fc2_w, fc2_b = se
        cmid = fc1_w.shape[0]
        rows = jnp.arange(m)
        rowsel = (rows[None, :] // (do * ho)
                  == jnp.arange(n)[:, None]).astype(jnp.float32)       # (N, M)
        rowselt = jnp.transpose(rowsel)                                 # (M, N)
        colsel = ((cols[:, None] % cout == jnp.arange(cout)[None, :])
                  .astype(jnp.float32) / float(do * ho * wo))           # (NC,C)
        chanb = (jnp.arange(cout)[:, None]
                 == cols[None, :] % cout).astype(jnp.float32)           # (C,NC)
        if cmid == 1:
            w1 = fc1_w.reshape(1, cout).astype(jnp.float32)
            w2 = fc2_w.reshape(1, cout).astype(jnp.float32)
        else:
            w1 = jnp.transpose(fc1_w).astype(jnp.float32)               # (C,cm)
            w2 = jnp.transpose(fc2_w).astype(jnp.float32)               # (cm,C)
        b1 = fc1_b.reshape(1, cmid).astype(jnp.float32)
        b2 = fc2_b.reshape(1, cout).astype(jnp.float32)
        se_ops = [rowsel, rowselt, colsel, chanb, w1, b1, w2, b2]
        operands += se_ops
        in_specs += [pl.BlockSpec(op.shape, lambda i: (0, 0))
                     for op in se_ops]

    add_residual = resid is not None
    if add_residual:
        assert resid.shape == (n, do, ho, wo, cout), resid.shape
        operands.append(resid.reshape(m, nc).astype(jnp.float32))
        in_specs.append(pl.BlockSpec((m, nc), lambda i: (0, 0)))

    kern = functools.partial(
        conv_bn_kernel, group=group, cout=cout, cmid=cmid, eps=eps,
        apply_se=apply_se, add_residual=add_residual, apply_relu=relu)

    out = pl.pallas_call(
        kern,
        out_shape=jax.ShapeDtypeStruct((m, nc), jnp.float32),
        grid=(taps // group,),
        in_specs=in_specs,
        out_specs=pl.BlockSpec((m, nc), lambda i: (0, 0)),
        scratch_shapes=[pltpu.VMEM((m, nc), jnp.float32)],
        compiler_params=pltpu.CompilerParams(
            dimension_semantics=("arbitrary",)),
    )(*operands)

    return out.reshape(n, do, ho, wo, cout)


# ----------------------------------------------------------------------------
# Parameter init (deterministic, synthetic; PyTorch-style layouts)
# ----------------------------------------------------------------------------
def init_params(key, n_in, n_out, reduction=16):
    ks = jax.random.split(key, 8)

    def conv_init(kk, cout, cin, k):
        k1, k2 = jax.random.split(kk)
        w = jax.random.normal(k1, (cout, cin, k, k, k), jnp.float32) * 0.05
        b = jax.random.normal(k2, (cout,), jnp.float32) * 0.05
        return w, b

    p = {}
    p["convl1_w"], p["convl1_b"] = conv_init(ks[0], n_out, n_in, 1)
    p["convl2_w"], p["convl2_b"] = conv_init(ks[1], n_out, n_out, 5)
    p["convr1_w"], p["convr1_b"] = conv_init(ks[2], n_out, n_in, 3)
    p["convr2_w"], p["convr2_b"] = conv_init(ks[3], n_out, n_out, 3)
    for name in ("bnl1", "bnl2", "bnr1", "bnr2"):
        p[name + "_g"] = jnp.ones((n_out,), jnp.float32)
        p[name + "_b"] = jnp.zeros((n_out,), jnp.float32)
    cmid = max(n_out // reduction, 1)
    p["se_fc1_w"] = jax.random.normal(ks[4], (cmid, n_out), jnp.float32) * 0.1
    p["se_fc1_b"] = jax.random.normal(ks[5], (cmid,), jnp.float32) * 0.1
    p["se_fc2_w"] = jax.random.normal(ks[6], (n_out, cmid), jnp.float32) * 0.1
    p["se_fc2_b"] = jax.random.normal(ks[7], (n_out,), jnp.float32) * 0.1
    return p


# ----------------------------------------------------------------------------
# inRes forward (stride=1, n_in == 2*n_out -> identity shortcut)
# ----------------------------------------------------------------------------
@jax.jit
def inres_forward(x_ncdhw, params):
    x = jnp.transpose(x_ncdhw, (0, 2, 3, 4, 1)).astype(jnp.float32)  # NDHWC
    n_out = params["convl1_w"].shape[0]
    se = (params["se_fc1_w"], params["se_fc1_b"],
          params["se_fc2_w"], params["se_fc2_b"])

    # left branch: conv1x1(pad1) -> BN -> ReLU -> conv5x5(pad1) -> BN -> SE
    #              -> (+ residual[:, :n_out]) -> ReLU           (all fused)
    outl = conv_bn(x, params["convl1_w"], params["convl1_b"],
                   params["bnl1_g"], params["bnl1_b"], pad=1, relu=True)
    outl = conv_bn(outl, params["convl2_w"], params["convl2_b"],
                   params["bnl2_g"], params["bnl2_b"], pad=1, relu=True,
                   se=se, resid=x[..., :n_out])

    # right branch: conv3x3 -> BN -> ReLU -> conv3x3 -> BN -> SE
    #              -> (+ residual[:, n_out:]) -> ReLU           (all fused)
    outr = conv_bn(x, params["convr1_w"], params["convr1_b"],
                   params["bnr1_g"], params["bnr1_b"], pad=1, relu=True)
    outr = conv_bn(outr, params["convr2_w"], params["convr2_b"],
                   params["bnr2_g"], params["bnr2_b"], pad=1, relu=True,
                   se=se, resid=x[..., n_out:])

    # channel concat (left | right); residual add + final ReLU already fused.
    out = jnp.concatenate([outl, outr], axis=-1)     # (N, D, H, W, 2*n_out)
    return jnp.transpose(out, (0, 4, 1, 2, 3))       # back to NCDHW


# ----------------------------------------------------------------------------
if __name__ == "__main__":
    n_in, n_out = 32, 16        # n_in == 2*n_out -> identity shortcut, stride=1
    N, D, H, W = 2, 8, 8, 8

    key = jax.random.PRNGKey(0)
    k_x, k_p = jax.random.split(key)
    x = jax.random.normal(k_x, (N, n_in, D, H, W), jnp.float32)
    params = init_params(k_p, n_in, n_out)

    out = inres_forward(x, params)
    out = jax.block_until_ready(out)
    assert out.shape == (N, 2 * n_out, D, H, W), out.shape
    assert bool(jnp.all(out >= 0.0))  # final ReLU
    print("KERNEL_OK")
</pallas_src>

<mosaic_0001>
module attributes {stable_mosaic.version = 11 : i64} {
  func.func @conv_bn_kernel(%arg0: i32, %arg1: memref<1x200x320xbf16, #tpu.memory_space<vmem>>, %arg2: memref<1x320x160xbf16, #tpu.memory_space<vmem>>, %arg3: memref<1x160xf32, #tpu.memory_space<vmem>>, %arg4: memref<1x160xf32, #tpu.memory_space<vmem>>, %arg5: memref<1x160xf32, #tpu.memory_space<vmem>>, %arg6: memref<160x160xf32, #tpu.memory_space<vmem>>, %arg7: memref<200x160xf32, #tpu.memory_space<vmem>>, %arg8: memref<200x160xf32, #tpu.memory_space<vmem>>) attributes {dimension_semantics = [#tpu.dimension_semantics<arbitrary>], iteration_bounds = array<i64: 1>, scalar_prefetch = 0 : i64, scratch_operands = 1 : i64, tpu.core_type = #tpu.core_type<tc>, window_params = [{transform_indices = @transform_0, window_bounds = array<i64: 1, 200, 320>}, {transform_indices = @transform_1, window_bounds = array<i64: 1, 320, 160>}, {pipeline_mode = #tpu.pipeline_mode<synchronous>, transform_indices = @transform_2, window_bounds = array<i64: 1, 160>}, {pipeline_mode = #tpu.pipeline_mode<synchronous>, transform_indices = @transform_3, window_bounds = array<i64: 1, 160>}, {pipeline_mode = #tpu.pipeline_mode<synchronous>, transform_indices = @transform_4, window_bounds = array<i64: 1, 160>}, {pipeline_mode = #tpu.pipeline_mode<synchronous>, transform_indices = @transform_5, window_bounds = array<i64: 160, 160>}, {pipeline_mode = #tpu.pipeline_mode<synchronous>, transform_indices = @transform_6, window_bounds = array<i64: 200, 160>}]} {
    %c0_i32 = arith.constant 0 : i32
    %0 = arith.cmpi eq, %arg0, %c0_i32 : i32
    %1 = arith.extui %0 : i1 to i32
    %c0_i32_0 = arith.constant 0 : i32
    %2 = arith.cmpi ne, %1, %c0_i32_0 : i32
    scf.if %2 {
      %cst_12 = arith.constant 0.000000e+00 : f32
      %14 = vector.broadcast %cst_12 : f32 to vector<200x160xf32>
      %c0_13 = arith.constant 0 : index
      %c0_14 = arith.constant 0 : index
      %15 = vector.load %arg8[%c0_13, %c0_14] : memref<200x160xf32, #tpu.memory_space<vmem>>, vector<200x160xf32>
      tpu.vector_store %arg8[%c0_13, %c0_14], %14 {strides = array<i32>} : memref<200x160xf32, #tpu.memory_space<vmem>>, vector<200x160xf32>,
    } else {
    }
    %c0 = arith.constant 0 : index
    %c0_1 = arith.constant 0 : index
    %c0_2 = arith.constant 0 : index
    %3 = vector.load %arg1[%c0, %c0_1, %c0_2] : memref<1x200x320xbf16, #tpu.memory_space<vmem>>, vector<1x200x320xbf16>
    %4 = vector.shape_cast %3 : vector<1x200x320xbf16> to vector<200x320xbf16>
    %c0_3 = arith.constant 0 : index
    %c0_4 = arith.constant 0 : index
    %c0_5 = arith.constant 0 : index
    %5 = vector.load %arg2[%c0_3, %c0_4, %c0_5] : memref<1x320x160xbf16, #tpu.memory_space<vmem>>, vector<1x320x160xbf16>
    %6 = vector.shape_cast %5 : vector<1x320x160xbf16> to vector<320x160xbf16>
    %cst = arith.constant dense<0.000000e+00> : vector<200x160xf32>
    %7 = tpu.matmul %4, %6, %cst {dimension_numbers = #tpu.dot_dimension_numbers<[1], [0], [0], [1], [0, 0, 1, 1], [], []>} : vector<200x320xbf16>, vector<320x160xbf16>, vector<200x160xf32> -> vector<200x160xf32>
    %c0_6 = arith.constant 0 : index
    %c0_7 = arith.constant 0 : index
    %8 = vector.load %arg8[%c0_6, %c0_7] : memref<200x160xf32, #tpu.memory_space<vmem>>, vector<200x160xf32>
    %9 = arith.addf %8, %7 : vector<200x160xf32>
    %c0_8 = arith.constant 0 : index
    %c0_9 = arith.constant 0 : index
    %10 = vector.load %arg8[%c0_8, %c0_9] : memref<200x160xf32, #tpu.memory_space<vmem>>, vector<200x160xf32>
    tpu.vector_store %arg8[%c0_8, %c0_9], %9 {strides = array<i32>} : memref<200x160xf32, #tpu.memory_space<vmem>>, vector<200x160xf32>,
    %c0_i32_10 = arith.constant 0 : i32
    %11 = arith.cmpi eq, %arg0, %c0_i32_10 : i32
    %12 = arith.extui %11 : i1 to i32
    %c0_i32_11 = arith.constant 0 : i32
    %13 = arith.cmpi ne, %12, %c0_i32_11 : i32
    scf.if %13 {
      %c0_12 = arith.constant 0 : index
      %c0_13 = arith.constant 0 : index
      %14 = vector.load %arg8[%c0_12, %c0_13] : memref<200x160xf32, #tpu.memory_space<vmem>>, vector<200x160xf32>
      %c0_14 = arith.constant 0 : index
      %c0_15 = arith.constant 0 : index
      %15 = vector.load %arg3[%c0_14, %c0_15] : memref<1x160xf32, #tpu.memory_space<vmem>>, vector<1x160xf32>
      %16 = vector.broadcast %15 : vector<1x160xf32> to vector<200x160xf32>
      %17 = arith.addf %14, %16 : vector<200x160xf32>
      %cst_16 = arith.constant 1.000000e+00 : f32
      %18 = vector.broadcast %cst_16 : f32 to vector<1x200xf32>
      %cst_17 = arith.constant dense<0.000000e+00> : vector<1x160xf32>
      %19 = tpu.matmul %18, %17, %cst_17 {dimension_numbers = #tpu.dot_dimension_numbers<[1], [0], [0], [1], [0, 0, 1, 1], [], []>} : vector<1x200xf32>, vector<200x160xf32>, vector<1x160xf32> -> vector<1x160xf32>
      %20 = arith.mulf %17, %17 : vector<200x160xf32>
      %cst_18 = arith.constant dense<0.000000e+00> : vector<1x160xf32>
      %21 = tpu.matmul %18, %20, %cst_18 {dimension_numbers = #tpu.dot_dimension_numbers<[1], [0], [0], [1], [0, 0, 1, 1], [], []>} : vector<1x200xf32>, vector<200x160xf32>, vector<1x160xf32> -> vector<1x160xf32>
      %c0_19 = arith.constant 0 : index
      %c0_20 = arith.constant 0 : index
      %22 = vector.load %arg6[%c0_19, %c0_20] : memref<160x160xf32, #tpu.memory_space<vmem>>, vector<160x160xf32>
      %cst_21 = arith.constant dense<0.000000e+00> : vector<1x160xf32>
      %23 = tpu.matmul %19, %22, %cst_21 {dimension_numbers = #tpu.dot_dimension_numbers<[1], [0], [0], [1], [0, 0, 1, 1], [], []>} : vector<1x160xf32>, vector<160x160xf32>, vector<1x160xf32> -> vector<1x160xf32>
      %cst_22 = arith.constant 5.000000e-04 : f32
      %24 = vector.broadcast %cst_22 : f32 to vector<1x160xf32>
      %25 = arith.mulf %23, %24 : vector<1x160xf32>
      %c0_23 = arith.constant 0 : index
      %c0_24 = arith.constant 0 : index
      %26 = vector.load %arg6[%c0_23, %c0_24] : memref<160x160xf32, #tpu.memory_space<vmem>>, vector<160x160xf32>
      %cst_25 = arith.constant dense<0.000000e+00> : vector<1x160xf32>
      %27 = tpu.matmul %21, %26, %cst_25 {dimension_numbers = #tpu.dot_dimension_numbers<[1], [0], [0], [1], [0, 0, 1, 1], [], []>} : vector<1x160xf32>, vector<160x160xf32>, vector<1x160xf32> -> vector<1x160xf32>
      %cst_26 = arith.constant 5.000000e-04 : f32
      %28 = vector.broadcast %cst_26 : f32 to vector<1x160xf32>
      %29 = arith.mulf %27, %28 : vector<1x160xf32>
      %30 = arith.mulf %25, %25 : vector<1x160xf32>
      %31 = arith.subf %29, %30 : vector<1x160xf32>
      %32 = vector.broadcast %25 : vector<1x160xf32> to vector<200x160xf32>
      %33 = arith.subf %17, %32 : vector<200x160xf32>
      %cst_27 = arith.constant 9.99999974E-6 : f32
      %34 = vector.broadcast %cst_27 : f32 to vector<1x160xf32>
      %35 = arith.addf %31, %34 : vector<1x160xf32>
      %36 = math.rsqrt %35 : vector<1x160xf32>
      %37 = vector.broadcast %36 : vector<1x160xf32> to vector<200x160xf32>
      %38 = arith.mulf %33, %37 : vector<200x160xf32>
      %c0_28 = arith.constant 0 : index
      %c0_29 = arith.constant 0 : index
      %39 = vector.load %arg4[%c0_28, %c0_29] : memref<1x160xf32, #tpu.memory_space<vmem>>, vector<1x160xf32>
      %40 = vector.broadcast %39 : vector<1x160xf32> to vector<200x160xf32>
      %41 = arith.mulf %38, %40 : vector<200x160xf32>
      %c0_30 = arith.constant 0 : index
      %c0_31 = arith.constant 0 : index
      %42 = vector.load %arg5[%c0_30, %c0_31] : memref<1x160xf32, #tpu.memory_space<vmem>>, vector<1x160xf32>
      %43 = vector.broadcast %42 : vector<1x160xf32> to vector<200x160xf32>
      %44 = arith.addf %41, %43 : vector<200x160xf32>
      %cst_32 = arith.constant 0.000000e+00 : f32
      %45 = vector.broadcast %cst_32 : f32 to vector<200x160xf32>
      %46 = arith.maximumf %44, %45 : vector<200x160xf32>
      %c0_33 = arith.constant 0 : index
      %c0_34 = arith.constant 0 : index
      %47 = vector.load %arg7[%c0_33, %c0_34] : memref<200x160xf32, #tpu.memory_space<vmem>>, vector<200x160xf32>
      tpu.vector_store %arg7[%c0_33, %c0_34], %46 {strides = array<i32>} : memref<200x160xf32, #tpu.memory_space<vmem>>, vector<200x160xf32>,
    } else {
    }
    return
  }
  func.func @transform_0(%arg0: i32) -> (i32, i32, i32) {
    %c0_i32 = arith.constant 0 : i32
    %c0_i32_0 = arith.constant 0 : i32
    %c0_i32_1 = arith.constant 0 : i32
    return %arg0, %c0_i32, %c0_i32_0 : i32, i32, i32
  }
  func.func @transform_1(%arg0: i32) -> (i32, i32, i32) {
    %c0_i32 = arith.constant 0 : i32
    %c0_i32_0 = arith.constant 0 : i32
    %c0_i32_1 = arith.constant 0 : i32
    return %arg0, %c0_i32, %c0_i32_0 : i32, i32, i32
  }
  func.func @transform_2(%arg0: i32) -> (i32, i32) {
    %c0_i32 = arith.constant 0 : i32
    %c0_i32_0 = arith.constant 0 : i32
    %c0_i32_1 = arith.constant 0 : i32
    return %c0_i32, %c0_i32_0 : i32, i32
  }
  func.func @transform_3(%arg0: i32) -> (i32, i32) {
    %c0_i32 = arith.constant 0 : i32
    %c0_i32_0 = arith.constant 0 : i32
    %c0_i32_1 = arith.constant 0 : i32
    return %c0_i32, %c0_i32_0 : i32, i32
  }
  func.func @transform_4(%arg0: i32) -> (i32, i32) {
    %c0_i32 = arith.constant 0 : i32
    %c0_i32_0 = arith.constant 0 : i32
    %c0_i32_1 = arith.constant 0 : i32
    return %c0_i32, %c0_i32_0 : i32, i32
  }
  func.func @transform_5(%arg0: i32) -> (i32, i32) {
    %c0_i32 = arith.constant 0 : i32
    %c0_i32_0 = arith.constant 0 : i32
    %c0_i32_1 = arith.constant 0 : i32
    return %c0_i32, %c0_i32_0 : i32, i32
  }
  func.func @transform_6(%arg0: i32) -> (i32, i32) {
    %c0_i32 = arith.constant 0 : i32
    %c0_i32_0 = arith.constant 0 : i32
    %c0_i32_1 = arith.constant 0 : i32
    return %c0_i32, %c0_i32_0 : i32, i32
  }
}

module attributes {stable_mosaic.version = 11 : i64} {
  func.func @conv_bn_kernel(%arg0: i32, %arg1: memref<5x128x192xbf16, #tpu.memory_space<vmem>>, %arg2: memref<5x192x128xbf16, #tpu.memory_space<vmem>>, %arg3: memref<1x128xf32, #tpu.memory_space<vmem>>, %arg4: memref<1x128xf32, #tpu.memory_space<vmem>>, %arg5: memref<1x128xf32, #tpu.memory_space<vmem>>, %arg6: memref<128x128xf32, #tpu.memory_space<vmem>>, %arg7: memref<2x128xf32, #tpu.memory_space<vmem>>, %arg8: memref<128x2xf32, #tpu.memory_space<vmem>>, %arg9: memref<128x16xf32, #tpu.memory_space<vmem>>, %arg10: memref<16x128xf32, #tpu.memory_space<vmem>>, %arg11: memref<1x16xf32, #tpu.memory_space<vmem>>, %arg12: memref<1x1xf32, #tpu.memory_space<vmem>>, %arg13: memref<1x16xf32, #tpu.memory_space<vmem>>, %arg14: memref<1x16xf32, #tpu.memory_space<vmem>>, %arg15: memref<128x128xf32, #tpu.memory_space<vmem>>, %arg16: memref<128x128xf32, #tpu.memory_space<vmem>>, %arg17: memref<128x128xf32, #tpu.memory_space<vmem>>) attributes {dimension_semantics = [#tpu.dimension_semantics<arbitrary>], iteration_bounds = array<i64: 5>, scalar_prefetch = 0 : i64, scratch_operands = 1 : i64, tpu.core_type = #tpu.core_type<tc>, window_params = [{transform_indices = @transform_0, window_bounds = array<i64: 5, 128, 192>}, {transform_indices = @transform_1, window_bounds = array<i64: 5, 192, 128>}, {pipeline_mode = #tpu.pipeline_mode<synchronous>, transform_indices = @transform_2, window_bounds = array<i64: 1, 128>}, {pipeline_mode = #tpu.pipeline_mode<synchronous>, transform_indices = @transform_3, window_bounds = array<i64: 1, 128>}, {pipeline_mode = #tpu.pipeline_mode<synchronous>, transform_indices = @transform_4, window_bounds = array<i64: 1, 128>}, {pipeline_mode = #tpu.pipeline_mode<synchronous>, transform_indices = @transform_5, window_bounds = array<i64: 128, 128>}, {pipeline_mode = #tpu.pipeline_mode<synchronous>, transform_indices = @transform_6, window_bounds = array<i64: 2, 128>}, {pipeline_mode = #tpu.pipeline_mode<synchronous>, transform_indices = @transform_7, window_bounds = array<i64: 128, 2>}, {pipeline_mode = #tpu.pipeline_mode<synchronous>, transform_indices = @transform_8, window_bounds = array<i64: 128, 16>}, {pipeline_mode = #tpu.pipeline_mode<synchronous>, transform_indices = @transform_9, window_bounds = array<i64: 16, 128>}, {pipeline_mode = #tpu.pipeline_mode<synchronous>, transform_indices = @transform_10, window_bounds = array<i64: 1, 16>}, {pipeline_mode = #tpu.pipeline_mode<synchronous>, transform_indices = @transform_11, window_bounds = array<i64: 1, 1>}, {pipeline_mode = #tpu.pipeline_mode<synchronous>, transform_indices = @transform_12, window_bounds = array<i64: 1, 16>}, {pipeline_mode = #tpu.pipeline_mode<synchronous>, transform_indices = @transform_13, window_bounds = array<i64: 1, 16>}, {pipeline_mode = #tpu.pipeline_mode<synchronous>, transform_indices = @transform_14, window_bounds = array<i64: 128, 128>}, {pipeline_mode = #tpu.pipeline_mode<synchronous>, transform_indices = @transform_15, window_bounds = array<i64: 128, 128>}]} {
    %c0_i32 = arith.constant 0 : i32
    %0 = arith.cmpi eq, %arg0, %c0_i32 : i32
    %1 = arith.extui %0 : i1 to i32
    %c0_i32_0 = arith.constant 0 : i32
    %2 = arith.cmpi ne, %1, %c0_i32_0 : i32
    scf.if %2 {
      %cst_35 = arith.constant 0.000000e+00 : f32
      %38 = vector.broadcast %cst_35 : f32 to vector<128x128xf32>
      %c0_36 = arith.constant 0 : index
      %c0_37 = arith.constant 0 : index
      %39 = vector.load %arg17[%c0_36, %c0_37] : memref<128x128xf32, #tpu.memory_space<vmem>>, vector<128x128xf32>
      tpu.vector_store %arg17[%c0_36, %c0_37], %38 {strides = array<i32>} : memref<128x128xf32, #tpu.memory_space<vmem>>, vector<128x128xf32>,
    } else {
    }
    %c0 = arith.constant 0 : index
    %c0_1 = arith.constant 0 : index
    %c0_2 = arith.constant 0 : index
    %3 = vector.load %arg1[%c0, %c0_1, %c0_2] : memref<5x128x192xbf16, #tpu.memory_space<vmem>>, vector<1x128x192xbf16>
    %4 = vector.shape_cast %3 : vector<1x128x192xbf16> to vector<128x192xbf16>
    %c0_3 = arith.constant 0 : index
    %c0_4 = arith.constant 0 : index
    %c0_5 = arith.constant 0 : index
    %5 = vector.load %arg2[%c0_3, %c0_4, %c0_5] : memref<5x192x128xbf16, #tpu.memory_space<vmem>>, vector<1x192x128xbf16>
    %6 = vector.shape_cast %5 : vector<1x192x128xbf16> to vector<192x128xbf16>
    %cst = arith.constant dense<0.000000e+00> : vector<128x128xf32>
    %7 = tpu.matmul %4, %6, %cst {dimension_numbers = #tpu.dot_dimension_numbers<[1], [0], [0], [1], [0, 0, 1, 1], [], []>} : vector<128x192xbf16>, vector<192x128xbf16>, vector<128x128xf32> -> vector<128x128xf32>
    %c1 = arith.constant 1 : index
    %c0_6 = arith.constant 0 : index
    %c0_7 = arith.constant 0 : index
    %8 = vector.load %arg1[%c1, %c0_6, %c0_7] : memref<5x128x192xbf16, #tpu.memory_space<vmem>>, vector<1x128x192xbf16>
    %9 = vector.shape_cast %8 : vector<1x128x192xbf16> to vector<128x192xbf16>
    %c1_8 = arith.constant 1 : index
    %c0_9 = arith.constant 0 : index
    %c0_10 = arith.constant 0 : index
    %10 = vector.load %arg2[%c1_8, %c0_9, %c0_10] : memref<5x192x128xbf16, #tpu.memory_space<vmem>>, vector<1x192x128xbf16>
    %11 = vector.shape_cast %10 : vector<1x192x128xbf16> to vector<192x128xbf16>
    %cst_11 = arith.constant dense<0.000000e+00> : vector<128x128xf32>
    %12 = tpu.matmul %9, %11, %cst_11 {dimension_numbers = #tpu.dot_dimension_numbers<[1], [0], [0], [1], [0, 0, 1, 1], [], []>} : vector<128x192xbf16>, vector<192x128xbf16>, vector<128x128xf32> -> vector<128x128xf32>
    %13 = arith.addf %7, %12 : vector<128x128xf32>
    %c2 = arith.constant 2 : index
    %c0_12 = arith.constant 0 : index
    %c0_13 = arith.constant 0 : index
    %14 = vector.load %arg1[%c2, %c0_12, %c0_13] : memref<5x128x192xbf16, #tpu.memory_space<vmem>>, vector<1x128x192xbf16>
    %15 = vector.shape_cast %14 : vector<1x128x192xbf16> to vector<128x192xbf16>
    %c2_14 = arith.constant 2 : index
    %c0_15 = arith.constant 0 : index
    %c0_16 = arith.constant 0 : index
    %16 = vector.load %arg2[%c2_14, %c0_15, %c0_16] : memref<5x192x128xbf16, #tpu.memory_space<vmem>>, vector<1x192x128xbf16>
    %17 = vector.shape_cast %16 : vector<1x192x128xbf16> to vector<192x128xbf16>
    %cst_17 = arith.constant dense<0.000000e+00> : vector<128x128xf32>
    %18 = tpu.matmul %15, %17, %cst_17 {dimension_numbers = #tpu.dot_dimension_numbers<[1], [0], [0], [1], [0, 0, 1, 1], [], []>} : vector<128x192xbf16>, vector<192x128xbf16>, vector<128x128xf32> -> vector<128x128xf32>
    %19 = arith.addf %13, %18 : vector<128x128xf32>
    %c3 = arith.constant 3 : index
    %c0_18 = arith.constant 0 : index
    %c0_19 = arith.constant 0 : index
    %20 = vector.load %arg1[%c3, %c0_18, %c0_19] : memref<5x128x192xbf16, #tpu.memory_space<vmem>>, vector<1x128x192xbf16>
    %21 = vector.shape_cast %20 : vector<1x128x192xbf16> to vector<128x192xbf16>
    %c3_20 = arith.constant 3 : index
    %c0_21 = arith.constant 0 : index
    %c0_22 = arith.constant 0 : index
    %22 = vector.load %arg2[%c3_20, %c0_21, %c0_22] : memref<5x192x128xbf16, #tpu.memory_space<vmem>>, vector<1x192x128xbf16>
    %23 = vector.shape_cast %22 : vector<1x192x128xbf16> to vector<192x128xbf16>
    %cst_23 = arith.constant dense<0.000000e+00> : vector<128x128xf32>
    %24 = tpu.matmul %21, %23, %cst_23 {dimension_numbers = #tpu.dot_dimension_numbers<[1], [0], [0], [1], [0, 0, 1, 1], [], []>} : vector<128x192xbf16>, vector<192x128xbf16>, vector<128x128xf32> -> vector<128x128xf32>
    %25 = arith.addf %19, %24 : vector<128x128xf32>
    %c4 = arith.constant 4 : index
    %c0_24 = arith.constant 0 : index
    %c0_25 = arith.constant 0 : index
    %26 = vector.load %arg1[%c4, %c0_24, %c0_25] : memref<5x128x192xbf16, #tpu.memory_space<vmem>>, vector<1x128x192xbf16>
    %27 = vector.shape_cast %26 : vector<1x128x192xbf16> to vector<128x192xbf16>
    %c4_26 = arith.constant 4 : index
    %c0_27 = arith.constant 0 : index
    %c0_28 = arith.constant 0 : index
    %28 = vector.load %arg2[%c4_26, %c0_27, %c0_28] : memref<5x192x128xbf16, #tpu.memory_space<vmem>>, vector<1x192x128xbf16>
    %29 = vector.shape_cast %28 : vector<1x192x128xbf16> to vector<192x128xbf16>
    %cst_29 = arith.constant dense<0.000000e+00> : vector<128x128xf32>
    %30 = tpu.matmul %27, %29, %cst_29 {dimension_numbers = #tpu.dot_dimension_numbers<[1], [0], [0], [1], [0, 0, 1, 1], [], []>} : vector<128x192xbf16>, vector<192x128xbf16>, vector<128x128xf32> -> vector<128x128xf32>
    %31 = arith.addf %25, %30 : vector<128x128xf32>
    %c0_30 = arith.constant 0 : index
    %c0_31 = arith.constant 0 : index
    %32 = vector.load %arg17[%c0_30, %c0_31] : memref<128x128xf32, #tpu.memory_space<vmem>>, vector<128x128xf32>
    %33 = arith.addf %32, %31 : vector<128x128xf32>
    %c0_32 = arith.constant 0 : index
    %c0_33 = arith.constant 0 : index
    %34 = vector.load %arg17[%c0_32, %c0_33] : memref<128x128xf32, #tpu.memory_space<vmem>>, vector<128x128xf32>
    tpu.vector_store %arg17[%c0_32, %c0_33], %33 {strides = array<i32>} : memref<128x128xf32, #tpu.memory_space<vmem>>, vector<128x128xf32>,
    %c4_i32 = arith.constant 4 : i32
    %35 = arith.cmpi eq, %arg0, %c4_i32 : i32
    %36 = arith.extui %35 : i1 to i32
    %c0_i32_34 = arith.constant 0 : i32
    %37 = arith.cmpi ne, %36, %c0_i32_34 : i32
    scf.if %37 {
      %c0_35 = arith.constant 0 : index
      %c0_36 = arith.constant 0 : index
      %38 = vector.load %arg17[%c0_35, %c0_36] : memref<128x128xf32, #tpu.memory_space<vmem>>, vector<128x128xf32>
      %c0_37 = arith.constant 0 : index
      %c0_38 = arith.constant 0 : index
      %39 = vector.load %arg3[%c0_37, %c0_38] : memref<1x128xf32, #tpu.memory_space<vmem>>, vector<1x128xf32>
      %40 = vector.broadcast %39 : vector<1x128xf32> to vector<128x128xf32>
      %41 = arith.addf %38, %40 : vector<128x128xf32>
      %cst_39 = arith.constant 1.000000e+00 : f32
      %42 = vector.broadcast %cst_39 : f32 to vector<1x128xf32>
      %cst_40 = arith.constant dense<0.000000e+00> : vector<1x128xf32>
      %43 = tpu.matmul %42, %41, %cst_40 {dimension_numbers = #tpu.dot_dimension_numbers<[1], [0], [0], [1], [0, 0, 1, 1], [], []>} : vector<1x128xf32>, vector<128x128xf32>, vector<1x128xf32> -> vector<1x128xf32>
      %44 = arith.mulf %41, %41 : vector<128x128xf32>
      %cst_41 = arith.constant dense<0.000000e+00> : vector<1x128xf32>
      %45 = tpu.matmul %42, %44, %cst_41 {dimension_numbers = #tpu.dot_dimension_numbers<[1], [0], [0], [1], [0, 0, 1, 1], [], []>} : vector<1x128xf32>, vector<128x128xf32>, vector<1x128xf32> -> vector<1x128xf32>
      %c0_42 = arith.constant 0 : index
      %c0_43 = arith.constant 0 : index
      %46 = vector.load %arg6[%c0_42, %c0_43] : memref<128x128xf32, #tpu.memory_space<vmem>>, vector<128x128xf32>
      %cst_44 = arith.constant dense<0.000000e+00> : vector<1x128xf32>
      %47 = tpu.matmul %43, %46, %cst_44 {dimension_numbers = #tpu.dot_dimension_numbers<[1], [0], [0], [1], [0, 0, 1, 1], [], []>} : vector<1x128xf32>, vector<128x128xf32>, vector<1x128xf32> -> vector<1x128xf32>
      %cst_45 = arith.constant 9.765625E-4 : f32
      %48 = vector.broadcast %cst_45 : f32 to vector<1x128xf32>
      %49 = arith.mulf %47, %48 : vector<1x128xf32>
      %c0_46 = arith.constant 0 : index
      %c0_47 = arith.constant 0 : index
      %50 = vector.load %arg6[%c0_46, %c0_47] : memref<128x128xf32, #tpu.memory_space<vmem>>, vector<128x128xf32>
      %cst_48 = arith.constant dense<0.000000e+00> : vector<1x128xf32>
      %51 = tpu.matmul %45, %50, %cst_48 {dimension_numbers = #tpu.dot_dimension_numbers<[1], [0], [0], [1], [0, 0, 1, 1], [], []>} : vector<1x128xf32>, vector<128x128xf32>, vector<1x128xf32> -> vector<1x128xf32>
      %cst_49 = arith.constant 9.765625E-4 : f32
      %52 = vector.broadcast %cst_49 : f32 to vector<1x128xf32>
      %53 = arith.mulf %51, %52 : vector<1x128xf32>
      %54 = arith.mulf %49, %49 : vector<1x128xf32>
      %55 = arith.subf %53, %54 : vector<1x128xf32>
      %56 = vector.broadcast %49 : vector<1x128xf32> to vector<128x128xf32>
      %57 = arith.subf %41, %56 : vector<128x128xf32>
      %cst_50 = arith.constant 9.99999974E-6 : f32
      %58 = vector.broadcast %cst_50 : f32 to vector<1x128xf32>
      %59 = arith.addf %55, %58 : vector<1x128xf32>
      %60 = math.rsqrt %59 : vector<1x128xf32>
      %61 = vector.broadcast %60 : vector<1x128xf32> to vector<128x128xf32>
      %62 = arith.mulf %57, %61 : vector<128x128xf32>
      %c0_51 = arith.constant 0 : index
      %c0_52 = arith.constant 0 : index
      %63 = vector.load %arg4[%c0_51, %c0_52] : memref<1x128xf32, #tpu.memory_space<vmem>>, vector<1x128xf32>
      %64 = vector.broadcast %63 : vector<1x128xf32> to vector<128x128xf32>
      %65 = arith.mulf %62, %64 : vector<128x128xf32>
      %c0_53 = arith.constant 0 : index
      %c0_54 = arith.constant 0 : index
      %66 = vector.load %arg5[%c0_53, %c0_54] : memref<1x128xf32, #tpu.memory_space<vmem>>, vector<1x128xf32>
      %67 = vector.broadcast %66 : vector<1x128xf32> to vector<128x128xf32>
      %68 = arith.addf %65, %67 : vector<128x128xf32>
      %c0_55 = arith.constant 0 : index
      %c0_56 = arith.constant 0 : index
      %69 = vector.load %arg7[%c0_55, %c0_56] : memref<2x128xf32, #tpu.memory_space<vmem>>, vector<2x128xf32>
      %cst_57 = arith.constant dense<0.000000e+00> : vector<2x128xf32>
      %70 = tpu.matmul %69, %68, %cst_57 {dimension_numbers = #tpu.dot_dimension_numbers<[1], [0], [0], [1], [0, 0, 1, 1], [], []>} : vector<2x128xf32>, vector<128x128xf32>, vector<2x128xf32> -> vector<2x128xf32>
      %c0_58 = arith.constant 0 : index
      %c0_59 = arith.constant 0 : index
      %71 = vector.load %arg9[%c0_58, %c0_59] : memref<128x16xf32, #tpu.memory_space<vmem>>, vector<128x16xf32>
      %cst_60 = arith.constant dense<0.000000e+00> : vector<2x16xf32>
      %72 = tpu.matmul %70, %71, %cst_60 {dimension_numbers = #tpu.dot_dimension_numbers<[1], [0], [0], [1], [0, 0, 1, 1], [], []>} : vector<2x128xf32>, vector<128x16xf32>, vector<2x16xf32> -> vector<2x16xf32>
      %c0_61 = arith.constant 0 : index
      %c0_62 = arith.constant 0 : index
      %73 = vector.load %arg11[%c0_61, %c0_62] : memref<1x16xf32, #tpu.memory_space<vmem>>, vector<1x16xf32>
      %74 = vector.broadcast %73 : vector<1x16xf32> to vector<2x16xf32>
      %75 = arith.mulf %72, %74 : vector<2x16xf32>
      %cst_63 = arith.constant dense<0.000000e+00> : vector<2xf32>
      %76 = vector.multi_reduction <add>, %75, %cst_63 [1] : vector<2x16xf32> to vector<2xf32>
      %77 = vector.shape_cast %76 : vector<2xf32> to vector<2x1xf32>
      %c0_64 = arith.constant 0 : index
      %c0_65 = arith.constant 0 : index
      %78 = vector.load %arg12[%c0_64, %c0_65] : memref<1x1xf32, #tpu.memory_space<vmem>>, vector<1x1xf32>
      %79 = vector.broadcast %78 : vector<1x1xf32> to vector<2x1xf32>
      %80 = arith.addf %77, %79 : vector<2x1xf32>
      %cst_66 = arith.constant 0.000000e+00 : f32
      %81 = vector.broadcast %cst_66 : f32 to vector<2x1xf32>
      %82 = arith.maximumf %80, %81 : vector<2x1xf32>
      %c0_67 = arith.constant 0 : index
      %c0_68 = arith.constant 0 : index
      %83 = vector.load %arg13[%c0_67, %c0_68] : memref<1x16xf32, #tpu.memory_space<vmem>>, vector<1x16xf32>
      %84 = vector.broadcast %82 : vector<2x1xf32> to vector<2x16xf32>
      %85 = vector.broadcast %83 : vector<1x16xf32> to vector<2x16xf32>
      %86 = arith.mulf %84, %85 : vector<2x16xf32>
      %c0_69 = arith.constant 0 : index
      %c0_70 = arith.constant 0 : index
      %87 = vector.load %arg14[%c0_69, %c0_70] : memref<1x16xf32, #tpu.memory_space<vmem>>, vector<1x16xf32>
      %88 = vector.broadcast %87 : vector<1x16xf32> to vector<2x16xf32>
      %89 = arith.addf %86, %88 : vector<2x16xf32>
      %90 = arith.negf %89 : vector<2x16xf32>
      %91 = math.exp %90 : vector<2x16xf32>
      %cst_71 = arith.constant 1.000000e+00 : f32
      %92 = vector.broadcast %cst_71 : f32 to vector<2x16xf32>
      %93 = arith.addf %92, %91 : vector<2x16xf32>
      %94 = arith.divf %92, %93 : vector<2x16xf32>
      %c0_72 = arith.constant 0 : index
      %c0_73 = arith.constant 0 : index
      %95 = vector.load %arg10[%c0_72, %c0_73] : memref<16x128xf32, #tpu.memory_space<vmem>>, vector<16x128xf32>
      %cst_74 = arith.constant dense<0.000000e+00> : vector<2x128xf32>
      %96 = tpu.matmul %94, %95, %cst_74 {dimension_numbers = #tpu.dot_dimension_numbers<[1], [0], [0], [1], [0, 0, 1, 1], [], []>} : vector<2x16xf32>, vector<16x128xf32>, vector<2x128xf32> -> vector<2x128xf32>
      %c0_75 = arith.constant 0 : index
      %c0_76 = arith.constant 0 : index
      %97 = vector.load %arg8[%c0_75, %c0_76] : memref<128x2xf32, #tpu.memory_space<vmem>>, vector<128x2xf32>
      %cst_77 = arith.constant dense<0.000000e+00> : vector<128x128xf32>
      %98 = tpu.matmul %97, %96, %cst_77 {dimension_numbers = #tpu.dot_dimension_numbers<[1], [0], [0], [1], [0, 0, 1, 1], [], []>} : vector<128x2xf32>, vector<2x128xf32>, vector<128x128xf32> -> vector<128x128xf32>
      %99 = arith.mulf %68, %98 : vector<128x128xf32>
      %c0_78 = arith.constant 0 : index
      %c0_79 = arith.constant 0 : index
      %100 = vector.load %arg15[%c0_78, %c0_79] : memref<128x128xf32, #tpu.memory_space<vmem>>, vector<128x128xf32>
      %101 = arith.addf %99, %100 : vector<128x128xf32>
      %cst_80 = arith.constant 0.000000e+00 : f32
      %102 = vector.broadcast %cst_80 : f32 to vector<128x128xf32>
      %103 = arith.maximumf %101, %102 : vector<128x128xf32>
      %c0_81 = arith.constant 0 : index
      %c0_82 = arith.constant 0 : index
      %104 = vector.load %arg16[%c0_81, %c0_82] : memref<128x128xf32, #tpu.memory_space<vmem>>, vector<128x128xf32>
      tpu.vector_store %arg16[%c0_81, %c0_82], %103 {strides = array<i32>} : memref<128x128xf32, #tpu.memory_space<vmem>>, vector<128x128xf32>,
    } else {
    }
    return
  }
  func.func @transform_0(%arg0: i32) -> (i32, i32, i32) {
    %c0_i32 = arith.constant 0 : i32
    %c0_i32_0 = arith.constant 0 : i32
    %c0_i32_1 = arith.constant 0 : i32
    return %arg0, %c0_i32, %c0_i32_0 : i32, i32, i32
  }
  func.func @transform_1(%arg0: i32) -> (i32, i32, i32) {
    %c0_i32 = arith.constant 0 : i32
    %c0_i32_0 = arith.constant 0 : i32
    %c0_i32_1 = arith.constant 0 : i32
    return %arg0, %c0_i32, %c0_i32_0 : i32, i32, i32
  }
  func.func @transform_2(%arg0: i32) -> (i32, i32) {
    %c0_i32 = arith.constant 0 : i32
    %c0_i32_0 = arith.constant 0 : i32
    %c0_i32_1 = arith.constant 0 : i32
    return %c0_i32, %c0_i32_0 : i32, i32
  }
  func.func @transform_3(%arg0: i32) -> (i32, i32) {
    %c0_i32 = arith.constant 0 : i32
    %c0_i32_0 = arith.constant 0 : i32
    %c0_i32_1 = arith.constant 0 : i32
    return %c0_i32, %c0_i32_0 : i32, i32
  }
  func.func @transform_4(%arg0: i32) -> (i32, i32) {
    %c0_i32 = arith.constant 0 : i32
    %c0_i32_0 = arith.constant 0 : i32
    %c0_i32_1 = arith.constant 0 : i32
    return %c0_i32, %c0_i32_0 : i32, i32
  }
  func.func @transform_5(%arg0: i32) -> (i32, i32) {
    %c0_i32 = arith.constant 0 : i32
    %c0_i32_0 = arith.constant 0 : i32
    %c0_i32_1 = arith.constant 0 : i32
    return %c0_i32, %c0_i32_0 : i32, i32
  }
  func.func @transform_6(%arg0: i32) -> (i32, i32) {
    %c0_i32 = arith.constant 0 : i32
    %c0_i32_0 = arith.constant 0 : i32
    %c0_i32_1 = arith.constant 0 : i32
    return %c0_i32, %c0_i32_0 : i32, i32
  }
  func.func @transform_7(%arg0: i32) -> (i32, i32) {
    %c0_i32 = arith.constant 0 : i32
    %c0_i32_0 = arith.constant 0 : i32
    %c0_i32_1 = arith.constant 0 : i32
    return %c0_i32, %c0_i32_0 : i32, i32
  }
  func.func @transform_8(%arg0: i32) -> (i32, i32) {
    %c0_i32 = arith.constant 0 : i32
    %c0_i32_0 = arith.constant 0 : i32
    %c0_i32_1 = arith.constant 0 : i32
    return %c0_i32, %c0_i32_0 : i32, i32
  }
  func.func @transform_9(%arg0: i32) -> (i32, i32) {
    %c0_i32 = arith.constant 0 : i32
    %c0_i32_0 = arith.constant 0 : i32
    %c0_i32_1 = arith.constant 0 : i32
    return %c0_i32, %c0_i32_0 : i32, i32
  }
  func.func @transform_10(%arg0: i32) -> (i32, i32) {
    %c0_i32 = arith.constant 0 : i32
    %c0_i32_0 = arith.constant 0 : i32
    %c0_i32_1 = arith.constant 0 : i32
    return %c0_i32, %c0_i32_0 : i32, i32
  }
  func.func @transform_11(%arg0: i32) -> (i32, i32) {
    %c0_i32 = arith.constant 0 : i32
    %c0_i32_0 = arith.constant 0 : i32
    %c0_i32_1 = arith.constant 0 : i32
    return %c0_i32, %c0_i32_0 : i32, i32
  }
  func.func @transform_12(%arg0: i32) -> (i32, i32) {
    %c0_i32 = arith.constant 0 : i32
    %c0_i32_0 = arith.constant 0 : i32
    %c0_i32_1 = arith.constant 0 : i32
    return %c0_i32, %c0_i32_0 : i32, i32
  }
  func.func @transform_13(%arg0: i32) -> (i32, i32) {
    %c0_i32 = arith.constant 0 : i32
    %c0_i32_0 = arith.constant 0 : i32
    %c0_i32_1 = arith.constant 0 : i32
    return %c0_i32, %c0_i32_0 : i32, i32
  }
  func.func @transform_14(%arg0: i32) -> (i32, i32) {
    %c0_i32 = arith.constant 0 : i32
    %c0_i32_0 = arith.constant 0 : i32
    %c0_i32_1 = arith.constant 0 : i32
    return %c0_i32, %c0_i32_0 : i32, i32
  }
  func.func @transform_15(%arg0: i32) -> (i32, i32) {
    %c0_i32 = arith.constant 0 : i32
    %c0_i32_0 = arith.constant 0 : i32
    %c0_i32_1 = arith.constant 0 : i32
    return %c0_i32, %c0_i32_0 : i32, i32
  }
}

module attributes {stable_mosaic.version = 11 : i64} {
  func.func @conv_bn_kernel(%arg0: i32, %arg1: memref<3x128x320xbf16, #tpu.memory_space<vmem>>, %arg2: memref<3x320x128xbf16, #tpu.memory_space<vmem>>, %arg3: memref<1x128xf32, #tpu.memory_space<vmem>>, %arg4: memref<1x128xf32, #tpu.memory_space<vmem>>, %arg5: memref<1x128xf32, #tpu.memory_space<vmem>>, %arg6: memref<128x128xf32, #tpu.memory_space<vmem>>, %arg7: memref<128x128xf32, #tpu.memory_space<vmem>>, %arg8: memref<128x128xf32, #tpu.memory_space<vmem>>) attributes {dimension_semantics = [#tpu.dimension_semantics<arbitrary>], iteration_bounds = array<i64: 3>, scalar_prefetch = 0 : i64, scratch_operands = 1 : i64, tpu.core_type = #tpu.core_type<tc>, window_params = [{transform_indices = @transform_0, window_bounds = array<i64: 3, 128, 320>}, {transform_indices = @transform_1, window_bounds = array<i64: 3, 320, 128>}, {pipeline_mode = #tpu.pipeline_mode<synchronous>, transform_indices = @transform_2, window_bounds = array<i64: 1, 128>}, {pipeline_mode = #tpu.pipeline_mode<synchronous>, transform_indices = @transform_3, window_bounds = array<i64: 1, 128>}, {pipeline_mode = #tpu.pipeline_mode<synchronous>, transform_indices = @transform_4, window_bounds = array<i64: 1, 128>}, {pipeline_mode = #tpu.pipeline_mode<synchronous>, transform_indices = @transform_5, window_bounds = array<i64: 128, 128>}, {pipeline_mode = #tpu.pipeline_mode<synchronous>, transform_indices = @transform_6, window_bounds = array<i64: 128, 128>}]} {
    %c0_i32 = arith.constant 0 : i32
    %0 = arith.cmpi eq, %arg0, %c0_i32 : i32
    %1 = arith.extui %0 : i1 to i32
    %c0_i32_0 = arith.constant 0 : i32
    %2 = arith.cmpi ne, %1, %c0_i32_0 : i32
    scf.if %2 {
      %cst_23 = arith.constant 0.000000e+00 : f32
      %26 = vector.broadcast %cst_23 : f32 to vector<128x128xf32>
      %c0_24 = arith.constant 0 : index
      %c0_25 = arith.constant 0 : index
      %27 = vector.load %arg8[%c0_24, %c0_25] : memref<128x128xf32, #tpu.memory_space<vmem>>, vector<128x128xf32>
      tpu.vector_store %arg8[%c0_24, %c0_25], %26 {strides = array<i32>} : memref<128x128xf32, #tpu.memory_space<vmem>>, vector<128x128xf32>,
    } else {
    }
    %c0 = arith.constant 0 : index
    %c0_1 = arith.constant 0 : index
    %c0_2 = arith.constant 0 : index
    %3 = vector.load %arg1[%c0, %c0_1, %c0_2] : memref<3x128x320xbf16, #tpu.memory_space<vmem>>, vector<1x128x320xbf16>
    %4 = vector.shape_cast %3 : vector<1x128x320xbf16> to vector<128x320xbf16>
    %c0_3 = arith.constant 0 : index
    %c0_4 = arith.constant 0 : index
    %c0_5 = arith.constant 0 : index
    %5 = vector.load %arg2[%c0_3, %c0_4, %c0_5] : memref<3x320x128xbf16, #tpu.memory_space<vmem>>, vector<1x320x128xbf16>
    %6 = vector.shape_cast %5 : vector<1x320x128xbf16> to vector<320x128xbf16>
    %cst = arith.constant dense<0.000000e+00> : vector<128x128xf32>
    %7 = tpu.matmul %4, %6, %cst {dimension_numbers = #tpu.dot_dimension_numbers<[1], [0], [0], [1], [0, 0, 1, 1], [], []>} : vector<128x320xbf16>, vector<320x128xbf16>, vector<128x128xf32> -> vector<128x128xf32>
    %c1 = arith.constant 1 : index
    %c0_6 = arith.constant 0 : index
    %c0_7 = arith.constant 0 : index
    %8 = vector.load %arg1[%c1, %c0_6, %c0_7] : memref<3x128x320xbf16, #tpu.memory_space<vmem>>, vector<1x128x320xbf16>
    %9 = vector.shape_cast %8 : vector<1x128x320xbf16> to vector<128x320xbf16>
    %c1_8 = arith.constant 1 : index
    %c0_9 = arith.constant 0 : index
    %c0_10 = arith.constant 0 : index
    %10 = vector.load %arg2[%c1_8, %c0_9, %c0_10] : memref<3x320x128xbf16, #tpu.memory_space<vmem>>, vector<1x320x128xbf16>
    %11 = vector.shape_cast %10 : vector<1x320x128xbf16> to vector<320x128xbf16>
    %cst_11 = arith.constant dense<0.000000e+00> : vector<128x128xf32>
    %12 = tpu.matmul %9, %11, %cst_11 {dimension_numbers = #tpu.dot_dimension_numbers<[1], [0], [0], [1], [0, 0, 1, 1], [], []>} : vector<128x320xbf16>, vector<320x128xbf16>, vector<128x128xf32> -> vector<128x128xf32>
    %13 = arith.addf %7, %12 : vector<128x128xf32>
    %c2 = arith.constant 2 : index
    %c0_12 = arith.constant 0 : index
    %c0_13 = arith.constant 0 : index
    %14 = vector.load %arg1[%c2, %c0_12, %c0_13] : memref<3x128x320xbf16, #tpu.memory_space<vmem>>, vector<1x128x320xbf16>
    %15 = vector.shape_cast %14 : vector<1x128x320xbf16> to vector<128x320xbf16>
    %c2_14 = arith.constant 2 : index
    %c0_15 = arith.constant 0 : index
    %c0_16 = arith.constant 0 : index
    %16 = vector.load %arg2[%c2_14, %c0_15, %c0_16] : memref<3x320x128xbf16, #tpu.memory_space<vmem>>, vector<1x320x128xbf16>
    %17 = vector.shape_cast %16 : vector<1x320x128xbf16> to vector<320x128xbf16>
    %cst_17 = arith.constant dense<0.000000e+00> : vector<128x128xf32>
    %18 = tpu.matmul %15, %17, %cst_17 {dimension_numbers = #tpu.dot_dimension_numbers<[1], [0], [0], [1], [0, 0, 1, 1], [], []>} : vector<128x320xbf16>, vector<320x128xbf16>, vector<128x128xf32> -> vector<128x128xf32>
    %19 = arith.addf %13, %18 : vector<128x128xf32>
    %c0_18 = arith.constant 0 : index
    %c0_19 = arith.constant 0 : index
    %20 = vector.load %arg8[%c0_18, %c0_19] : memref<128x128xf32, #tpu.memory_space<vmem>>, vector<128x128xf32>
    %21 = arith.addf %20, %19 : vector<128x128xf32>
    %c0_20 = arith.constant 0 : index
    %c0_21 = arith.constant 0 : index
    %22 = vector.load %arg8[%c0_20, %c0_21] : memref<128x128xf32, #tpu.memory_space<vmem>>, vector<128x128xf32>
    tpu.vector_store %arg8[%c0_20, %c0_21], %21 {strides = array<i32>} : memref<128x128xf32, #tpu.memory_space<vmem>>, vector<128x128xf32>,
    %c2_i32 = arith.constant 2 : i32
    %23 = arith.cmpi eq, %arg0, %c2_i32 : i32
    %24 = arith.extui %23 : i1 to i32
    %c0_i32_22 = arith.constant 0 : i32
    %25 = arith.cmpi ne, %24, %c0_i32_22 : i32
    scf.if %25 {
      %c0_23 = arith.constant 0 : index
      %c0_24 = arith.constant 0 : index
      %26 = vector.load %arg8[%c0_23, %c0_24] : memref<128x128xf32, #tpu.memory_space<vmem>>, vector<128x128xf32>
      %c0_25 = arith.constant 0 : index
      %c0_26 = arith.constant 0 : index
      %27 = vector.load %arg3[%c0_25, %c0_26] : memref<1x128xf32, #tpu.memory_space<vmem>>, vector<1x128xf32>
      %28 = vector.broadcast %27 : vector<1x128xf32> to vector<128x128xf32>
      %29 = arith.addf %26, %28 : vector<128x128xf32>
      %cst_27 = arith.constant 1.000000e+00 : f32
      %30 = vector.broadcast %cst_27 : f32 to vector<1x128xf32>
      %cst_28 = arith.constant dense<0.000000e+00> : vector<1x128xf32>
      %31 = tpu.matmul %30, %29, %cst_28 {dimension_numbers = #tpu.dot_dimension_numbers<[1], [0], [0], [1], [0, 0, 1, 1], [], []>} : vector<1x128xf32>, vector<128x128xf32>, vector<1x128xf32> -> vector<1x128xf32>
      %32 = arith.mulf %29, %29 : vector<128x128xf32>
      %cst_29 = arith.constant dense<0.000000e+00> : vector<1x128xf32>
      %33 = tpu.matmul %30, %32, %cst_29 {dimension_numbers = #tpu.dot_dimension_numbers<[1], [0], [0], [1], [0, 0, 1, 1], [], []>} : vector<1x128xf32>, vector<128x128xf32>, vector<1x128xf32> -> vector<1x128xf32>
      %c0_30 = arith.constant 0 : index
      %c0_31 = arith.constant 0 : index
      %34 = vector.load %arg6[%c0_30, %c0_31] : memref<128x128xf32, #tpu.memory_space<vmem>>, vector<128x128xf32>
      %cst_32 = arith.constant dense<0.000000e+00> : vector<1x128xf32>
      %35 = tpu.matmul %31, %34, %cst_32 {dimension_numbers = #tpu.dot_dimension_numbers<[1], [0], [0], [1], [0, 0, 1, 1], [], []>} : vector<1x128xf32>, vector<128x128xf32>, vector<1x128xf32> -> vector<1x128xf32>
      %cst_33 = arith.constant 9.765625E-4 : f32
      %36 = vector.broadcast %cst_33 : f32 to vector<1x128xf32>
      %37 = arith.mulf %35, %36 : vector<1x128xf32>
      %c0_34 = arith.constant 0 : index
      %c0_35 = arith.constant 0 : index
      %38 = vector.load %arg6[%c0_34, %c0_35] : memref<128x128xf32, #tpu.memory_space<vmem>>, vector<128x128xf32>
      %cst_36 = arith.constant dense<0.000000e+00> : vector<1x128xf32>
      %39 = tpu.matmul %33, %38, %cst_36 {dimension_numbers = #tpu.dot_dimension_numbers<[1], [0], [0], [1], [0, 0, 1, 1], [], []>} : vector<1x128xf32>, vector<128x128xf32>, vector<1x128xf32> -> vector<1x128xf32>
      %cst_37 = arith.constant 9.765625E-4 : f32
      %40 = vector.broadcast %cst_37 : f32 to vector<1x128xf32>
      %41 = arith.mulf %39, %40 : vector<1x128xf32>
      %42 = arith.mulf %37, %37 : vector<1x128xf32>
      %43 = arith.subf %41, %42 : vector<1x128xf32>
      %44 = vector.broadcast %37 : vector<1x128xf32> to vector<128x128xf32>
      %45 = arith.subf %29, %44 : vector<128x128xf32>
      %cst_38 = arith.constant 9.99999974E-6 : f32
      %46 = vector.broadcast %cst_38 : f32 to vector<1x128xf32>
      %47 = arith.addf %43, %46 : vector<1x128xf32>
      %48 = math.rsqrt %47 : vector<1x128xf32>
      %49 = vector.broadcast %48 : vector<1x128xf32> to vector<128x128xf32>
      %50 = arith.mulf %45, %49 : vector<128x128xf32>
      %c0_39 = arith.constant 0 : index
      %c0_40 = arith.constant 0 : index
      %51 = vector.load %arg4[%c0_39, %c0_40] : memref<1x128xf32, #tpu.memory_space<vmem>>, vector<1x128xf32>
      %52 = vector.broadcast %51 : vector<1x128xf32> to vector<128x128xf32>
      %53 = arith.mulf %50, %52 : vector<128x128xf32>
      %c0_41 = arith.constant 0 : index
      %c0_42 = arith.constant 0 : index
      %54 = vector.load %arg5[%c0_41, %c0_42] : memref<1x128xf32, #tpu.memory_space<vmem>>, vector<1x128xf32>
      %55 = vector.broadcast %54 : vector<1x128xf32> to vector<128x128xf32>
      %56 = arith.addf %53, %55 : vector<128x128xf32>
      %cst_43 = arith.constant 0.000000e+00 : f32
      %57 = vector.broadcast %cst_43 : f32 to vector<128x128xf32>
      %58 = arith.maximumf %56, %57 : vector<128x128xf32>
      %c0_44 = arith.constant 0 : index
      %c0_45 = arith.constant 0 : index
      %59 = vector.load %arg7[%c0_44, %c0_45] : memref<128x128xf32, #tpu.memory_space<vmem>>, vector<128x128xf32>
      tpu.vector_store %arg7[%c0_44, %c0_45], %58 {strides = array<i32>} : memref<128x128xf32, #tpu.memory_space<vmem>>, vector<128x128xf32>,
    } else {
    }
    return
  }
  func.func @transform_0(%arg0: i32) -> (i32, i32, i32) {
    %c0_i32 = arith.constant 0 : i32
    %c0_i32_0 = arith.constant 0 : i32
    %c0_i32_1 = arith.constant 0 : i32
    return %arg0, %c0_i32, %c0_i32_0 : i32, i32, i32
  }
  func.func @transform_1(%arg0: i32) -> (i32, i32, i32) {
    %c0_i32 = arith.constant 0 : i32
    %c0_i32_0 = arith.constant 0 : i32
    %c0_i32_1 = arith.constant 0 : i32
    return %arg0, %c0_i32, %c0_i32_0 : i32, i32, i32
  }
  func.func @transform_2(%arg0: i32) -> (i32, i32) {
    %c0_i32 = arith.constant 0 : i32
    %c0_i32_0 = arith.constant 0 : i32
    %c0_i32_1 = arith.constant 0 : i32
    return %c0_i32, %c0_i32_0 : i32, i32
  }
  func.func @transform_3(%arg0: i32) -> (i32, i32) {
    %c0_i32 = arith.constant 0 : i32
    %c0_i32_0 = arith.constant 0 : i32
    %c0_i32_1 = arith.constant 0 : i32
    return %c0_i32, %c0_i32_0 : i32, i32
  }
  func.func @transform_4(%arg0: i32) -> (i32, i32) {
    %c0_i32 = arith.constant 0 : i32
    %c0_i32_0 = arith.constant 0 : i32
    %c0_i32_1 = arith.constant 0 : i32
    return %c0_i32, %c0_i32_0 : i32, i32
  }
  func.func @transform_5(%arg0: i32) -> (i32, i32) {
    %c0_i32 = arith.constant 0 : i32
    %c0_i32_0 = arith.constant 0 : i32
    %c0_i32_1 = arith.constant 0 : i32
    return %c0_i32, %c0_i32_0 : i32, i32
  }
  func.func @transform_6(%arg0: i32) -> (i32, i32) {
    %c0_i32 = arith.constant 0 : i32
    %c0_i32_0 = arith.constant 0 : i32
    %c0_i32_1 = arith.constant 0 : i32
    return %c0_i32, %c0_i32_0 : i32, i32
  }
}

module attributes {stable_mosaic.version = 11 : i64} {
  func.func @conv_bn_kernel(%arg0: i32, %arg1: memref<3x128x160xbf16, #tpu.memory_space<vmem>>, %arg2: memref<3x160x128xbf16, #tpu.memory_space<vmem>>, %arg3: memref<1x128xf32, #tpu.memory_space<vmem>>, %arg4: memref<1x128xf32, #tpu.memory_space<vmem>>, %arg5: memref<1x128xf32, #tpu.memory_space<vmem>>, %arg6: memref<128x128xf32, #tpu.memory_space<vmem>>, %arg7: memref<2x128xf32, #tpu.memory_space<vmem>>, %arg8: memref<128x2xf32, #tpu.memory_space<vmem>>, %arg9: memref<128x16xf32, #tpu.memory_space<vmem>>, %arg10: memref<16x128xf32, #tpu.memory_space<vmem>>, %arg11: memref<1x16xf32, #tpu.memory_space<vmem>>, %arg12: memref<1x1xf32, #tpu.memory_space<vmem>>, %arg13: memref<1x16xf32, #tpu.memory_space<vmem>>, %arg14: memref<1x16xf32, #tpu.memory_space<vmem>>, %arg15: memref<128x128xf32, #tpu.memory_space<vmem>>, %arg16: memref<128x128xf32, #tpu.memory_space<vmem>>, %arg17: memref<128x128xf32, #tpu.memory_space<vmem>>) attributes {dimension_semantics = [#tpu.dimension_semantics<arbitrary>], iteration_bounds = array<i64: 3>, scalar_prefetch = 0 : i64, scratch_operands = 1 : i64, tpu.core_type = #tpu.core_type<tc>, window_params = [{transform_indices = @transform_0, window_bounds = array<i64: 3, 128, 160>}, {transform_indices = @transform_1, window_bounds = array<i64: 3, 160, 128>}, {pipeline_mode = #tpu.pipeline_mode<synchronous>, transform_indices = @transform_2, window_bounds = array<i64: 1, 128>}, {pipeline_mode = #tpu.pipeline_mode<synchronous>, transform_indices = @transform_3, window_bounds = array<i64: 1, 128>}, {pipeline_mode = #tpu.pipeline_mode<synchronous>, transform_indices = @transform_4, window_bounds = array<i64: 1, 128>}, {pipeline_mode = #tpu.pipeline_mode<synchronous>, transform_indices = @transform_5, window_bounds = array<i64: 128, 128>}, {pipeline_mode = #tpu.pipeline_mode<synchronous>, transform_indices = @transform_6, window_bounds = array<i64: 2, 128>}, {pipeline_mode = #tpu.pipeline_mode<synchronous>, transform_indices = @transform_7, window_bounds = array<i64: 128, 2>}, {pipeline_mode = #tpu.pipeline_mode<synchronous>, transform_indices = @transform_8, window_bounds = array<i64: 128, 16>}, {pipeline_mode = #tpu.pipeline_mode<synchronous>, transform_indices = @transform_9, window_bounds = array<i64: 16, 128>}, {pipeline_mode = #tpu.pipeline_mode<synchronous>, transform_indices = @transform_10, window_bounds = array<i64: 1, 16>}, {pipeline_mode = #tpu.pipeline_mode<synchronous>, transform_indices = @transform_11, window_bounds = array<i64: 1, 1>}, {pipeline_mode = #tpu.pipeline_mode<synchronous>, transform_indices = @transform_12, window_bounds = array<i64: 1, 16>}, {pipeline_mode = #tpu.pipeline_mode<synchronous>, transform_indices = @transform_13, window_bounds = array<i64: 1, 16>}, {pipeline_mode = #tpu.pipeline_mode<synchronous>, transform_indices = @transform_14, window_bounds = array<i64: 128, 128>}, {pipeline_mode = #tpu.pipeline_mode<synchronous>, transform_indices = @transform_15, window_bounds = array<i64: 128, 128>}]} {
    %c0_i32 = arith.constant 0 : i32
    %0 = arith.cmpi eq, %arg0, %c0_i32 : i32
    %1 = arith.extui %0 : i1 to i32
    %c0_i32_0 = arith.constant 0 : i32
    %2 = arith.cmpi ne, %1, %c0_i32_0 : i32
    scf.if %2 {
      %cst_23 = arith.constant 0.000000e+00 : f32
      %26 = vector.broadcast %cst_23 : f32 to vector<128x128xf32>
      %c0_24 = arith.constant 0 : index
      %c0_25 = arith.constant 0 : index
      %27 = vector.load %arg17[%c0_24, %c0_25] : memref<128x128xf32, #tpu.memory_space<vmem>>, vector<128x128xf32>
      tpu.vector_store %arg17[%c0_24, %c0_25], %26 {strides = array<i32>} : memref<128x128xf32, #tpu.memory_space<vmem>>, vector<128x128xf32>,
    } else {
    }
    %c0 = arith.constant 0 : index
    %c0_1 = arith.constant 0 : index
    %c0_2 = arith.constant 0 : index
    %3 = vector.load %arg1[%c0, %c0_1, %c0_2] : memref<3x128x160xbf16, #tpu.memory_space<vmem>>, vector<1x128x160xbf16>
    %4 = vector.shape_cast %3 : vector<1x128x160xbf16> to vector<128x160xbf16>
    %c0_3 = arith.constant 0 : index
    %c0_4 = arith.constant 0 : index
    %c0_5 = arith.constant 0 : index
    %5 = vector.load %arg2[%c0_3, %c0_4, %c0_5] : memref<3x160x128xbf16, #tpu.memory_space<vmem>>, vector<1x160x128xbf16>
    %6 = vector.shape_cast %5 : vector<1x160x128xbf16> to vector<160x128xbf16>
    %cst = arith.constant dense<0.000000e+00> : vector<128x128xf32>
    %7 = tpu.matmul %4, %6, %cst {dimension_numbers = #tpu.dot_dimension_numbers<[1], [0], [0], [1], [0, 0, 1, 1], [], []>} : vector<128x160xbf16>, vector<160x128xbf16>, vector<128x128xf32> -> vector<128x128xf32>
    %c1 = arith.constant 1 : index
    %c0_6 = arith.constant 0 : index
    %c0_7 = arith.constant 0 : index
    %8 = vector.load %arg1[%c1, %c0_6, %c0_7] : memref<3x128x160xbf16, #tpu.memory_space<vmem>>, vector<1x128x160xbf16>
    %9 = vector.shape_cast %8 : vector<1x128x160xbf16> to vector<128x160xbf16>
    %c1_8 = arith.constant 1 : index
    %c0_9 = arith.constant 0 : index
    %c0_10 = arith.constant 0 : index
    %10 = vector.load %arg2[%c1_8, %c0_9, %c0_10] : memref<3x160x128xbf16, #tpu.memory_space<vmem>>, vector<1x160x128xbf16>
    %11 = vector.shape_cast %10 : vector<1x160x128xbf16> to vector<160x128xbf16>
    %cst_11 = arith.constant dense<0.000000e+00> : vector<128x128xf32>
    %12 = tpu.matmul %9, %11, %cst_11 {dimension_numbers = #tpu.dot_dimension_numbers<[1], [0], [0], [1], [0, 0, 1, 1], [], []>} : vector<128x160xbf16>, vector<160x128xbf16>, vector<128x128xf32> -> vector<128x128xf32>
    %13 = arith.addf %7, %12 : vector<128x128xf32>
    %c2 = arith.constant 2 : index
    %c0_12 = arith.constant 0 : index
    %c0_13 = arith.constant 0 : index
    %14 = vector.load %arg1[%c2, %c0_12, %c0_13] : memref<3x128x160xbf16, #tpu.memory_space<vmem>>, vector<1x128x160xbf16>
    %15 = vector.shape_cast %14 : vector<1x128x160xbf16> to vector<128x160xbf16>
    %c2_14 = arith.constant 2 : index
    %c0_15 = arith.constant 0 : index
    %c0_16 = arith.constant 0 : index
    %16 = vector.load %arg2[%c2_14, %c0_15, %c0_16] : memref<3x160x128xbf16, #tpu.memory_space<vmem>>, vector<1x160x128xbf16>
    %17 = vector.shape_cast %16 : vector<1x160x128xbf16> to vector<160x128xbf16>
    %cst_17 = arith.constant dense<0.000000e+00> : vector<128x128xf32>
    %18 = tpu.matmul %15, %17, %cst_17 {dimension_numbers = #tpu.dot_dimension_numbers<[1], [0], [0], [1], [0, 0, 1, 1], [], []>} : vector<128x160xbf16>, vector<160x128xbf16>, vector<128x128xf32> -> vector<128x128xf32>
    %19 = arith.addf %13, %18 : vector<128x128xf32>
    %c0_18 = arith.constant 0 : index
    %c0_19 = arith.constant 0 : index
    %20 = vector.load %arg17[%c0_18, %c0_19] : memref<128x128xf32, #tpu.memory_space<vmem>>, vector<128x128xf32>
    %21 = arith.addf %20, %19 : vector<128x128xf32>
    %c0_20 = arith.constant 0 : index
    %c0_21 = arith.constant 0 : index
    %22 = vector.load %arg17[%c0_20, %c0_21] : memref<128x128xf32, #tpu.memory_space<vmem>>, vector<128x128xf32>
    tpu.vector_store %arg17[%c0_20, %c0_21], %21 {strides = array<i32>} : memref<128x128xf32, #tpu.memory_space<vmem>>, vector<128x128xf32>,
    %c2_i32 = arith.constant 2 : i32
    %23 = arith.cmpi eq, %arg0, %c2_i32 : i32
    %24 = arith.extui %23 : i1 to i32
    %c0_i32_22 = arith.constant 0 : i32
    %25 = arith.cmpi ne, %24, %c0_i32_22 : i32
    scf.if %25 {
      %c0_23 = arith.constant 0 : index
      %c0_24 = arith.constant 0 : index
      %26 = vector.load %arg17[%c0_23, %c0_24] : memref<128x128xf32, #tpu.memory_space<vmem>>, vector<128x128xf32>
      %c0_25 = arith.constant 0 : index
      %c0_26 = arith.constant 0 : index
      %27 = vector.load %arg3[%c0_25, %c0_26] : memref<1x128xf32, #tpu.memory_space<vmem>>, vector<1x128xf32>
      %28 = vector.broadcast %27 : vector<1x128xf32> to vector<128x128xf32>
      %29 = arith.addf %26, %28 : vector<128x128xf32>
      %cst_27 = arith.constant 1.000000e+00 : f32
      %30 = vector.broadcast %cst_27 : f32 to vector<1x128xf32>
      %cst_28 = arith.constant dense<0.000000e+00> : vector<1x128xf32>
      %31 = tpu.matmul %30, %29, %cst_28 {dimension_numbers = #tpu.dot_dimension_numbers<[1], [0], [0], [1], [0, 0, 1, 1], [], []>} : vector<1x128xf32>, vector<128x128xf32>, vector<1x128xf32> -> vector<1x128xf32>
      %32 = arith.mulf %29, %29 : vector<128x128xf32>
      %cst_29 = arith.constant dense<0.000000e+00> : vector<1x128xf32>
      %33 = tpu.matmul %30, %32, %cst_29 {dimension_numbers = #tpu.dot_dimension_numbers<[1], [0], [0], [1], [0, 0, 1, 1], [], []>} : vector<1x128xf32>, vector<128x128xf32>, vector<1x128xf32> -> vector<1x128xf32>
      %c0_30 = arith.constant 0 : index
      %c0_31 = arith.constant 0 : index
      %34 = vector.load %arg6[%c0_30, %c0_31] : memref<128x128xf32, #tpu.memory_space<vmem>>, vector<128x128xf32>
      %cst_32 = arith.constant dense<0.000000e+00> : vector<1x128xf32>
      %35 = tpu.matmul %31, %34, %cst_32 {dimension_numbers = #tpu.dot_dimension_numbers<[1], [0], [0], [1], [0, 0, 1, 1], [], []>} : vector<1x128xf32>, vector<128x128xf32>, vector<1x128xf32> -> vector<1x128xf32>
      %cst_33 = arith.constant 9.765625E-4 : f32
      %36 = vector.broadcast %cst_33 : f32 to vector<1x128xf32>
      %37 = arith.mulf %35, %36 : vector<1x128xf32>
      %c0_34 = arith.constant 0 : index
      %c0_35 = arith.constant 0 : index
      %38 = vector.load %arg6[%c0_34, %c0_35] : memref<128x128xf32, #tpu.memory_space<vmem>>, vector<128x128xf32>
      %cst_36 = arith.constant dense<0.000000e+00> : vector<1x128xf32>
      %39 = tpu.matmul %33, %38, %cst_36 {dimension_numbers = #tpu.dot_dimension_numbers<[1], [0], [0], [1], [0, 0, 1, 1], [], []>} : vector<1x128xf32>, vector<128x128xf32>, vector<1x128xf32> -> vector<1x128xf32>
      %cst_37 = arith.constant 9.765625E-4 : f32
      %40 = vector.broadcast %cst_37 : f32 to vector<1x128xf32>
      %41 = arith.mulf %39, %40 : vector<1x128xf32>
      %42 = arith.mulf %37, %37 : vector<1x128xf32>
      %43 = arith.subf %41, %42 : vector<1x128xf32>
      %44 = vector.broadcast %37 : vector<1x128xf32> to vector<128x128xf32>
      %45 = arith.subf %29, %44 : vector<128x128xf32>
      %cst_38 = arith.constant 9.99999974E-6 : f32
      %46 = vector.broadcast %cst_38 : f32 to vector<1x128xf32>
      %47 = arith.addf %43, %46 : vector<1x128xf32>
      %48 = math.rsqrt %47 : vector<1x128xf32>
      %49 = vector.broadcast %48 : vector<1x128xf32> to vector<128x128xf32>
      %50 = arith.mulf %45, %49 : vector<128x128xf32>
      %c0_39 = arith.constant 0 : index
      %c0_40 = arith.constant 0 : index
      %51 = vector.load %arg4[%c0_39, %c0_40] : memref<1x128xf32, #tpu.memory_space<vmem>>, vector<1x128xf32>
      %52 = vector.broadcast %51 : vector<1x128xf32> to vector<128x128xf32>
      %53 = arith.mulf %50, %52 : vector<128x128xf32>
      %c0_41 = arith.constant 0 : index
      %c0_42 = arith.constant 0 : index
      %54 = vector.load %arg5[%c0_41, %c0_42] : memref<1x128xf32, #tpu.memory_space<vmem>>, vector<1x128xf32>
      %55 = vector.broadcast %54 : vector<1x128xf32> to vector<128x128xf32>
      %56 = arith.addf %53, %55 : vector<128x128xf32>
      %c0_43 = arith.constant 0 : index
      %c0_44 = arith.constant 0 : index
      %57 = vector.load %arg7[%c0_43, %c0_44] : memref<2x128xf32, #tpu.memory_space<vmem>>, vector<2x128xf32>
      %cst_45 = arith.constant dense<0.000000e+00> : vector<2x128xf32>
      %58 = tpu.matmul %57, %56, %cst_45 {dimension_numbers = #tpu.dot_dimension_numbers<[1], [0], [0], [1], [0, 0, 1, 1], [], []>} : vector<2x128xf32>, vector<128x128xf32>, vector<2x128xf32> -> vector<2x128xf32>
      %c0_46 = arith.constant 0 : index
      %c0_47 = arith.constant 0 : index
      %59 = vector.load %arg9[%c0_46, %c0_47] : memref<128x16xf32, #tpu.memory_space<vmem>>, vector<128x16xf32>
      %cst_48 = arith.constant dense<0.000000e+00> : vector<2x16xf32>
      %60 = tpu.matmul %58, %59, %cst_48 {dimension_numbers = #tpu.dot_dimension_numbers<[1], [0], [0], [1], [0, 0, 1, 1], [], []>} : vector<2x128xf32>, vector<128x16xf32>, vector<2x16xf32> -> vector<2x16xf32>
      %c0_49 = arith.constant 0 : index
      %c0_50 = arith.constant 0 : index
      %61 = vector.load %arg11[%c0_49, %c0_50] : memref<1x16xf32, #tpu.memory_space<vmem>>, vector<1x16xf32>
      %62 = vector.broadcast %61 : vector<1x16xf32> to vector<2x16xf32>
      %63 = arith.mulf %60, %62 : vector<2x16xf32>
      %cst_51 = arith.constant dense<0.000000e+00> : vector<2xf32>
      %64 = vector.multi_reduction <add>, %63, %cst_51 [1] : vector<2x16xf32> to vector<2xf32>
      %65 = vector.shape_cast %64 : vector<2xf32> to vector<2x1xf32>
      %c0_52 = arith.constant 0 : index
      %c0_53 = arith.constant 0 : index
      %66 = vector.load %arg12[%c0_52, %c0_53] : memref<1x1xf32, #tpu.memory_space<vmem>>, vector<1x1xf32>
      %67 = vector.broadcast %66 : vector<1x1xf32> to vector<2x1xf32>
      %68 = arith.addf %65, %67 : vector<2x1xf32>
      %cst_54 = arith.constant 0.000000e+00 : f32
      %69 = vector.broadcast %cst_54 : f32 to vector<2x1xf32>
      %70 = arith.maximumf %68, %69 : vector<2x1xf32>
      %c0_55 = arith.constant 0 : index
      %c0_56 = arith.constant 0 : index
      %71 = vector.load %arg13[%c0_55, %c0_56] : memref<1x16xf32, #tpu.memory_space<vmem>>, vector<1x16xf32>
      %72 = vector.broadcast %70 : vector<2x1xf32> to vector<2x16xf32>
      %73 = vector.broadcast %71 : vector<1x16xf32> to vector<2x16xf32>
      %74 = arith.mulf %72, %73 : vector<2x16xf32>
      %c0_57 = arith.constant 0 : index
      %c0_58 = arith.constant 0 : index
      %75 = vector.load %arg14[%c0_57, %c0_58] : memref<1x16xf32, #tpu.memory_space<vmem>>, vector<1x16xf32>
      %76 = vector.broadcast %75 : vector<1x16xf32> to vector<2x16xf32>
      %77 = arith.addf %74, %76 : vector<2x16xf32>
      %78 = arith.negf %77 : vector<2x16xf32>
      %79 = math.exp %78 : vector<2x16xf32>
      %cst_59 = arith.constant 1.000000e+00 : f32
      %80 = vector.broadcast %cst_59 : f32 to vector<2x16xf32>
      %81 = arith.addf %80, %79 : vector<2x16xf32>
      %82 = arith.divf %80, %81 : vector<2x16xf32>
      %c0_60 = arith.constant 0 : index
      %c0_61 = arith.constant 0 : index
      %83 = vector.load %arg10[%c0_60, %c0_61] : memref<16x128xf32, #tpu.memory_space<vmem>>, vector<16x128xf32>
      %cst_62 = arith.constant dense<0.000000e+00> : vector<2x128xf32>
      %84 = tpu.matmul %82, %83, %cst_62 {dimension_numbers = #tpu.dot_dimension_numbers<[1], [0], [0], [1], [0, 0, 1, 1], [], []>} : vector<2x16xf32>, vector<16x128xf32>, vector<2x128xf32> -> vector<2x128xf32>
      %c0_63 = arith.constant 0 : index
      %c0_64 = arith.constant 0 : index
      %85 = vector.load %arg8[%c0_63, %c0_64] : memref<128x2xf32, #tpu.memory_space<vmem>>, vector<128x2xf32>
      %cst_65 = arith.constant dense<0.000000e+00> : vector<128x128xf32>
      %86 = tpu.matmul %85, %84, %cst_65 {dimension_numbers = #tpu.dot_dimension_numbers<[1], [0], [0], [1], [0, 0, 1, 1], [], []>} : vector<128x2xf32>, vector<2x128xf32>, vector<128x128xf32> -> vector<128x128xf32>
      %87 = arith.mulf %56, %86 : vector<128x128xf32>
      %c0_66 = arith.constant 0 : index
      %c0_67 = arith.constant 0 : index
      %88 = vector.load %arg15[%c0_66, %c0_67] : memref<128x128xf32, #tpu.memory_space<vmem>>, vector<128x128xf32>
      %89 = arith.addf %87, %88 : vector<128x128xf32>
      %cst_68 = arith.constant 0.000000e+00 : f32
      %90 = vector.broadcast %cst_68 : f32 to vector<128x128xf32>
      %91 = arith.maximumf %89, %90 : vector<128x128xf32>
      %c0_69 = arith.constant 0 : index
      %c0_70 = arith.constant 0 : index
      %92 = vector.load %arg16[%c0_69, %c0_70] : memref<128x128xf32, #tpu.memory_space<vmem>>, vector<128x128xf32>
      tpu.vector_store %arg16[%c0_69, %c0_70], %91 {strides = array<i32>} : memref<128x128xf32, #tpu.memory_space<vmem>>, vector<128x128xf32>,
    } else {
    }
    return
  }
  func.func @transform_0(%arg0: i32) -> (i32, i32, i32) {
    %c0_i32 = arith.constant 0 : i32
    %c0_i32_0 = arith.constant 0 : i32
    %c0_i32_1 = arith.constant 0 : i32
    return %arg0, %c0_i32, %c0_i32_0 : i32, i32, i32
  }
  func.func @transform_1(%arg0: i32) -> (i32, i32, i32) {
    %c0_i32 = arith.constant 0 : i32
    %c0_i32_0 = arith.constant 0 : i32
    %c0_i32_1 = arith.constant 0 : i32
    return %arg0, %c0_i32, %c0_i32_0 : i32, i32, i32
  }
  func.func @transform_2(%arg0: i32) -> (i32, i32) {
    %c0_i32 = arith.constant 0 : i32
    %c0_i32_0 = arith.constant 0 : i32
    %c0_i32_1 = arith.constant 0 : i32
    return %c0_i32, %c0_i32_0 : i32, i32
  }
  func.func @transform_3(%arg0: i32) -> (i32, i32) {
    %c0_i32 = arith.constant 0 : i32
    %c0_i32_0 = arith.constant 0 : i32
    %c0_i32_1 = arith.constant 0 : i32
    return %c0_i32, %c0_i32_0 : i32, i32
  }
  func.func @transform_4(%arg0: i32) -> (i32, i32) {
    %c0_i32 = arith.constant 0 : i32
    %c0_i32_0 = arith.constant 0 : i32
    %c0_i32_1 = arith.constant 0 : i32
    return %c0_i32, %c0_i32_0 : i32, i32
  }
  func.func @transform_5(%arg0: i32) -> (i32, i32) {
    %c0_i32 = arith.constant 0 : i32
    %c0_i32_0 = arith.constant 0 : i32
    %c0_i32_1 = arith.constant 0 : i32
    return %c0_i32, %c0_i32_0 : i32, i32
  }
  func.func @transform_6(%arg0: i32) -> (i32, i32) {
    %c0_i32 = arith.constant 0 : i32
    %c0_i32_0 = arith.constant 0 : i32
    %c0_i32_1 = arith.constant 0 : i32
    return %c0_i32, %c0_i32_0 : i32, i32
  }
  func.func @transform_7(%arg0: i32) -> (i32, i32) {
    %c0_i32 = arith.constant 0 : i32
    %c0_i32_0 = arith.constant 0 : i32
    %c0_i32_1 = arith.constant 0 : i32
    return %c0_i32, %c0_i32_0 : i32, i32
  }
  func.func @transform_8(%arg0: i32) -> (i32, i32) {
    %c0_i32 = arith.constant 0 : i32
    %c0_i32_0 = arith.constant 0 : i32
    %c0_i32_1 = arith.constant 0 : i32
    return %c0_i32, %c0_i32_0 : i32, i32
  }
  func.func @transform_9(%arg0: i32) -> (i32, i32) {
    %c0_i32 = arith.constant 0 : i32
    %c0_i32_0 = arith.constant 0 : i32
    %c0_i32_1 = arith.constant 0 : i32
    return %c0_i32, %c0_i32_0 : i32, i32
  }
  func.func @transform_10(%arg0: i32) -> (i32, i32) {
    %c0_i32 = arith.constant 0 : i32
    %c0_i32_0 = arith.constant 0 : i32
    %c0_i32_1 = arith.constant 0 : i32
    return %c0_i32, %c0_i32_0 : i32, i32
  }
  func.func @transform_11(%arg0: i32) -> (i32, i32) {
    %c0_i32 = arith.constant 0 : i32
    %c0_i32_0 = arith.constant 0 : i32
    %c0_i32_1 = arith.constant 0 : i32
    return %c0_i32, %c0_i32_0 : i32, i32
  }
  func.func @transform_12(%arg0: i32) -> (i32, i32) {
    %c0_i32 = arith.constant 0 : i32
    %c0_i32_0 = arith.constant 0 : i32
    %c0_i32_1 = arith.constant 0 : i32
    return %c0_i32, %c0_i32_0 : i32, i32
  }
  func.func @transform_13(%arg0: i32) -> (i32, i32) {
    %c0_i32 = arith.constant 0 : i32
    %c0_i32_0 = arith.constant 0 : i32
    %c0_i32_1 = arith.constant 0 : i32
    return %c0_i32, %c0_i32_0 : i32, i32
  }
  func.func @transform_14(%arg0: i32) -> (i32, i32) {
    %c0_i32 = arith.constant 0 : i32
    %c0_i32_0 = arith.constant 0 : i32
    %c0_i32_1 = arith.constant 0 : i32
    return %c0_i32, %c0_i32_0 : i32, i32
  }
  func.func @transform_15(%arg0: i32) -> (i32, i32) {
    %c0_i32 = arith.constant 0 : i32
    %c0_i32_0 = arith.constant 0 : i32
    %c0_i32_1 = arith.constant 0 : i32
    return %c0_i32, %c0_i32_0 : i32, i32
  }
}

</mosaic_0001>

<llo_original>
// kernel: tile.63
$region0: #{tile.63}
  #allocation0 [shape = 's32[1]{0}', space=sflag, size = 0x4, scoped, tag = 'scoped memory for tile.63']
  %s0 = inlined_call_operand.vmem [shape: f32[16], index: 0, kind: input, shape index: {}]
  %s1 = inlined_call_operand.vmem [shape: f32[10,16], index: 1, kind: output, shape index: {}]
  // Predicated region
  $region2: #{tile.63} parent=0 // pred_check
    _
  $region3: #{tile.63} parent=0 // pred_check_branch
    %3 = sbr.rel (0) target = $region5
  $region4: #{tile.63} parent=0 // pred_region
    _
  $region5: #{tile.63} parent=0 // pred_fallthru
    _
  %v4 = vld [vmem:[%s0] ss:$0 sm:$0xff]
  %5 = vst [vmem:[%s1] sm:$0xff] %v4
  %s6 = scalar_lea.vmem %s1, 8
  %7 = vst [vmem:[%s6] sm:$0xff] %v4

// kernel: tile.64
$region0: #{tile.64}
  %s0 = inlined_call_operand.vmem [shape: f32[10,16], index: 0, kind: input, shape index: {}]
  %s1 = inlined_call_operand.vmem [shape: f32[1,160], index: 1, kind: output, shape index: {}]
  $region1: #{tile.64} parent=0
    #allocation0 [shape = 'u8[8192]{0}', space=vmem, size = 0x2000, scoped, tag = 'scoped mem for output reshape']
    %s2 = smov 3
    %v3 = vld [vmem:[%s0] ss:$8 sm:%s2]
    %vm4 = vcmask 130048
    %5 = vst.msk [vmem:[#allocation0] ss:$8 sm:$0x3] %vm4, %v3
    %s6 = scalar_lea.vmem %s0, 7
    %v7 = vld [vmem:[%s6] sm:$0x1]
    %8 = vrot.lane.b32.xlu0 %v7, 112
    %v9 = vpop.permute.xlu0 %8
    %vm10 = vcmask 1048448
    %11 = vst.msk [vmem:[#allocation0] sm:$0x1] %vm10, %v9
    %s12 = scalar_lea.vmem %s0, 6
    %v13 = vld [vmem:[%s12] sm:$0x1]
    %14 = vrot.lane.b32.xlu0 %v13, 96
    %v15 = vpop.permute.xlu0 %14
    %vm16 = vcmask 917248
    %17 = vst.msk [vmem:[#allocation0] sm:$0x1] %vm16, %v15
    %s18 = scalar_lea.vmem %s0, 5
    %v19 = vld [vmem:[%s18] sm:$0x1]
    %20 = vrot.lane.b32.xlu0 %v19, 80
    %v21 = vpop.permute.xlu0 %20
    %vm22 = vcmask 786048
    %23 = vst.msk [vmem:[#allocation0] sm:$0x1] %vm22, %v21
    %s24 = scalar_lea.vmem %s0, 4
    %v25 = vld [vmem:[%s24] sm:$0x1]
    %26 = vrot.lane.b32.xlu0 %v25, 64
    %v27 = vpop.permute.xlu0 %26
    %vm28 = vcmask 654848
    %29 = vst.msk [vmem:[#allocation0] sm:$0x1] %vm28, %v27
    %s30 = scalar_lea.vmem %s0, 3
    %v31 = vld [vmem:[%s30] sm:$0x1]
    %32 = vrot.lane.b32.xlu0 %v31, 48
    %v33 = vpop.permute.xlu0 %32
    %vm34 = vcmask 523648
    %35 = vst.msk [vmem:[#allocation0] sm:$0x1] %vm34, %v33
    %s36 = scalar_lea.vmem %s0, 2
    %v37 = vld [vmem:[%s36] sm:$0x1]
    %38 = vrot.lane.b32.xlu0 %v37, 32
    %v39 = vpop.permute.xlu0 %38
    %vm40 = vcmask 392448
    %41 = vst.msk [vmem:[#allocation0] sm:$0x1] %vm40, %v39
    %s42 = scalar_lea.vmem %s0, 1
    %s43 = smov 3
    %v44 = vld [vmem:[%s42] ss:$8 sm:%s43]
    %45 = vrot.lane.b32.xlu0 %v44, 16
    %v46 = vpop.permute.xlu0 %45
    %vm47 = vcmask 261248
    %48 = vst.msk [vmem:[#allocation0] ss:$8 sm:$0x3] %vm47, %v46
    %s50 = sshllo.u32 0, 1
    %v52 = vld [vmem:[#allocation0] sm:%s50]
    %s53 = sshllo.u32 0, 1
    %54 = vst [vmem:[%s1] sm:%s53] %v52
    %s55 = scalar_lea.vmem [#allocation0], 8
    %v56 = vld [vmem:[%s55] sm:%s50]
    %s57 = sshllo.u32 0, 1
    %s58 = scalar_lea.vmem %s1, 1
    %59 = vst [vmem:[%s58] sm:%s57] %v56

// kernel: inres_forward.4
$region0: #{inres_forward.4}
  #allocation0 [shape = 'u32[]', space=smem, size = 0x4, offset = 0x4, fixed_abs, tag = 'smem constant byte address 0x4 - core index']
  #allocation1 [shape = 'u32[144,128]{1,0:T(1,128)}', space=vmem, size = 0x12000, scoped, tag = 'internal scratch']
  #allocation2 [shape = 'f32[200,160]{1,0:T(8,128)}', space=vmem, size = 0x32000, scoped, tag = 'scratch operand']
  %s0 = inlined_call_operand.vmem [shape: bf16[1,200,320], index: 0, kind: input, shape index: {}]
  %s1 = inlined_call_operand.vmem [shape: bf16[1,320,160], index: 1, kind: input, shape index: {}]
  %s2 = inlined_call_operand.vmem [shape: f32[1,160], index: 2, kind: input, shape index: {}]
  %s3 = inlined_call_operand.vmem [shape: f32[1,160], index: 3, kind: input, shape index: {}]
  %s4 = inlined_call_operand.vmem [shape: f32[1,160], index: 4, kind: input, shape index: {}]
  %s5 = inlined_call_operand.vmem [shape: f32[160,160], index: 5, kind: input, shape index: {}]
  %s6 = inlined_call_operand.vmem [shape: f32[200,160], index: 6, kind: output, shape index: {}]
  %s7 = sld [smem:[#allocation0]]
  $region42: #{inres_forward.4} parent=0
    _
  %s9 = ssub.s32 1, %s7
  %s10 = scalar_select 0, %s9, %s7
  // Predicated region
  $region2: #{inres_forward.4} parent=0 // pred_check
    _
  $region3: #{inres_forward.4} parent=0 // pred_check_branch
    %12 = sbr.rel (0) target = $region5
  $region4: #{inres_forward.4} parent=0 // pred_region
    _
  $region5: #{inres_forward.4} parent=0 // pred_fallthru
    _
  // Predicated region
  $region6: #{inres_forward.4} parent=0 // pred_check
    _
  $region7: #{inres_forward.4} parent=0 // pred_check_branch
    %14 = sbr.rel (0) target = $region9
  $region8: #{inres_forward.4} parent=0 // pred_region
    _
  $region9: #{inres_forward.4} parent=0 // pred_fallthru
    _
  // Predicated region
  $region10: #{inres_forward.4} parent=0 // pred_check
    _
  $region11: #{inres_forward.4} parent=0 // pred_check_branch
    %16 = sbr.rel (0) target = $region13
  $region12: #{inres_forward.4} parent=0 // pred_region
    _
  $region13: #{inres_forward.4} parent=0 // pred_fallthru
    _
  // Predicated region
  $region14: #{inres_forward.4} parent=0 // pred_check
    _
  $region15: #{inres_forward.4} parent=0 // pred_check_branch
    %18 = sbr.rel (0) target = $region17
  $region16: #{inres_forward.4} parent=0 // pred_region
    _
  $region17: #{inres_forward.4} parent=0 // pred_fallthru
    _
  // Predicated region
  $region18: #{inres_forward.4} parent=0 // pred_check
    _
  $region19: #{inres_forward.4} parent=0 // pred_check_branch
    %20 = sbr.rel (0) target = $region21
  $region20: #{inres_forward.4} parent=0 // pred_region
    _
  $region21: #{inres_forward.4} parent=0 // pred_fallthru
    _
  // Predicated region
  $region22: #{inres_forward.4} parent=0 // pred_check
    _
  $region23: #{inres_forward.4} parent=0 // pred_check_branch
    %22 = sbr.rel (0) target = $region25
  $region24: #{inres_forward.4} parent=0 // pred_region
    _
  $region25: #{inres_forward.4} parent=0 // pred_fallthru
    _
  %p24 = scmp.eq.s32.totalorder 0, 0
  // Predicated region
  $region26: #{inres_forward.4} parent=0 // pred_check
    %p25 = pneg %p24
  $region27: #{inres_forward.4} parent=0 // pred_check_branch
    %27 = sbr.rel (%p25) target = $region29
  $region28: #{inres_forward.4} parent=0 // pred_region
    %28 = vst [vmem:[#allocation2] sm:$0xff] 0.0
    %vm29 = vcmask 261120
    %30 = vst.msk [vmem:[#allocation2 + $0x8] sm:$0xff] %vm29, 0.0
    %31 = vst [vmem:[#allocation2 + $0x10] sm:$0xff] 0.0
    %32 = vst.msk [vmem:[#allocation2 + $0x18] sm:$0xff] %vm29, 0.0
    %33 = vst [vmem:[#allocation2 + $0x20] sm:$0xff] 0.0
    %34 = vst.msk [vmem:[#allocation2 + $0x28] sm:$0xff] %vm29, 0.0
    %35 = vst [vmem:[#allocation2 + $0x30] sm:$0xff] 0.0
    %36 = vst.msk [vmem:[#allocation2 + $0x38] sm:$0xff] %vm29, 0.0
    %37 = vst [vmem:[#allocation2 + $0x40] sm:$0xff] 0.0
    %38 = vst.msk [vmem:[#allocation2 + $0x48] sm:$0xff] %vm29, 0.0
    %39 = vst [vmem:[#allocation2 + $0x50] sm:$0xff] 0.0
    %40 = vst.msk [vmem:[#allocation2 + $0x58] sm:$0xff] %vm29, 0.0
    %41 = vst [vmem:[#allocation2 + $0x60] sm:$0xff] 0.0
    %42 = vst.msk [vmem:[#allocation2 + $0x68] sm:$0xff] %vm29, 0.0
    %43 = vst [vmem:[#allocation2 + $0x70] sm:$0xff] 0.0
    %44 = vst.msk [vmem:[#allocation2 + $0x78] sm:$0xff] %vm29, 0.0
    %45 = vst [vmem:[#allocation2 + $0x80] sm:$0xff] 0.0
    %46 = vst.msk [vmem:[#allocation2 + $0x88] sm:$0xff] %vm29, 0.0
    %47 = vst [vmem:[#allocation2 + $0x90] sm:$0xff] 0.0
    %48 = vst.msk [vmem:[#allocation2 + $0x98] sm:$0xff] %vm29, 0.0
    %49 = vst [vmem:[#allocation2 + $0xa0] sm:$0xff] 0.0
    %50 = vst.msk [vmem:[#allocation2 + $0xa8] sm:$0xff] %vm29, 0.0
    %51 = vst [vmem:[#allocation2 + $0xb0] sm:$0xff] 0.0
    %52 = vst.msk [vmem:[#allocation2 + $0xb8] sm:$0xff] %vm29, 0.0
    %53 = vst [vmem:[#allocation2 + $0xc0] sm:$0xff] 0.0
    %54 = vst.msk [vmem:[#allocation2 + $0xc8] sm:$0xff] %vm29, 0.0
    %55 = vst [vmem:[#allocation2 + $0xd0] sm:$0xff] 0.0
    %56 = vst.msk [vmem:[#allocation2 + $0xd8] sm:$0xff] %vm29, 0.0
    %57 = vst [vmem:[#allocation2 + $0xe0] sm:$0xff] 0.0
    %58 = vst.msk [vmem:[#allocation2 + $0xe8] sm:$0xff] %vm29, 0.0
    %59 = vst [vmem:[#allocation2 + $0xf0] sm:$0xff] 0.0
    %60 = vst.msk [vmem:[#allocation2 + $0xf8] sm:$0xff] %vm29, 0.0
    %61 = vst [vmem:[#allocation2 + $0x100] sm:$0xff] 0.0
    %62 = vst.msk [vmem:[#allocation2 + $0x108] sm:$0xff] %vm29, 0.0
    %63 = vst [vmem:[#allocation2 + $0x110] sm:$0xff] 0.0
    %64 = vst.msk [vmem:[#allocation2 + $0x118] sm:$0xff] %vm29, 0.0
    %65 = vst [vmem:[#allocation2 + $0x120] sm:$0xff] 0.0
    %66 = vst.msk [vmem:[#allocation2 + $0x128] sm:$0xff] %vm29, 0.0
    %67 = vst [vmem:[#allocation2 + $0x130] sm:$0xff] 0.0
    %68 = vst.msk [vmem:[#allocation2 + $0x138] sm:$0xff] %vm29, 0.0
    %69 = vst [vmem:[#allocation2 + $0x140] sm:$0xff] 0.0
    %70 = vst.msk [vmem:[#allocation2 + $0x148] sm:$0xff] %vm29, 0.0
    %71 = vst [vmem:[#allocation2 + $0x150] sm:$0xff] 0.0
    %72 = vst.msk [vmem:[#allocation2 + $0x158] sm:$0xff] %vm29, 0.0
    %73 = vst [vmem:[#allocation2 + $0x160] sm:$0xff] 0.0
    %74 = vst.msk [vmem:[#allocation2 + $0x168] sm:$0xff] %vm29, 0.0
    %75 = vst [vmem:[#allocation2 + $0x170] sm:$0xff] 0.0
    %76 = vst.msk [vmem:[#allocation2 + $0x178] sm:$0xff] %vm29, 0.0
    %77 = vst [vmem:[#allocation2 + $0x180] sm:$0xff] 0.0
    %78 = vst.msk [vmem:[#allocation2 + $0x188] sm:$0xff] %vm29, 0.0
  $region29: #{inres_forward.4} parent=0 // pred_fallthru
    _
  %v79 = vld [vmem:[%s0] sm:$0xff]
  %v80 = vld [vmem:[%s0 + $0x8] sm:$0xf]
  %v81 = vld [vmem:[%s0 + $0xc] sm:$0xff]
  %v82 = vld [vmem:[%s0 + $0x14] sm:$0xf]
  %v83 = vld [vmem:[%s0 + $0x18] sm:$0xff]
  %v84 = vld [vmem:[%s0 + $0x20] sm:$0xf]
  %v85 = vld [vmem:[%s0 + $0x24] sm:$0xff]
  %v86 = vld [vmem:[%s0 + $0x2c] sm:$0xf]
  %v87 = vld [vmem:[%s0 + $0x30] sm:$0xff]
  %v88 = vld [vmem:[%s0 + $0x38] sm:$0xf]
  %v89 = vld [vmem:[%s0 + $0x3c] sm:$0xff]
  %v90 = vld [vmem:[%s0 + $0x44] sm:$0xf]
  %v91 = vld [vmem:[%s0 + $0x48] sm:$0xff]
  %v92 = vld [vmem:[%s0 + $0x50] sm:$0xf]
  %v93 = vld [vmem:[%s0 + $0x54] sm:$0xff]
  %v94 = vld [vmem:[%s0 + $0x5c] sm:$0xf]
  %v95 = vld [vmem:[%s0 + $0x60] sm:$0xff]
  %v96 = vld [vmem:[%s0 + $0x68] sm:$0xf]
  %v97 = vld [vmem:[%s0 + $0x6c] sm:$0xff]
  %v98 = vld [vmem:[%s0 + $0x74] sm:$0xf]
  %v99 = vld [vmem:[%s0 + $0x78] sm:$0xff]
  %v100 = vld [vmem:[%s0 + $0x80] sm:$0xf]
  %v101 = vld [vmem:[%s0 + $0x84] sm:$0xff]
  %v102 = vld [vmem:[%s0 + $0x8c] sm:$0xf]
  %v103 = vld [vmem:[%s0 + $0x90] sm:$0xff]
  %v104 = vld [vmem:[%s0 + $0x98] sm:$0xf]
  %v105 = vld [vmem:[%s0 + $0x9c] sm:$0xff]
  %v106 = vld [vmem:[%s0 + $0xa4] sm:$0xf]
  %v107 = vld [vmem:[%s0 + $0xa8] sm:$0xff]
  %v108 = vld [vmem:[%s0 + $0xb0] sm:$0xf]
  %v109 = vld [vmem:[%s0 + $0xb4] sm:$0xff]
  %v110 = vld [vmem:[%s0 + $0xbc] sm:$0xf]
  %v111 = vld [vmem:[%s0 + $0xc0] sm:$0xff]
  %v112 = vld [vmem:[%s0 + $0xc8] sm:$0xf]
  %v113 = vld [vmem:[%s0 + $0xcc] sm:$0xff]
  %v114 = vld [vmem:[%s0 + $0xd4] sm:$0xf]
  %v115 = vld [vmem:[%s0 + $0xd8] sm:$0xff]
  %v116 = vld [vmem:[%s0 + $0xe0] sm:$0xf]
  %v117 = vld [vmem:[%s0 + $0xe4] sm:$0xff]
  %v118 = vld [vmem:[%s0 + $0xec] sm:$0xf]
  %v119 = vld [vmem:[%s0 + $0xf0] sm:$0xff]
  %v120 = vld [vmem:[%s0 + $0xf8] sm:$0xf]
  %v121 = vld [vmem:[%s0 + $0xfc] sm:$0xff]
  %v122 = vld [vmem:[%s0 + $0x104] sm:$0xf]
  %v123 = vld [vmem:[%s0 + $0x108] sm:$0xff]
  %v124 = vld [vmem:[%s0 + $0x110] sm:$0xf]
  %v125 = vld [vmem:[%s0 + $0x114] sm:$0xff]
  %v126 = vld [vmem:[%s0 + $0x11c] sm:$0xf]
  %v127 = vld [vmem:[%s0 + $0x120] sm:$0xff]
  %v128 = vld [vmem:[%s0 + $0x128] sm:$0xf]
  %v129 = vld [vmem:[%s1] sm:$0xff]
  %v130 = vld [vmem:[%s1 + $0x8] sm:$0xff]
  %v131 = vld [vmem:[%s1 + $0x10] sm:$0xff]
  %v132 = vld [vmem:[%s1 + $0x18] sm:$0xff]
  %v133 = vld [vmem:[%s1 + $0x20] sm:$0xff]
  %v134 = vld [vmem:[%s1 + $0x28] sm:$0xff]
  %v135 = vld [vmem:[%s1 + $0x30] sm:$0xff]
  %v136 = vld [vmem:[%s1 + $0x38] sm:$0xff]
  %v137 = vld [vmem:[%s1 + $0x40] sm:$0xff]
  %v138 = vld [vmem:[%s1 + $0x48] sm:$0xff]
  %v139 = vld [vmem:[%s1 + $0x50] sm:$0xff]
  %v140 = vld [vmem:[%s1 + $0x58] sm:$0xff]
  %v141 = vld [vmem:[%s1 + $0x60] sm:$0xff]
  %v142 = vld [vmem:[%s1 + $0x68] sm:$0xff]
  %v143 = vld [vmem:[%s1 + $0x70] sm:$0xff]
  %v144 = vld [vmem:[%s1 + $0x78] sm:$0xff]
  %v145 = vld [vmem:[%s1 + $0x80] sm:$0xff]
  %v146 = vld [vmem:[%s1 + $0x88] sm:$0xff]
  %v147 = vld [vmem:[%s1 + $0x90] sm:$0xff]
  %v148 = vld [vmem:[%s1 + $0x98] sm:$0xff]
  %v149 = vld [vmem:[%s1 + $0xa0] sm:$0xff]
  %v150 = vld [vmem:[%s1 + $0xa8] sm:$0xff]
  %v151 = vld [vmem:[%s1 + $0xb0] sm:$0xff]
  %v152 = vld [vmem:[%s1 + $0xb8] sm:$0xff]
  %v153 = vld [vmem:[%s1 + $0xc0] sm:$0xff]
  %v154 = vld [vmem:[%s1 + $0xc8] sm:$0xff]
  %v155 = vld [vmem:[%s1 + $0xd0] sm:$0xff]
  %v156 = vld [vmem:[%s1 + $0xd8] sm:$0xff]
  %v157 = vld [vmem:[%s1 + $0xe0] sm:$0xff]
  %v158 = vld [vmem:[%s1 + $0xe8] sm:$0xff]
  %v159 = vld [vmem:[%s1 + $0xf0] sm:$0xff]
  %v160 = vld [vmem:[%s1 + $0xf8] sm:$0xff]
  %v161 = vld [vmem:[%s1 + $0x100] sm:$0xff]
  %v162 = vld [vmem:[%s1 + $0x108] sm:$0xff]
  %v163 = vld [vmem:[%s1 + $0x110] sm:$0xff]
  %v164 = vld [vmem:[%s1 + $0x118] sm:$0xff]
  %v165 = vld [vmem:[%s1 + $0x120] sm:$0xff]
  %v166 = vld [vmem:[%s1 + $0x128] sm:$0xff]
  %v167 = vld [vmem:[%s1 + $0x130] sm:$0xff]
  %v168 = vld [vmem:[%s1 + $0x138] sm:$0xff]
  %v219 = vunpack.c.l.b16 %v79
  %v220 = vunpack.c.h.b16 %v79
  %v221 = vunpack.c.l.b16 %v80
  %v222 = vunpack.c.l.b16 %v81
  %v223 = vunpack.c.h.b16 %v81
  %v224 = vunpack.c.l.b16 %v82
  %v225 = vunpack.c.l.b16 %v83
  %v226 = vunpack.c.h.b16 %v83
  %v227 = vunpack.c.l.b16 %v84
  %v228 = vunpack.c.l.b16 %v85
  %v229 = vunpack.c.h.b16 %v85
  %v230 = vunpack.c.l.b16 %v86
  %v231 = vunpack.c.l.b16 %v87
  %v232 = vunpack.c.h.b16 %v87
  %v233 = vunpack.c.l.b16 %v88
  %v234 = vunpack.c.l.b16 %v89
  %v235 = vunpack.c.h.b16 %v89
  %v236 = vunpack.c.l.b16 %v90
  %v237 = vunpack.c.l.b16 %v91
  %v238 = vunpack.c.h.b16 %v91
  %v239 = vunpack.c.l.b16 %v92
  %v240 = vunpack.c.l.b16 %v93
  %v241 = vunpack.c.h.b16 %v93
  %v242 = vunpack.c.l.b16 %v94
  %v243 = vunpack.c.l.b16 %v95
  %v244 = vunpack.c.h.b16 %v95
  %v245 = vunpack.c.l.b16 %v96
  %v246 = vunpack.c.l.b16 %v97
  %v247 = vunpack.c.h.b16 %v97
  %v248 = vunpack.c.l.b16 %v98
  %v249 = vunpack.c.l.b16 %v99
  %v250 = vunpack.c.h.b16 %v99
  %v251 = vunpack.c.l.b16 %v100
  %v252 = vunpack.c.l.b16 %v101
  %v253 = vunpack.c.h.b16 %v101
  %v254 = vunpack.c.l.b16 %v102
  %v255 = vunpack.c.l.b16 %v103
  %v256 = vunpack.c.h.b16 %v103
  %v257 = vunpack.c.l.b16 %v104
  %v258 = vunpack.c.l.b16 %v105
  %v259 = vunpack.c.h.b16 %v105
  %v260 = vunpack.c.l.b16 %v106
  %v261 = vunpack.c.l.b16 %v107
  %v262 = vunpack.c.h.b16 %v107
  %v263 = vunpack.c.l.b16 %v108
  %v264 = vunpack.c.l.b16 %v109
  %v265 = vunpack.c.h.b16 %v109
  %v266 = vunpack.c.l.b16 %v110
  %v267 = vunpack.c.l.b16 %v111
  %v268 = vunpack.c.h.b16 %v111
  %v269 = vunpack.c.l.b16 %v112
  %v270 = vunpack.c.l.b16 %v113
  %v271 = vunpack.c.h.b16 %v113
  %v272 = vunpack.c.l.b16 %v114
  %v273 = vunpack.c.l.b16 %v115
  %v274 = vunpack.c.h.b16 %v115
  %v275 = vunpack.c.l.b16 %v116
  %v276 = vunpack.c.l.b16 %v117
  %v277 = vunpack.c.h.b16 %v117
  %v278 = vunpack.c.l.b16 %v118
  %v279 = vunpack.c.l.b16 %v119
  %v280 = vunpack.c.h.b16 %v119
  %v281 = vunpack.c.l.b16 %v120
  %v282 = vunpack.c.l.b16 %v121
  %v283 = vunpack.c.h.b16 %v121
  %v284 = vunpack.c.l.b16 %v122
  %v285 = vunpack.c.l.b16 %v123
  %v286 = vunpack.c.h.b16 %v123
  %v287 = vunpack.c.l.b16 %v124
  %v288 = vunpack.c.l.b16 %v125
  %v289 = vunpack.c.h.b16 %v125
  %v290 = vunpack.c.l.b16 %v126
  %v291 = vunpack.c.l.b16 %v127
  %v292 = vunpack.c.h.b16 %v127
  %v293 = vunpack.c.l.b16 %v128
  %v294 = vpack.c.b16 %v222, %v219
  %v295 = vpack.c.b16 %v223, %v220
  %v296 = vpack.c.b16 %v224, %v221
  %v297 = vpack.c.b16 %v228, %v225
  %v298 = vpack.c.b16 %v229, %v226
  %v299 = vpack.c.b16 %v230, %v227
  %v300 = vpack.c.b16 %v234, %v231
  %v301 = vpack.c.b16 %v235, %v232
  %v302 = vpack.c.b16 %v236, %v233
  %v303 = vpack.c.b16 %v240, %v237
  %v304 = vpack.c.b16 %v241, %v238
  %v305 = vpack.c.b16 %v242, %v239
  %v306 = vpack.c.b16 %v246, %v243
  %v307 = vpack.c.b16 %v247, %v244
  %v308 = vpack.c.b16 %v248, %v245
  %v309 = vpack.c.b16 %v252, %v249
  %v310 = vpack.c.b16 %v253, %v250
  %v311 = vpack.c.b16 %v254, %v251
  %v312 = vpack.c.b16 %v258, %v255
  %v313 = vpack.c.b16 %v259, %v256
  %v314 = vpack.c.b16 %v260, %v257
  %v315 = vpack.c.b16 %v264, %v261
  %v316 = vpack.c.b16 %v265, %v262
  %v317 = vpack.c.b16 %v266, %v263
  %v318 = vpack.c.b16 %v270, %v267
  %v319 = vpack.c.b16 %v271, %v268
  %v320 = vpack.c.b16 %v272, %v269
  %v321 = vpack.c.b16 %v276, %v273
  %v322 = vpack.c.b16 %v277, %v274
  %v323 = vpack.c.b16 %v278, %v275
  %v324 = vpack.c.b16 %v282, %v279
  %v325 = vpack.c.b16 %v283, %v280
  %v326 = vpack.c.b16 %v284, %v281
  %v327 = vpack.c.b16 %v288, %v285
  %v328 = vpack.c.b16 %v289, %v286
  %v329 = vpack.c.b16 %v290, %v287
  %v330 = vpack.c.b16 %v291, %v291
  %v331 = vpack.c.b16 %v292, %v292
  %v332 = vpack.c.b16 %v293, %v293
  %v399 = vunpack.c.l.b16 %v129
  %v400 = vunpack.c.h.b16 %v129
  %v401 = vunpack.c.l.b16 %v130
  %v402 = vunpack.c.h.b16 %v130
  %v403 = vunpack.c.l.b16 %v131
  %v404 = vunpack.c.h.b16 %v131
  %v405 = vunpack.c.l.b16 %v132
  %v406 = vunpack.c.h.b16 %v132
  %v407 = vunpack.c.l.b16 %v133
  %v408 = vunpack.c.h.b16 %v133
  %v409 = vunpack.c.l.b16 %v134
  %v410 = vunpack.c.h.b16 %v134
  %v411 = vunpack.c.l.b16 %v135
  %v412 = vunpack.c.h.b16 %v135
  %v413 = vunpack.c.l.b16 %v136
  %v414 = vunpack.c.h.b16 %v136
  %v415 = vunpack.c.l.b16 %v137
  %v416 = vunpack.c.h.b16 %v137
  %v417 = vunpack.c.l.b16 %v138
  %v418 = vunpack.c.h.b16 %v138
  %v419 = vunpack.c.l.b16 %v139
  %v420 = vunpack.c.h.b16 %v139
  %v421 = vunpack.c.l.b16 %v140
  %v422 = vunpack.c.h.b16 %v140
  %v423 = vunpack.c.l.b16 %v141
  %v424 = vunpack.c.h.b16 %v141
  %v425 = vunpack.c.l.b16 %v142
  %v426 = vunpack.c.h.b16 %v142
  %v427 = vunpack.c.l.b16 %v143
  %v428 = vunpack.c.h.b16 %v143
  %v429 = vunpack.c.l.b16 %v144
  %v430 = vunpack.c.h.b16 %v144
  %v431 = vunpack.c.l.b16 %v145
  %v432 = vunpack.c.h.b16 %v145
  %v433 = vunpack.c.l.b16 %v146
  %v434 = vunpack.c.h.b16 %v146
  %v435 = vunpack.c.l.b16 %v147
  %v436 = vunpack.c.h.b16 %v147
  %v437 = vunpack.c.l.b16 %v148
  %v438 = vunpack.c.h.b16 %v148
  %v439 = vunpack.c.l.b16 %v149
  %v440 = vunpack.c.h.b16 %v149
  %v441 = vunpack.c.l.b16 %v150
  %v442 = vunpack.c.h.b16 %v150
  %v443 = vunpack.c.l.b16 %v151
  %v444 = vunpack.c.h.b16 %v151
  %v445 = vunpack.c.l.b16 %v152
  %v446 = vunpack.c.h.b16 %v152
  %v447 = vunpack.c.l.b16 %v153
  %v448 = vunpack.c.h.b16 %v153
  %v449 = vunpack.c.l.b16 %v154
  %v450 = vunpack.c.h.b16 %v154
  %v451 = vunpack.c.l.b16 %v155
  %v452 = vunpack.c.h.b16 %v155
  %v453 = vunpack.c.l.b16 %v156
  %v454 = vunpack.c.h.b16 %v156
  %v455 = vunpack.c.l.b16 %v157
  %v456 = vunpack.c.h.b16 %v157
  %v457 = vunpack.c.l.b16 %v158
  %v458 = vunpack.c.h.b16 %v158
  %v459 = vunpack.c.l.b16 %v159
  %v460 = vunpack.c.h.b16 %v159
  %v461 = vunpack.c.l.b16 %v160
  %v462 = vunpack.c.h.b16 %v160
  %v463 = vunpack.c.l.b16 %v161
  %v464 = vunpack.c.h.b16 %v161
  %v465 = vunpack.c.l.b16 %v162
  %v466 = vunpack.c.h.b16 %v162
  %v467 = vunpack.c.l.b16 %v163
  %v468 = vunpack.c.h.b16 %v163
  %v469 = vunpack.c.l.b16 %v164
  %v470 = vunpack.c.h.b16 %v164
  %v471 = vunpack.c.l.b16 %v165
  %v472 = vunpack.c.h.b16 %v165
  %v473 = vunpack.c.l.b16 %v166
  %v474 = vunpack.c.h.b16 %v166
  %v475 = vunpack.c.l.b16 %v167
  %v476 = vunpack.c.h.b16 %v167
  %v477 = vunpack.c.l.b16 %v168
  %v478 = vunpack.c.h.b16 %v168
  %v479 = vpack.c.b16 %v401, %v399
  %v480 = vpack.c.b16 %v402, %v400
  %v481 = vpack.c.b16 %v405, %v403
  %v482 = vpack.c.b16 %v406, %v404
  %v483 = vpack.c.b16 %v409, %v407
  %v484 = vpack.c.b16 %v410, %v408
  %v485 = vpack.c.b16 %v413, %v411
  %v486 = vpack.c.b16 %v414, %v412
  %v487 = vpack.c.b16 %v417, %v415
  %v488 = vpack.c.b16 %v418, %v416
  %v489 = vpack.c.b16 %v421, %v419
  %v490 = vpack.c.b16 %v422, %v420
  %v491 = vpack.c.b16 %v425, %v423
  %v492 = vpack.c.b16 %v426, %v424
  %v493 = vpack.c.b16 %v429, %v427
  %v494 = vpack.c.b16 %v430, %v428
  %v495 = vpack.c.b16 %v433, %v431
  %v496 = vpack.c.b16 %v434, %v432
  %v497 = vpack.c.b16 %v437, %v435
  %v498 = vpack.c.b16 %v438, %v436
  %v499 = vpack.c.b16 %v441, %v439
  %v500 = vpack.c.b16 %v442, %v440
  %v501 = vpack.c.b16 %v445, %v443
  %v502 = vpack.c.b16 %v446, %v444
  %v503 = vpack.c.b16 %v449, %v447
  %v504 = vpack.c.b16 %v450, %v448
  %v505 = vpack.c.b16 %v453, %v451
  %v506 = vpack.c.b16 %v454, %v452
  %v507 = vpack.c.b16 %v457, %v455
  %v508 = vpack.c.b16 %v458, %v456
  %v509 = vpack.c.b16 %v461, %v459
  %v510 = vpack.c.b16 %v462, %v460
  %v511 = vpack.c.b16 %v465, %v463
  %v512 = vpack.c.b16 %v466, %v464
  %v513 = vpack.c.b16 %v469, %v467
  %v514 = vpack.c.b16 %v470, %v468
  %v515 = vpack.c.b16 %v473, %v471
  %v516 = vpack.c.b16 %v474, %v472
  %v517 = vpack.c.b16 %v477, %v475
  %v518 = vpack.c.b16 %v478, %v476
  %vm559 = vcmask 523264
  %v561 = vsel %vm559, %v296, 0
  %v564 = vsel %vm559, %v299, 0
  %v567 = vsel %vm559, %v302, 0
  %v570 = vsel %vm559, %v305, 0
  %v573 = vsel %vm559, %v308, 0
  %v576 = vsel %vm559, %v311, 0
  %v579 = vsel %vm559, %v314, 0
  %v582 = vsel %vm559, %v317, 0
  %v585 = vsel %vm559, %v320, 0
  %v588 = vsel %vm559, %v323, 0
  %v591 = vsel %vm559, %v326, 0
  %v594 = vsel %vm559, %v329, 0
  %v597 = vsel %vm559, %v332, 0
  %599 = vmatprep.subr.bf16.mxu0 %v480
  %600 = vmatpush1.bf16.msra.mxu0 %v479
  %601 = vmatprep.subr.bf16.mxu0 %v482
  %602 = vmatpush1.bf16.msra.mxu0 %v481
  %603 = vmatprep.subr.bf16.mxu0 %v484
  %604 = vmatpush1.bf16.msra.mxu0 %v483
  %605 = vmatprep.subr.bf16.mxu0 %v486
  %606 = vmatpush1.bf16.msra.mxu0 %v485
  %607 = vmatprep.subr.bf16.mxu0 %v488
  %608 = vmatpush1.bf16.msra.mxu0 %v487
  %609 = vmatprep.subr.bf16.mxu0 %v490
  %610 = vmatpush1.bf16.msra.mxu0 %v489
  %611 = vmatprep.subr.bf16.mxu0 %v492
  %612 = vmatpush1.bf16.msra.mxu0 %v491
  %613 = vmatprep.subr.bf16.mxu0 %v494
  %614 = vmatpush1.bf16.msra.mxu0 %v493
  %615 = vmatprep.subr.bf16.mxu0 %v496
  %616 = vmatpush1.bf16.msra.mxu0 %v495
  %617 = vmatprep.subr.bf16.mxu0 %v498
  %618 = vmatpush1.bf16.msra.mxu0 %v497
  %619 = vmatprep.subr.bf16.mxu0 %v500
  %620 = vmatpush1.bf16.msra.mxu0 %v499
  %621 = vmatprep.subr.bf16.mxu0 %v502
  %622 = vmatpush1.bf16.msra.mxu0 %v501
  %623 = vmatprep.subr.bf16.mxu0 %v504
  %624 = vmatpush1.bf16.msra.mxu0 %v503
  %625 = vmatprep.subr.bf16.mxu0 %v506
  %626 = vmatpush1.bf16.msra.mxu0 %v505
  %627 = vmatprep.subr.bf16.mxu0 %v508
  %628 = vmatpush1.bf16.msra.mxu0 %v507
  %629 = vmatprep.subr.bf16.mxu0 %v510
  %630 = vmatpush1.bf16.msra.mxu0 %v509
  %631 = vmatprep.mubr.bf16.mxu0 %v295
  %632 = vmatmul.mubr.bf16.gmra.mrb[0].mxu0 %v294
  %v633 = vpop.f32.mrb[0].mxu0
  %v634 = vadd.f32 0.0, %v633
  %v635 = vpop.f32.mrb[0].mxu0
  %v636 = vadd.f32 0.0, %v635
  %v637 = vpop.f32.mrb[0].mxu0
  %v638 = vadd.f32 0.0, %v637
  %v639 = vpop.f32.mrb[0].mxu0
  %v640 = vadd.f32 0.0, %v639
  %641 = vmatprep.mubr.bf16.mxu0 %v298
  %642 = vmatmul.mubr.bf16.gmra.mrb[0].mxu0 %v297
  %v643 = vpop.f32.mrb[0].mxu0
  %v644 = vadd.f32 0.0, %v643
  %v645 = vpop.f32.mrb[0].mxu0
  %v646 = vadd.f32 0.0, %v645
  %v647 = vpop.f32.mrb[0].mxu0
  %v648 = vadd.f32 0.0, %v647
  %v649 = vpop.f32.mrb[0].mxu0
  %v650 = vadd.f32 0.0, %v649
  %651 = vmatprep.mubr.bf16.mxu0 %v301
  %652 = vmatmul.mubr.bf16.gmra.mrb[0].mxu0 %v300
  %v653 = vpop.f32.mrb[0].mxu0
  %v654 = vadd.f32 0.0, %v653
  %v655 = vpop.f32.mrb[0].mxu0
  %v656 = vadd.f32 0.0, %v655
  %v657 = vpop.f32.mrb[0].mxu0
  %v658 = vadd.f32 0.0, %v657
  %v659 = vpop.f32.mrb[0].mxu0
  %v660 = vadd.f32 0.0, %v659
  %661 = vmatprep.mubr.bf16.mxu0 %v304
  %662 = vmatmul.mubr.bf16.gmra.mrb[0].mxu0 %v303
  %v663 = vpop.f32.mrb[0].mxu0
  %v664 = vadd.f32 0.0, %v663
  %v665 = vpop.f32.mrb[0].mxu0
  %v666 = vadd.f32 0.0, %v665
  %v667 = vpop.f32.mrb[0].mxu0
  %v668 = vadd.f32 0.0, %v667
  %v669 = vpop.f32.mrb[0].mxu0
  %v670 = vadd.f32 0.0, %v669
  %671 = vmatprep.mubr.bf16.mxu0 %v307
  %672 = vmatmul.mubr.bf16.gmra.mrb[0].mxu0 %v306
  %v673 = vpop.f32.mrb[0].mxu0
  %v674 = vadd.f32 0.0, %v673
  %v675 = vpop.f32.mrb[0].mxu0
  %v676 = vadd.f32 0.0, %v675
  %v677 = vpop.f32.mrb[0].mxu0
  %v678 = vadd.f32 0.0, %v677
  %v679 = vpop.f32.mrb[0].mxu0
  %v680 = vadd.f32 0.0, %v679
  %681 = vmatprep.mubr.bf16.mxu0 %v310
  %682 = vmatmul.mubr.bf16.gmra.mrb[0].mxu0 %v309
  %v683 = vpop.f32.mrb[0].mxu0
  %v684 = vadd.f32 0.0, %v683
  %v685 = vpop.f32.mrb[0].mxu0
  %v686 = vadd.f32 0.0, %v685
  %v687 = vpop.f32.mrb[0].mxu0
  %v688 = vadd.f32 0.0, %v687
  %v689 = vpop.f32.mrb[0].mxu0
  %v690 = vadd.f32 0.0, %v689
  %691 = vmatprep.mubr.bf16.mxu0 %v313
  %692 = vmatmul.mubr.bf16.gmra.mrb[0].mxu0 %v312
  %v693 = vpop.f32.mrb[0].mxu0
  %v694 = vadd.f32 0.0, %v693
  %v695 = vpop.f32.mrb[0].mxu0
  %v696 = vadd.f32 0.0, %v695
  %v697 = vpop.f32.mrb[0].mxu0
  %v698 = vadd.f32 0.0, %v697
  %v699 = vpop.f32.mrb[0].mxu0
  %v700 = vadd.f32 0.0, %v699
  %701 = vmatprep.mubr.bf16.mxu0 %v316
  %702 = vmatmul.mubr.bf16.gmra.mrb[0].mxu0 %v315
  %v703 = vpop.f32.mrb[0].mxu0
  %v704 = vadd.f32 0.0, %v703
  %v705 = vpop.f32.mrb[0].mxu0
  %v706 = vadd.f32 0.0, %v705
  %v707 = vpop.f32.mrb[0].mxu0
  %v708 = vadd.f32 0.0, %v707
  %v709 = vpop.f32.mrb[0].mxu0
  %v710 = vadd.f32 0.0, %v709
  %711 = vmatprep.mubr.bf16.mxu0 %v319
  %712 = vmatmul.mubr.bf16.gmra.mrb[0].mxu0 %v318
  %v713 = vpop.f32.mrb[0].mxu0
  %v714 = vadd.f32 0.0, %v713
  %v715 = vpop.f32.mrb[0].mxu0
  %v716 = vadd.f32 0.0, %v715
  %v717 = vpop.f32.mrb[0].mxu0
  %v718 = vadd.f32 0.0, %v717
  %v719 = vpop.f32.mrb[0].mxu0
  %v720 = vadd.f32 0.0, %v719
  %721 = vmatprep.mubr.bf16.mxu0 %v322
  %722 = vmatmul.mubr.bf16.gmra.mrb[0].mxu0 %v321
  %v723 = vpop.f32.mrb[0].mxu0
  %v724 = vadd.f32 0.0, %v723
  %v725 = vpop.f32.mrb[0].mxu0
  %v726 = vadd.f32 0.0, %v725
  %v727 = vpop.f32.mrb[0].mxu0
  %v728 = vadd.f32 0.0, %v727
  %v729 = vpop.f32.mrb[0].mxu0
  %v730 = vadd.f32 0.0, %v729
  %731 = vmatprep.mubr.bf16.mxu0 %v325
  %732 = vmatmul.mubr.bf16.gmra.mrb[0].mxu0 %v324
  %v733 = vpop.f32.mrb[0].mxu0
  %v734 = vadd.f32 0.0, %v733
  %v735 = vpop.f32.mrb[0].mxu0
  %v736 = vadd.f32 0.0, %v735
  %v737 = vpop.f32.mrb[0].mxu0
  %v738 = vadd.f32 0.0, %v737
  %v739 = vpop.f32.mrb[0].mxu0
  %v740 = vadd.f32 0.0, %v739
  %741 = vmatprep.mubr.bf16.mxu0 %v328
  %742 = vmatmul.mubr.bf16.gmra.mrb[0].mxu0 %v327
  %v743 = vpop.f32.mrb[0].mxu0
  %v744 = vadd.f32 0.0, %v743
  %v745 = vpop.f32.mrb[0].mxu0
  %v746 = vadd.f32 0.0, %v745
  %v747 = vpop.f32.mrb[0].mxu0
  %v748 = vadd.f32 0.0, %v747
  %v749 = vpop.f32.mrb[0].mxu0
  %v750 = vadd.f32 0.0, %v749
  %751 = vmatprep.mubr.bf16.mxu0 %v331
  %752 = vmatmul.mubr.bf16.gmra.mrb[0].mxu0 %v330
  %v753 = vpop.f32.mrb[0].mxu0
  %v754 = vadd.f32 0.0, %v753
  %v755 = vpop.f32.mrb[0].mxu0
  %v756 = vadd.f32 0.0, %v755
  %v757 = vpop.f32.mrb[0].mxu0
  %v758 = vpop.f32.mrb[0].mxu0
  %759 = vdwg.mxu0
  %760 = vmatprep.subr.bf16.mxu0 %v512
  %761 = vmatpush1.bf16.msra.mxu0 %v511
  %762 = vmatprep.subr.bf16.mxu0 %v514
  %763 = vmatpush1.bf16.msra.mxu0 %v513
  %764 = vmatprep.subr.bf16.mxu0 %v516
  %765 = vmatpush1.bf16.msra.mxu0 %v515
  %766 = vmatprep.subr.bf16.mxu0 %v518
  %767 = vmatpush1.bf16.msra.mxu0 %v517
  %768 = vmatprep.subr.bf16.mxu0 0
  %769 = vmatpush1.bf16.msra.mxu0 0
  %770 = vmatprep.subr.bf16.mxu0 0
  %771 = vmatpush1.bf16.msra.mxu0 0
  %772 = vmatprep.subr.bf16.mxu0 0
  %773 = vmatpush1.bf16.msra.mxu0 0
  %774 = vmatprep.subr.bf16.mxu0 0
  %775 = vmatpush1.bf16.msra.mxu0 0
  %776 = vmatprep.subr.bf16.mxu0 0
  %777 = vmatpush1.bf16.msra.mxu0 0
  %778 = vmatprep.subr.bf16.mxu0 0
  %779 = vmatpush1.bf16.msra.mxu0 0
  %780 = vmatprep.subr.bf16.mxu0 0
  %781 = vmatpush1.bf16.msra.mxu0 0
  %782 = vmatprep.subr.bf16.mxu0 0
  %783 = vmatpush1.bf16.msra.mxu0 0
  %784 = vmatprep.subr.bf16.mxu0 0
  %785 = vmatpush1.bf16.msra.mxu0 0
  %786 = vmatprep.subr.bf16.mxu0 0
  %787 = vmatpush1.bf16.msra.mxu0 0
  %788 = vmatprep.subr.bf16.mxu0 0
  %789 = vmatpush1.bf16.msra.mxu0 0
  %790 = vmatprep.subr.bf16.mxu0 0
  %791 = vmatpush1.bf16.msra.mxu0 0
  %792 = vmatprep.mubr.bf16.mxu0 0
  %793 = vmatmul.mubr.bf16.gmra.mrb[0].mxu0 %v561
  %v794 = vpop.f32.mrb[0].mxu0
  %v795 = vadd.f32 %v634, %v794
  %v796 = vpop.f32.mrb[0].mxu0
  %v797 = vadd.f32 %v636, %v796
  %v798 = vpop.f32.mrb[0].mxu0
  %v799 = vadd.f32 %v638, %v798
  %v800 = vpop.f32.mrb[0].mxu0
  %v801 = vadd.f32 %v640, %v800
  %802 = vmatprep.mubr.bf16.mxu0 0
  %803 = vmatmul.mubr.bf16.gmra.mrb[0].mxu0 %v564
  %v804 = vpop.f32.mrb[0].mxu0
  %v805 = vadd.f32 %v644, %v804
  %v806 = vpop.f32.mrb[0].mxu0
  %v807 = vadd.f32 %v646, %v806
  %v808 = vpop.f32.mrb[0].mxu0
  %v809 = vadd.f32 %v648, %v808
  %v810 = vpop.f32.mrb[0].mxu0
  %v811 = vadd.f32 %v650, %v810
  %812 = vmatprep.mubr.bf16.mxu0 0
  %813 = vmatmul.mubr.bf16.gmra.mrb[0].mxu0 %v567
  %v814 = vpop.f32.mrb[0].mxu0
  %v815 = vadd.f32 %v654, %v814
  %v816 = vpop.f32.mrb[0].mxu0
  %v817 = vadd.f32 %v656, %v816
  %v818 = vpop.f32.mrb[0].mxu0
  %v819 = vadd.f32 %v658, %v818
  %v820 = vpop.f32.mrb[0].mxu0
  %v821 = vadd.f32 %v660, %v820
  %822 = vmatprep.mubr.bf16.mxu0 0
  %823 = vmatmul.mubr.bf16.gmra.mrb[0].mxu0 %v570
  %v824 = vpop.f32.mrb[0].mxu0
  %v825 = vadd.f32 %v664, %v824
  %v826 = vpop.f32.mrb[0].mxu0
  %v827 = vadd.f32 %v666, %v826
  %v828 = vpop.f32.mrb[0].mxu0
  %v829 = vadd.f32 %v668, %v828
  %v830 = vpop.f32.mrb[0].mxu0
  %v831 = vadd.f32 %v670, %v830
  %832 = vmatprep.mubr.bf16.mxu0 0
  %833 = vmatmul.mubr.bf16.gmra.mrb[0].mxu0 %v573
  %v834 = vpop.f32.mrb[0].mxu0
  %v835 = vadd.f32 %v674, %v834
  %v836 = vpop.f32.mrb[0].mxu0
  %v837 = vadd.f32 %v676, %v836
  %v838 = vpop.f32.mrb[0].mxu0
  %v839 = vadd.f32 %v678, %v838
  %v840 = vpop.f32.mrb[0].mxu0
  %v841 = vadd.f32 %v680, %v840
  %842 = vmatprep.mubr.bf16.mxu0 0
  %843 = vmatmul.mubr.bf16.gmra.mrb[0].mxu0 %v576
  %v844 = vpop.f32.mrb[0].mxu0
  %v845 = vadd.f32 %v684, %v844
  %v846 = vpop.f32.mrb[0].mxu0
  %v847 = vadd.f32 %v686, %v846
  %v848 = vpop.f32.mrb[0].mxu0
  %v849 = vadd.f32 %v688, %v848
  %v850 = vpop.f32.mrb[0].mxu0
  %v851 = vadd.f32 %v690, %v850
  %852 = vmatprep.mubr.bf16.mxu0 0
  %853 = vmatmul.mubr.bf16.gmra.mrb[0].mxu0 %v579
  %v854 = vpop.f32.mrb[0].mxu0
  %v855 = vadd.f32 %v694, %v854
  %v856 = vpop.f32.mrb[0].mxu0
  %v857 = vadd.f32 %v696, %v856
  %v858 = vpop.f32.mrb[0].mxu0
  %v859 = vadd.f32 %v698, %v858
  %v860 = vpop.f32.mrb[0].mxu0
  %v861 = vadd.f32 %v700, %v860
  %862 = vmatprep.mubr.bf16.mxu0 0
  %863 = vmatmul.mubr.bf16.gmra.mrb[0].mxu0 %v582
  %v864 = vpop.f32.mrb[0].mxu0
  %v865 = vadd.f32 %v704, %v864
  %v866 = vpop.f32.mrb[0].mxu0
  %v867 = vadd.f32 %v706, %v866
  %v868 = vpop.f32.mrb[0].mxu0
  %v869 = vadd.f32 %v708, %v868
  %v870 = vpop.f32.mrb[0].mxu0
  %v871 = vadd.f32 %v710, %v870
  %872 = vmatprep.mubr.bf16.mxu0 0
  %873 = vmatmul.mubr.bf16.gmra.mrb[0].mxu0 %v585
  %v874 = vpop.f32.mrb[0].mxu0
  %v875 = vadd.f32 %v714, %v874
  %v876 = vpop.f32.mrb[0].mxu0
  %v877 = vadd.f32 %v716, %v876
  %v878 = vpop.f32.mrb[0].mxu0
  %v879 = vadd.f32 %v718, %v878
  %v880 = vpop.f32.mrb[0].mxu0
  %v881 = vadd.f32 %v720, %v880
  %882 = vmatprep.mubr.bf16.mxu0 0
  %883 = vmatmul.mubr.bf16.gmra.mrb[0].mxu0 %v588
  %v884 = vpop.f32.mrb[0].mxu0
  %v885 = vadd.f32 %v724, %v884
  %v886 = vpop.f32.mrb[0].mxu0
  %v887 = vadd.f32 %v726, %v886
  %v888 = vpop.f32.mrb[0].mxu0
  %v889 = vadd.f32 %v728, %v888
  %v890 = vpop.f32.mrb[0].mxu0
  %v891 = vadd.f32 %v730, %v890
  %892 = vmatprep.mubr.bf16.mxu0 0
  %893 = vmatmul.mubr.bf16.gmra.mrb[0].mxu0 %v591
  %v894 = vpop.f32.mrb[0].mxu0
  %v895 = vadd.f32 %v734, %v894
  %v896 = vpop.f32.mrb[0].mxu0
  %v897 = vadd.f32 %v736, %v896
  %v898 = vpop.f32.mrb[0].mxu0
  %v899 = vadd.f32 %v738, %v898
  %v900 = vpop.f32.mrb[0].mxu0
  %v901 = vadd.f32 %v740, %v900
  %902 = vmatprep.mubr.bf16.mxu0 0
  %903 = vmatmul.mubr.bf16.gmra.mrb[0].mxu0 %v594
  %v904 = vpop.f32.mrb[0].mxu0
  %v905 = vadd.f32 %v744, %v904
  %v906 = vpop.f32.mrb[0].mxu0
  %v907 = vadd.f32 %v746, %v906
  %v908 = vpop.f32.mrb[0].mxu0
  %v909 = vadd.f32 %v748, %v908
  %v910 = vpop.f32.mrb[0].mxu0
  %v911 = vadd.f32 %v750, %v910
  %912 = vmatprep.mubr.bf16.mxu0 0
  %913 = vmatmul.mubr.bf16.gmra.mrb[0].mxu0 %v597
  %v914 = vpop.f32.mrb[0].mxu0
  %v915 = vadd.f32 %v754, %v914
  %v916 = vpop.f32.mrb[0].mxu0
  %v917 = vadd.f32 %v756, %v916
  %v918 = vpop.f32.mrb[0].mxu0
  %v919 = vpop.f32.mrb[0].mxu0
  %920 = vdwg.mxu0
  %v921 = vld [vmem:[#allocation2] sm:$0xff]
  %v922 = vld [vmem:[#allocation2 + $0x8] sm:$0xff]
  %v923 = vld [vmem:[#allocation2 + $0x10] sm:$0xff]
  %v924 = vld [vmem:[#allocation2 + $0x18] sm:$0xff]
  %v925 = vld [vmem:[#allocation2 + $0x20] sm:$0xff]
  %v926 = vld [vmem:[#allocation2 + $0x28] sm:$0xff]
  %v927 = vld [vmem:[#allocation2 + $0x30] sm:$0xff]
  %v928 = vld [vmem:[#allocation2 + $0x38] sm:$0xff]
  %v929 = vld [vmem:[#allocation2 + $0x40] sm:$0xff]
  %v930 = vld [vmem:[#allocation2 + $0x48] sm:$0xff]
  %v931 = vld [vmem:[#allocation2 + $0x50] sm:$0xff]
  %v932 = vld [vmem:[#allocation2 + $0x58] sm:$0xff]
  %v933 = vld [vmem:[#allocation2 + $0x60] sm:$0xff]
  %v934 = vld [vmem:[#allocation2 + $0x68] sm:$0xff]
  %v935 = vld [vmem:[#allocation2 + $0x70] sm:$0xff]
  %v936 = vld [vmem:[#allocation2 + $0x78] sm:$0xff]
  %v937 = vld [vmem:[#allocation2 + $0x80] sm:$0xff]
  %v938 = vld [vmem:[#allocation2 + $0x88] sm:$0xff]
  %v939 = vld [vmem:[#allocation2 + $0x90] sm:$0xff]
  %v940 = vld [vmem:[#allocation2 + $0x98] sm:$0xff]
  %v941 = vld [vmem:[#allocation2 + $0xa0] sm:$0xff]
  %v942 = vld [vmem:[#allocation2 + $0xa8] sm:$0xff]
  %v943 = vld [vmem:[#allocation2 + $0xb0] sm:$0xff]
  %v944 = vld [vmem:[#allocation2 + $0xb8] sm:$0xff]
  %v945 = vld [vmem:[#allocation2 + $0xc0] sm:$0xff]
  %v946 = vld [vmem:[#allocation2 + $0xc8] sm:$0xff]
  %v947 = vld [vmem:[#allocation2 + $0xd0] sm:$0xff]
  %v948 = vld [vmem:[#allocation2 + $0xd8] sm:$0xff]
  %v949 = vld [vmem:[#allocation2 + $0xe0] sm:$0xff]
  %v950 = vld [vmem:[#allocation2 + $0xe8] sm:$0xff]
  %v951 = vld [vmem:[#allocation2 + $0xf0] sm:$0xff]
  %v952 = vld [vmem:[#allocation2 + $0xf8] sm:$0xff]
  %v953 = vld [vmem:[#allocation2 + $0x100] sm:$0xff]
  %v954 = vld [vmem:[#allocation2 + $0x108] sm:$0xff]
  %v955 = vld [vmem:[#allocation2 + $0x110] sm:$0xff]
  %v956 = vld [vmem:[#allocation2 + $0x118] sm:$0xff]
  %v957 = vld [vmem:[#allocation2 + $0x120] sm:$0xff]
  %v958 = vld [vmem:[#allocation2 + $0x128] sm:$0xff]
  %v959 = vld [vmem:[#allocation2 + $0x130] sm:$0xff]
  %v960 = vld [vmem:[#allocation2 + $0x138] sm:$0xff]
  %v961 = vld [vmem:[#allocation2 + $0x140] sm:$0xff]
  %v962 = vld [vmem:[#allocation2 + $0x148] sm:$0xff]
  %v963 = vld [vmem:[#allocation2 + $0x150] sm:$0xff]
  %v964 = vld [vmem:[#allocation2 + $0x158] sm:$0xff]
  %v965 = vld [vmem:[#allocation2 + $0x160] sm:$0xff]
  %v966 = vld [vmem:[#allocation2 + $0x168] sm:$0xff]
  %v967 = vld [vmem:[#allocation2 + $0x170] sm:$0xff]
  %v968 = vld [vmem:[#allocation2 + $0x178] sm:$0xff]
  %v969 = vld [vmem:[#allocation2 + $0x180] sm:$0xff]
  %v970 = vld [vmem:[#allocation2 + $0x188] sm:$0xff]
  %v971 = vadd.f32 %v921, %v795
  %v972 = vadd.f32 %v922, %v797
  %v973 = vadd.f32 %v923, %v799
  %v974 = vadd.f32 %v924, %v801
  %v975 = vadd.f32 %v925, %v805
  %v976 = vadd.f32 %v926, %v807
  %v977 = vadd.f32 %v927, %v809
  %v978 = vadd.f32 %v928, %v811
  %v979 = vadd.f32 %v929, %v815
  %v980 = vadd.f32 %v930, %v817
  %v981 = vadd.f32 %v931, %v819
  %v982 = vadd.f32 %v932, %v821
  %v983 = vadd.f32 %v933, %v825
  %v984 = vadd.f32 %v934, %v827
  %v985 = vadd.f32 %v935, %v829
  %v986 = vadd.f32 %v936, %v831
  %v987 = vadd.f32 %v937, %v835
  %v988 = vadd.f32 %v938, %v837
  %v989 = vadd.f32 %v939, %v839
  %v990 = vadd.f32 %v940, %v841
  %v991 = vadd.f32 %v941, %v845
  %v992 = vadd.f32 %v942, %v847
  %v993 = vadd.f32 %v943, %v849
  %v994 = vadd.f32 %v944, %v851
  %v995 = vadd.f32 %v945, %v855
  %v996 = vadd.f32 %v946, %v857
  %v997 = vadd.f32 %v947, %v859
  %v998 = vadd.f32 %v948, %v861
  %v999 = vadd.f32 %v949, %v865
  %v1000 = vadd.f32 %v950, %v867
  %v1001 = vadd.f32 %v951, %v869
  %v1002 = vadd.f32 %v952, %v871
  %v1003 = vadd.f32 %v953, %v875
  %v1004 = vadd.f32 %v954, %v877
  %v1005 = vadd.f32 %v955, %v879
  %v1006 = vadd.f32 %v956, %v881
  %v1007 = vadd.f32 %v957, %v885
  %v1008 = vadd.f32 %v958, %v887
  %v1009 = vadd.f32 %v959, %v889
  %v1010 = vadd.f32 %v960, %v891
  %v1011 = vadd.f32 %v961, %v895
  %v1012 = vadd.f32 %v962, %v897
  %v1013 = vadd.f32 %v963, %v899
  %v1014 = vadd.f32 %v964, %v901
  %v1015 = vadd.f32 %v965, %v905
  %v1016 = vadd.f32 %v966, %v907
  %v1017 = vadd.f32 %v967, %v909
  %v1018 = vadd.f32 %v968, %v911
  %v1019 = vadd.f32 %v969, %v915
  %v1020 = vadd.f32 %v970, %v917
  %1021 = vst [vmem:[#allocation2] sm:$0xff] %v971
  %vm1022 = vcmask 261120
  %1023 = vst.msk [vmem:[#allocation2 + $0x8] sm:$0xff] %vm1022, %v972
  %1024 = vst [vmem:[#allocation2 + $0x10] sm:$0xff] %v973
  %1025 = vst.msk [vmem:[#allocation2 + $0x18] sm:$0xff] %vm1022, %v974
  %1026 = vst [vmem:[#allocation2 + $0x20] sm:$0xff] %v975
  %1027 = vst.msk [vmem:[#allocation2 + $0x28] sm:$0xff] %vm1022, %v976
  %1028 = vst [vmem:[#allocation2 + $0x30] sm:$0xff] %v977
  %1029 = vst.msk [vmem:[#allocation2 + $0x38] sm:$0xff] %vm1022, %v978
  %1030 = vst [vmem:[#allocation2 + $0x40] sm:$0xff] %v979
  %1031 = vst.msk [vmem:[#allocation2 + $0x48] sm:$0xff] %vm1022, %v980
  %1032 = vst [vmem:[#allocation2 + $0x50] sm:$0xff] %v981
  %1033 = vst.msk [vmem:[#allocation2 + $0x58] sm:$0xff] %vm1022, %v982
  %1034 = vst [vmem:[#allocation2 + $0x60] sm:$0xff] %v983
  %1035 = vst.msk [vmem:[#allocation2 + $0x68] sm:$0xff] %vm1022, %v984
  %1036 = vst [vmem:[#allocation2 + $0x70] sm:$0xff] %v985
  %1037 = vst.msk [vmem:[#allocation2 + $0x78] sm:$0xff] %vm1022, %v986
  %1038 = vst [vmem:[#allocation2 + $0x80] sm:$0xff] %v987
  %1039 = vst.msk [vmem:[#allocation2 + $0x88] sm:$0xff] %vm1022, %v988
  %1040 = vst [vmem:[#allocation2 + $0x90] sm:$0xff] %v989
  %1041 = vst.msk [vmem:[#allocation2 + $0x98] sm:$0xff] %vm1022, %v990
  %1042 = vst [vmem:[#allocation2 + $0xa0] sm:$0xff] %v991
  %1043 = vst.msk [vmem:[#allocation2 + $0xa8] sm:$0xff] %vm1022, %v992
  %1044 = vst [vmem:[#allocation2 + $0xb0] sm:$0xff] %v993
  %1045 = vst.msk [vmem:[#allocation2 + $0xb8] sm:$0xff] %vm1022, %v994
  %1046 = vst [vmem:[#allocation2 + $0xc0] sm:$0xff] %v995
  %1047 = vst.msk [vmem:[#allocation2 + $0xc8] sm:$0xff] %vm1022, %v996
  %1048 = vst [vmem:[#allocation2 + $0xd0] sm:$0xff] %v997
  %1049 = vst.msk [vmem:[#allocation2 + $0xd8] sm:$0xff] %vm1022, %v998
  %1050 = vst [vmem:[#allocation2 + $0xe0] sm:$0xff] %v999
  %1051 = vst.msk [vmem:[#allocation2 + $0xe8] sm:$0xff] %vm1022, %v1000
  %1052 = vst [vmem:[#allocation2 + $0xf0] sm:$0xff] %v1001
  %1053 = vst.msk [vmem:[#allocation2 + $0xf8] sm:$0xff] %vm1022, %v1002
  %1054 = vst [vmem:[#allocation2 + $0x100] sm:$0xff] %v1003
  %1055 = vst.msk [vmem:[#allocation2 + $0x108] sm:$0xff] %vm1022, %v1004
  %1056 = vst [vmem:[#allocation2 + $0x110] sm:$0xff] %v1005
  %1057 = vst.msk [vmem:[#allocation2 + $0x118] sm:$0xff] %vm1022, %v1006
  %1058 = vst [vmem:[#allocation2 + $0x120] sm:$0xff] %v1007
  %1059 = vst.msk [vmem:[#allocation2 + $0x128] sm:$0xff] %vm1022, %v1008
  %1060 = vst [vmem:[#allocation2 + $0x130] sm:$0xff] %v1009
  %1061 = vst.msk [vmem:[#allocation2 + $0x138] sm:$0xff] %vm1022, %v1010
  %1062 = vst [vmem:[#allocation2 + $0x140] sm:$0xff] %v1011
  %1063 = vst.msk [vmem:[#allocation2 + $0x148] sm:$0xff] %vm1022, %v1012
  %1064 = vst [vmem:[#allocation2 + $0x150] sm:$0xff] %v1013
  %1065 = vst.msk [vmem:[#allocation2 + $0x158] sm:$0xff] %vm1022, %v1014
  %1066 = vst [vmem:[#allocation2 + $0x160] sm:$0xff] %v1015
  %1067 = vst.msk [vmem:[#allocation2 + $0x168] sm:$0xff] %vm1022, %v1016
  %1068 = vst [vmem:[#allocation2 + $0x170] sm:$0xff] %v1017
  %1069 = vst.msk [vmem:[#allocation2 + $0x178] sm:$0xff] %vm1022, %v1018
  %1070 = vst [vmem:[#allocation2 + $0x180] sm:$0xff] %v1019
  %1071 = vst.msk [vmem:[#allocation2 + $0x188] sm:$0xff] %vm1022, %v1020
  // Predicated region
  $region30: #{inres_forward.4} parent=0 // pred_check
    %p1072 = pneg %p24
  $region31: #{inres_forward.4} parent=0 // pred_check_branch
    %1074 = sbr.rel (%p1072) target = $region33
  $region32: #{inres_forward.4} parent=0 // pred_region
    %v1075 = vld [vmem:[#allocation2] sm:$0xff]
    %v1076 = vld [vmem:[#allocation2 + $0x8] sm:$0xff]
    %v1077 = vld [vmem:[#allocation2 + $0x10] sm:$0xff]
    %v1078 = vld [vmem:[#allocation2 + $0x18] sm:$0xff]
    %v1079 = vld [vmem:[#allocation2 + $0x20] sm:$0xff]
    %v1080 = vld [vmem:[#allocation2 + $0x28] sm:$0xff]
    %v1081 = vld [vmem:[#allocation2 + $0x30] sm:$0xff]
    %v1082 = vld [vmem:[#allocation2 + $0x38] sm:$0xff]
    %v1083 = vld [vmem:[#allocation2 + $0x40] sm:$0xff]
    %v1084 = vld [vmem:[#allocation2 + $0x48] sm:$0xff]
    %v1085 = vld [vmem:[#allocation2 + $0x50] sm:$0xff]
    %v1086 = vld [vmem:[#allocation2 + $0x58] sm:$0xff]
    %v1087 = vld [vmem:[#allocation2 + $0x60] sm:$0xff]
    %v1088 = vld [vmem:[#allocation2 + $0x68] sm:$0xff]
    %v1089 = vld [vmem:[#allocation2 + $0x70] sm:$0xff]
    %v1090 = vld [vmem:[#allocation2 + $0x78] sm:$0xff]
    %v1091 = vld [vmem:[#allocation2 + $0x80] sm:$0xff]
    %v1092 = vld [vmem:[#allocation2 + $0x88] sm:$0xff]
    %v1093 = vld [vmem:[#allocation2 + $0x90] sm:$0xff]
    %v1094 = vld [vmem:[#allocation2 + $0x98] sm:$0xff]
    %v1095 = vld [vmem:[#allocation2 + $0xa0] sm:$0xff]
    %v1096 = vld [vmem:[#allocation2 + $0xa8] sm:$0xff]
    %v1097 = vld [vmem:[#allocation2 + $0xb0] sm:$0xff]
    %v1098 = vld [vmem:[#allocation2 + $0xb8] sm:$0xff]
    %v1099 = vld [vmem:[#allocation2 + $0xc0] sm:$0xff]
    %v1100 = vld [vmem:[#allocation2 + $0xc8] sm:$0xff]
    %v1101 = vld [vmem:[#allocation2 + $0xd0] sm:$0xff]
    %v1102 = vld [vmem:[#allocation2 + $0xd8] sm:$0xff]
    %v1103 = vld [vmem:[#allocation2 + $0xe0] sm:$0xff]
    %v1104 = vld [vmem:[#allocation2 + $0xe8] sm:$0xff]
    %v1105 = vld [vmem:[#allocation2 + $0xf0] sm:$0xff]
    %v1106 = vld [vmem:[#allocation2 + $0xf8] sm:$0xff]
    %v1107 = vld [vmem:[#allocation2 + $0x100] sm:$0xff]
    %v1108 = vld [vmem:[#allocation2 + $0x108] sm:$0xff]
    %v1109 = vld [vmem:[#allocation2 + $0x110] sm:$0xff]
    %v1110 = vld [vmem:[#allocation2 + $0x118] sm:$0xff]
    %v1111 = vld [vmem:[#allocation2 + $0x120] sm:$0xff]
    %v1112 = vld [vmem:[#allocation2 + $0x128] sm:$0xff]
    %v1113 = vld [vmem:[#allocation2 + $0x130] sm:$0xff]
    %v1114 = vld [vmem:[#allocation2 + $0x138] sm:$0xff]
    %v1115 = vld [vmem:[#allocation2 + $0x140] sm:$0xff]
    %v1116 = vld [vmem:[#allocation2 + $0x148] sm:$0xff]
    %v1117 = vld [vmem:[#allocation2 + $0x150] sm:$0xff]
    %v1118 = vld [vmem:[#allocation2 + $0x158] sm:$0xff]
    %v1119 = vld [vmem:[#allocation2 + $0x160] sm:$0xff]
    %v1120 = vld [vmem:[#allocation2 + $0x168] sm:$0xff]
    %v1121 = vld [vmem:[#allocation2 + $0x170] sm:$0xff]
    %v1122 = vld [vmem:[#allocation2 + $0x178] sm:$0xff]
    %v1123 = vld [vmem:[#allocation2 + $0x180] sm:$0xff]
    %v1124 = vld [vmem:[#allocation2 + $0x188] sm:$0xff]
    %v1125 = vld [vmem:[%s2] sm:$0x3]
    %v1127 = vlaneseq
    %v1128 = vshrl.u32 %v1127, 7
    %v1129 = vsub.s32 0, %v1128
    %v1130 = vrot.slane %v1125, %v1129
    %v1131 = vlaneseq
    %v1132 = vshrl.u32 %v1131, 7
    %v1133 = vsub.s32 1, %v1132
    %v1134 = vrot.slane %v1125, %v1133
    %v1137 = vadd.f32 %v1075, %v1130
    %v1138 = vadd.f32 %v1076, %v1134
    %v1139 = vadd.f32 %v1077, %v1130
    %v1140 = vadd.f32 %v1078, %v1134
    %v1141 = vadd.f32 %v1079, %v1130
    %v1142 = vadd.f32 %v1080, %v1134
    %v1143 = vadd.f32 %v1081, %v1130
    %v1144 = vadd.f32 %v1082, %v1134
    %v1145 = vadd.f32 %v1083, %v1130
    %v1146 = vadd.f32 %v1084, %v1134
    %v1147 = vadd.f32 %v1085, %v1130
    %v1148 = vadd.f32 %v1086, %v1134
    %v1149 = vadd.f32 %v1087, %v1130
    %v1150 = vadd.f32 %v1088, %v1134
    %v1151 = vadd.f32 %v1089, %v1130
    %v1152 = vadd.f32 %v1090, %v1134
    %v1153 = vadd.f32 %v1091, %v1130
    %v1154 = vadd.f32 %v1092, %v1134
    %v1155 = vadd.f32 %v1093, %v1130
    %v1156 = vadd.f32 %v1094, %v1134
    %v1157 = vadd.f32 %v1095, %v1130
    %v1158 = vadd.f32 %v1096, %v1134
    %v1159 = vadd.f32 %v1097, %v1130
    %v1160 = vadd.f32 %v1098, %v1134
    %v1161 = vadd.f32 %v1099, %v1130
    %v1162 = vadd.f32 %v1100, %v1134
    %v1163 = vadd.f32 %v1101, %v1130
    %v1164 = vadd.f32 %v1102, %v1134
    %v1165 = vadd.f32 %v1103, %v1130
    %v1166 = vadd.f32 %v1104, %v1134
    %v1167 = vadd.f32 %v1105, %v1130
    %v1168 = vadd.f32 %v1106, %v1134
    %v1169 = vadd.f32 %v1107, %v1130
    %v1170 = vadd.f32 %v1108, %v1134
    %v1171 = vadd.f32 %v1109, %v1130
    %v1172 = vadd.f32 %v1110, %v1134
    %v1173 = vadd.f32 %v1111, %v1130
    %v1174 = vadd.f32 %v1112, %v1134
    %v1175 = vadd.f32 %v1113, %v1130
    %v1176 = vadd.f32 %v1114, %v1134
    %v1177 = vadd.f32 %v1115, %v1130
    %v1178 = vadd.f32 %v1116, %v1134
    %v1179 = vadd.f32 %v1117, %v1130
    %v1180 = vadd.f32 %v1118, %v1134
    %v1181 = vadd.f32 %v1119, %v1130
    %v1182 = vadd.f32 %v1120, %v1134
    %v1183 = vadd.f32 %v1121, %v1130
    %v1184 = vadd.f32 %v1122, %v1134
    %v1185 = vadd.f32 %v1123, %v1130
    %v1186 = vadd.f32 %v1124, %v1134
    %vm1187 = vcmask 588800
    %v1189 = vsel %vm1187, 1.0, 0
    %1191 = vmatprep.subr.mxu0 %v1138
    %1192 = vmatpush1.msra.mxu0 %v1137
    %1193 = vmatprep.subr.mxu0 %v1140
    %1194 = vmatpush1.msra.mxu0 %v1139
    %1195 = vmatprep.subr.mxu0 %v1142
    %1196 = vmatpush1.msra.mxu0 %v1141
    %1197 = vmatprep.subr.mxu0 %v1144
    %1198 = vmatpush1.msra.mxu0 %v1143
    %1199 = vmatprep.subr.mxu0 %v1146
    %1200 = vmatpush1.msra.mxu0 %v1145
    %1201 = vmatprep.subr.mxu0 %v1148
    %1202 = vmatpush1.msra.mxu0 %v1147
    %1203 = vmatprep.subr.mxu0 %v1150
    %1204 = vmatpush1.msra.mxu0 %v1149
    %1205 = vmatprep.subr.mxu0 %v1152
    %1206 = vmatpush1.msra.mxu0 %v1151
    %1207 = vmatprep.subr.mxu0 %v1154
    %1208 = vmatpush1.msra.mxu0 %v1153
    %1209 = vmatprep.subr.mxu0 %v1156
    %1210 = vmatpush1.msra.mxu0 %v1155
    %1211 = vmatprep.subr.mxu0 %v1158
    %1212 = vmatpush1.msra.mxu0 %v1157
    %1213 = vmatprep.subr.mxu0 %v1160
    %1214 = vmatpush1.msra.mxu0 %v1159
    %1215 = vmatprep.subr.mxu0 %v1162
    %1216 = vmatpush1.msra.mxu0 %v1161
    %1217 = vmatprep.subr.mxu0 %v1164
    %1218 = vmatpush1.msra.mxu0 %v1163
    %1219 = vmatprep.subr.mxu0 %v1166
    %1220 = vmatpush1.msra.mxu0 %v1165
    %1221 = vmatprep.subr.mxu0 %v1168
    %1222 = vmatpush1.msra.mxu0 %v1167
    %1223 = vmatprep.subr.mxu0 %v1170
    %1224 = vmatpush1.msra.mxu0 %v1169
    %1225 = vmatprep.subr.mxu0 %v1172
    %1226 = vmatpush1.msra.mxu0 %v1171
    %1227 = vmatprep.subr.mxu0 %v1174
    %1228 = vmatpush1.msra.mxu0 %v1173
    %1229 = vmatprep.subr.mxu0 %v1176
    %1230 = vmatpush1.msra.mxu0 %v1175
    %1231 = vmatprep.subr.mxu0 %v1178
    %1232 = vmatpush1.msra.mxu0 %v1177
    %1233 = vmatprep.subr.mxu0 %v1180
    %1234 = vmatpush1.msra.mxu0 %v1179
    %1235 = vmatprep.subr.mxu0 %v1182
    %1236 = vmatpush1.msra.mxu0 %v1181
    %1237 = vmatprep.subr.mxu0 %v1184
    %1238 = vmatpush1.msra.mxu0 %v1183
    %1239 = vmatprep.subr.mxu0 %v1186
    %1240 = vmatpush1.msra.mxu0 %v1185
    %1241 = vmatprep.subr.mxu0 0.0
    %1242 = vmatpush1.msra.mxu0 0.0
    %1243 = vmatprep.subr.mxu0 0.0
    %1244 = vmatpush1.msra.mxu0 0.0
    %1245 = vmatprep.subr.mxu0 0.0
    %1246 = vmatpush1.msra.mxu0 0.0
    %1247 = vmatprep.subr.mxu0 0.0
    %1248 = vmatpush1.msra.mxu0 0.0
    %1249 = vmatprep.subr.mxu0 0.0
    %1250 = vmatpush1.msra.mxu0 0.0
    %1251 = vmatprep.subr.mxu0 0.0
    %1252 = vmatpush1.msra.mxu0 0.0
    %1253 = vmatprep.subr.mxu0 0.0
    %1254 = vmatpush1.msra.mxu0 0.0
    %1255 = vmatprep.mubr.f32.mxu0 %v1189
    %1256 = vmatmul.mubr.f32.gmra.mrb[0].mxu0 1.0
    %v1257 = vpop.f32.mrb[0].mxu0
    %v1258 = vadd.f32 0.0, %v1257
    %v1259 = vpop.f32.mrb[0].mxu0
    %v1260 = vadd.f32 0.0, %v1259
    %1261 = vdwg.mxu0
    %v1262 = vmul.f32 %v1137, %v1137
    %v1263 = vmul.f32 %v1138, %v1138
    %v1264 = vmul.f32 %v1139, %v1139
    %v1265 = vmul.f32 %v1140, %v1140
    %v1266 = vmul.f32 %v1141, %v1141
    %v1267 = vmul.f32 %v1142, %v1142
    %v1268 = vmul.f32 %v1143, %v1143
    %v1269 = vmul.f32 %v1144, %v1144
    %v1270 = vmul.f32 %v1145, %v1145
    %v1271 = vmul.f32 %v1146, %v1146
    %v1272 = vmul.f32 %v1147, %v1147
    %v1273 = vmul.f32 %v1148, %v1148
    %v1274 = vmul.f32 %v1149, %v1149
    %v1275 = vmul.f32 %v1150, %v1150
    %v1276 = vmul.f32 %v1151, %v1151
    %v1277 = vmul.f32 %v1152, %v1152
    %v1278 = vmul.f32 %v1153, %v1153
    %v1279 = vmul.f32 %v1154, %v1154
    %v1280 = vmul.f32 %v1155, %v1155
    %v1281 = vmul.f32 %v1156, %v1156
    %v1282 = vmul.f32 %v1157, %v1157
    %v1283 = vmul.f32 %v1158, %v1158
    %v1284 = vmul.f32 %v1159, %v1159
    %v1285 = vmul.f32 %v1160, %v1160
    %v1286 = vmul.f32 %v1161, %v1161
    %v1287 = vmul.f32 %v1162, %v1162
    %v1288 = vmul.f32 %v1163, %v1163
    %v1289 = vmul.f32 %v1164, %v1164
    %v1290 = vmul.f32 %v1165, %v1165
    %v1291 = vmul.f32 %v1166, %v1166
    %v1292 = vmul.f32 %v1167, %v1167
    %v1293 = vmul.f32 %v1168, %v1168
    %v1294 = vmul.f32 %v1169, %v1169
    %v1295 = vmul.f32 %v1170, %v1170
    %v1296 = vmul.f32 %v1171, %v1171
    %v1297 = vmul.f32 %v1172, %v1172
    %v1298 = vmul.f32 %v1173, %v1173
    %v1299 = vmul.f32 %v1174, %v1174
    %v1300 = vmul.f32 %v1175, %v1175
    %v1301 = vmul.f32 %v1176, %v1176
    %v1302 = vmul.f32 %v1177, %v1177
    %v1303 = vmul.f32 %v1178, %v1178
    %v1304 = vmul.f32 %v1179, %v1179
    %v1305 = vmul.f32 %v1180, %v1180
    %v1306 = vmul.f32 %v1181, %v1181
    %v1307 = vmul.f32 %v1182, %v1182
    %v1308 = vmul.f32 %v1183, %v1183
    %v1309 = vmul.f32 %v1184, %v1184
    %v1310 = vmul.f32 %v1185, %v1185
    %v1311 = vmul.f32 %v1186, %v1186
    %1312 = vmatprep.subr.mxu0 %v1263
    %1313 = vmatpush1.msra.mxu0 %v1262
    %1314 = vmatprep.subr.mxu0 %v1265
    %1315 = vmatpush1.msra.mxu0 %v1264
    %1316 = vmatprep.subr.mxu0 %v1267
    %1317 = vmatpush1.msra.mxu0 %v1266
    %1318 = vmatprep.subr.mxu0 %v1269
    %1319 = vmatpush1.msra.mxu0 %v1268
    %1320 = vmatprep.subr.mxu0 %v1271
    %1321 = vmatpush1.msra.mxu0 %v1270
    %1322 = vmatprep.subr.mxu0 %v1273
    %1323 = vmatpush1.msra.mxu0 %v1272
    %1324 = vmatprep.subr.mxu0 %v1275
    %1325 = vmatpush1.msra.mxu0 %v1274
    %1326 = vmatprep.subr.mxu0 %v1277
    %1327 = vmatpush1.msra.mxu0 %v1276
    %1328 = vmatprep.subr.mxu0 %v1279
    %1329 = vmatpush1.msra.mxu0 %v1278
    %1330 = vmatprep.subr.mxu0 %v1281
    %1331 = vmatpush1.msra.mxu0 %v1280
    %1332 = vmatprep.subr.mxu0 %v1283
    %1333 = vmatpush1.msra.mxu0 %v1282
    %1334 = vmatprep.subr.mxu0 %v1285
    %1335 = vmatpush1.msra.mxu0 %v1284
    %1336 = vmatprep.subr.mxu0 %v1287
    %1337 = vmatpush1.msra.mxu0 %v1286
    %1338 = vmatprep.subr.mxu0 %v1289
    %1339 = vmatpush1.msra.mxu0 %v1288
    %1340 = vmatprep.subr.mxu0 %v1291
    %1341 = vmatpush1.msra.mxu0 %v1290
    %1342 = vmatprep.subr.mxu0 %v1293
    %1343 = vmatpush1.msra.mxu0 %v1292
    %1344 = vmatprep.subr.mxu0 %v1295
    %1345 = vmatpush1.msra.mxu0 %v1294
    %1346 = vmatprep.subr.mxu0 %v1297
    %1347 = vmatpush1.msra.mxu0 %v1296
    %1348 = vmatprep.subr.mxu0 %v1299
    %1349 = vmatpush1.msra.mxu0 %v1298
    %1350 = vmatprep.subr.mxu0 %v1301
    %1351 = vmatpush1.msra.mxu0 %v1300
    %1352 = vmatprep.subr.mxu0 %v1303
    %1353 = vmatpush1.msra.mxu0 %v1302
    %1354 = vmatprep.subr.mxu0 %v1305
    %1355 = vmatpush1.msra.mxu0 %v1304
    %1356 = vmatprep.subr.mxu0 %v1307
    %1357 = vmatpush1.msra.mxu0 %v1306
    %1358 = vmatprep.subr.mxu0 %v1309
    %1359 = vmatpush1.msra.mxu0 %v1308
    %1360 = vmatprep.subr.mxu0 %v1311
    %1361 = vmatpush1.msra.mxu0 %v1310
    %1362 = vmatprep.subr.mxu0 0.0
    %1363 = vmatpush1.msra.mxu0 0.0
    %1364 = vmatprep.subr.mxu0 0.0
    %1365 = vmatpush1.msra.mxu0 0.0
    %1366 = vmatprep.subr.mxu0 0.0
    %1367 = vmatpush1.msra.mxu0 0.0
    %1368 = vmatprep.subr.mxu0 0.0
    %1369 = vmatpush1.msra.mxu0 0.0
    %1370 = vmatprep.subr.mxu0 0.0
    %1371 = vmatpush1.msra.mxu0 0.0
    %1372 = vmatprep.subr.mxu0 0.0
    %1373 = vmatpush1.msra.mxu0 0.0
    %1374 = vmatprep.subr.mxu0 0.0
    %1375 = vmatpush1.msra.mxu0 0.0
    %1376 = vmatprep.mubr.f32.mxu0 %v1189
    %1377 = vmatmul.mubr.f32.gmra.mrb[0].mxu0 1.0
    %v1378 = vpop.f32.mrb[0].mxu0
    %v1379 = vadd.f32 0.0, %v1378
    %v1380 = vpop.f32.mrb[0].mxu0
    %v1381 = vadd.f32 0.0, %v1380
    %1382 = vdwg.mxu0
    %v1383 = vld [vmem:[%s5] sm:$0xff]
    %v1384 = vld [vmem:[%s5 + $0x8] sm:$0xff]
    %v1385 = vld [vmem:[%s5 + $0x10] sm:$0xff]
    %v1386 = vld [vmem:[%s5 + $0x18] sm:$0xff]
    %v1387 = vld [vmem:[%s5 + $0x20] sm:$0xff]
    %v1388 = vld [vmem:[%s5 + $0x28] sm:$0xff]
    %v1389 = vld [vmem:[%s5 + $0x30] sm:$0xff]
    %v1390 = vld [vmem:[%s5 + $0x38] sm:$0xff]
    %v1391 = vld [vmem:[%s5 + $0x40] sm:$0xff]
    %v1392 = vld [vmem:[%s5 + $0x48] sm:$0xff]
    %v1393 = vld [vmem:[%s5 + $0x50] sm:$0xff]
    %v1394 = vld [vmem:[%s5 + $0x58] sm:$0xff]
    %v1395 = vld [vmem:[%s5 + $0x60] sm:$0xff]
    %v1396 = vld [vmem:[%s5 + $0x68] sm:$0xff]
    %v1397 = vld [vmem:[%s5 + $0x70] sm:$0xff]
    %v1398 = vld [vmem:[%s5 + $0x78] sm:$0xff]
    %v1399 = vld [vmem:[%s5 + $0x80] sm:$0xff]
    %v1400 = vld [vmem:[%s5 + $0x88] sm:$0xff]
    %v1401 = vld [vmem:[%s5 + $0x90] sm:$0xff]
    %v1402 = vld [vmem:[%s5 + $0x98] sm:$0xff]
    %v1403 = vld [vmem:[%s5 + $0xa0] sm:$0xff]
    %v1404 = vld [vmem:[%s5 + $0xa8] sm:$0xff]
    %v1405 = vld [vmem:[%s5 + $0xb0] sm:$0xff]
    %v1406 = vld [vmem:[%s5 + $0xb8] sm:$0xff]
    %v1407 = vld [vmem:[%s5 + $0xc0] sm:$0xff]
    %v1408 = vld [vmem:[%s5 + $0xc8] sm:$0xff]
    %v1409 = vld [vmem:[%s5 + $0xd0] sm:$0xff]
    %v1410 = vld [vmem:[%s5 + $0xd8] sm:$0xff]
    %v1411 = vld [vmem:[%s5 + $0xe0] sm:$0xff]
    %v1412 = vld [vmem:[%s5 + $0xe8] sm:$0xff]
    %v1413 = vld [vmem:[%s5 + $0xf0] sm:$0xff]
    %v1414 = vld [vmem:[%s5 + $0xf8] sm:$0xff]
    %v1415 = vld [vmem:[%s5 + $0x100] sm:$0xff]
    %v1416 = vld [vmem:[%s5 + $0x108] sm:$0xff]
    %v1417 = vld [vmem:[%s5 + $0x110] sm:$0xff]
    %v1418 = vld [vmem:[%s5 + $0x118] sm:$0xff]
    %v1419 = vld [vmem:[%s5 + $0x120] sm:$0xff]
    %v1420 = vld [vmem:[%s5 + $0x128] sm:$0xff]
    %v1421 = vld [vmem:[%s5 + $0x130] sm:$0xff]
    %v1422 = vld [vmem:[%s5 + $0x138] sm:$0xff]
    %v1424 = vsel %vm1022, %v1260, 0
    %1426 = vmatprep.subr.mxu0 %v1384
    %1427 = vmatpush1.msra.mxu0 %v1383
    %1428 = vmatprep.subr.mxu0 %v1386
    %1429 = vmatpush1.msra.mxu0 %v1385
    %1430 = vmatprep.subr.mxu0 %v1388
    %1431 = vmatpush1.msra.mxu0 %v1387
    %1432 = vmatprep.subr.mxu0 %v1390
    %1433 = vmatpush1.msra.mxu0 %v1389
    %1434 = vmatprep.subr.mxu0 %v1392
    %1435 = vmatpush1.msra.mxu0 %v1391
    %1436 = vmatprep.subr.mxu0 %v1394
    %1437 = vmatpush1.msra.mxu0 %v1393
    %1438 = vmatprep.subr.mxu0 %v1396
    %1439 = vmatpush1.msra.mxu0 %v1395
    %1440 = vmatprep.subr.mxu0 %v1398
    %1441 = vmatpush1.msra.mxu0 %v1397
    %1442 = vmatprep.subr.mxu0 %v1400
    %1443 = vmatpush1.msra.mxu0 %v1399
    %1444 = vmatprep.subr.mxu0 %v1402
    %1445 = vmatpush1.msra.mxu0 %v1401
    %1446 = vmatprep.subr.mxu0 %v1404
    %1447 = vmatpush1.msra.mxu0 %v1403
    %1448 = vmatprep.subr.mxu0 %v1406
    %1449 = vmatpush1.msra.mxu0 %v1405
    %1450 = vmatprep.subr.mxu0 %v1408
    %1451 = vmatpush1.msra.mxu0 %v1407
    %1452 = vmatprep.subr.mxu0 %v1410
    %1453 = vmatpush1.msra.mxu0 %v1409
    %1454 = vmatprep.subr.mxu0 %v1412
    %1455 = vmatpush1.msra.mxu0 %v1411
    %1456 = vmatprep.subr.mxu0 %v1414
    %1457 = vmatpush1.msra.mxu0 %v1413
    %1458 = vmatprep.subr.mxu0 %v1416
    %1459 = vmatpush1.msra.mxu0 %v1415
    %1460 = vmatprep.subr.mxu0 %v1418
    %1461 = vmatpush1.msra.mxu0 %v1417
    %1462 = vmatprep.subr.mxu0 %v1420
    %1463 = vmatpush1.msra.mxu0 %v1419
    %1464 = vmatprep.subr.mxu0 %v1422
    %1465 = vmatpush1.msra.mxu0 %v1421
    %1466 = vmatprep.subr.mxu0 0.0
    %1467 = vmatpush1.msra.mxu0 0.0
    %1468 = vmatprep.subr.mxu0 0.0
    %1469 = vmatpush1.msra.mxu0 0.0
    %1470 = vmatprep.subr.mxu0 0.0
    %1471 = vmatpush1.msra.mxu0 0.0
    %1472 = vmatprep.subr.mxu0 0.0
    %1473 = vmatpush1.msra.mxu0 0.0
    %1474 = vmatprep.subr.mxu0 0.0
    %1475 = vmatpush1.msra.mxu0 0.0
    %1476 = vmatprep.subr.mxu0 0.0
    %1477 = vmatpush1.msra.mxu0 0.0
    %1478 = vmatprep.subr.mxu0 0.0
    %1479 = vmatpush1.msra.mxu0 0.0
    %1480 = vmatprep.subr.mxu0 0.0
    %1481 = vmatpush1.msra.mxu0 0.0
    %1482 = vmatprep.subr.mxu0 0.0
    %1483 = vmatpush1.msra.mxu0 0.0
    %1484 = vmatprep.subr.mxu0 0.0
    %1485 = vmatpush1.msra.mxu0 0.0
    %1486 = vmatprep.subr.mxu0 0.0
    %1487 = vmatpush1.msra.mxu0 0.0
    %1488 = vmatprep.subr.mxu0 0.0
    %1489 = vmatpush1.msra.mxu0 0.0
    %1490 = vmatprep.mubr.f32.mxu0 %v1424
    %1491 = vmatmul.mubr.f32.gmra.mrb[0].mxu0 %v1258
    %v1492 = vpop.f32.mrb[0].mxu0
    %v1493 = vadd.f32 0.0, %v1492
    %v1494 = vpop.f32.mrb[0].mxu0
    %v1495 = vadd.f32 0.0, %v1494
    %1496 = vdwg.mxu0
    %v1497 = vmul.f32 %v1493, 0.0005
    %v1498 = vmul.f32 %v1495, 0.0005
    %v1500 = vsel %vm1022, %v1381, 0
    %1502 = vmatprep.subr.mxu0 %v1384
    %1503 = vmatpush1.msra.mxu0 %v1383
    %1504 = vmatprep.subr.mxu0 %v1386
    %1505 = vmatpush1.msra.mxu0 %v1385
    %1506 = vmatprep.subr.mxu0 %v1388
    %1507 = vmatpush1.msra.mxu0 %v1387
    %1508 = vmatprep.subr.mxu0 %v1390
    %1509 = vmatpush1.msra.mxu0 %v1389
    %1510 = vmatprep.subr.mxu0 %v1392
    %1511 = vmatpush1.msra.mxu0 %v1391
    %1512 = vmatprep.subr.mxu0 %v1394
    %1513 = vmatpush1.msra.mxu0 %v1393
    %1514 = vmatprep.subr.mxu0 %v1396
    %1515 = vmatpush1.msra.mxu0 %v1395
    %1516 = vmatprep.subr.mxu0 %v1398
    %1517 = vmatpush1.msra.mxu0 %v1397
    %1518 = vmatprep.subr.mxu0 %v1400
    %1519 = vmatpush1.msra.mxu0 %v1399
    %1520 = vmatprep.subr.mxu0 %v1402
    %1521 = vmatpush1.msra.mxu0 %v1401
    %1522 = vmatprep.subr.mxu0 %v1404
    %1523 = vmatpush1.msra.mxu0 %v1403
    %1524 = vmatprep.subr.mxu0 %v1406
    %1525 = vmatpush1.msra.mxu0 %v1405
    %1526 = vmatprep.subr.mxu0 %v1408
    %1527 = vmatpush1.msra.mxu0 %v1407
    %1528 = vmatprep.subr.mxu0 %v1410
    %1529 = vmatpush1.msra.mxu0 %v1409
    %1530 = vmatprep.subr.mxu0 %v1412
    %1531 = vmatpush1.msra.mxu0 %v1411
    %1532 = vmatprep.subr.mxu0 %v1414
    %1533 = vmatpush1.msra.mxu0 %v1413
    %1534 = vmatprep.subr.mxu0 %v1416
    %1535 = vmatpush1.msra.mxu0 %v1415
    %1536 = vmatprep.subr.mxu0 %v1418
    %1537 = vmatpush1.msra.mxu0 %v1417
    %1538 = vmatprep.subr.mxu0 %v1420
    %1539 = vmatpush1.msra.mxu0 %v1419
    %1540 = vmatprep.subr.mxu0 %v1422
    %1541 = vmatpush1.msra.mxu0 %v1421
    %1542 = vmatprep.subr.mxu0 0.0
    %1543 = vmatpush1.msra.mxu0 0.0
    %1544 = vmatprep.subr.mxu0 0.0
    %1545 = vmatpush1.msra.mxu0 0.0
    %1546 = vmatprep.subr.mxu0 0.0
    %1547 = vmatpush1.msra.mxu0 0.0
    %1548 = vmatprep.subr.mxu0 0.0
    %1549 = vmatpush1.msra.mxu0 0.0
    %1550 = vmatprep.subr.mxu0 0.0
    %1551 = vmatpush1.msra.mxu0 0.0
    %1552 = vmatprep.subr.mxu0 0.0
    %1553 = vmatpush1.msra.mxu0 0.0
    %1554 = vmatprep.subr.mxu0 0.0
    %1555 = vmatpush1.msra.mxu0 0.0
    %1556 = vmatprep.subr.mxu0 0.0
    %1557 = vmatpush1.msra.mxu0 0.0
    %1558 = vmatprep.subr.mxu0 0.0
    %1559 = vmatpush1.msra.mxu0 0.0
    %1560 = vmatprep.subr.mxu0 0.0
    %1561 = vmatpush1.msra.mxu0 0.0
    %1562 = vmatprep.subr.mxu0 0.0
    %1563 = vmatpush1.msra.mxu0 0.0
    %1564 = vmatprep.subr.mxu0 0.0
    %1565 = vmatpush1.msra.mxu0 0.0
    %1566 = vmatprep.mubr.f32.mxu0 %v1500
    %1567 = vmatmul.mubr.f32.gmra.mrb[0].mxu0 %v1379
    %v1568 = vpop.f32.mrb[0].mxu0
    %v1569 = vadd.f32 0.0, %v1568
    %v1570 = vpop.f32.mrb[0].mxu0
    %v1571 = vadd.f32 0.0, %v1570
    %1572 = vdwg.mxu0
    %v1573 = vmul.f32 %v1569, 0.0005
    %v1574 = vmul.f32 %v1571, 0.0005
    %v1575 = vmul.f32 %v1497, %v1497
    %v1576 = vmul.f32 %v1498, %v1498
    %v1577 = vsub.f32 %v1573, %v1575
    %v1578 = vsub.f32 %v1574, %v1576
    %v1579 = vlaneseq
    %v1580 = vshrl.u32 %v1579, 7
    %v1581 = vsub.s32 0, %v1580
    %v1582 = vrot.slane %v1497, %v1581
    %v1583 = vlaneseq
    %v1584 = vshrl.u32 %v1583, 7
    %v1585 = vsub.s32 0, %v1584
    %v1586 = vrot.slane %v1498, %v1585
    %v1587 = vsub.f32 %v1137, %v1582
    %v1588 = vsub.f32 %v1138, %v1586
    %v1589 = vsub.f32 %v1139, %v1582
    %v1590 = vsub.f32 %v1140, %v1586
    %v1591 = vsub.f32 %v1141, %v1582
    %v1592 = vsub.f32 %v1142, %v1586
    %v1593 = vsub.f32 %v1143, %v1582
    %v1594 = vsub.f32 %v1144, %v1586
    %v1595 = vsub.f32 %v1145, %v1582
    %v1596 = vsub.f32 %v1146, %v1586
    %v1597 = vsub.f32 %v1147, %v1582
    %v1598 = vsub.f32 %v1148, %v1586
    %v1599 = vsub.f32 %v1149, %v1582
    %v1600 = vsub.f32 %v1150, %v1586
    %v1601 = vsub.f32 %v1151, %v1582
    %v1602 = vsub.f32 %v1152, %v1586
    %v1603 = vsub.f32 %v1153, %v1582
    %v1604 = vsub.f32 %v1154, %v1586
    %v1605 = vsub.f32 %v1155, %v1582
    %v1606 = vsub.f32 %v1156, %v1586
    %v1607 = vsub.f32 %v1157, %v1582
    %v1608 = vsub.f32 %v1158, %v1586
    %v1609 = vsub.f32 %v1159, %v1582
    %v1610 = vsub.f32 %v1160, %v1586
    %v1611 = vsub.f32 %v1161, %v1582
    %v1612 = vsub.f32 %v1162, %v1586
    %v1613 = vsub.f32 %v1163, %v1582
    %v1614 = vsub.f32 %v1164, %v1586
    %v1615 = vsub.f32 %v1165, %v1582
    %v1616 = vsub.f32 %v1166, %v1586
    %v1617 = vsub.f32 %v1167, %v1582
    %v1618 = vsub.f32 %v1168, %v1586
    %v1619 = vsub.f32 %v1169, %v1582
    %v1620 = vsub.f32 %v1170, %v1586
    %v1621 = vsub.f32 %v1171, %v1582
    %v1622 = vsub.f32 %v1172, %v1586
    %v1623 = vsub.f32 %v1173, %v1582
    %v1624 = vsub.f32 %v1174, %v1586
    %v1625 = vsub.f32 %v1175, %v1582
    %v1626 = vsub.f32 %v1176, %v1586
    %v1627 = vsub.f32 %v1177, %v1582
    %v1628 = vsub.f32 %v1178, %v1586
    %v1629 = vsub.f32 %v1179, %v1582
    %v1630 = vsub.f32 %v1180, %v1586
    %v1631 = vsub.f32 %v1181, %v1582
    %v1632 = vsub.f32 %v1182, %v1586
    %v1633 = vsub.f32 %v1183, %v1582
    %v1634 = vsub.f32 %v1184, %v1586
    %v1635 = vsub.f32 %v1185, %v1582
    %v1636 = vsub.f32 %v1186, %v1586
    %v1637 = vadd.f32 %v1577, 1e-05
    %v1638 = vadd.f32 %v1578, 1e-05
    %v1639 = vrsqrt.pop %v1637
    %v1640 = vrsqrt.pop %v1638
    %v1641 = vlaneseq
    %v1642 = vshrl.u32 %v1641, 7
    %v1643 = vsub.s32 0, %v1642
    %v1644 = vrot.slane %v1639, %v1643
    %v1645 = vlaneseq
    %v1646 = vshrl.u32 %v1645, 7
    %v1647 = vsub.s32 0, %v1646
    %v1648 = vrot.slane %v1640, %v1647
    %v1649 = vmul.f32 %v1587, %v1644
    %v1650 = vmul.f32 %v1588, %v1648
    %v1651 = vmul.f32 %v1589, %v1644
    %v1652 = vmul.f32 %v1590, %v1648
    %v1653 = vmul.f32 %v1591, %v1644
    %v1654 = vmul.f32 %v1592, %v1648
    %v1655 = vmul.f32 %v1593, %v1644
    %v1656 = vmul.f32 %v1594, %v1648
    %v1657 = vmul.f32 %v1595, %v1644
    %v1658 = vmul.f32 %v1596, %v1648
    %v1659 = vmul.f32 %v1597, %v1644
    %v1660 = vmul.f32 %v1598, %v1648
    %v1661 = vmul.f32 %v1599, %v1644
    %v1662 = vmul.f32 %v1600, %v1648
    %v1663 = vmul.f32 %v1601, %v1644
    %v1664 = vmul.f32 %v1602, %v1648
    %v1665 = vmul.f32 %v1603, %v1644
    %v1666 = vmul.f32 %v1604, %v1648
    %v1667 = vmul.f32 %v1605, %v1644
    %v1668 = vmul.f32 %v1606, %v1648
    %v1669 = vmul.f32 %v1607, %v1644
    %v1670 = vmul.f32 %v1608, %v1648
    %v1671 = vmul.f32 %v1609, %v1644
    %v1672 = vmul.f32 %v1610, %v1648
    %v1673 = vmul.f32 %v1611, %v1644
    %v1674 = vmul.f32 %v1612, %v1648
    %v1675 = vmul.f32 %v1613, %v1644
    %v1676 = vmul.f32 %v1614, %v1648
    %v1677 = vmul.f32 %v1615, %v1644
    %v1678 = vmul.f32 %v1616, %v1648
    %v1679 = vmul.f32 %v1617, %v1644
    %v1680 = vmul.f32 %v1618, %v1648
    %v1681 = vmul.f32 %v1619, %v1644
    %v1682 = vmul.f32 %v1620, %v1648
    %v1683 = vmul.f32 %v1621, %v1644
    %v1684 = vmul.f32 %v1622, %v1648
    %v1685 = vmul.f32 %v1623, %v1644
    %v1686 = vmul.f32 %v1624, %v1648
    %v1687 = vmul.f32 %v1625, %v1644
    %v1688 = vmul.f32 %v1626, %v1648
    %v1689 = vmul.f32 %v1627, %v1644
    %v1690 = vmul.f32 %v1628, %v1648
    %v1691 = vmul.f32 %v1629, %v1644
    %v1692 = vmul.f32 %v1630, %v1648
    %v1693 = vmul.f32 %v1631, %v1644
    %v1694 = vmul.f32 %v1632, %v1648
    %v1695 = vmul.f32 %v1633, %v1644
    %v1696 = vmul.f32 %v1634, %v1648
    %v1697 = vmul.f32 %v1635, %v1644
    %v1698 = vmul.f32 %v1636, %v1648
    %v1699 = vld [vmem:[%s3] sm:$0x3]
    %v1701 = vlaneseq
    %v1702 = vshrl.u32 %v1701, 7
    %v1703 = vsub.s32 0, %v1702
    %v1704 = vrot.slane %v1699, %v1703
    %v1705 = vlaneseq
    %v1706 = vshrl.u32 %v1705, 7
    %v1707 = vsub.s32 1, %v1706
    %v1708 = vrot.slane %v1699, %v1707
    %v1711 = vmul.f32 %v1649, %v1704
    %v1712 = vmul.f32 %v1650, %v1708
    %v1713 = vmul.f32 %v1651, %v1704
    %v1714 = vmul.f32 %v1652, %v1708
    %v1715 = vmul.f32 %v1653, %v1704
    %v1716 = vmul.f32 %v1654, %v1708
    %v1717 = vmul.f32 %v1655, %v1704
    %v1718 = vmul.f32 %v1656, %v1708
    %v1719 = vmul.f32 %v1657, %v1704
    %v1720 = vmul.f32 %v1658, %v1708
    %v1721 = vmul.f32 %v1659, %v1704
    %v1722 = vmul.f32 %v1660, %v1708
    %v1723 = vmul.f32 %v1661, %v1704
    %v1724 = vmul.f32 %v1662, %v1708
    %v1725 = vmul.f32 %v1663, %v1704
    %v1726 = vmul.f32 %v1664, %v1708
    %v1727 = vmul.f32 %v1665, %v1704
    %v1728 = vmul.f32 %v1666, %v1708
    %v1729 = vmul.f32 %v1667, %v1704
    %v1730 = vmul.f32 %v1668, %v1708
    %v1731 = vmul.f32 %v1669, %v1704
    %v1732 = vmul.f32 %v1670, %v1708
    %v1733 = vmul.f32 %v1671, %v1704
    %v1734 = vmul.f32 %v1672, %v1708
    %v1735 = vmul.f32 %v1673, %v1704
    %v1736 = vmul.f32 %v1674, %v1708
    %v1737 = vmul.f32 %v1675, %v1704
    %v1738 = vmul.f32 %v1676, %v1708
    %v1739 = vmul.f32 %v1677, %v1704
    %v1740 = vmul.f32 %v1678, %v1708
    %v1741 = vmul.f32 %v1679, %v1704
    %v1742 = vmul.f32 %v1680, %v1708
    %v1743 = vmul.f32 %v1681, %v1704
    %v1744 = vmul.f32 %v1682, %v1708
    %v1745 = vmul.f32 %v1683, %v1704
    %v1746 = vmul.f32 %v1684, %v1708
    %v1747 = vmul.f32 %v1685, %v1704
    %v1748 = vmul.f32 %v1686, %v1708
    %v1749 = vmul.f32 %v1687, %v1704
    %v1750 = vmul.f32 %v1688, %v1708
    %v1751 = vmul.f32 %v1689, %v1704
    %v1752 = vmul.f32 %v1690, %v1708
    %v1753 = vmul.f32 %v1691, %v1704
    %v1754 = vmul.f32 %v1692, %v1708
    %v1755 = vmul.f32 %v1693, %v1704
    %v1756 = vmul.f32 %v1694, %v1708
    %v1757 = vmul.f32 %v1695, %v1704
    %v1758 = vmul.f32 %v1696, %v1708
    %v1759 = vmul.f32 %v1697, %v1704
    %v1760 = vmul.f32 %v1698, %v1708
    %v1761 = vld [vmem:[%s4] sm:$0x3]
    %v1763 = vlaneseq
    %v1764 = vshrl.u32 %v1763, 7
    %v1765 = vsub.s32 0, %v1764
    %v1766 = vrot.slane %v1761, %v1765
    %v1767 = vlaneseq
    %v1768 = vshrl.u32 %v1767, 7
    %v1769 = vsub.s32 1, %v1768
    %v1770 = vrot.slane %v1761, %v1769
    %v1773 = vadd.f32 %v1711, %v1766
    %v1774 = vadd.f32 %v1712, %v1770
    %v1775 = vadd.f32 %v1713, %v1766
    %v1776 = vadd.f32 %v1714, %v1770
    %v1777 = vadd.f32 %v1715, %v1766
    %v1778 = vadd.f32 %v1716, %v1770
    %v1779 = vadd.f32 %v1717, %v1766
    %v1780 = vadd.f32 %v1718, %v1770
    %v1781 = vadd.f32 %v1719, %v1766
    %v1782 = vadd.f32 %v1720, %v1770
    %v1783 = vadd.f32 %v1721, %v1766
    %v1784 = vadd.f32 %v1722, %v1770
    %v1785 = vadd.f32 %v1723, %v1766
    %v1786 = vadd.f32 %v1724, %v1770
    %v1787 = vadd.f32 %v1725, %v1766
    %v1788 = vadd.f32 %v1726, %v1770
    %v1789 = vadd.f32 %v1727, %v1766
    %v1790 = vadd.f32 %v1728, %v1770
    %v1791 = vadd.f32 %v1729, %v1766
    %v1792 = vadd.f32 %v1730, %v1770
    %v1793 = vadd.f32 %v1731, %v1766
    %v1794 = vadd.f32 %v1732, %v1770
    %v1795 = vadd.f32 %v1733, %v1766
    %v1796 = vadd.f32 %v1734, %v1770
    %v1797 = vadd.f32 %v1735, %v1766
    %v1798 = vadd.f32 %v1736, %v1770
    %v1799 = vadd.f32 %v1737, %v1766
    %v1800 = vadd.f32 %v1738, %v1770
    %v1801 = vadd.f32 %v1739, %v1766
    %v1802 = vadd.f32 %v1740, %v1770
    %v1803 = vadd.f32 %v1741, %v1766
    %v1804 = vadd.f32 %v1742, %v1770
    %v1805 = vadd.f32 %v1743, %v1766
    %v1806 = vadd.f32 %v1744, %v1770
    %v1807 = vadd.f32 %v1745, %v1766
    %v1808 = vadd.f32 %v1746, %v1770
    %v1809 = vadd.f32 %v1747, %v1766
    %v1810 = vadd.f32 %v1748, %v1770
    %v1811 = vadd.f32 %v1749, %v1766
    %v1812 = vadd.f32 %v1750, %v1770
    %v1813 = vadd.f32 %v1751, %v1766
    %v1814 = vadd.f32 %v1752, %v1770
    %v1815 = vadd.f32 %v1753, %v1766
    %v1816 = vadd.f32 %v1754, %v1770
    %v1817 = vadd.f32 %v1755, %v1766
    %v1818 = vadd.f32 %v1756, %v1770
    %v1819 = vadd.f32 %v1757, %v1766
    %v1820 = vadd.f32 %v1758, %v1770
    %v1821 = vadd.f32 %v1759, %v1766
    %v1822 = vadd.f32 %v1760, %v1770
    %v1823 = vmax.f32 %v1773, 0.0
    %v1824 = vmax.f32 %v1774, 0.0
    %v1825 = vmax.f32 %v1775, 0.0
    %v1826 = vmax.f32 %v1776, 0.0
    %v1827 = vmax.f32 %v1777, 0.0
    %v1828 = vmax.f32 %v1778, 0.0
    %v1829 = vmax.f32 %v1779, 0.0
    %v1830 = vmax.f32 %v1780, 0.0
    %v1831 = vmax.f32 %v1781, 0.0
    %v1832 = vmax.f32 %v1782, 0.0
    %v1833 = vmax.f32 %v1783, 0.0
    %v1834 = vmax.f32 %v1784, 0.0
    %v1835 = vmax.f32 %v1785, 0.0
    %v1836 = vmax.f32 %v1786, 0.0
    %v1837 = vmax.f32 %v1787, 0.0
    %v1838 = vmax.f32 %v1788, 0.0
    %v1839 = vmax.f32 %v1789, 0.0
    %v1840 = vmax.f32 %v1790, 0.0
    %v1841 = vmax.f32 %v1791, 0.0
    %v1842 = vmax.f32 %v1792, 0.0
    %v1843 = vmax.f32 %v1793, 0.0
    %v1844 = vmax.f32 %v1794, 0.0
    %v1845 = vmax.f32 %v1795, 0.0
    %v1846 = vmax.f32 %v1796, 0.0
    %v1847 = vmax.f32 %v1797, 0.0
    %v1848 = vmax.f32 %v1798, 0.0
    %v1849 = vmax.f32 %v1799, 0.0
    %v1850 = vmax.f32 %v1800, 0.0
    %v1851 = vmax.f32 %v1801, 0.0
    %v1852 = vmax.f32 %v1802, 0.0
    %v1853 = vmax.f32 %v1803, 0.0
    %v1854 = vmax.f32 %v1804, 0.0
    %v1855 = vmax.f32 %v1805, 0.0
    %v1856 = vmax.f32 %v1806, 0.0
    %v1857 = vmax.f32 %v1807, 0.0
    %v1858 = vmax.f32 %v1808, 0.0
    %v1859 = vmax.f32 %v1809, 0.0
    %v1860 = vmax.f32 %v1810, 0.0
    %v1861 = vmax.f32 %v1811, 0.0
    %v1862 = vmax.f32 %v1812, 0.0
    %v1863 = vmax.f32 %v1813, 0.0
    %v1864 = vmax.f32 %v1814, 0.0
    %v1865 = vmax.f32 %v1815, 0.0
    %v1866 = vmax.f32 %v1816, 0.0
    %v1867 = vmax.f32 %v1817, 0.0
    %v1868 = vmax.f32 %v1818, 0.0
    %v1869 = vmax.f32 %v1819, 0.0
    %v1870 = vmax.f32 %v1820, 0.0
    %v1871 = vmax.f32 %v1821, 0.0
    %v1872 = vmax.f32 %v1822, 0.0
    %1873 = vst [vmem:[%s6] sm:$0xff] %v1823
    %1874 = vst.msk [vmem:[%s6 + $0x8] sm:$0xff] %vm1022, %v1824
    %1875 = vst [vmem:[%s6 + $0x10] sm:$0xff] %v1825
    %1876 = vst.msk [vmem:[%s6 + $0x18] sm:$0xff] %vm1022, %v1826
    %1877 = vst [vmem:[%s6 + $0x20] sm:$0xff] %v1827
    %1878 = vst.msk [vmem:[%s6 + $0x28] sm:$0xff] %vm1022, %v1828
    %1879 = vst [vmem:[%s6 + $0x30] sm:$0xff] %v1829
    %1880 = vst.msk [vmem:[%s6 + $0x38] sm:$0xff] %vm1022, %v1830
    %1881 = vst [vmem:[%s6 + $0x40] sm:$0xff] %v1831
    %1882 = vst.msk [vmem:[%s6 + $0x48] sm:$0xff] %vm1022, %v1832
    %1883 = vst [vmem:[%s6 + $0x50] sm:$0xff] %v1833
    %1884 = vst.msk [vmem:[%s6 + $0x58] sm:$0xff] %vm1022, %v1834
    %1885 = vst [vmem:[%s6 + $0x60] sm:$0xff] %v1835
    %1886 = vst.msk [vmem:[%s6 + $0x68] sm:$0xff] %vm1022, %v1836
    %1887 = vst [vmem:[%s6 + $0x70] sm:$0xff] %v1837
    %1888 = vst.msk [vmem:[%s6 + $0x78] sm:$0xff] %vm1022, %v1838
    %1889 = vst [vmem:[%s6 + $0x80] sm:$0xff] %v1839
    %1890 = vst.msk [vmem:[%s6 + $0x88] sm:$0xff] %vm1022, %v1840
    %1891 = vst [vmem:[%s6 + $0x90] sm:$0xff] %v1841
    %1892 = vst.msk [vmem:[%s6 + $0x98] sm:$0xff] %vm1022, %v1842
    %1893 = vst [vmem:[%s6 + $0xa0] sm:$0xff] %v1843
    %1894 = vst.msk [vmem:[%s6 + $0xa8] sm:$0xff] %vm1022, %v1844
    %1895 = vst [vmem:[%s6 + $0xb0] sm:$0xff] %v1845
    %1896 = vst.msk [vmem:[%s6 + $0xb8] sm:$0xff] %vm1022, %v1846
    %1897 = vst [vmem:[%s6 + $0xc0] sm:$0xff] %v1847
    %1898 = vst.msk [vmem:[%s6 + $0xc8] sm:$0xff] %vm1022, %v1848
    %1899 = vst [vmem:[%s6 + $0xd0] sm:$0xff] %v1849
    %1900 = vst.msk [vmem:[%s6 + $0xd8] sm:$0xff] %vm1022, %v1850
    %1901 = vst [vmem:[%s6 + $0xe0] sm:$0xff] %v1851
    %1902 = vst.msk [vmem:[%s6 + $0xe8] sm:$0xff] %vm1022, %v1852
    %1903 = vst [vmem:[%s6 + $0xf0] sm:$0xff] %v1853
    %1904 = vst.msk [vmem:[%s6 + $0xf8] sm:$0xff] %vm1022, %v1854
    %1905 = vst [vmem:[%s6 + $0x100] sm:$0xff] %v1855
    %1906 = vst.msk [vmem:[%s6 + $0x108] sm:$0xff] %vm1022, %v1856
    %1907 = vst [vmem:[%s6 + $0x110] sm:$0xff] %v1857
    %1908 = vst.msk [vmem:[%s6 + $0x118] sm:$0xff] %vm1022, %v1858
    %1909 = vst [vmem:[%s6 + $0x120] sm:$0xff] %v1859
    %1910 = vst.msk [vmem:[%s6 + $0x128] sm:$0xff] %vm1022, %v1860
    %1911 = vst [vmem:[%s6 + $0x130] sm:$0xff] %v1861
    %1912 = vst.msk [vmem:[%s6 + $0x138] sm:$0xff] %vm1022, %v1862
    %1913 = vst [vmem:[%s6 + $0x140] sm:$0xff] %v1863
    %1914 = vst.msk [vmem:[%s6 + $0x148] sm:$0xff] %vm1022, %v1864
    %1915 = vst [vmem:[%s6 + $0x150] sm:$0xff] %v1865
    %1916 = vst.msk [vmem:[%s6 + $0x158] sm:$0xff] %vm1022, %v1866
    %1917 = vst [vmem:[%s6 + $0x160] sm:$0xff] %v1867
    %1918 = vst.msk [vmem:[%s6 + $0x168] sm:$0xff] %vm1022, %v1868
    %1919 = vst [vmem:[%s6 + $0x170] sm:$0xff] %v1869
    %1920 = vst.msk [vmem:[%s6 + $0x178] sm:$0xff] %vm1022, %v1870
    %1921 = vst [vmem:[%s6 + $0x180] sm:$0xff] %v1871
    %1922 = vst.msk [vmem:[%s6 + $0x188] sm:$0xff] %vm1022, %v1872
  $region33: #{inres_forward.4} parent=0 // pred_fallthru
    _
  // Predicated region
  $region34: #{inres_forward.4} parent=0 // pred_check
    _
  $region35: #{inres_forward.4} parent=0 // pred_check_branch
    %1924 = sbr.rel (0) target = $region37
  $region36: #{inres_forward.4} parent=0 // pred_region
    _
  $region37: #{inres_forward.4} parent=0 // pred_fallthru
    _
  // Predicated region
  $region38: #{inres_forward.4} parent=0 // pred_check
    _
  $region39: #{inres_forward.4} parent=0 // pred_check_branch
    %1926 = sbr.rel (0) target = $region41
  $region40: #{inres_forward.4} parent=0 // pred_region
    _
  $region41: #{inres_forward.4} parent=0 // pred_fallthru
    _

// kernel: tile.78
$region0: #{tile.78}
  #allocation0 [shape = 's32[1]{0}', space=sflag, size = 0x4, scoped, tag = 'scoped memory for tile.78']
  %s0 = inlined_call_operand.vmem [shape: f32[16], index: 0, kind: input, shape index: {}]
  %s1 = inlined_call_operand.vmem [shape: f32[8,16], index: 1, kind: output, shape index: {}]
  // Predicated region
  $region2: #{tile.78} parent=0 // pred_check
    _
  $region3: #{tile.78} parent=0 // pred_check_branch
    %3 = sbr.rel (0) target = $region5
  $region4: #{tile.78} parent=0 // pred_region
    _
  $region5: #{tile.78} parent=0 // pred_fallthru
    _
  %v4 = vld [vmem:[%s0] ss:$0 sm:$0xff]
  %5 = vst [vmem:[%s1] sm:$0xff] %v4

// kernel: tile.79
$region0: #{tile.79}
  %s0 = inlined_call_operand.vmem [shape: f32[8,16], index: 0, kind: input, shape index: {}]
  %s1 = inlined_call_operand.vmem [shape: f32[1,128], index: 1, kind: output, shape index: {}]
  $region1: #{tile.79} parent=0
    #allocation0 [shape = 'u8[4096]{0}', space=vmem, size = 0x1000, scoped, tag = 'scoped mem for output reshape']
    %v2 = vld [vmem:[%s0] sm:$0x1]
    %vm3 = vcmask 130048
    %4 = vst.msk [vmem:[#allocation0] sm:$0x1] %vm3, %v2
    %s5 = scalar_lea.vmem %s0, 7
    %v6 = vld [vmem:[%s5] sm:$0x1]
    %7 = vrot.lane.b32.xlu0 %v6, 112
    %v8 = vpop.permute.xlu0 %7
    %vm9 = vcmask 1048448
    %10 = vst.msk [vmem:[#allocation0] sm:$0x1] %vm9, %v8
    %s11 = scalar_lea.vmem %s0, 6
    %v12 = vld [vmem:[%s11] sm:$0x1]
    %13 = vrot.lane.b32.xlu0 %v12, 96
    %v14 = vpop.permute.xlu0 %13
    %vm15 = vcmask 917248
    %16 = vst.msk [vmem:[#allocation0] sm:$0x1] %vm15, %v14
    %s17 = scalar_lea.vmem %s0, 5
    %v18 = vld [vmem:[%s17] sm:$0x1]
    %19 = vrot.lane.b32.xlu0 %v18, 80
    %v20 = vpop.permute.xlu0 %19
    %vm21 = vcmask 786048
    %22 = vst.msk [vmem:[#allocation0] sm:$0x1] %vm21, %v20
    %s23 = scalar_lea.vmem %s0, 4
    %v24 = vld [vmem:[%s23] sm:$0x1]
    %25 = vrot.lane.b32.xlu0 %v24, 64
    %v26 = vpop.permute.xlu0 %25
    %vm27 = vcmask 654848
    %28 = vst.msk [vmem:[#allocation0] sm:$0x1] %vm27, %v26
    %s29 = scalar_lea.vmem %s0, 3
    %v30 = vld [vmem:[%s29] sm:$0x1]
    %31 = vrot.lane.b32.xlu0 %v30, 48
    %v32 = vpop.permute.xlu0 %31
    %vm33 = vcmask 523648
    %34 = vst.msk [vmem:[#allocation0] sm:$0x1] %vm33, %v32
    %s35 = scalar_lea.vmem %s0, 2
    %v36 = vld [vmem:[%s35] sm:$0x1]
    %37 = vrot.lane.b32.xlu0 %v36, 32
    %v38 = vpop.permute.xlu0 %37
    %vm39 = vcmask 392448
    %40 = vst.msk [vmem:[#allocation0] sm:$0x1] %vm39, %v38
    %s41 = scalar_lea.vmem %s0, 1
    %v42 = vld [vmem:[%s41] sm:$0x1]
    %43 = vrot.lane.b32.xlu0 %v42, 16
    %v44 = vpop.permute.xlu0 %43
    %vm45 = vcmask 261248
    %46 = vst.msk [vmem:[#allocation0] sm:$0x1] %vm45, %v44
    %s48 = sshllo.u32 0, 1
    %v50 = vld [vmem:[#allocation0] sm:%s48]
    %s51 = sshllo.u32 0, 1
    %52 = vst [vmem:[%s1] sm:%s51] %v50

// kernel: inres_forward.5
$region0: #{inres_forward.5}
  #allocation0 [shape = 'u32[]', space=smem, size = 0x4, offset = 0x4, fixed_abs, tag = 'smem constant byte address 0x4 - core index']
  #allocation1 [shape = 'u32[144,128]{1,0:T(1,128)}', space=vmem, size = 0x12000, scoped, tag = 'internal scratch']
  #allocation2 [shape = 'f32[128,128]{1,0:T(8,128)}', space=vmem, size = 0x10000, scoped, tag = 'scratch operand']
  #allocation3 [shape = 'f32[1,1]{1,0:T(1,128)S(1)}', space=vmem, size = 0x200, scoped, tag = 'scoped memory for inres_forward.5']
  %s0 = inlined_call_operand.vmem [shape: bf16[25,128,192], index: 0, kind: input, shape index: {}]
  %s1 = inlined_call_operand.vmem [shape: bf16[25,192,128], index: 1, kind: input, shape index: {}]
  %s2 = inlined_call_operand.vmem [shape: f32[1,128], index: 2, kind: input, shape index: {}]
  %s3 = inlined_call_operand.vmem [shape: f32[1,128], index: 3, kind: input, shape index: {}]
  %s4 = inlined_call_operand.vmem [shape: f32[1,128], index: 4, kind: input, shape index: {}]
  %s5 = inlined_call_operand.vmem [shape: f32[128,128], index: 5, kind: input, shape index: {}]
  %s6 = inlined_call_operand.vmem [shape: f32[2,128], index: 6, kind: input, shape index: {}]
  %s7 = inlined_call_operand.vmem [shape: f32[128,2], index: 7, kind: input, shape index: {}]
  %s8 = inlined_call_operand.vmem [shape: f32[128,16], index: 8, kind: input, shape index: {}]
  %s9 = inlined_call_operand.vmem [shape: f32[16,128], index: 9, kind: input, shape index: {}]
  %s10 = inlined_call_operand.vmem [shape: f32[1,16], index: 10, kind: input, shape index: {}]
  %s11 = inlined_call_operand.<no memory space> [shape: f32[1,1], index: 11, kind: input, shape index: {}]
  %s12 = inlined_call_operand.vmem [shape: f32[1,16], index: 12, kind: input, shape index: {}]
  %s13 = inlined_call_operand.vmem [shape: f32[1,16], index: 13, kind: input, shape index: {}]
  %s14 = inlined_call_operand.vmem [shape: f32[128,128], index: 14, kind: input, shape index: {}]
  %s15 = inlined_call_operand.vmem [shape: f32[128,128], index: 15, kind: output, shape index: {}]
  %s16 = sld [smem:[#allocation0]]
  $region101: #{inres_forward.5} parent=0
    _
  %s18 = ssub.s32 1, %s16
  %s19 = scalar_select 0, %s18, %s16
  %v20 = vstv %s11
  %21 = vst [vmem:[#allocation3] sm:$0x1] %v20
  loop: start=0, step=1, limit=7
  $region2: #{inres_forward.5} parent=0 // loop_pre_header
    _
  $region3: #{inres_forward.5} parent=0 // loop_header
    %s23 = sphi 0, %s27
    %p24 = scmp.ge.s32.totalorder %s23, 7
    %s33 = sphi 0, %s35
    %s36 = sphi 0, %s33
    %s37 = sphi 0, %s36
    %s53 = sphi 0, %s37
    %s59 = sphi 0, %s61
    %s62 = sphi 0, %s59
    %s63 = sphi 0, %s62
    %s79 = sphi 0, %s63
    %s83 = sphi 0, %s83
    %s85 = sphi 0, %s83
    %s86 = sphi 0, %s85
    %s100 = sphi 0, %s86
    %s104 = sphi 0, %s104
    %s106 = sphi 0, %s104
    %s107 = sphi 0, %s106
    %s121 = sphi 0, %s107
    %s125 = sphi 0, %s125
    %s127 = sphi 0, %s125
    %s128 = sphi 0, %s127
    %s142 = sphi 0, %s128
    %s146 = sphi 0, %s146
    %s148 = sphi 0, %s146
    %s149 = sphi 0, %s148
    %s163 = sphi 0, %s149
    %s167 = sphi 0, %s167
    %s169 = sphi 0, %s167
    %s170 = sphi 0, %s169
    %s184 = sphi 0, %s170
    %s188 = sphi 0, %s188
    %s190 = sphi 0, %s188
    %s191 = sphi 0, %s190
    %s205 = sphi 0, %s191
    %s209 = sphi 0, %s209
    %s211 = sphi 0, %s209
    %s212 = sphi 0, %s211
    %s226 = sphi 0, %s212
    %s230 = sphi 0, %s230
    %s232 = sphi 0, %s230
    %s233 = sphi 0, %s232
    %s247 = sphi 0, %s233
    %s251 = sphi 0, %s251
    %s253 = sphi 0, %s251
    %s254 = sphi 0, %s253
    %s268 = sphi 0, %s254
    %s272 = sphi 0, %s272
    %s274 = sphi 0, %s272
    %s275 = sphi 0, %s274
    %s289 = sphi 0, %s275
    %s293 = sphi 0, %s293
    %s295 = sphi 0, %s293
    %s296 = sphi 0, %s295
    %s310 = sphi 0, %s296
    %s314 = sphi 0, %s314
    %s316 = sphi 0, %s314
    %s317 = sphi 0, %s316
    %s331 = sphi 0, %s317
    %s335 = sphi 0, %s335
    %s337 = sphi 0, %s335
    %s338 = sphi 0, %s337
    %s352 = sphi 0, %s338
    %s356 = sphi 0, %s356
    %s358 = sphi 0, %s356
    %s359 = sphi 0, %s358
    %s373 = sphi 0, %s359
  $region4: #{inres_forward.5} parent=0 // loop_header_branch
    %26 = sbr.rel (%p24) target = $region8
  $region5: #{inres_forward.5} parent=0 // loop_body
    %s28 = ssub.s32 %s23, 1
    %s29 = ssub.s32 %s23, 2
    %s30 = sadd.s32 %s23, 1
    %s31 = ssub.s32 %s23, %s30
    %p32 = scmp.eq.s32.totalorder %s31, 0
    %s34 = sadd.s32 %s33, 1
    %s35 = scalar_select %p32, %s33, %s34
    %p38 = pneg %p32
    %p39 = scmp.eq.s32.totalorder %s23, 4
    %p40 = por %p38, %p39
    %p41 = scmp.ne.s32.totalorder %s33, %s36
    %p42 = scmp.eq.s32.totalorder %s23, 0
    %p43 = por %p41, %p42
    %p44 = scmp.ne.s32.totalorder %s33, %s36
    %p45 = scmp.eq.s32.totalorder %s28, 4
    %p46 = por %p44, %p45
    %p47 = scmp.ne.s32.totalorder %s36, %s37
    %p48 = scmp.eq.s32.totalorder %s28, 0
    %p49 = por %p47, %p48
    %p50 = scmp.ne.s32.totalorder %s36, %s37
    %p51 = scmp.eq.s32.totalorder %s29, 4
    %p52 = por %p50, %p51
    %p54 = scmp.ne.s32.totalorder %s37, %s53
    %p55 = scmp.eq.s32.totalorder %s29, 0
    %p56 = por %p54, %p55
    %s57 = ssub.s32 %s23, %s30
    %p58 = scmp.eq.s32.totalorder %s57, 0
    %s60 = sadd.s32 %s59, 1
    %s61 = scalar_select %p58, %s59, %s60
    %p64 = pneg %p58
    %p65 = scmp.eq.s32.totalorder %s23, 4
    %p66 = por %p64, %p65
    %p67 = scmp.ne.s32.totalorder %s59, %s62
    %p68 = scmp.eq.s32.totalorder %s23, 0
    %p69 = por %p67, %p68
    %p70 = scmp.ne.s32.totalorder %s59, %s62
    %p71 = scmp.eq.s32.totalorder %s28, 4
    %p72 = por %p70, %p71
    %p73 = scmp.ne.s32.totalorder %s62, %s63
    %p74 = scmp.eq.s32.totalorder %s28, 0
    %p75 = por %p73, %p74
    %p76 = scmp.ne.s32.totalorder %s62, %s63
    %p77 = scmp.eq.s32.totalorder %s29, 4
    %p78 = por %p76, %p77
    %p80 = scmp.ne.s32.totalorder %s63, %s79
    %p81 = scmp.eq.s32.totalorder %s29, 0
    %p82 = por %p80, %p81
    %s84 = sadd.s32 %s83, 1
    %p87 = scmp.eq.s32.totalorder %s23, 4
    %p88 = scmp.ne.s32.totalorder %s83, %s85
    %p89 = scmp.eq.s32.totalorder %s23, 0
    %p90 = por %p88, %p89
    %p91 = scmp.ne.s32.totalorder %s83, %s85
    %p92 = scmp.eq.s32.totalorder %s28, 4
    %p93 = por %p91, %p92
    %p94 = scmp.ne.s32.totalorder %s85, %s86
    %p95 = scmp.eq.s32.totalorder %s28, 0
    %p96 = por %p94, %p95
    %p97 = scmp.ne.s32.totalorder %s85, %s86
    %p98 = scmp.eq.s32.totalorder %s29, 4
    %p99 = por %p97, %p98
    %p101 = scmp.ne.s32.totalorder %s86, %s100
    %p102 = scmp.eq.s32.totalorder %s29, 0
    %p103 = por %p101, %p102
    %s105 = sadd.s32 %s104, 1
    %p108 = scmp.eq.s32.totalorder %s23, 4
    %p109 = scmp.ne.s32.totalorder %s104, %s106
    %p110 = scmp.eq.s32.totalorder %s23, 0
    %p111 = por %p109, %p110
    %p112 = scmp.ne.s32.totalorder %s104, %s106
    %p113 = scmp.eq.s32.totalorder %s28, 4
    %p114 = por %p112, %p113
    %p115 = scmp.ne.s32.totalorder %s106, %s107
    %p116 = scmp.eq.s32.totalorder %s28, 0
    %p117 = por %p115, %p116
    %p118 = scmp.ne.s32.totalorder %s106, %s107
    %p119 = scmp.eq.s32.totalorder %s29, 4
    %p120 = por %p118, %p119
    %p122 = scmp.ne.s32.totalorder %s107, %s121
    %p123 = scmp.eq.s32.totalorder %s29, 0
    %p124 = por %p122, %p123
    %s126 = sadd.s32 %s125, 1
    %p129 = scmp.eq.s32.totalorder %s23, 4
    %p130 = scmp.ne.s32.totalorder %s125, %s127
    %p131 = scmp.eq.s32.totalorder %s23, 0
    %p132 = por %p130, %p131
    %p133 = scmp.ne.s32.totalorder %s125, %s127
    %p134 = scmp.eq.s32.totalorder %s28, 4
    %p135 = por %p133, %p134
    %p136 = scmp.ne.s32.totalorder %s127, %s128
    %p137 = scmp.eq.s32.totalorder %s28, 0
    %p138 = por %p136, %p137
    %p139 = scmp.ne.s32.totalorder %s127, %s128
    %p140 = scmp.eq.s32.totalorder %s29, 4
    %p141 = por %p139, %p140
    %p143 = scmp.ne.s32.totalorder %s128, %s142
    %p144 = scmp.eq.s32.totalorder %s29, 0
    %p145 = por %p143, %p144
    %s147 = sadd.s32 %s146, 1
    %p150 = scmp.eq.s32.totalorder %s23, 4
    %p151 = scmp.ne.s32.totalorder %s146, %s148
    %p152 = scmp.eq.s32.totalorder %s23, 0
    %p153 = por %p151, %p152
    %p154 = scmp.ne.s32.totalorder %s146, %s148
    %p155 = scmp.eq.s32.totalorder %s28, 4
    %p156 = por %p154, %p155
    %p157 = scmp.ne.s32.totalorder %s148, %s149
    %p158 = scmp.eq.s32.totalorder %s28, 0
    %p159 = por %p157, %p158
    %p160 = scmp.ne.s32.totalorder %s148, %s149
    %p161 = scmp.eq.s32.totalorder %s29, 4
    %p162 = por %p160, %p161
    %p164 = scmp.ne.s32.totalorder %s149, %s163
    %p165 = scmp.eq.s32.totalorder %s29, 0
    %p166 = por %p164, %p165
    %s168 = sadd.s32 %s167, 1
    %p171 = scmp.eq.s32.totalorder %s23, 4
    %p172 = scmp.ne.s32.totalorder %s167, %s169
    %p173 = scmp.eq.s32.totalorder %s23, 0
    %p174 = por %p172, %p173
    %p175 = scmp.ne.s32.totalorder %s167, %s169
    %p176 = scmp.eq.s32.totalorder %s28, 4
    %p177 = por %p175, %p176
    %p178 = scmp.ne.s32.totalorder %s169, %s170
    %p179 = scmp.eq.s32.totalorder %s28, 0
    %p180 = por %p178, %p179
    %p181 = scmp.ne.s32.totalorder %s169, %s170
    %p182 = scmp.eq.s32.totalorder %s29, 4
    %p183 = por %p181, %p182
    %p185 = scmp.ne.s32.totalorder %s170, %s184
    %p186 = scmp.eq.s32.totalorder %s29, 0
    %p187 = por %p185, %p186
    %s189 = sadd.s32 %s188, 1
    %p192 = scmp.eq.s32.totalorder %s23, 4
    %p193 = scmp.ne.s32.totalorder %s188, %s190
    %p194 = scmp.eq.s32.totalorder %s23, 0
    %p195 = por %p193, %p194
    %p196 = scmp.ne.s32.totalorder %s188, %s190
    %p197 = scmp.eq.s32.totalorder %s28, 4
    %p198 = por %p196, %p197
    %p199 = scmp.ne.s32.totalorder %s190, %s191
    %p200 = scmp.eq.s32.totalorder %s28, 0
    %p201 = por %p199, %p200
    %p202 = scmp.ne.s32.totalorder %s190, %s191
    %p203 = scmp.eq.s32.totalorder %s29, 4
    %p204 = por %p202, %p203
    %p206 = scmp.ne.s32.totalorder %s191, %s205
    %p207 = scmp.eq.s32.totalorder %s29, 0
    %p208 = por %p206, %p207
    %s210 = sadd.s32 %s209, 1
    %p213 = scmp.eq.s32.totalorder %s23, 4
    %p214 = scmp.ne.s32.totalorder %s209, %s211
    %p215 = scmp.eq.s32.totalorder %s23, 0
    %p216 = por %p214, %p215
    %p217 = scmp.ne.s32.totalorder %s209, %s211
    %p218 = scmp.eq.s32.totalorder %s28, 4
    %p219 = por %p217, %p218
    %p220 = scmp.ne.s32.totalorder %s211, %s212
    %p221 = scmp.eq.s32.totalorder %s28, 0
    %p222 = por %p220, %p221
    %p223 = scmp.ne.s32.totalorder %s211, %s212
    %p224 = scmp.eq.s32.totalorder %s29, 4
    %p225 = por %p223, %p224
    %p227 = scmp.ne.s32.totalorder %s212, %s226
    %p228 = scmp.eq.s32.totalorder %s29, 0
    %p229 = por %p227, %p228
    %s231 = sadd.s32 %s230, 1
    %p234 = scmp.eq.s32.totalorder %s23, 4
    %p235 = scmp.ne.s32.totalorder %s230, %s232
    %p236 = scmp.eq.s32.totalorder %s23, 0
    %p237 = por %p235, %p236
    %p238 = scmp.ne.s32.totalorder %s230, %s232
    %p239 = scmp.eq.s32.totalorder %s28, 4
    %p240 = por %p238, %p239
    %p241 = scmp.ne.s32.totalorder %s232, %s233
    %p242 = scmp.eq.s32.totalorder %s28, 0
    %p243 = por %p241, %p242
    %p244 = scmp.ne.s32.totalorder %s232, %s233
    %p245 = scmp.eq.s32.totalorder %s29, 4
    %p246 = por %p244, %p245
    %p248 = scmp.ne.s32.totalorder %s233, %s247
    %p249 = scmp.eq.s32.totalorder %s29, 0
    %p250 = por %p248, %p249
    %s252 = sadd.s32 %s251, 1
    %p255 = scmp.eq.s32.totalorder %s23, 4
    %p256 = scmp.ne.s32.totalorder %s251, %s253
    %p257 = scmp.eq.s32.totalorder %s23, 0
    %p258 = por %p256, %p257
    %p259 = scmp.ne.s32.totalorder %s251, %s253
    %p260 = scmp.eq.s32.totalorder %s28, 4
    %p261 = por %p259, %p260
    %p262 = scmp.ne.s32.totalorder %s253, %s254
    %p263 = scmp.eq.s32.totalorder %s28, 0
    %p264 = por %p262, %p263
    %p265 = scmp.ne.s32.totalorder %s253, %s254
    %p266 = scmp.eq.s32.totalorder %s29, 4
    %p267 = por %p265, %p266
    %p269 = scmp.ne.s32.totalorder %s254, %s268
    %p270 = scmp.eq.s32.totalorder %s29, 0
    %p271 = por %p269, %p270
    %s273 = sadd.s32 %s272, 1
    %p276 = scmp.eq.s32.totalorder %s23, 4
    %p277 = scmp.ne.s32.totalorder %s272, %s274
    %p278 = scmp.eq.s32.totalorder %s23, 0
    %p279 = por %p277, %p278
    %p280 = scmp.ne.s32.totalorder %s272, %s274
    %p281 = scmp.eq.s32.totalorder %s28, 4
    %p282 = por %p280, %p281
    %p283 = scmp.ne.s32.totalorder %s274, %s275
    %p284 = scmp.eq.s32.totalorder %s28, 0
    %p285 = por %p283, %p284
    %p286 = scmp.ne.s32.totalorder %s274, %s275
    %p287 = scmp.eq.s32.totalorder %s29, 4
    %p288 = por %p286, %p287
    %p290 = scmp.ne.s32.totalorder %s275, %s289
    %p291 = scmp.eq.s32.totalorder %s29, 0
    %p292 = por %p290, %p291
    %s294 = sadd.s32 %s293, 1
    %p297 = scmp.eq.s32.totalorder %s23, 4
    %p298 = scmp.ne.s32.totalorder %s293, %s295
    %p299 = scmp.eq.s32.totalorder %s23, 0
    %p300 = por %p298, %p299
    %p301 = scmp.ne.s32.totalorder %s293, %s295
    %p302 = scmp.eq.s32.totalorder %s28, 4
    %p303 = por %p301, %p302
    %p304 = scmp.ne.s32.totalorder %s295, %s296
    %p305 = scmp.eq.s32.totalorder %s28, 0
    %p306 = por %p304, %p305
    %p307 = scmp.ne.s32.totalorder %s295, %s296
    %p308 = scmp.eq.s32.totalorder %s29, 4
    %p309 = por %p307, %p308
    %p311 = scmp.ne.s32.totalorder %s296, %s310
    %p312 = scmp.eq.s32.totalorder %s29, 0
    %p313 = por %p311, %p312
    %s315 = sadd.s32 %s314, 1
    %p318 = scmp.eq.s32.totalorder %s23, 4
    %p319 = scmp.ne.s32.totalorder %s314, %s316
    %p320 = scmp.eq.s32.totalorder %s23, 0
    %p321 = por %p319, %p320
    %p322 = scmp.ne.s32.totalorder %s314, %s316
    %p323 = scmp.eq.s32.totalorder %s28, 4
    %p324 = por %p322, %p323
    %p325 = scmp.ne.s32.totalorder %s316, %s317
    %p326 = scmp.eq.s32.totalorder %s28, 0
    %p327 = por %p325, %p326
    %p328 = scmp.ne.s32.totalorder %s316, %s317
    %p329 = scmp.eq.s32.totalorder %s29, 4
    %p330 = por %p328, %p329
    %p332 = scmp.ne.s32.totalorder %s317, %s331
    %p333 = scmp.eq.s32.totalorder %s29, 0
    %p334 = por %p332, %p333
    %s336 = sadd.s32 %s335, 1
    %p339 = scmp.eq.s32.totalorder %s23, 4
    %p340 = scmp.ne.s32.totalorder %s335, %s337
    %p341 = scmp.eq.s32.totalorder %s23, 0
    %p342 = por %p340, %p341
    %p343 = scmp.ne.s32.totalorder %s335, %s337
    %p344 = scmp.eq.s32.totalorder %s28, 4
    %p345 = por %p343, %p344
    %p346 = scmp.ne.s32.totalorder %s337, %s338
    %p347 = scmp.eq.s32.totalorder %s28, 0
    %p348 = por %p346, %p347
    %p349 = scmp.ne.s32.totalorder %s337, %s338
    %p350 = scmp.eq.s32.totalorder %s29, 4
    %p351 = por %p349, %p350
    %p353 = scmp.ne.s32.totalorder %s338, %s352
    %p354 = scmp.eq.s32.totalorder %s29, 0
    %p355 = por %p353, %p354
    %s357 = sadd.s32 %s356, 1
    %p360 = scmp.eq.s32.totalorder %s23, 4
    %p361 = scmp.ne.s32.totalorder %s356, %s358
    %p362 = scmp.eq.s32.totalorder %s23, 0
    %p363 = por %p361, %p362
    %p364 = scmp.ne.s32.totalorder %s356, %s358
    %p365 = scmp.eq.s32.totalorder %s28, 4
    %p366 = por %p364, %p365
    %p367 = scmp.ne.s32.totalorder %s358, %s359
    %p368 = scmp.eq.s32.totalorder %s28, 0
    %p369 = por %p367, %p368
    %p370 = scmp.ne.s32.totalorder %s358, %s359
    %p371 = scmp.eq.s32.totalorder %s29, 4
    %p372 = por %p370, %p371
    %p374 = scmp.ne.s32.totalorder %s359, %s373
    %p375 = scmp.eq.s32.totalorder %s29, 0
    %p376 = por %p374, %p375
    %p377 = scmp.le.s32.totalorder 1, %s23
    %p378 = scmp.lt.s32.totalorder %s23, 6
    %p379 = pnand %p377, %p378
    %p380 = pneg %p379
    // Predicated region
    $region9: #{inres_forward.5} parent=5 // pred_check
      _
    $region10: #{inres_forward.5} parent=5 // pred_check_branch
      %382 = sbr.rel (%p379) target = $region12
    $region11: #{inres_forward.5} parent=5 // pred_region
      %s383 = ssub.s32 %s23, 1
      // Predicated region
      $region13: #{inres_forward.5} parent=11 // pred_check
        %p384 = pneg %p96
      $region14: #{inres_forward.5} parent=11 // pred_check_branch
        %386 = sbr.rel (%p384) target = $region16
      $region15: #{inres_forward.5} parent=11 // pred_region
        _
      $region16: #{inres_forward.5} parent=11 // pred_fallthru
        _
      // Predicated region
      $region17: #{inres_forward.5} parent=11 // pred_check
        %p387 = pneg %p117
      $region18: #{inres_forward.5} parent=11 // pred_check_branch
        %389 = sbr.rel (%p387) target = $region20
      $region19: #{inres_forward.5} parent=11 // pred_region
        _
      $region20: #{inres_forward.5} parent=11 // pred_fallthru
        _
      // Predicated region
      $region21: #{inres_forward.5} parent=11 // pred_check
        %p390 = pneg %p138
      $region22: #{inres_forward.5} parent=11 // pred_check_branch
        %392 = sbr.rel (%p390) target = $region24
      $region23: #{inres_forward.5} parent=11 // pred_region
        _
      $region24: #{inres_forward.5} parent=11 // pred_fallthru
        _
      // Predicated region
      $region25: #{inres_forward.5} parent=11 // pred_check
        %p393 = pneg %p159
      $region26: #{inres_forward.5} parent=11 // pred_check_branch
        %395 = sbr.rel (%p393) target = $region28
      $region27: #{inres_forward.5} parent=11 // pred_region
        _
      $region28: #{inres_forward.5} parent=11 // pred_fallthru
        _
      // Predicated region
      $region29: #{inres_forward.5} parent=11 // pred_check
        %p396 = pneg %p180
      $region30: #{inres_forward.5} parent=11 // pred_check_branch
        %398 = sbr.rel (%p396) target = $region32
      $region31: #{inres_forward.5} parent=11 // pred_region
        _
      $region32: #{inres_forward.5} parent=11 // pred_fallthru
        _
      // Predicated region
      $region33: #{inres_forward.5} parent=11 // pred_check
        %p399 = pneg %p201
      $region34: #{inres_forward.5} parent=11 // pred_check_branch
        %401 = sbr.rel (%p399) target = $region36
      $region35: #{inres_forward.5} parent=11 // pred_region
        _
      $region36: #{inres_forward.5} parent=11 // pred_fallthru
        _
      // Predicated region
      $region37: #{inres_forward.5} parent=11 // pred_check
        %p402 = pneg %p222
      $region38: #{inres_forward.5} parent=11 // pred_check_branch
        %404 = sbr.rel (%p402) target = $region40
      $region39: #{inres_forward.5} parent=11 // pred_region
        _
      $region40: #{inres_forward.5} parent=11 // pred_fallthru
        _
      // Predicated region
      $region41: #{inres_forward.5} parent=11 // pred_check
        %p405 = pneg %p243
      $region42: #{inres_forward.5} parent=11 // pred_check_branch
        %407 = sbr.rel (%p405) target = $region44
      $region43: #{inres_forward.5} parent=11 // pred_region
        _
      $region44: #{inres_forward.5} parent=11 // pred_fallthru
        _
      // Predicated region
      $region45: #{inres_forward.5} parent=11 // pred_check
        %p408 = pneg %p264
      $region46: #{inres_forward.5} parent=11 // pred_check_branch
        %410 = sbr.rel (%p408) target = $region48
      $region47: #{inres_forward.5} parent=11 // pred_region
        _
      $region48: #{inres_forward.5} parent=11 // pred_fallthru
        _
      // Predicated region
      $region49: #{inres_forward.5} parent=11 // pred_check
        %p411 = pneg %p285
      $region50: #{inres_forward.5} parent=11 // pred_check_branch
        %413 = sbr.rel (%p411) target = $region52
      $region51: #{inres_forward.5} parent=11 // pred_region
        _
      $region52: #{inres_forward.5} parent=11 // pred_fallthru
        _
      // Predicated region
      $region53: #{inres_forward.5} parent=11 // pred_check
        %p414 = pneg %p306
      $region54: #{inres_forward.5} parent=11 // pred_check_branch
        %416 = sbr.rel (%p414) target = $region56
      $region55: #{inres_forward.5} parent=11 // pred_region
        _
      $region56: #{inres_forward.5} parent=11 // pred_fallthru
        _
      // Predicated region
      $region57: #{inres_forward.5} parent=11 // pred_check
        %p417 = pneg %p327
      $region58: #{inres_forward.5} parent=11 // pred_check_branch
        %419 = sbr.rel (%p417) target = $region60
      $region59: #{inres_forward.5} parent=11 // pred_region
        _
      $region60: #{inres_forward.5} parent=11 // pred_fallthru
        _
      // Predicated region
      $region61: #{inres_forward.5} parent=11 // pred_check
        %p420 = pneg %p348
      $region62: #{inres_forward.5} parent=11 // pred_check_branch
        %422 = sbr.rel (%p420) target = $region64
      $region63: #{inres_forward.5} parent=11 // pred_region
        _
      $region64: #{inres_forward.5} parent=11 // pred_fallthru
        _
    $region12: #{inres_forward.5} parent=5 // pred_fallthru
      _
    %p423 = scmp.lt.s32.totalorder %s23, 5
    // Predicated region
    $region65: #{inres_forward.5} parent=5 // pred_check
      %p424 = pneg %p423
    $region66: #{inres_forward.5} parent=5 // pred_check_branch
      %426 = sbr.rel (%p424) target = $region68
    $region67: #{inres_forward.5} parent=5 // pred_region
      // Predicated region
      $region69: #{inres_forward.5} parent=67 // pred_check
        %p427 = pneg %p43
      $region70: #{inres_forward.5} parent=67 // pred_check_branch
        %429 = sbr.rel (%p427) target = $region72
      $region71: #{inres_forward.5} parent=67 // pred_region
        %s430 = smul.u32 5, %s23
        %p431 = scmp.lt.s32.totalorder %s430, 24
        %s432 = scalar_select %p431, %s430, 24
        %s433 = smul.addr %s432, 32
        %s434 = smul.addr %s433, 4
        %s435 = scalar_lea.vmem %s0, %s434
        %s436 = smul.u32 5, %s23
      $region72: #{inres_forward.5} parent=67 // pred_fallthru
        _
      // Predicated region
      $region73: #{inres_forward.5} parent=67 // pred_check
        %p437 = pneg %p69
      $region74: #{inres_forward.5} parent=67 // pred_check_branch
        %439 = sbr.rel (%p437) target = $region76
      $region75: #{inres_forward.5} parent=67 // pred_region
        %s440 = smul.u32 5, %s23
        %p441 = scmp.lt.s32.totalorder %s440, 24
        %s442 = scalar_select %p441, %s440, 24
        %s443 = smul.addr %s442, 24
        %s444 = smul.addr %s443, 4
        %s445 = scalar_lea.vmem %s1, %s444
        %s446 = smul.u32 5, %s23
      $region76: #{inres_forward.5} parent=67 // pred_fallthru
        _
    $region68: #{inres_forward.5} parent=5 // pred_fallthru
      _
    %p447 = scmp.le.s32.totalorder 1, %s23
    %p448 = scmp.lt.s32.totalorder %s23, 6
    %p449 = pnand %p447, %p448
    %p450 = pneg %p449
    // Predicated region
    $region77: #{inres_forward.5} parent=5 // pred_check
      _
    $region78: #{inres_forward.5} parent=5 // pred_check_branch
      %452 = sbr.rel (%p449) target = $region80
    $region79: #{inres_forward.5} parent=5 // pred_region
      %s453 = ssub.s32 %s23, 1
      %s454 = smul.u32 5, %s28
      %p455 = scmp.lt.s32.totalorder %s454, 24
      %s456 = scalar_select %p455, %s454, 24
      %s457 = smul.addr %s456, 32
      %s458 = smul.addr %s457, 4
      %s459 = scalar_lea.vmem %s0, %s458
      %p460 = pneg %p49
      %p461 = pneg %p46
      %s462 = smul.u32 5, %s28
      %p463 = scmp.lt.s32.totalorder %s462, 24
      %s464 = scalar_select %p463, %s462, 24
      %s465 = smul.addr %s464, 24
      %s466 = smul.addr %s465, 4
      %s467 = scalar_lea.vmem %s1, %s466
      %p468 = pneg %p75
      %p469 = pneg %p72
      %p470 = pneg %p96
      %p471 = pneg %p93
      %p472 = pneg %p117
      %p473 = pneg %p114
      %p474 = pneg %p138
      %p475 = pneg %p135
      %p476 = pneg %p159
      %p477 = pneg %p156
      %p478 = pneg %p180
      %p479 = pneg %p177
      %p480 = pneg %p201
      %p481 = pneg %p198
      %p482 = pneg %p222
      %p483 = pneg %p219
      %p484 = pneg %p243
      %p485 = pneg %p240
      %p486 = pneg %p264
      %p487 = pneg %p261
      %p488 = pneg %p285
      %p489 = pneg %p282
      %p490 = pneg %p306
      %p491 = pneg %p303
      %p492 = pneg %p327
      %p493 = pneg %p324
      %p494 = pneg %p348
      %p495 = pneg %p345
      %p496 = pneg %p369
      %p497 = pneg %p366
      %s498 = smul.u32 5, %s28
      %p499 = scmp.lt.s32.totalorder %s498, 24
      %s500 = scalar_select %p499, %s498, 24
      %s501 = smul.addr %s500, 32
      %s502 = smul.addr %s501, 4
      %s503 = scalar_lea.vmem %s0, %s502
      %s504 = smul.u32 5, %s28
      %s505 = smul.u32 5, %s28
      %p506 = scmp.lt.s32.totalorder %s505, 24
      %s507 = scalar_select %p506, %s505, 24
      %s508 = smul.addr %s507, 24
      %s509 = smul.addr %s508, 4
      %s510 = scalar_lea.vmem %s1, %s509
      %s511 = smul.u32 5, %s28
      %p513 = scmp.eq.s32.totalorder %s28, 0
      // Predicated region
      $region81: #{inres_forward.5} parent=79 // pred_check
        %p514 = pneg %p513
      $region82: #{inres_forward.5} parent=79 // pred_check_branch
        %516 = sbr.rel (%p514) target = $region84
      $region83: #{inres_forward.5} parent=79 // pred_region
        %517 = vst [vmem:[#allocation2] sm:$0xff] 0.0
        %518 = vst [vmem:[#allocation2 + $0x8] sm:$0xff] 0.0
        %519 = vst [vmem:[#allocation2 + $0x10] sm:$0xff] 0.0
        %520 = vst [vmem:[#allocation2 + $0x18] sm:$0xff] 0.0
        %521 = vst [vmem:[#allocation2 + $0x20] sm:$0xff] 0.0
        %522 = vst [vmem:[#allocation2 + $0x28] sm:$0xff] 0.0
        %523 = vst [vmem:[#allocation2 + $0x30] sm:$0xff] 0.0
        %524 = vst [vmem:[#allocation2 + $0x38] sm:$0xff] 0.0
        %525 = vst [vmem:[#allocation2 + $0x40] sm:$0xff] 0.0
        %526 = vst [vmem:[#allocation2 + $0x48] sm:$0xff] 0.0
        %527 = vst [vmem:[#allocation2 + $0x50] sm:$0xff] 0.0
        %528 = vst [vmem:[#allocation2 + $0x58] sm:$0xff] 0.0
        %529 = vst [vmem:[#allocation2 + $0x60] sm:$0xff] 0.0
        %530 = vst [vmem:[#allocation2 + $0x68] sm:$0xff] 0.0
        %531 = vst [vmem:[#allocation2 + $0x70] sm:$0xff] 0.0
        %532 = vst [vmem:[#allocation2 + $0x78] sm:$0xff] 0.0
      $region84: #{inres_forward.5} parent=79 // pred_fallthru
        _
      %v533 = vld [vmem:[%s503] sm:$0xff]
      %v534 = vld [vmem:[%s503 + $0x8] sm:$0xff]
      %v535 = vld [vmem:[%s503 + $0x10] sm:$0xff]
      %v536 = vld [vmem:[%s503 + $0x18] sm:$0xff]
      %v537 = vld [vmem:[%s503 + $0x20] sm:$0xff]
      %v538 = vld [vmem:[%s503 + $0x28] sm:$0xff]
      %v539 = vld [vmem:[%s503 + $0x30] sm:$0xff]
      %v540 = vld [vmem:[%s503 + $0x38] sm:$0xff]
      %v541 = vld [vmem:[%s503 + $0x40] sm:$0xff]
      %v542 = vld [vmem:[%s503 + $0x48] sm:$0xff]
      %v543 = vld [vmem:[%s503 + $0x50] sm:$0xff]
      %v544 = vld [vmem:[%s503 + $0x58] sm:$0xff]
      %v545 = vld [vmem:[%s503 + $0x60] sm:$0xff]
      %v546 = vld [vmem:[%s503 + $0x68] sm:$0xff]
      %v547 = vld [vmem:[%s503 + $0x70] sm:$0xff]
      %v548 = vld [vmem:[%s503 + $0x78] sm:$0xff]
      %v549 = vld [vmem:[%s510] sm:$0xf]
      %v550 = vld [vmem:[%s510 + $0x4] sm:$0xf]
      %v551 = vld [vmem:[%s510 + $0x8] sm:$0xf]
      %v552 = vld [vmem:[%s510 + $0xc] sm:$0xf]
      %v553 = vld [vmem:[%s510 + $0x10] sm:$0xf]
      %v554 = vld [vmem:[%s510 + $0x14] sm:$0xf]
      %v555 = vld [vmem:[%s510 + $0x18] sm:$0xf]
      %v556 = vld [vmem:[%s510 + $0x1c] sm:$0xf]
      %v557 = vld [vmem:[%s510 + $0x20] sm:$0xf]
      %v558 = vld [vmem:[%s510 + $0x24] sm:$0xf]
      %v559 = vld [vmem:[%s510 + $0x28] sm:$0xf]
      %v560 = vld [vmem:[%s510 + $0x2c] sm:$0xf]
      %v561 = vld [vmem:[%s510 + $0x30] sm:$0xf]
      %v562 = vld [vmem:[%s510 + $0x34] sm:$0xf]
      %v563 = vld [vmem:[%s510 + $0x38] sm:$0xf]
      %v564 = vld [vmem:[%s510 + $0x3c] sm:$0xf]
      %v565 = vld [vmem:[%s510 + $0x40] sm:$0xf]
      %v566 = vld [vmem:[%s510 + $0x44] sm:$0xf]
      %v567 = vld [vmem:[%s510 + $0x48] sm:$0xf]
      %v568 = vld [vmem:[%s510 + $0x4c] sm:$0xf]
      %v569 = vld [vmem:[%s510 + $0x50] sm:$0xf]
      %v570 = vld [vmem:[%s510 + $0x54] sm:$0xf]
      %v571 = vld [vmem:[%s510 + $0x58] sm:$0xf]
      %v572 = vld [vmem:[%s510 + $0x5c] sm:$0xf]
      %s573 = scalar_lea.vmem %s503, 128
      %v574 = vld [vmem:[%s573] sm:$0xff]
      %v575 = vld [vmem:[%s573 + $0x8] sm:$0xff]
      %v576 = vld [vmem:[%s573 + $0x10] sm:$0xff]
      %v577 = vld [vmem:[%s573 + $0x18] sm:$0xff]
      %v578 = vld [vmem:[%s573 + $0x20] sm:$0xff]
      %v579 = vld [vmem:[%s573 + $0x28] sm:$0xff]
      %v580 = vld [vmem:[%s573 + $0x30] sm:$0xff]
      %v581 = vld [vmem:[%s573 + $0x38] sm:$0xff]
      %v582 = vld [vmem:[%s573 + $0x40] sm:$0xff]
      %v583 = vld [vmem:[%s573 + $0x48] sm:$0xff]
      %v584 = vld [vmem:[%s573 + $0x50] sm:$0xff]
      %v585 = vld [vmem:[%s573 + $0x58] sm:$0xff]
      %v586 = vld [vmem:[%s573 + $0x60] sm:$0xff]
      %v587 = vld [vmem:[%s573 + $0x68] sm:$0xff]
      %v588 = vld [vmem:[%s573 + $0x70] sm:$0xff]
      %v589 = vld [vmem:[%s573 + $0x78] sm:$0xff]
      %s590 = scalar_lea.vmem %s510, 96
      %v591 = vld [vmem:[%s590] sm:$0xf]
      %v592 = vld [vmem:[%s590 + $0x4] sm:$0xf]
      %v593 = vld [vmem:[%s590 + $0x8] sm:$0xf]
      %v594 = vld [vmem:[%s590 + $0xc] sm:$0xf]
      %v595 = vld [vmem:[%s590 + $0x10] sm:$0xf]
      %v596 = vld [vmem:[%s590 + $0x14] sm:$0xf]
      %v597 = vld [vmem:[%s590 + $0x18] sm:$0xf]
      %v598 = vld [vmem:[%s590 + $0x1c] sm:$0xf]
      %v599 = vld [vmem:[%s590 + $0x20] sm:$0xf]
      %v600 = vld [vmem:[%s590 + $0x24] sm:$0xf]
      %v601 = vld [vmem:[%s590 + $0x28] sm:$0xf]
      %v602 = vld [vmem:[%s590 + $0x2c] sm:$0xf]
      %v603 = vld [vmem:[%s590 + $0x30] sm:$0xf]
      %v604 = vld [vmem:[%s590 + $0x34] sm:$0xf]
      %v605 = vld [vmem:[%s590 + $0x38] sm:$0xf]
      %v606 = vld [vmem:[%s590 + $0x3c] sm:$0xf]
      %v607 = vld [vmem:[%s590 + $0x40] sm:$0xf]
      %v608 = vld [vmem:[%s590 + $0x44] sm:$0xf]
      %v609 = vld [vmem:[%s590 + $0x48] sm:$0xf]
      %v610 = vld [vmem:[%s590 + $0x4c] sm:$0xf]
      %v611 = vld [vmem:[%s590 + $0x50] sm:$0xf]
      %v612 = vld [vmem:[%s590 + $0x54] sm:$0xf]
      %v613 = vld [vmem:[%s590 + $0x58] sm:$0xf]
      %v614 = vld [vmem:[%s590 + $0x5c] sm:$0xf]
      %v631 = vunpack.c.l.b16 %v574
      %v632 = vunpack.c.h.b16 %v574
      %v633 = vunpack.c.l.b16 %v575
      %v634 = vunpack.c.h.b16 %v575
      %v635 = vunpack.c.l.b16 %v576
      %v636 = vunpack.c.h.b16 %v576
      %v637 = vunpack.c.l.b16 %v577
      %v638 = vunpack.c.h.b16 %v577
      %v639 = vunpack.c.l.b16 %v578
      %v640 = vunpack.c.h.b16 %v578
      %v641 = vunpack.c.l.b16 %v579
      %v642 = vunpack.c.h.b16 %v579
      %v643 = vunpack.c.l.b16 %v580
      %v644 = vunpack.c.h.b16 %v580
      %v645 = vunpack.c.l.b16 %v581
      %v646 = vunpack.c.h.b16 %v581
      %v647 = vunpack.c.l.b16 %v582
      %v648 = vunpack.c.h.b16 %v582
      %v649 = vunpack.c.l.b16 %v583
      %v650 = vunpack.c.h.b16 %v583
      %v651 = vunpack.c.l.b16 %v584
      %v652 = vunpack.c.h.b16 %v584
      %v653 = vunpack.c.l.b16 %v585
      %v654 = vunpack.c.h.b16 %v585
      %v655 = vunpack.c.l.b16 %v586
      %v656 = vunpack.c.h.b16 %v586
      %v657 = vunpack.c.l.b16 %v587
      %v658 = vunpack.c.h.b16 %v587
      %v659 = vunpack.c.l.b16 %v588
      %v660 = vunpack.c.h.b16 %v588
      %v661 = vunpack.c.l.b16 %v589
      %v662 = vunpack.c.h.b16 %v589
      %v663 = vpack.c.b16 %v633, %v631
      %v664 = vpack.c.b16 %v634, %v632
      %v665 = vpack.c.b16 %v637, %v635
      %v666 = vpack.c.b16 %v638, %v636
      %v667 = vpack.c.b16 %v641, %v639
      %v668 = vpack.c.b16 %v642, %v640
      %v669 = vpack.c.b16 %v645, %v643
      %v670 = vpack.c.b16 %v646, %v644
      %v671 = vpack.c.b16 %v649, %v647
      %v672 = vpack.c.b16 %v650, %v648
      %v673 = vpack.c.b16 %v653, %v651
      %v674 = vpack.c.b16 %v654, %v652
      %v675 = vpack.c.b16 %v657, %v655
      %v676 = vpack.c.b16 %v658, %v656
      %v677 = vpack.c.b16 %v661, %v659
      %v678 = vpack.c.b16 %v662, %v660
      %v711 = vunpack.c.l.b16 %v591
      %v712 = vunpack.c.l.b16 %v592
      %v713 = vunpack.c.l.b16 %v593
      %v714 = vunpack.c.l.b16 %v594
      %v715 = vunpack.c.l.b16 %v595
      %v716 = vunpack.c.l.b16 %v596
      %v717 = vunpack.c.l.b16 %v597
      %v718 = vunpack.c.l.b16 %v598
      %v719 = vunpack.c.l.b16 %v599
      %v720 = vunpack.c.l.b16 %v600
      %v721 = vunpack.c.l.b16 %v601
      %v722 = vunpack.c.l.b16 %v602
      %v723 = vunpack.c.l.b16 %v603
      %v724 = vunpack.c.l.b16 %v604
      %v725 = vunpack.c.l.b16 %v605
      %v726 = vunpack.c.l.b16 %v606
      %v727 = vunpack.c.l.b16 %v607
      %v728 = vunpack.c.l.b16 %v608
      %v729 = vunpack.c.l.b16 %v609
      %v730 = vunpack.c.l.b16 %v610
      %v731 = vunpack.c.l.b16 %v611
      %v732 = vunpack.c.l.b16 %v612
      %v733 = vunpack.c.l.b16 %v613
      %v734 = vunpack.c.l.b16 %v614
      %v735 = vpack.c.b16 %v712, %v711
      %v736 = vpack.c.b16 %v714, %v713
      %v737 = vpack.c.b16 %v716, %v715
      %v738 = vpack.c.b16 %v718, %v717
      %v739 = vpack.c.b16 %v720, %v719
      %v740 = vpack.c.b16 %v722, %v721
      %v741 = vpack.c.b16 %v724, %v723
      %v742 = vpack.c.b16 %v726, %v725
      %v743 = vpack.c.b16 %v728, %v727
      %v744 = vpack.c.b16 %v730, %v729
      %v745 = vpack.c.b16 %v732, %v731
      %v746 = vpack.c.b16 %v734, %v733
      %vm759 = vcmask 523264
      %v761 = vsel %vm759, %v664, 0
      %v764 = vsel %vm759, %v666, 0
      %v767 = vsel %vm759, %v668, 0
      %v770 = vsel %vm759, %v670, 0
      %v773 = vsel %vm759, %v672, 0
      %v776 = vsel %vm759, %v674, 0
      %v779 = vsel %vm759, %v676, 0
      %v782 = vsel %vm759, %v678, 0
      %784 = vmatprep.subr.bf16.mxu0 0
      %785 = vmatpush1.bf16.msra.mxu0 %v735
      %786 = vmatprep.subr.bf16.mxu0 0
      %787 = vmatpush1.bf16.msra.mxu0 %v736
      %788 = vmatprep.subr.bf16.mxu0 0
      %789 = vmatpush1.bf16.msra.mxu0 %v737
      %790 = vmatprep.subr.bf16.mxu0 0
      %791 = vmatpush1.bf16.msra.mxu0 %v738
      %792 = vmatprep.subr.bf16.mxu0 0
      %793 = vmatpush1.bf16.msra.mxu0 %v739
      %794 = vmatprep.subr.bf16.mxu0 0
      %795 = vmatpush1.bf16.msra.mxu0 %v740
      %796 = vmatprep.subr.bf16.mxu0 0
      %797 = vmatpush1.bf16.msra.mxu0 %v741
      %798 = vmatprep.subr.bf16.mxu0 0
      %799 = vmatpush1.bf16.msra.mxu0 %v742
      %800 = vmatprep.subr.bf16.mxu0 0
      %801 = vmatpush1.bf16.msra.mxu0 %v743
      %802 = vmatprep.subr.bf16.mxu0 0
      %803 = vmatpush1.bf16.msra.mxu0 %v744
      %804 = vmatprep.subr.bf16.mxu0 0
      %805 = vmatpush1.bf16.msra.mxu0 %v745
      %806 = vmatprep.subr.bf16.mxu0 0
      %807 = vmatpush1.bf16.msra.mxu0 %v746
      %808 = vmatprep.subr.bf16.mxu0 0
      %809 = vmatpush1.bf16.msra.mxu0 0
      %810 = vmatprep.subr.bf16.mxu0 0
      %811 = vmatpush1.bf16.msra.mxu0 0
      %812 = vmatprep.subr.bf16.mxu0 0
      %813 = vmatpush1.bf16.msra.mxu0 0
      %814 = vmatprep.subr.bf16.mxu0 0
      %815 = vmatpush1.bf16.msra.mxu0 0
      %816 = vmatprep.mubr.bf16.mxu0 %v761
      %817 = vmatmul.mubr.bf16.gmra.mrb[0].mxu0 %v663
      %v818 = vpop.f32.mrb[0].mxu0
      %v819 = vadd.f32 0.0, %v818
      %v820 = vpop.f32.mrb[0].mxu0
      %v821 = vpop.f32.mrb[0].mxu0
      %v822 = vadd.f32 0.0, %v821
      %v823 = vpop.f32.mrb[0].mxu0
      %824 = vmatprep.mubr.bf16.mxu0 %v764
      %825 = vmatmul.mubr.bf16.gmra.mrb[0].mxu0 %v665
      %v826 = vpop.f32.mrb[0].mxu0
      %v827 = vadd.f32 0.0, %v826
      %v828 = vpop.f32.mrb[0].mxu0
      %v829 = vpop.f32.mrb[0].mxu0
      %v830 = vadd.f32 0.0, %v829
      %v831 = vpop.f32.mrb[0].mxu0
      %832 = vmatprep.mubr.bf16.mxu0 %v767
      %833 = vmatmul.mubr.bf16.gmra.mrb[0].mxu0 %v667
      %v834 = vpop.f32.mrb[0].mxu0
      %v835 = vadd.f32 0.0, %v834
      %v836 = vpop.f32.mrb[0].mxu0
      %v837 = vpop.f32.mrb[0].mxu0
      %v838 = vadd.f32 0.0, %v837
      %v839 = vpop.f32.mrb[0].mxu0
      %840 = vmatprep.mubr.bf16.mxu0 %v770
      %841 = vmatmul.mubr.bf16.gmra.mrb[0].mxu0 %v669
      %v842 = vpop.f32.mrb[0].mxu0
      %v843 = vadd.f32 0.0, %v842
      %v844 = vpop.f32.mrb[0].mxu0
      %v845 = vpop.f32.mrb[0].mxu0
      %v846 = vadd.f32 0.0, %v845
      %v847 = vpop.f32.mrb[0].mxu0
      %848 = vmatprep.mubr.bf16.mxu0 %v773
      %849 = vmatmul.mubr.bf16.gmra.mrb[0].mxu0 %v671
      %v850 = vpop.f32.mrb[0].mxu0
      %v851 = vadd.f32 0.0, %v850
      %v852 = vpop.f32.mrb[0].mxu0
      %v853 = vpop.f32.mrb[0].mxu0
      %v854 = vadd.f32 0.0, %v853
      %v855 = vpop.f32.mrb[0].mxu0
      %856 = vmatprep.mubr.bf16.mxu0 %v776
      %857 = vmatmul.mubr.bf16.gmra.mrb[0].mxu0 %v673
      %v858 = vpop.f32.mrb[0].mxu0
      %v859 = vadd.f32 0.0, %v858
      %v860 = vpop.f32.mrb[0].mxu0
      %v861 = vpop.f32.mrb[0].mxu0
      %v862 = vadd.f32 0.0, %v861
      %v863 = vpop.f32.mrb[0].mxu0
      %864 = vmatprep.mubr.bf16.mxu0 %v779
      %865 = vmatmul.mubr.bf16.gmra.mrb[0].mxu0 %v675
      %v866 = vpop.f32.mrb[0].mxu0
      %v867 = vadd.f32 0.0, %v866
      %v868 = vpop.f32.mrb[0].mxu0
      %v869 = vpop.f32.mrb[0].mxu0
      %v870 = vadd.f32 0.0, %v869
      %v871 = vpop.f32.mrb[0].mxu0
      %872 = vmatprep.mubr.bf16.mxu0 %v782
      %873 = vmatmul.mubr.bf16.gmra.mrb[0].mxu0 %v677
      %v874 = vpop.f32.mrb[0].mxu0
      %v875 = vadd.f32 0.0, %v874
      %v876 = vpop.f32.mrb[0].mxu0
      %v877 = vpop.f32.mrb[0].mxu0
      %v878 = vadd.f32 0.0, %v877
      %v879 = vpop.f32.mrb[0].mxu0
      %880 = vdwg.mxu0
      %v897 = vunpack.c.l.b16 %v533
      %v898 = vunpack.c.h.b16 %v533
      %v899 = vunpack.c.l.b16 %v534
      %v900 = vunpack.c.h.b16 %v534
      %v901 = vunpack.c.l.b16 %v535
      %v902 = vunpack.c.h.b16 %v535
      %v903 = vunpack.c.l.b16 %v536
      %v904 = vunpack.c.h.b16 %v536
      %v905 = vunpack.c.l.b16 %v537
      %v906 = vunpack.c.h.b16 %v537
      %v907 = vunpack.c.l.b16 %v538
      %v908 = vunpack.c.h.b16 %v538
      %v909 = vunpack.c.l.b16 %v539
      %v910 = vunpack.c.h.b16 %v539
      %v911 = vunpack.c.l.b16 %v540
      %v912 = vunpack.c.h.b16 %v540
      %v913 = vunpack.c.l.b16 %v541
      %v914 = vunpack.c.h.b16 %v541
      %v915 = vunpack.c.l.b16 %v542
      %v916 = vunpack.c.h.b16 %v542
      %v917 = vunpack.c.l.b16 %v543
      %v918 = vunpack.c.h.b16 %v543
      %v919 = vunpack.c.l.b16 %v544
      %v920 = vunpack.c.h.b16 %v544
      %v921 = vunpack.c.l.b16 %v545
      %v922 = vunpack.c.h.b16 %v545
      %v923 = vunpack.c.l.b16 %v546
      %v924 = vunpack.c.h.b16 %v546
      %v925 = vunpack.c.l.b16 %v547
      %v926 = vunpack.c.h.b16 %v547
      %v927 = vunpack.c.l.b16 %v548
      %v928 = vunpack.c.h.b16 %v548
      %v929 = vpack.c.b16 %v899, %v897
      %v930 = vpack.c.b16 %v900, %v898
      %v931 = vpack.c.b16 %v903, %v901
      %v932 = vpack.c.b16 %v904, %v902
      %v933 = vpack.c.b16 %v907, %v905
      %v934 = vpack.c.b16 %v908, %v906
      %v935 = vpack.c.b16 %v911, %v909
      %v936 = vpack.c.b16 %v912, %v910
      %v937 = vpack.c.b16 %v915, %v913
      %v938 = vpack.c.b16 %v916, %v914
      %v939 = vpack.c.b16 %v919, %v917
      %v940 = vpack.c.b16 %v920, %v918
      %v941 = vpack.c.b16 %v923, %v921
      %v942 = vpack.c.b16 %v924, %v922
      %v943 = vpack.c.b16 %v927, %v925
      %v944 = vpack.c.b16 %v928, %v926
      %v977 = vunpack.c.l.b16 %v549
      %v978 = vunpack.c.l.b16 %v550
      %v979 = vunpack.c.l.b16 %v551
      %v980 = vunpack.c.l.b16 %v552
      %v981 = vunpack.c.l.b16 %v553
      %v982 = vunpack.c.l.b16 %v554
      %v983 = vunpack.c.l.b16 %v555
      %v984 = vunpack.c.l.b16 %v556
      %v985 = vunpack.c.l.b16 %v557
      %v986 = vunpack.c.l.b16 %v558
      %v987 = vunpack.c.l.b16 %v559
      %v988 = vunpack.c.l.b16 %v560
      %v989 = vunpack.c.l.b16 %v561
      %v990 = vunpack.c.l.b16 %v562
      %v991 = vunpack.c.l.b16 %v563
      %v992 = vunpack.c.l.b16 %v564
      %v993 = vunpack.c.l.b16 %v565
      %v994 = vunpack.c.l.b16 %v566
      %v995 = vunpack.c.l.b16 %v567
      %v996 = vunpack.c.l.b16 %v568
      %v997 = vunpack.c.l.b16 %v569
      %v998 = vunpack.c.l.b16 %v570
      %v999 = vunpack.c.l.b16 %v571
      %v1000 = vunpack.c.l.b16 %v572
      %v1001 = vpack.c.b16 %v978, %v977
      %v1002 = vpack.c.b16 %v980, %v979
      %v1003 = vpack.c.b16 %v982, %v981
      %v1004 = vpack.c.b16 %v984, %v983
      %v1005 = vpack.c.b16 %v986, %v985
      %v1006 = vpack.c.b16 %v988, %v987
      %v1007 = vpack.c.b16 %v990, %v989
      %v1008 = vpack.c.b16 %v992, %v991
      %v1009 = vpack.c.b16 %v994, %v993
      %v1010 = vpack.c.b16 %v996, %v995
      %v1011 = vpack.c.b16 %v998, %v997
      %v1012 = vpack.c.b16 %v1000, %v999
      %v1026 = vsel %vm759, %v930, 0
      %v1029 = vsel %vm759, %v932, 0
      %v1032 = vsel %vm759, %v934, 0
      %v1035 = vsel %vm759, %v936, 0
      %v1038 = vsel %vm759, %v938, 0
      %v1041 = vsel %vm759, %v940, 0
      %v1044 = vsel %vm759, %v942, 0
      %v1047 = vsel %vm759, %v944, 0
      %1049 = vmatprep.subr.bf16.mxu0 0
      %1050 = vmatpush1.bf16.msra.mxu0 %v1001
      %1051 = vmatprep.subr.bf16.mxu0 0
      %1052 = vmatpush1.bf16.msra.mxu0 %v1002
      %1053 = vmatprep.subr.bf16.mxu0 0
      %1054 = vmatpush1.bf16.msra.mxu0 %v1003
      %1055 = vmatprep.subr.bf16.mxu0 0
      %1056 = vmatpush1.bf16.msra.mxu0 %v1004
      %1057 = vmatprep.subr.bf16.mxu0 0
      %1058 = vmatpush1.bf16.msra.mxu0 %v1005
      %1059 = vmatprep.subr.bf16.mxu0 0
      %1060 = vmatpush1.bf16.msra.mxu0 %v1006
      %1061 = vmatprep.subr.bf16.mxu0 0
      %1062 = vmatpush1.bf16.msra.mxu0 %v1007
      %1063 = vmatprep.subr.bf16.mxu0 0
      %1064 = vmatpush1.bf16.msra.mxu0 %v1008
      %1065 = vmatprep.subr.bf16.mxu0 0
      %1066 = vmatpush1.bf16.msra.mxu0 %v1009
      %1067 = vmatprep.subr.bf16.mxu0 0
      %1068 = vmatpush1.bf16.msra.mxu0 %v1010
      %1069 = vmatprep.subr.bf16.mxu0 0
      %1070 = vmatpush1.bf16.msra.mxu0 %v1011
      %1071 = vmatprep.subr.bf16.mxu0 0
      %1072 = vmatpush1.bf16.msra.mxu0 %v1012
      %1073 = vmatprep.subr.bf16.mxu0 0
      %1074 = vmatpush1.bf16.msra.mxu0 0
      %1075 = vmatprep.subr.bf16.mxu0 0
      %1076 = vmatpush1.bf16.msra.mxu0 0
      %1077 = vmatprep.subr.bf16.mxu0 0
      %1078 = vmatpush1.bf16.msra.mxu0 0
      %1079 = vmatprep.subr.bf16.mxu0 0
      %1080 = vmatpush1.bf16.msra.mxu0 0
      %1081 = vmatprep.mubr.bf16.mxu0 %v1026
      %1082 = vmatmul.mubr.bf16.gmra.mrb[0].mxu0 %v929
      %v1083 = vpop.f32.mrb[0].mxu0
      %v1084 = vadd.f32 %v819, %v1083
      %v1085 = vpop.f32.mrb[0].mxu0
      %v1086 = vpop.f32.mrb[0].mxu0
      %v1087 = vadd.f32 %v822, %v1086
      %v1088 = vpop.f32.mrb[0].mxu0
      %1089 = vmatprep.mubr.bf16.mxu0 %v1029
      %1090 = vmatmul.mubr.bf16.gmra.mrb[0].mxu0 %v931
      %v1091 = vpop.f32.mrb[0].mxu0
      %v1092 = vadd.f32 %v827, %v1091
      %v1093 = vpop.f32.mrb[0].mxu0
      %v1094 = vpop.f32.mrb[0].mxu0
      %v1095 = vadd.f32 %v830, %v1094
      %v1096 = vpop.f32.mrb[0].mxu0
      %1097 = vmatprep.mubr.bf16.mxu0 %v1032
      %1098 = vmatmul.mubr.bf16.gmra.mrb[0].mxu0 %v933
      %v1099 = vpop.f32.mrb[0].mxu0
      %v1100 = vadd.f32 %v835, %v1099
      %v1101 = vpop.f32.mrb[0].mxu0
      %v1102 = vpop.f32.mrb[0].mxu0
      %v1103 = vadd.f32 %v838, %v1102
      %v1104 = vpop.f32.mrb[0].mxu0
      %1105 = vmatprep.mubr.bf16.mxu0 %v1035
      %1106 = vmatmul.mubr.bf16.gmra.mrb[0].mxu0 %v935
      %v1107 = vpop.f32.mrb[0].mxu0
      %v1108 = vadd.f32 %v843, %v1107
      %v1109 = vpop.f32.mrb[0].mxu0
      %v1110 = vpop.f32.mrb[0].mxu0
      %v1111 = vadd.f32 %v846, %v1110
      %v1112 = vpop.f32.mrb[0].mxu0
      %1113 = vmatprep.mubr.bf16.mxu0 %v1038
      %1114 = vmatmul.mubr.bf16.gmra.mrb[0].mxu0 %v937
      %v1115 = vpop.f32.mrb[0].mxu0
      %v1116 = vadd.f32 %v851, %v1115
      %v1117 = vpop.f32.mrb[0].mxu0
      %v1118 = vpop.f32.mrb[0].mxu0
      %v1119 = vadd.f32 %v854, %v1118
      %v1120 = vpop.f32.mrb[0].mxu0
      %1121 = vmatprep.mubr.bf16.mxu0 %v1041
      %1122 = vmatmul.mubr.bf16.gmra.mrb[0].mxu0 %v939
      %v1123 = vpop.f32.mrb[0].mxu0
      %v1124 = vadd.f32 %v859, %v1123
      %v1125 = vpop.f32.mrb[0].mxu0
      %v1126 = vpop.f32.mrb[0].mxu0
      %v1127 = vadd.f32 %v862, %v1126
      %v1128 = vpop.f32.mrb[0].mxu0
      %1129 = vmatprep.mubr.bf16.mxu0 %v1044
      %1130 = vmatmul.mubr.bf16.gmra.mrb[0].mxu0 %v941
      %v1131 = vpop.f32.mrb[0].mxu0
      %v1132 = vadd.f32 %v867, %v1131
      %v1133 = vpop.f32.mrb[0].mxu0
      %v1134 = vpop.f32.mrb[0].mxu0
      %v1135 = vadd.f32 %v870, %v1134
      %v1136 = vpop.f32.mrb[0].mxu0
      %1137 = vmatprep.mubr.bf16.mxu0 %v1047
      %1138 = vmatmul.mubr.bf16.gmra.mrb[0].mxu0 %v943
      %v1139 = vpop.f32.mrb[0].mxu0
      %v1140 = vadd.f32 %v875, %v1139
      %v1141 = vpop.f32.mrb[0].mxu0
      %v1142 = vpop.f32.mrb[0].mxu0
      %v1143 = vadd.f32 %v878, %v1142
      %v1144 = vpop.f32.mrb[0].mxu0
      %1145 = vdwg.mxu0
      %s1146 = scalar_lea.vmem %s503, 256
      %v1147 = vld [vmem:[%s1146] sm:$0xff]
      %v1148 = vld [vmem:[%s1146 + $0x8] sm:$0xff]
      %v1149 = vld [vmem:[%s1146 + $0x10] sm:$0xff]
      %v1150 = vld [vmem:[%s1146 + $0x18] sm:$0xff]
      %v1151 = vld [vmem:[%s1146 + $0x20] sm:$0xff]
      %v1152 = vld [vmem:[%s1146 + $0x28] sm:$0xff]
      %v1153 = vld [vmem:[%s1146 + $0x30] sm:$0xff]
      %v1154 = vld [vmem:[%s1146 + $0x38] sm:$0xff]
      %v1155 = vld [vmem:[%s1146 + $0x40] sm:$0xff]
      %v1156 = vld [vmem:[%s1146 + $0x48] sm:$0xff]
      %v1157 = vld [vmem:[%s1146 + $0x50] sm:$0xff]
      %v1158 = vld [vmem:[%s1146 + $0x58] sm:$0xff]
      %v1159 = vld [vmem:[%s1146 + $0x60] sm:$0xff]
      %v1160 = vld [vmem:[%s1146 + $0x68] sm:$0xff]
      %v1161 = vld [vmem:[%s1146 + $0x70] sm:$0xff]
      %v1162 = vld [vmem:[%s1146 + $0x78] sm:$0xff]
      %s1163 = scalar_lea.vmem %s510, 192
      %v1164 = vld [vmem:[%s1163] sm:$0xf]
      %v1165 = vld [vmem:[%s1163 + $0x4] sm:$0xf]
      %v1166 = vld [vmem:[%s1163 + $0x8] sm:$0xf]
      %v1167 = vld [vmem:[%s1163 + $0xc] sm:$0xf]
      %v1168 = vld [vmem:[%s1163 + $0x10] sm:$0xf]
      %v1169 = vld [vmem:[%s1163 + $0x14] sm:$0xf]
      %v1170 = vld [vmem:[%s1163 + $0x18] sm:$0xf]
      %v1171 = vld [vmem:[%s1163 + $0x1c] sm:$0xf]
      %v1172 = vld [vmem:[%s1163 + $0x20] sm:$0xf]
      %v1173 = vld [vmem:[%s1163 + $0x24] sm:$0xf]
      %v1174 = vld [vmem:[%s1163 + $0x28] sm:$0xf]
      %v1175 = vld [vmem:[%s1163 + $0x2c] sm:$0xf]
      %v1176 = vld [vmem:[%s1163 + $0x30] sm:$0xf]
      %v1177 = vld [vmem:[%s1163 + $0x34] sm:$0xf]
      %v1178 = vld [vmem:[%s1163 + $0x38] sm:$0xf]
      %v1179 = vld [vmem:[%s1163 + $0x3c] sm:$0xf]
      %v1180 = vld [vmem:[%s1163 + $0x40] sm:$0xf]
      %v1181 = vld [vmem:[%s1163 + $0x44] sm:$0xf]
      %v1182 = vld [vmem:[%s1163 + $0x48] sm:$0xf]
      %v1183 = vld [vmem:[%s1163 + $0x4c] sm:$0xf]
      %v1184 = vld [vmem:[%s1163 + $0x50] sm:$0xf]
      %v1185 = vld [vmem:[%s1163 + $0x54] sm:$0xf]
      %v1186 = vld [vmem:[%s1163 + $0x58] sm:$0xf]
      %v1187 = vld [vmem:[%s1163 + $0x5c] sm:$0xf]
      %v1204 = vunpack.c.l.b16 %v1147
      %v1205 = vunpack.c.h.b16 %v1147
      %v1206 = vunpack.c.l.b16 %v1148
      %v1207 = vunpack.c.h.b16 %v1148
      %v1208 = vunpack.c.l.b16 %v1149
      %v1209 = vunpack.c.h.b16 %v1149
      %v1210 = vunpack.c.l.b16 %v1150
      %v1211 = vunpack.c.h.b16 %v1150
      %v1212 = vunpack.c.l.b16 %v1151
      %v1213 = vunpack.c.h.b16 %v1151
      %v1214 = vunpack.c.l.b16 %v1152
      %v1215 = vunpack.c.h.b16 %v1152
      %v1216 = vunpack.c.l.b16 %v1153
      %v1217 = vunpack.c.h.b16 %v1153
      %v1218 = vunpack.c.l.b16 %v1154
      %v1219 = vunpack.c.h.b16 %v1154
      %v1220 = vunpack.c.l.b16 %v1155
      %v1221 = vunpack.c.h.b16 %v1155
      %v1222 = vunpack.c.l.b16 %v1156
      %v1223 = vunpack.c.h.b16 %v1156
      %v1224 = vunpack.c.l.b16 %v1157
      %v1225 = vunpack.c.h.b16 %v1157
      %v1226 = vunpack.c.l.b16 %v1158
      %v1227 = vunpack.c.h.b16 %v1158
      %v1228 = vunpack.c.l.b16 %v1159
      %v1229 = vunpack.c.h.b16 %v1159
      %v1230 = vunpack.c.l.b16 %v1160
      %v1231 = vunpack.c.h.b16 %v1160
      %v1232 = vunpack.c.l.b16 %v1161
      %v1233 = vunpack.c.h.b16 %v1161
      %v1234 = vunpack.c.l.b16 %v1162
      %v1235 = vunpack.c.h.b16 %v1162
      %v1236 = vpack.c.b16 %v1206, %v1204
      %v1237 = vpack.c.b16 %v1207, %v1205
      %v1238 = vpack.c.b16 %v1210, %v1208
      %v1239 = vpack.c.b16 %v1211, %v1209
      %v1240 = vpack.c.b16 %v1214, %v1212
      %v1241 = vpack.c.b16 %v1215, %v1213
      %v1242 = vpack.c.b16 %v1218, %v1216
      %v1243 = vpack.c.b16 %v1219, %v1217
      %v1244 = vpack.c.b16 %v1222, %v1220
      %v1245 = vpack.c.b16 %v1223, %v1221
      %v1246 = vpack.c.b16 %v1226, %v1224
      %v1247 = vpack.c.b16 %v1227, %v1225
      %v1248 = vpack.c.b16 %v1230, %v1228
      %v1249 = vpack.c.b16 %v1231, %v1229
      %v1250 = vpack.c.b16 %v1234, %v1232
      %v1251 = vpack.c.b16 %v1235, %v1233
      %v1284 = vunpack.c.l.b16 %v1164
      %v1285 = vunpack.c.l.b16 %v1165
      %v1286 = vunpack.c.l.b16 %v1166
      %v1287 = vunpack.c.l.b16 %v1167
      %v1288 = vunpack.c.l.b16 %v1168
      %v1289 = vunpack.c.l.b16 %v1169
      %v1290 = vunpack.c.l.b16 %v1170
      %v1291 = vunpack.c.l.b16 %v1171
      %v1292 = vunpack.c.l.b16 %v1172
      %v1293 = vunpack.c.l.b16 %v1173
      %v1294 = vunpack.c.l.b16 %v1174
      %v1295 = vunpack.c.l.b16 %v1175
      %v1296 = vunpack.c.l.b16 %v1176
      %v1297 = vunpack.c.l.b16 %v1177
      %v1298 = vunpack.c.l.b16 %v1178
      %v1299 = vunpack.c.l.b16 %v1179
      %v1300 = vunpack.c.l.b16 %v1180
      %v1301 = vunpack.c.l.b16 %v1181
      %v1302 = vunpack.c.l.b16 %v1182
      %v1303 = vunpack.c.l.b16 %v1183
      %v1304 = vunpack.c.l.b16 %v1184
      %v1305 = vunpack.c.l.b16 %v1185
      %v1306 = vunpack.c.l.b16 %v1186
      %v1307 = vunpack.c.l.b16 %v1187
      %v1308 = vpack.c.b16 %v1285, %v1284
      %v1309 = vpack.c.b16 %v1287, %v1286
      %v1310 = vpack.c.b16 %v1289, %v1288
      %v1311 = vpack.c.b16 %v1291, %v1290
      %v1312 = vpack.c.b16 %v1293, %v1292
      %v1313 = vpack.c.b16 %v1295, %v1294
      %v1314 = vpack.c.b16 %v1297, %v1296
      %v1315 = vpack.c.b16 %v1299, %v1298
      %v1316 = vpack.c.b16 %v1301, %v1300
      %v1317 = vpack.c.b16 %v1303, %v1302
      %v1318 = vpack.c.b16 %v1305, %v1304
      %v1319 = vpack.c.b16 %v1307, %v1306
      %v1333 = vsel %vm759, %v1237, 0
      %v1336 = vsel %vm759, %v1239, 0
      %v1339 = vsel %vm759, %v1241, 0
      %v1342 = vsel %vm759, %v1243, 0
      %v1345 = vsel %vm759, %v1245, 0
      %v1348 = vsel %vm759, %v1247, 0
      %v1351 = vsel %vm759, %v1249, 0
      %v1354 = vsel %vm759, %v1251, 0
      %1356 = vmatprep.subr.bf16.mxu0 0
      %1357 = vmatpush1.bf16.msra.mxu0 %v1308
      %1358 = vmatprep.subr.bf16.mxu0 0
      %1359 = vmatpush1.bf16.msra.mxu0 %v1309
      %1360 = vmatprep.subr.bf16.mxu0 0
      %1361 = vmatpush1.bf16.msra.mxu0 %v1310
      %1362 = vmatprep.subr.bf16.mxu0 0
      %1363 = vmatpush1.bf16.msra.mxu0 %v1311
      %1364 = vmatprep.subr.bf16.mxu0 0
      %1365 = vmatpush1.bf16.msra.mxu0 %v1312
      %1366 = vmatprep.subr.bf16.mxu0 0
      %1367 = vmatpush1.bf16.msra.mxu0 %v1313
      %1368 = vmatprep.subr.bf16.mxu0 0
      %1369 = vmatpush1.bf16.msra.mxu0 %v1314
      %1370 = vmatprep.subr.bf16.mxu0 0
      %1371 = vmatpush1.bf16.msra.mxu0 %v1315
      %1372 = vmatprep.subr.bf16.mxu0 0
      %1373 = vmatpush1.bf16.msra.mxu0 %v1316
      %1374 = vmatprep.subr.bf16.mxu0 0
      %1375 = vmatpush1.bf16.msra.mxu0 %v1317
      %1376 = vmatprep.subr.bf16.mxu0 0
      %1377 = vmatpush1.bf16.msra.mxu0 %v1318
      %1378 = vmatprep.subr.bf16.mxu0 0
      %1379 = vmatpush1.bf16.msra.mxu0 %v1319
      %1380 = vmatprep.subr.bf16.mxu0 0
      %1381 = vmatpush1.bf16.msra.mxu0 0
      %1382 = vmatprep.subr.bf16.mxu0 0
      %1383 = vmatpush1.bf16.msra.mxu0 0
      %1384 = vmatprep.subr.bf16.mxu0 0
      %1385 = vmatpush1.bf16.msra.mxu0 0
      %1386 = vmatprep.subr.bf16.mxu0 0
      %1387 = vmatpush1.bf16.msra.mxu0 0
      %1388 = vmatprep.mubr.bf16.mxu0 %v1333
      %1389 = vmatmul.mubr.bf16.gmra.mrb[0].mxu0 %v1236
      %v1390 = vpop.f32.mrb[0].mxu0
      %v1391 = vadd.f32 0.0, %v1390
      %v1392 = vpop.f32.mrb[0].mxu0
      %v1393 = vpop.f32.mrb[0].mxu0
      %v1394 = vadd.f32 0.0, %v1393
      %v1395 = vpop.f32.mrb[0].mxu0
      %1396 = vmatprep.mubr.bf16.mxu0 %v1336
      %1397 = vmatmul.mubr.bf16.gmra.mrb[0].mxu0 %v1238
      %v1398 = vpop.f32.mrb[0].mxu0
      %v1399 = vadd.f32 0.0, %v1398
      %v1400 = vpop.f32.mrb[0].mxu0
      %v1401 = vpop.f32.mrb[0].mxu0
      %v1402 = vadd.f32 0.0, %v1401
      %v1403 = vpop.f32.mrb[0].mxu0
      %1404 = vmatprep.mubr.bf16.mxu0 %v1339
      %1405 = vmatmul.mubr.bf16.gmra.mrb[0].mxu0 %v1240
      %v1406 = vpop.f32.mrb[0].mxu0
      %v1407 = vadd.f32 0.0, %v1406
      %v1408 = vpop.f32.mrb[0].mxu0
      %v1409 = vpop.f32.mrb[0].mxu0
      %v1410 = vadd.f32 0.0, %v1409
      %v1411 = vpop.f32.mrb[0].mxu0
      %1412 = vmatprep.mubr.bf16.mxu0 %v1342
      %1413 = vmatmul.mubr.bf16.gmra.mrb[0].mxu0 %v1242
      %v1414 = vpop.f32.mrb[0].mxu0
      %v1415 = vadd.f32 0.0, %v1414
      %v1416 = vpop.f32.mrb[0].mxu0
      %v1417 = vpop.f32.mrb[0].mxu0
      %v1418 = vadd.f32 0.0, %v1417
      %v1419 = vpop.f32.mrb[0].mxu0
      %1420 = vmatprep.mubr.bf16.mxu0 %v1345
      %1421 = vmatmul.mubr.bf16.gmra.mrb[0].mxu0 %v1244
      %v1422 = vpop.f32.mrb[0].mxu0
      %v1423 = vadd.f32 0.0, %v1422
      %v1424 = vpop.f32.mrb[0].mxu0
      %v1425 = vpop.f32.mrb[0].mxu0
      %v1426 = vadd.f32 0.0, %v1425
      %v1427 = vpop.f32.mrb[0].mxu0
      %1428 = vmatprep.mubr.bf16.mxu0 %v1348
      %1429 = vmatmul.mubr.bf16.gmra.mrb[0].mxu0 %v1246
      %v1430 = vpop.f32.mrb[0].mxu0
      %v1431 = vadd.f32 0.0, %v1430
      %v1432 = vpop.f32.mrb[0].mxu0
      %v1433 = vpop.f32.mrb[0].mxu0
      %v1434 = vadd.f32 0.0, %v1433
      %v1435 = vpop.f32.mrb[0].mxu0
      %1436 = vmatprep.mubr.bf16.mxu0 %v1351
      %1437 = vmatmul.mubr.bf16.gmra.mrb[0].mxu0 %v1248
      %v1438 = vpop.f32.mrb[0].mxu0
      %v1439 = vadd.f32 0.0, %v1438
      %v1440 = vpop.f32.mrb[0].mxu0
      %v1441 = vpop.f32.mrb[0].mxu0
      %v1442 = vadd.f32 0.0, %v1441
      %v1443 = vpop.f32.mrb[0].mxu0
      %1444 = vmatprep.mubr.bf16.mxu0 %v1354
      %1445 = vmatmul.mubr.bf16.gmra.mrb[0].mxu0 %v1250
      %v1446 = vpop.f32.mrb[0].mxu0
      %v1447 = vadd.f32 0.0, %v1446
      %v1448 = vpop.f32.mrb[0].mxu0
      %v1449 = vpop.f32.mrb[0].mxu0
      %v1450 = vadd.f32 0.0, %v1449
      %v1451 = vpop.f32.mrb[0].mxu0
      %1452 = vdwg.mxu0
      %v1453 = vadd.f32 %v1084, %v1391
      %v1454 = vadd.f32 %v1087, %v1394
      %v1455 = vadd.f32 %v1092, %v1399
      %v1456 = vadd.f32 %v1095, %v1402
      %v1457 = vadd.f32 %v1100, %v1407
      %v1458 = vadd.f32 %v1103, %v1410
      %v1459 = vadd.f32 %v1108, %v1415
      %v1460 = vadd.f32 %v1111, %v1418
      %v1461 = vadd.f32 %v1116, %v1423
      %v1462 = vadd.f32 %v1119, %v1426
      %v1463 = vadd.f32 %v1124, %v1431
      %v1464 = vadd.f32 %v1127, %v1434
      %v1465 = vadd.f32 %v1132, %v1439
      %v1466 = vadd.f32 %v1135, %v1442
      %v1467 = vadd.f32 %v1140, %v1447
      %v1468 = vadd.f32 %v1143, %v1450
      %s1469 = scalar_lea.vmem %s503, 384
      %v1470 = vld [vmem:[%s1469] sm:$0xff]
      %v1471 = vld [vmem:[%s1469 + $0x8] sm:$0xff]
      %v1472 = vld [vmem:[%s1469 + $0x10] sm:$0xff]
      %v1473 = vld [vmem:[%s1469 + $0x18] sm:$0xff]
      %v1474 = vld [vmem:[%s1469 + $0x20] sm:$0xff]
      %v1475 = vld [vmem:[%s1469 + $0x28] sm:$0xff]
      %v1476 = vld [vmem:[%s1469 + $0x30] sm:$0xff]
      %v1477 = vld [vmem:[%s1469 + $0x38] sm:$0xff]
      %v1478 = vld [vmem:[%s1469 + $0x40] sm:$0xff]
      %v1479 = vld [vmem:[%s1469 + $0x48] sm:$0xff]
      %v1480 = vld [vmem:[%s1469 + $0x50] sm:$0xff]
      %v1481 = vld [vmem:[%s1469 + $0x58] sm:$0xff]
      %v1482 = vld [vmem:[%s1469 + $0x60] sm:$0xff]
      %v1483 = vld [vmem:[%s1469 + $0x68] sm:$0xff]
      %v1484 = vld [vmem:[%s1469 + $0x70] sm:$0xff]
      %v1485 = vld [vmem:[%s1469 + $0x78] sm:$0xff]
      %s1486 = scalar_lea.vmem %s510, 288
      %v1487 = vld [vmem:[%s1486] sm:$0xf]
      %v1488 = vld [vmem:[%s1486 + $0x4] sm:$0xf]
      %v1489 = vld [vmem:[%s1486 + $0x8] sm:$0xf]
      %v1490 = vld [vmem:[%s1486 + $0xc] sm:$0xf]
      %v1491 = vld [vmem:[%s1486 + $0x10] sm:$0xf]
      %v1492 = vld [vmem:[%s1486 + $0x14] sm:$0xf]
      %v1493 = vld [vmem:[%s1486 + $0x18] sm:$0xf]
      %v1494 = vld [vmem:[%s1486 + $0x1c] sm:$0xf]
      %v1495 = vld [vmem:[%s1486 + $0x20] sm:$0xf]
      %v1496 = vld [vmem:[%s1486 + $0x24] sm:$0xf]
      %v1497 = vld [vmem:[%s1486 + $0x28] sm:$0xf]
      %v1498 = vld [vmem:[%s1486 + $0x2c] sm:$0xf]
      %v1499 = vld [vmem:[%s1486 + $0x30] sm:$0xf]
      %v1500 = vld [vmem:[%s1486 + $0x34] sm:$0xf]
      %v1501 = vld [vmem:[%s1486 + $0x38] sm:$0xf]
      %v1502 = vld [vmem:[%s1486 + $0x3c] sm:$0xf]
      %v1503 = vld [vmem:[%s1486 + $0x40] sm:$0xf]
      %v1504 = vld [vmem:[%s1486 + $0x44] sm:$0xf]
      %v1505 = vld [vmem:[%s1486 + $0x48] sm:$0xf]
      %v1506 = vld [vmem:[%s1486 + $0x4c] sm:$0xf]
      %v1507 = vld [vmem:[%s1486 + $0x50] sm:$0xf]
      %v1508 = vld [vmem:[%s1486 + $0x54] sm:$0xf]
      %v1509 = vld [vmem:[%s1486 + $0x58] sm:$0xf]
      %v1510 = vld [vmem:[%s1486 + $0x5c] sm:$0xf]
      %v1527 = vunpack.c.l.b16 %v1470
      %v1528 = vunpack.c.h.b16 %v1470
      %v1529 = vunpack.c.l.b16 %v1471
      %v1530 = vunpack.c.h.b16 %v1471
      %v1531 = vunpack.c.l.b16 %v1472
      %v1532 = vunpack.c.h.b16 %v1472
      %v1533 = vunpack.c.l.b16 %v1473
      %v1534 = vunpack.c.h.b16 %v1473
      %v1535 = vunpack.c.l.b16 %v1474
      %v1536 = vunpack.c.h.b16 %v1474
      %v1537 = vunpack.c.l.b16 %v1475
      %v1538 = vunpack.c.h.b16 %v1475
      %v1539 = vunpack.c.l.b16 %v1476
      %v1540 = vunpack.c.h.b16 %v1476
      %v1541 = vunpack.c.l.b16 %v1477
      %v1542 = vunpack.c.h.b16 %v1477
      %v1543 = vunpack.c.l.b16 %v1478
      %v1544 = vunpack.c.h.b16 %v1478
      %v1545 = vunpack.c.l.b16 %v1479
      %v1546 = vunpack.c.h.b16 %v1479
      %v1547 = vunpack.c.l.b16 %v1480
      %v1548 = vunpack.c.h.b16 %v1480
      %v1549 = vunpack.c.l.b16 %v1481
      %v1550 = vunpack.c.h.b16 %v1481
      %v1551 = vunpack.c.l.b16 %v1482
      %v1552 = vunpack.c.h.b16 %v1482
      %v1553 = vunpack.c.l.b16 %v1483
      %v1554 = vunpack.c.h.b16 %v1483
      %v1555 = vunpack.c.l.b16 %v1484
      %v1556 = vunpack.c.h.b16 %v1484
      %v1557 = vunpack.c.l.b16 %v1485
      %v1558 = vunpack.c.h.b16 %v1485
      %v1559 = vpack.c.b16 %v1529, %v1527
      %v1560 = vpack.c.b16 %v1530, %v1528
      %v1561 = vpack.c.b16 %v1533, %v1531
      %v1562 = vpack.c.b16 %v1534, %v1532
      %v1563 = vpack.c.b16 %v1537, %v1535
      %v1564 = vpack.c.b16 %v1538, %v1536
      %v1565 = vpack.c.b16 %v1541, %v1539
      %v1566 = vpack.c.b16 %v1542, %v1540
      %v1567 = vpack.c.b16 %v1545, %v1543
      %v1568 = vpack.c.b16 %v1546, %v1544
      %v1569 = vpack.c.b16 %v1549, %v1547
      %v1570 = vpack.c.b16 %v1550, %v1548
      %v1571 = vpack.c.b16 %v1553, %v1551
      %v1572 = vpack.c.b16 %v1554, %v1552
      %v1573 = vpack.c.b16 %v1557, %v1555
      %v1574 = vpack.c.b16 %v1558, %v1556
      %v1607 = vunpack.c.l.b16 %v1487
      %v1608 = vunpack.c.l.b16 %v1488
      %v1609 = vunpack.c.l.b16 %v1489
      %v1610 = vunpack.c.l.b16 %v1490
      %v1611 = vunpack.c.l.b16 %v1491
      %v1612 = vunpack.c.l.b16 %v1492
      %v1613 = vunpack.c.l.b16 %v1493
      %v1614 = vunpack.c.l.b16 %v1494
      %v1615 = vunpack.c.l.b16 %v1495
      %v1616 = vunpack.c.l.b16 %v1496
      %v1617 = vunpack.c.l.b16 %v1497
      %v1618 = vunpack.c.l.b16 %v1498
      %v1619 = vunpack.c.l.b16 %v1499
      %v1620 = vunpack.c.l.b16 %v1500
      %v1621 = vunpack.c.l.b16 %v1501
      %v1622 = vunpack.c.l.b16 %v1502
      %v1623 = vunpack.c.l.b16 %v1503
      %v1624 = vunpack.c.l.b16 %v1504
      %v1625 = vunpack.c.l.b16 %v1505
      %v1626 = vunpack.c.l.b16 %v1506
      %v1627 = vunpack.c.l.b16 %v1507
      %v1628 = vunpack.c.l.b16 %v1508
      %v1629 = vunpack.c.l.b16 %v1509
      %v1630 = vunpack.c.l.b16 %v1510
      %v1631 = vpack.c.b16 %v1608, %v1607
      %v1632 = vpack.c.b16 %v1610, %v1609
      %v1633 = vpack.c.b16 %v1612, %v1611
      %v1634 = vpack.c.b16 %v1614, %v1613
      %v1635 = vpack.c.b16 %v1616, %v1615
      %v1636 = vpack.c.b16 %v1618, %v1617
      %v1637 = vpack.c.b16 %v1620, %v1619
      %v1638 = vpack.c.b16 %v1622, %v1621
      %v1639 = vpack.c.b16 %v1624, %v1623
      %v1640 = vpack.c.b16 %v1626, %v1625
      %v1641 = vpack.c.b16 %v1628, %v1627
      %v1642 = vpack.c.b16 %v1630, %v1629
      %v1656 = vsel %vm759, %v1560, 0
      %v1659 = vsel %vm759, %v1562, 0
      %v1662 = vsel %vm759, %v1564, 0
      %v1665 = vsel %vm759, %v1566, 0
      %v1668 = vsel %vm759, %v1568, 0
      %v1671 = vsel %vm759, %v1570, 0
      %v1674 = vsel %vm759, %v1572, 0
      %v1677 = vsel %vm759, %v1574, 0
      %1679 = vmatprep.subr.bf16.mxu0 0
      %1680 = vmatpush1.bf16.msra.mxu0 %v1631
      %1681 = vmatprep.subr.bf16.mxu0 0
      %1682 = vmatpush1.bf16.msra.mxu0 %v1632
      %1683 = vmatprep.subr.bf16.mxu0 0
      %1684 = vmatpush1.bf16.msra.mxu0 %v1633
      %1685 = vmatprep.subr.bf16.mxu0 0
      %1686 = vmatpush1.bf16.msra.mxu0 %v1634
      %1687 = vmatprep.subr.bf16.mxu0 0
      %1688 = vmatpush1.bf16.msra.mxu0 %v1635
      %1689 = vmatprep.subr.bf16.mxu0 0
      %1690 = vmatpush1.bf16.msra.mxu0 %v1636
      %1691 = vmatprep.subr.bf16.mxu0 0
      %1692 = vmatpush1.bf16.msra.mxu0 %v1637
      %1693 = vmatprep.subr.bf16.mxu0 0
      %1694 = vmatpush1.bf16.msra.mxu0 %v1638
      %1695 = vmatprep.subr.bf16.mxu0 0
      %1696 = vmatpush1.bf16.msra.mxu0 %v1639
      %1697 = vmatprep.subr.bf16.mxu0 0
      %1698 = vmatpush1.bf16.msra.mxu0 %v1640
      %1699 = vmatprep.subr.bf16.mxu0 0
      %1700 = vmatpush1.bf16.msra.mxu0 %v1641
      %1701 = vmatprep.subr.bf16.mxu0 0
      %1702 = vmatpush1.bf16.msra.mxu0 %v1642
      %1703 = vmatprep.subr.bf16.mxu0 0
      %1704 = vmatpush1.bf16.msra.mxu0 0
      %1705 = vmatprep.subr.bf16.mxu0 0
      %1706 = vmatpush1.bf16.msra.mxu0 0
      %1707 = vmatprep.subr.bf16.mxu0 0
      %1708 = vmatpush1.bf16.msra.mxu0 0
      %1709 = vmatprep.subr.bf16.mxu0 0
      %1710 = vmatpush1.bf16.msra.mxu0 0
      %1711 = vmatprep.mubr.bf16.mxu0 %v1656
      %1712 = vmatmul.mubr.bf16.gmra.mrb[0].mxu0 %v1559
      %v1713 = vpop.f32.mrb[0].mxu0
      %v1714 = vadd.f32 0.0, %v1713
      %v1715 = vpop.f32.mrb[0].mxu0
      %v1716 = vpop.f32.mrb[0].mxu0
      %v1717 = vadd.f32 0.0, %v1716
      %v1718 = vpop.f32.mrb[0].mxu0
      %1719 = vmatprep.mubr.bf16.mxu0 %v1659
      %1720 = vmatmul.mubr.bf16.gmra.mrb[0].mxu0 %v1561
      %v1721 = vpop.f32.mrb[0].mxu0
      %v1722 = vadd.f32 0.0, %v1721
      %v1723 = vpop.f32.mrb[0].mxu0
      %v1724 = vpop.f32.mrb[0].mxu0
      %v1725 = vadd.f32 0.0, %v1724
      %v1726 = vpop.f32.mrb[0].mxu0
      %1727 = vmatprep.mubr.bf16.mxu0 %v1662
      %1728 = vmatmul.mubr.bf16.gmra.mrb[0].mxu0 %v1563
      %v1729 = vpop.f32.mrb[0].mxu0
      %v1730 = vadd.f32 0.0, %v1729
      %v1731 = vpop.f32.mrb[0].mxu0
      %v1732 = vpop.f32.mrb[0].mxu0
      %v1733 = vadd.f32 0.0, %v1732
      %v1734 = vpop.f32.mrb[0].mxu0
      %1735 = vmatprep.mubr.bf16.mxu0 %v1665
      %1736 = vmatmul.mubr.bf16.gmra.mrb[0].mxu0 %v1565
      %v1737 = vpop.f32.mrb[0].mxu0
      %v1738 = vadd.f32 0.0, %v1737
      %v1739 = vpop.f32.mrb[0].mxu0
      %v1740 = vpop.f32.mrb[0].mxu0
      %v1741 = vadd.f32 0.0, %v1740
      %v1742 = vpop.f32.mrb[0].mxu0
      %1743 = vmatprep.mubr.bf16.mxu0 %v1668
      %1744 = vmatmul.mubr.bf16.gmra.mrb[0].mxu0 %v1567
      %v1745 = vpop.f32.mrb[0].mxu0
      %v1746 = vadd.f32 0.0, %v1745
      %v1747 = vpop.f32.mrb[0].mxu0
      %v1748 = vpop.f32.mrb[0].mxu0
      %v1749 = vadd.f32 0.0, %v1748
      %v1750 = vpop.f32.mrb[0].mxu0
      %1751 = vmatprep.mubr.bf16.mxu0 %v1671
      %1752 = vmatmul.mubr.bf16.gmra.mrb[0].mxu0 %v1569
      %v1753 = vpop.f32.mrb[0].mxu0
      %v1754 = vadd.f32 0.0, %v1753
      %v1755 = vpop.f32.mrb[0].mxu0
      %v1756 = vpop.f32.mrb[0].mxu0
      %v1757 = vadd.f32 0.0, %v1756
      %v1758 = vpop.f32.mrb[0].mxu0
      %1759 = vmatprep.mubr.bf16.mxu0 %v1674
      %1760 = vmatmul.mubr.bf16.gmra.mrb[0].mxu0 %v1571
      %v1761 = vpop.f32.mrb[0].mxu0
      %v1762 = vadd.f32 0.0, %v1761
      %v1763 = vpop.f32.mrb[0].mxu0
      %v1764 = vpop.f32.mrb[0].mxu0
      %v1765 = vadd.f32 0.0, %v1764
      %v1766 = vpop.f32.mrb[0].mxu0
      %1767 = vmatprep.mubr.bf16.mxu0 %v1677
      %1768 = vmatmul.mubr.bf16.gmra.mrb[0].mxu0 %v1573
      %v1769 = vpop.f32.mrb[0].mxu0
      %v1770 = vadd.f32 0.0, %v1769
      %v1771 = vpop.f32.mrb[0].mxu0
      %v1772 = vpop.f32.mrb[0].mxu0
      %v1773 = vadd.f32 0.0, %v1772
      %v1774 = vpop.f32.mrb[0].mxu0
      %1775 = vdwg.mxu0
      %v1776 = vadd.f32 %v1453, %v1714
      %v1777 = vadd.f32 %v1454, %v1717
      %v1778 = vadd.f32 %v1455, %v1722
      %v1779 = vadd.f32 %v1456, %v1725
      %v1780 = vadd.f32 %v1457, %v1730
      %v1781 = vadd.f32 %v1458, %v1733
      %v1782 = vadd.f32 %v1459, %v1738
      %v1783 = vadd.f32 %v1460, %v1741
      %v1784 = vadd.f32 %v1461, %v1746
      %v1785 = vadd.f32 %v1462, %v1749
      %v1786 = vadd.f32 %v1463, %v1754
      %v1787 = vadd.f32 %v1464, %v1757
      %v1788 = vadd.f32 %v1465, %v1762
      %v1789 = vadd.f32 %v1466, %v1765
      %v1790 = vadd.f32 %v1467, %v1770
      %v1791 = vadd.f32 %v1468, %v1773
      %s1792 = scalar_lea.vmem %s503, 512
      %v1793 = vld [vmem:[%s1792] sm:$0xff]
      %v1794 = vld [vmem:[%s1792 + $0x8] sm:$0xff]
      %v1795 = vld [vmem:[%s1792 + $0x10] sm:$0xff]
      %v1796 = vld [vmem:[%s1792 + $0x18] sm:$0xff]
      %v1797 = vld [vmem:[%s1792 + $0x20] sm:$0xff]
      %v1798 = vld [vmem:[%s1792 + $0x28] sm:$0xff]
      %v1799 = vld [vmem:[%s1792 + $0x30] sm:$0xff]
      %v1800 = vld [vmem:[%s1792 + $0x38] sm:$0xff]
      %v1801 = vld [vmem:[%s1792 + $0x40] sm:$0xff]
      %v1802 = vld [vmem:[%s1792 + $0x48] sm:$0xff]
      %v1803 = vld [vmem:[%s1792 + $0x50] sm:$0xff]
      %v1804 = vld [vmem:[%s1792 + $0x58] sm:$0xff]
      %v1805 = vld [vmem:[%s1792 + $0x60] sm:$0xff]
      %v1806 = vld [vmem:[%s1792 + $0x68] sm:$0xff]
      %v1807 = vld [vmem:[%s1792 + $0x70] sm:$0xff]
      %v1808 = vld [vmem:[%s1792 + $0x78] sm:$0xff]
      %s1809 = scalar_lea.vmem %s510, 384
      %v1810 = vld [vmem:[%s1809] sm:$0xf]
      %v1811 = vld [vmem:[%s1809 + $0x4] sm:$0xf]
      %v1812 = vld [vmem:[%s1809 + $0x8] sm:$0xf]
      %v1813 = vld [vmem:[%s1809 + $0xc] sm:$0xf]
      %v1814 = vld [vmem:[%s1809 + $0x10] sm:$0xf]
      %v1815 = vld [vmem:[%s1809 + $0x14] sm:$0xf]
      %v1816 = vld [vmem:[%s1809 + $0x18] sm:$0xf]
      %v1817 = vld [vmem:[%s1809 + $0x1c] sm:$0xf]
      %v1818 = vld [vmem:[%s1809 + $0x20] sm:$0xf]
      %v1819 = vld [vmem:[%s1809 + $0x24] sm:$0xf]
      %v1820 = vld [vmem:[%s1809 + $0x28] sm:$0xf]
      %v1821 = vld [vmem:[%s1809 + $0x2c] sm:$0xf]
      %v1822 = vld [vmem:[%s1809 + $0x30] sm:$0xf]
      %v1823 = vld [vmem:[%s1809 + $0x34] sm:$0xf]
      %v1824 = vld [vmem:[%s1809 + $0x38] sm:$0xf]
      %v1825 = vld [vmem:[%s1809 + $0x3c] sm:$0xf]
      %v1826 = vld [vmem:[%s1809 + $0x40] sm:$0xf]
      %v1827 = vld [vmem:[%s1809 + $0x44] sm:$0xf]
      %v1828 = vld [vmem:[%s1809 + $0x48] sm:$0xf]
      %v1829 = vld [vmem:[%s1809 + $0x4c] sm:$0xf]
      %v1830 = vld [vmem:[%s1809 + $0x50] sm:$0xf]
      %v1831 = vld [vmem:[%s1809 + $0x54] sm:$0xf]
      %v1832 = vld [vmem:[%s1809 + $0x58] sm:$0xf]
      %v1833 = vld [vmem:[%s1809 + $0x5c] sm:$0xf]
      %v1850 = vunpack.c.l.b16 %v1793
      %v1851 = vunpack.c.h.b16 %v1793
      %v1852 = vunpack.c.l.b16 %v1794
      %v1853 = vunpack.c.h.b16 %v1794
      %v1854 = vunpack.c.l.b16 %v1795
      %v1855 = vunpack.c.h.b16 %v1795
      %v1856 = vunpack.c.l.b16 %v1796
      %v1857 = vunpack.c.h.b16 %v1796
      %v1858 = vunpack.c.l.b16 %v1797
      %v1859 = vunpack.c.h.b16 %v1797
      %v1860 = vunpack.c.l.b16 %v1798
      %v1861 = vunpack.c.h.b16 %v1798
      %v1862 = vunpack.c.l.b16 %v1799
      %v1863 = vunpack.c.h.b16 %v1799
      %v1864 = vunpack.c.l.b16 %v1800
      %v1865 = vunpack.c.h.b16 %v1800
      %v1866 = vunpack.c.l.b16 %v1801
      %v1867 = vunpack.c.h.b16 %v1801
      %v1868 = vunpack.c.l.b16 %v1802
      %v1869 = vunpack.c.h.b16 %v1802
      %v1870 = vunpack.c.l.b16 %v1803
      %v1871 = vunpack.c.h.b16 %v1803
      %v1872 = vunpack.c.l.b16 %v1804
      %v1873 = vunpack.c.h.b16 %v1804
      %v1874 = vunpack.c.l.b16 %v1805
      %v1875 = vunpack.c.h.b16 %v1805
      %v1876 = vunpack.c.l.b16 %v1806
      %v1877 = vunpack.c.h.b16 %v1806
      %v1878 = vunpack.c.l.b16 %v1807
      %v1879 = vunpack.c.h.b16 %v1807
      %v1880 = vunpack.c.l.b16 %v1808
      %v1881 = vunpack.c.h.b16 %v1808
      %v1882 = vpack.c.b16 %v1852, %v1850
      %v1883 = vpack.c.b16 %v1853, %v1851
      %v1884 = vpack.c.b16 %v1856, %v1854
      %v1885 = vpack.c.b16 %v1857, %v1855
      %v1886 = vpack.c.b16 %v1860, %v1858
      %v1887 = vpack.c.b16 %v1861, %v1859
      %v1888 = vpack.c.b16 %v1864, %v1862
      %v1889 = vpack.c.b16 %v1865, %v1863
      %v1890 = vpack.c.b16 %v1868, %v1866
      %v1891 = vpack.c.b16 %v1869, %v1867
      %v1892 = vpack.c.b16 %v1872, %v1870
      %v1893 = vpack.c.b16 %v1873, %v1871
      %v1894 = vpack.c.b16 %v1876, %v1874
      %v1895 = vpack.c.b16 %v1877, %v1875
      %v1896 = vpack.c.b16 %v1880, %v1878
      %v1897 = vpack.c.b16 %v1881, %v1879
      %v1930 = vunpack.c.l.b16 %v1810
      %v1931 = vunpack.c.l.b16 %v1811
      %v1932 = vunpack.c.l.b16 %v1812
      %v1933 = vunpack.c.l.b16 %v1813
      %v1934 = vunpack.c.l.b16 %v1814
      %v1935 = vunpack.c.l.b16 %v1815
      %v1936 = vunpack.c.l.b16 %v1816
      %v1937 = vunpack.c.l.b16 %v1817
      %v1938 = vunpack.c.l.b16 %v1818
      %v1939 = vunpack.c.l.b16 %v1819
      %v1940 = vunpack.c.l.b16 %v1820
      %v1941 = vunpack.c.l.b16 %v1821
      %v1942 = vunpack.c.l.b16 %v1822
      %v1943 = vunpack.c.l.b16 %v1823
      %v1944 = vunpack.c.l.b16 %v1824
      %v1945 = vunpack.c.l.b16 %v1825
      %v1946 = vunpack.c.l.b16 %v1826
      %v1947 = vunpack.c.l.b16 %v1827
      %v1948 = vunpack.c.l.b16 %v1828
      %v1949 = vunpack.c.l.b16 %v1829
      %v1950 = vunpack.c.l.b16 %v1830
      %v1951 = vunpack.c.l.b16 %v1831
      %v1952 = vunpack.c.l.b16 %v1832
      %v1953 = vunpack.c.l.b16 %v1833
      %v1954 = vpack.c.b16 %v1931, %v1930
      %v1955 = vpack.c.b16 %v1933, %v1932
      %v1956 = vpack.c.b16 %v1935, %v1934
      %v1957 = vpack.c.b16 %v1937, %v1936
      %v1958 = vpack.c.b16 %v1939, %v1938
      %v1959 = vpack.c.b16 %v1941, %v1940
      %v1960 = vpack.c.b16 %v1943, %v1942
      %v1961 = vpack.c.b16 %v1945, %v1944
      %v1962 = vpack.c.b16 %v1947, %v1946
      %v1963 = vpack.c.b16 %v1949, %v1948
      %v1964 = vpack.c.b16 %v1951, %v1950
      %v1965 = vpack.c.b16 %v1953, %v1952
      %v1979 = vsel %vm759, %v1883, 0
      %v1982 = vsel %vm759, %v1885, 0
      %v1985 = vsel %vm759, %v1887, 0
      %v1988 = vsel %vm759, %v1889, 0
      %v1991 = vsel %vm759, %v1891, 0
      %v1994 = vsel %vm759, %v1893, 0
      %v1997 = vsel %vm759, %v1895, 0
      %v2000 = vsel %vm759, %v1897, 0
      %2002 = vmatprep.subr.bf16.mxu0 0
      %2003 = vmatpush1.bf16.msra.mxu0 %v1954
      %2004 = vmatprep.subr.bf16.mxu0 0
      %2005 = vmatpush1.bf16.msra.mxu0 %v1955
      %2006 = vmatprep.subr.bf16.mxu0 0
      %2007 = vmatpush1.bf16.msra.mxu0 %v1956
      %2008 = vmatprep.subr.bf16.mxu0 0
      %2009 = vmatpush1.bf16.msra.mxu0 %v1957
      %2010 = vmatprep.subr.bf16.mxu0 0
      %2011 = vmatpush1.bf16.msra.mxu0 %v1958
      %2012 = vmatprep.subr.bf16.mxu0 0
      %2013 = vmatpush1.bf16.msra.mxu0 %v1959
      %2014 = vmatprep.subr.bf16.mxu0 0
      %2015 = vmatpush1.bf16.msra.mxu0 %v1960
      %2016 = vmatprep.subr.bf16.mxu0 0
      %2017 = vmatpush1.bf16.msra.mxu0 %v1961
      %2018 = vmatprep.subr.bf16.mxu0 0
      %2019 = vmatpush1.bf16.msra.mxu0 %v1962
      %2020 = vmatprep.subr.bf16.mxu0 0
      %2021 = vmatpush1.bf16.msra.mxu0 %v1963
      %2022 = vmatprep.subr.bf16.mxu0 0
      %2023 = vmatpush1.bf16.msra.mxu0 %v1964
      %2024 = vmatprep.subr.bf16.mxu0 0
      %2025 = vmatpush1.bf16.msra.mxu0 %v1965
      %2026 = vmatprep.subr.bf16.mxu0 0
      %2027 = vmatpush1.bf16.msra.mxu0 0
      %2028 = vmatprep.subr.bf16.mxu0 0
      %2029 = vmatpush1.bf16.msra.mxu0 0
      %2030 = vmatprep.subr.bf16.mxu0 0
      %2031 = vmatpush1.bf16.msra.mxu0 0
      %2032 = vmatprep.subr.bf16.mxu0 0
      %2033 = vmatpush1.bf16.msra.mxu0 0
      %2034 = vmatprep.mubr.bf16.mxu0 %v1979
      %2035 = vmatmul.mubr.bf16.gmra.mrb[0].mxu0 %v1882
      %v2036 = vpop.f32.mrb[0].mxu0
      %v2037 = vadd.f32 0.0, %v2036
      %v2038 = vpop.f32.mrb[0].mxu0
      %v2039 = vpop.f32.mrb[0].mxu0
      %v2040 = vadd.f32 0.0, %v2039
      %v2041 = vpop.f32.mrb[0].mxu0
      %2042 = vmatprep.mubr.bf16.mxu0 %v1982
      %2043 = vmatmul.mubr.bf16.gmra.mrb[0].mxu0 %v1884
      %v2044 = vpop.f32.mrb[0].mxu0
      %v2045 = vadd.f32 0.0, %v2044
      %v2046 = vpop.f32.mrb[0].mxu0
      %v2047 = vpop.f32.mrb[0].mxu0
      %v2048 = vadd.f32 0.0, %v2047
      %v2049 = vpop.f32.mrb[0].mxu0
      %2050 = vmatprep.mubr.bf16.mxu0 %v1985
      %2051 = vmatmul.mubr.bf16.gmra.mrb[0].mxu0 %v1886
      %v2052 = vpop.f32.mrb[0].mxu0
      %v2053 = vadd.f32 0.0, %v2052
      %v2054 = vpop.f32.mrb[0].mxu0
      %v2055 = vpop.f32.mrb[0].mxu0
      %v2056 = vadd.f32 0.0, %v2055
      %v2057 = vpop.f32.mrb[0].mxu0
      %2058 = vmatprep.mubr.bf16.mxu0 %v1988
      %2059 = vmatmul.mubr.bf16.gmra.mrb[0].mxu0 %v1888
      %v2060 = vpop.f32.mrb[0].mxu0
      %v2061 = vadd.f32 0.0, %v2060
      %v2062 = vpop.f32.mrb[0].mxu0
      %v2063 = vpop.f32.mrb[0].mxu0
      %v2064 = vadd.f32 0.0, %v2063
      %v2065 = vpop.f32.mrb[0].mxu0
      %2066 = vmatprep.mubr.bf16.mxu0 %v1991
      %2067 = vmatmul.mubr.bf16.gmra.mrb[0].mxu0 %v1890
      %v2068 = vpop.f32.mrb[0].mxu0
      %v2069 = vadd.f32 0.0, %v2068
      %v2070 = vpop.f32.mrb[0].mxu0
      %v2071 = vpop.f32.mrb[0].mxu0
      %v2072 = vadd.f32 0.0, %v2071
      %v2073 = vpop.f32.mrb[0].mxu0
      %2074 = vmatprep.mubr.bf16.mxu0 %v1994
      %2075 = vmatmul.mubr.bf16.gmra.mrb[0].mxu0 %v1892
      %v2076 = vpop.f32.mrb[0].mxu0
      %v2077 = vadd.f32 0.0, %v2076
      %v2078 = vpop.f32.mrb[0].mxu0
      %v2079 = vpop.f32.mrb[0].mxu0
      %v2080 = vadd.f32 0.0, %v2079
      %v2081 = vpop.f32.mrb[0].mxu0
      %2082 = vmatprep.mubr.bf16.mxu0 %v1997
      %2083 = vmatmul.mubr.bf16.gmra.mrb[0].mxu0 %v1894
      %v2084 = vpop.f32.mrb[0].mxu0
      %v2085 = vadd.f32 0.0, %v2084
      %v2086 = vpop.f32.mrb[0].mxu0
      %v2087 = vpop.f32.mrb[0].mxu0
      %v2088 = vadd.f32 0.0, %v2087
      %v2089 = vpop.f32.mrb[0].mxu0
      %2090 = vmatprep.mubr.bf16.mxu0 %v2000
      %2091 = vmatmul.mubr.bf16.gmra.mrb[0].mxu0 %v1896
      %v2092 = vpop.f32.mrb[0].mxu0
      %v2093 = vadd.f32 0.0, %v2092
      %v2094 = vpop.f32.mrb[0].mxu0
      %v2095 = vpop.f32.mrb[0].mxu0
      %v2096 = vadd.f32 0.0, %v2095
      %v2097 = vpop.f32.mrb[0].mxu0
      %2098 = vdwg.mxu0
      %v2099 = vadd.f32 %v1776, %v2037
      %v2100 = vadd.f32 %v1777, %v2040
      %v2101 = vadd.f32 %v1778, %v2045
      %v2102 = vadd.f32 %v1779, %v2048
      %v2103 = vadd.f32 %v1780, %v2053
      %v2104 = vadd.f32 %v1781, %v2056
      %v2105 = vadd.f32 %v1782, %v2061
      %v2106 = vadd.f32 %v1783, %v2064
      %v2107 = vadd.f32 %v1784, %v2069
      %v2108 = vadd.f32 %v1785, %v2072
      %v2109 = vadd.f32 %v1786, %v2077
      %v2110 = vadd.f32 %v1787, %v2080
      %v2111 = vadd.f32 %v1788, %v2085
      %v2112 = vadd.f32 %v1789, %v2088
      %v2113 = vadd.f32 %v1790, %v2093
      %v2114 = vadd.f32 %v1791, %v2096
      %v2115 = vld [vmem:[#allocation2] sm:$0xff]
      %v2116 = vld [vmem:[#allocation2 + $0x8] sm:$0xff]
      %v2117 = vld [vmem:[#allocation2 + $0x10] sm:$0xff]
      %v2118 = vld [vmem:[#allocation2 + $0x18] sm:$0xff]
      %v2119 = vld [vmem:[#allocation2 + $0x20] sm:$0xff]
      %v2120 = vld [vmem:[#allocation2 + $0x28] sm:$0xff]
      %v2121 = vld [vmem:[#allocation2 + $0x30] sm:$0xff]
      %v2122 = vld [vmem:[#allocation2 + $0x38] sm:$0xff]
      %v2123 = vld [vmem:[#allocation2 + $0x40] sm:$0xff]
      %v2124 = vld [vmem:[#allocation2 + $0x48] sm:$0xff]
      %v2125 = vld [vmem:[#allocation2 + $0x50] sm:$0xff]
      %v2126 = vld [vmem:[#allocation2 + $0x58] sm:$0xff]
      %v2127 = vld [vmem:[#allocation2 + $0x60] sm:$0xff]
      %v2128 = vld [vmem:[#allocation2 + $0x68] sm:$0xff]
      %v2129 = vld [vmem:[#allocation2 + $0x70] sm:$0xff]
      %v2130 = vld [vmem:[#allocation2 + $0x78] sm:$0xff]
      %v2131 = vadd.f32 %v2115, %v2099
      %v2132 = vadd.f32 %v2116, %v2100
      %v2133 = vadd.f32 %v2117, %v2101
      %v2134 = vadd.f32 %v2118, %v2102
      %v2135 = vadd.f32 %v2119, %v2103
      %v2136 = vadd.f32 %v2120, %v2104
      %v2137 = vadd.f32 %v2121, %v2105
      %v2138 = vadd.f32 %v2122, %v2106
      %v2139 = vadd.f32 %v2123, %v2107
      %v2140 = vadd.f32 %v2124, %v2108
      %v2141 = vadd.f32 %v2125, %v2109
      %v2142 = vadd.f32 %v2126, %v2110
      %v2143 = vadd.f32 %v2127, %v2111
      %v2144 = vadd.f32 %v2128, %v2112
      %v2145 = vadd.f32 %v2129, %v2113
      %v2146 = vadd.f32 %v2130, %v2114
      %2147 = vst [vmem:[#allocation2] sm:$0xff] %v2131
      %2148 = vst [vmem:[#allocation2 + $0x8] sm:$0xff] %v2132
      %2149 = vst [vmem:[#allocation2 + $0x10] sm:$0xff] %v2133
      %2150 = vst [vmem:[#allocation2 + $0x18] sm:$0xff] %v2134
      %2151 = vst [vmem:[#allocation2 + $0x20] sm:$0xff] %v2135
      %2152 = vst [vmem:[#allocation2 + $0x28] sm:$0xff] %v2136
      %2153 = vst [vmem:[#allocation2 + $0x30] sm:$0xff] %v2137
      %2154 = vst [vmem:[#allocation2 + $0x38] sm:$0xff] %v2138
      %2155 = vst [vmem:[#allocation2 + $0x40] sm:$0xff] %v2139
      %2156 = vst [vmem:[#allocation2 + $0x48] sm:$0xff] %v2140
      %2157 = vst [vmem:[#allocation2 + $0x50] sm:$0xff] %v2141
      %2158 = vst [vmem:[#allocation2 + $0x58] sm:$0xff] %v2142
      %2159 = vst [vmem:[#allocation2 + $0x60] sm:$0xff] %v2143
      %2160 = vst [vmem:[#allocation2 + $0x68] sm:$0xff] %v2144
      %2161 = vst [vmem:[#allocation2 + $0x70] sm:$0xff] %v2145
      %2162 = vst [vmem:[#allocation2 + $0x78] sm:$0xff] %v2146
      %p2163 = scmp.eq.s32.totalorder %s28, 4
      // Predicated region
      $region85: #{inres_forward.5} parent=79 // pred_check
        %p2164 = pneg %p2163
      $region86: #{inres_forward.5} parent=79 // pred_check_branch
        %2166 = sbr.rel (%p2164) target = $region88
      $region87: #{inres_forward.5} parent=79 // pred_region
        %v2167 = vld [vmem:[#allocation2] sm:$0xff]
        %v2168 = vld [vmem:[#allocation2 + $0x8] sm:$0xff]
        %v2169 = vld [vmem:[#allocation2 + $0x10] sm:$0xff]
        %v2170 = vld [vmem:[#allocation2 + $0x18] sm:$0xff]
        %v2171 = vld [vmem:[#allocation2 + $0x20] sm:$0xff]
        %v2172 = vld [vmem:[#allocation2 + $0x28] sm:$0xff]
        %v2173 = vld [vmem:[#allocation2 + $0x30] sm:$0xff]
        %v2174 = vld [vmem:[#allocation2 + $0x38] sm:$0xff]
        %v2175 = vld [vmem:[#allocation2 + $0x40] sm:$0xff]
        %v2176 = vld [vmem:[#allocation2 + $0x48] sm:$0xff]
        %v2177 = vld [vmem:[#allocation2 + $0x50] sm:$0xff]
        %v2178 = vld [vmem:[#allocation2 + $0x58] sm:$0xff]
        %v2179 = vld [vmem:[#allocation2 + $0x60] sm:$0xff]
        %v2180 = vld [vmem:[#allocation2 + $0x68] sm:$0xff]
        %v2181 = vld [vmem:[#allocation2 + $0x70] sm:$0xff]
        %v2182 = vld [vmem:[#allocation2 + $0x78] sm:$0xff]
        %v2183 = vld [vmem:[%s2] sm:$0x1]
        %v2185 = vlaneseq
        %v2186 = vshrl.u32 %v2185, 7
        %v2187 = vsub.s32 0, %v2186
        %v2188 = vrot.slane %v2183, %v2187
        %v2190 = vadd.f32 %v2167, %v2188
        %v2191 = vadd.f32 %v2168, %v2188
        %v2192 = vadd.f32 %v2169, %v2188
        %v2193 = vadd.f32 %v2170, %v2188
        %v2194 = vadd.f32 %v2171, %v2188
        %v2195 = vadd.f32 %v2172, %v2188
        %v2196 = vadd.f32 %v2173, %v2188
        %v2197 = vadd.f32 %v2174, %v2188
        %v2198 = vadd.f32 %v2175, %v2188
        %v2199 = vadd.f32 %v2176, %v2188
        %v2200 = vadd.f32 %v2177, %v2188
        %v2201 = vadd.f32 %v2178, %v2188
        %v2202 = vadd.f32 %v2179, %v2188
        %v2203 = vadd.f32 %v2180, %v2188
        %v2204 = vadd.f32 %v2181, %v2188
        %v2205 = vadd.f32 %v2182, %v2188
        %2206 = vmatprep.subr.mxu0 0.0
        %2207 = vmatpush1.msra.mxu0 %v2190
        %2208 = vmatprep.subr.mxu0 0.0
        %2209 = vmatpush1.msra.mxu0 %v2191
        %2210 = vmatprep.subr.mxu0 0.0
        %2211 = vmatpush1.msra.mxu0 %v2192
        %2212 = vmatprep.subr.mxu0 0.0
        %2213 = vmatpush1.msra.mxu0 %v2193
        %2214 = vmatprep.subr.mxu0 0.0
        %2215 = vmatpush1.msra.mxu0 %v2194
        %2216 = vmatprep.subr.mxu0 0.0
        %2217 = vmatpush1.msra.mxu0 %v2195
        %2218 = vmatprep.subr.mxu0 0.0
        %2219 = vmatpush1.msra.mxu0 %v2196
        %2220 = vmatprep.subr.mxu0 0.0
        %2221 = vmatpush1.msra.mxu0 %v2197
        %2222 = vmatprep.subr.mxu0 0.0
        %2223 = vmatpush1.msra.mxu0 %v2198
        %2224 = vmatprep.subr.mxu0 0.0
        %2225 = vmatpush1.msra.mxu0 %v2199
        %2226 = vmatprep.subr.mxu0 0.0
        %2227 = vmatpush1.msra.mxu0 %v2200
        %2228 = vmatprep.subr.mxu0 0.0
        %2229 = vmatpush1.msra.mxu0 %v2201
        %2230 = vmatprep.subr.mxu0 0.0
        %2231 = vmatpush1.msra.mxu0 %v2202
        %2232 = vmatprep.subr.mxu0 0.0
        %2233 = vmatpush1.msra.mxu0 %v2203
        %2234 = vmatprep.subr.mxu0 0.0
        %2235 = vmatpush1.msra.mxu0 %v2204
        %2236 = vmatprep.subr.mxu0 0.0
        %2237 = vmatpush1.msra.mxu0 %v2205
        %2238 = vmatprep.subr.mxu0 0.0
        %2239 = vmatpush1.msra.mxu0 0.0
        %2240 = vmatprep.subr.mxu0 0.0
        %2241 = vmatpush1.msra.mxu0 0.0
        %2242 = vmatprep.subr.mxu0 0.0
        %2243 = vmatpush1.msra.mxu0 0.0
        %2244 = vmatprep.subr.mxu0 0.0
        %2245 = vmatpush1.msra.mxu0 0.0
        %2246 = vmatprep.subr.mxu0 0.0
        %2247 = vmatpush1.msra.mxu0 0.0
        %2248 = vmatprep.subr.mxu0 0.0
        %2249 = vmatpush1.msra.mxu0 0.0
        %2250 = vmatprep.subr.mxu0 0.0
        %2251 = vmatpush1.msra.mxu0 0.0
        %2252 = vmatprep.subr.mxu0 0.0
        %2253 = vmatpush1.msra.mxu0 0.0
        %2254 = vmatprep.subr.mxu0 0.0
        %2255 = vmatpush1.msra.mxu0 0.0
        %2256 = vmatprep.subr.mxu0 0.0
        %2257 = vmatpush1.msra.mxu0 0.0
        %2258 = vmatprep.subr.mxu0 0.0
        %2259 = vmatpush1.msra.mxu0 0.0
        %2260 = vmatprep.subr.mxu0 0.0
        %2261 = vmatpush1.msra.mxu0 0.0
        %2262 = vmatprep.subr.mxu0 0.0
        %2263 = vmatpush1.msra.mxu0 0.0
        %2264 = vmatprep.subr.mxu0 0.0
        %2265 = vmatpush1.msra.mxu0 0.0
        %2266 = vmatprep.subr.mxu0 0.0
        %2267 = vmatpush1.msra.mxu0 0.0
        %2268 = vmatprep.subr.mxu0 0.0
        %2269 = vmatpush1.msra.mxu0 0.0
        %2270 = vmatprep.mubr.f32.mxu0 0.0
        %2271 = vmatmul.mubr.f32.gmra.mrb[0].mxu0 1.0
        %v2272 = vpop.f32.mrb[0].mxu0
        %v2273 = vadd.f32 0.0, %v2272
        %v2274 = vpop.f32.mrb[0].mxu0
        %2275 = vdwg.mxu0
        %v2276 = vmul.f32 %v2190, %v2190
        %v2277 = vmul.f32 %v2191, %v2191
        %v2278 = vmul.f32 %v2192, %v2192
        %v2279 = vmul.f32 %v2193, %v2193
        %v2280 = vmul.f32 %v2194, %v2194
        %v2281 = vmul.f32 %v2195, %v2195
        %v2282 = vmul.f32 %v2196, %v2196
        %v2283 = vmul.f32 %v2197, %v2197
        %v2284 = vmul.f32 %v2198, %v2198
        %v2285 = vmul.f32 %v2199, %v2199
        %v2286 = vmul.f32 %v2200, %v2200
        %v2287 = vmul.f32 %v2201, %v2201
        %v2288 = vmul.f32 %v2202, %v2202
        %v2289 = vmul.f32 %v2203, %v2203
        %v2290 = vmul.f32 %v2204, %v2204
        %v2291 = vmul.f32 %v2205, %v2205
        %2292 = vmatprep.subr.mxu0 0.0
        %2293 = vmatpush1.msra.mxu0 %v2276
        %2294 = vmatprep.subr.mxu0 0.0
        %2295 = vmatpush1.msra.mxu0 %v2277
        %2296 = vmatprep.subr.mxu0 0.0
        %2297 = vmatpush1.msra.mxu0 %v2278
        %2298 = vmatprep.subr.mxu0 0.0
        %2299 = vmatpush1.msra.mxu0 %v2279
        %2300 = vmatprep.subr.mxu0 0.0
        %2301 = vmatpush1.msra.mxu0 %v2280
        %2302 = vmatprep.subr.mxu0 0.0
        %2303 = vmatpush1.msra.mxu0 %v2281
        %2304 = vmatprep.subr.mxu0 0.0
        %2305 = vmatpush1.msra.mxu0 %v2282
        %2306 = vmatprep.subr.mxu0 0.0
        %2307 = vmatpush1.msra.mxu0 %v2283
        %2308 = vmatprep.subr.mxu0 0.0
        %2309 = vmatpush1.msra.mxu0 %v2284
        %2310 = vmatprep.subr.mxu0 0.0
        %2311 = vmatpush1.msra.mxu0 %v2285
        %2312 = vmatprep.subr.mxu0 0.0
        %2313 = vmatpush1.msra.mxu0 %v2286
        %2314 = vmatprep.subr.mxu0 0.0
        %2315 = vmatpush1.msra.mxu0 %v2287
        %2316 = vmatprep.subr.mxu0 0.0
        %2317 = vmatpush1.msra.mxu0 %v2288
        %2318 = vmatprep.subr.mxu0 0.0
        %2319 = vmatpush1.msra.mxu0 %v2289
        %2320 = vmatprep.subr.mxu0 0.0
        %2321 = vmatpush1.msra.mxu0 %v2290
        %2322 = vmatprep.subr.mxu0 0.0
        %2323 = vmatpush1.msra.mxu0 %v2291
        %2324 = vmatprep.subr.mxu0 0.0
        %2325 = vmatpush1.msra.mxu0 0.0
        %2326 = vmatprep.subr.mxu0 0.0
        %2327 = vmatpush1.msra.mxu0 0.0
        %2328 = vmatprep.subr.mxu0 0.0
        %2329 = vmatpush1.msra.mxu0 0.0
        %2330 = vmatprep.subr.mxu0 0.0
        %2331 = vmatpush1.msra.mxu0 0.0
        %2332 = vmatprep.subr.mxu0 0.0
        %2333 = vmatpush1.msra.mxu0 0.0
        %2334 = vmatprep.subr.mxu0 0.0
        %2335 = vmatpush1.msra.mxu0 0.0
        %2336 = vmatprep.subr.mxu0 0.0
        %2337 = vmatpush1.msra.mxu0 0.0
        %2338 = vmatprep.subr.mxu0 0.0
        %2339 = vmatpush1.msra.mxu0 0.0
        %2340 = vmatprep.subr.mxu0 0.0
        %2341 = vmatpush1.msra.mxu0 0.0
        %2342 = vmatprep.subr.mxu0 0.0
        %2343 = vmatpush1.msra.mxu0 0.0
        %2344 = vmatprep.subr.mxu0 0.0
        %2345 = vmatpush1.msra.mxu0 0.0
        %2346 = vmatprep.subr.mxu0 0.0
        %2347 = vmatpush1.msra.mxu0 0.0
        %2348 = vmatprep.subr.mxu0 0.0
        %2349 = vmatpush1.msra.mxu0 0.0
        %2350 = vmatprep.subr.mxu0 0.0
        %2351 = vmatpush1.msra.mxu0 0.0
        %2352 = vmatprep.subr.mxu0 0.0
        %2353 = vmatpush1.msra.mxu0 0.0
        %2354 = vmatprep.subr.mxu0 0.0
        %2355 = vmatpush1.msra.mxu0 0.0
        %2356 = vmatprep.mubr.f32.mxu0 0.0
        %2357 = vmatmul.mubr.f32.gmra.mrb[0].mxu0 1.0
        %v2358 = vpop.f32.mrb[0].mxu0
        %v2359 = vadd.f32 0.0, %v2358
        %v2360 = vpop.f32.mrb[0].mxu0
        %2361 = vdwg.mxu0
        %v2362 = vld [vmem:[%s5] sm:$0xff]
        %v2363 = vld [vmem:[%s5 + $0x8] sm:$0xff]
        %v2364 = vld [vmem:[%s5 + $0x10] sm:$0xff]
        %v2365 = vld [vmem:[%s5 + $0x18] sm:$0xff]
        %v2366 = vld [vmem:[%s5 + $0x20] sm:$0xff]
        %v2367 = vld [vmem:[%s5 + $0x28] sm:$0xff]
        %v2368 = vld [vmem:[%s5 + $0x30] sm:$0xff]
        %v2369 = vld [vmem:[%s5 + $0x38] sm:$0xff]
        %v2370 = vld [vmem:[%s5 + $0x40] sm:$0xff]
        %v2371 = vld [vmem:[%s5 + $0x48] sm:$0xff]
        %v2372 = vld [vmem:[%s5 + $0x50] sm:$0xff]
        %v2373 = vld [vmem:[%s5 + $0x58] sm:$0xff]
        %v2374 = vld [vmem:[%s5 + $0x60] sm:$0xff]
        %v2375 = vld [vmem:[%s5 + $0x68] sm:$0xff]
        %v2376 = vld [vmem:[%s5 + $0x70] sm:$0xff]
        %v2377 = vld [vmem:[%s5 + $0x78] sm:$0xff]
        %2378 = vmatprep.subr.mxu0 0.0
        %2379 = vmatpush1.msra.mxu0 %v2362
        %2380 = vmatprep.subr.mxu0 0.0
        %2381 = vmatpush1.msra.mxu0 %v2363
        %2382 = vmatprep.subr.mxu0 0.0
        %2383 = vmatpush1.msra.mxu0 %v2364
        %2384 = vmatprep.subr.mxu0 0.0
        %2385 = vmatpush1.msra.mxu0 %v2365
        %2386 = vmatprep.subr.mxu0 0.0
        %2387 = vmatpush1.msra.mxu0 %v2366
        %2388 = vmatprep.subr.mxu0 0.0
        %2389 = vmatpush1.msra.mxu0 %v2367
        %2390 = vmatprep.subr.mxu0 0.0
        %2391 = vmatpush1.msra.mxu0 %v2368
        %2392 = vmatprep.subr.mxu0 0.0
        %2393 = vmatpush1.msra.mxu0 %v2369
        %2394 = vmatprep.subr.mxu0 0.0
        %2395 = vmatpush1.msra.mxu0 %v2370
        %2396 = vmatprep.subr.mxu0 0.0
        %2397 = vmatpush1.msra.mxu0 %v2371
        %2398 = vmatprep.subr.mxu0 0.0
        %2399 = vmatpush1.msra.mxu0 %v2372
        %2400 = vmatprep.subr.mxu0 0.0
        %2401 = vmatpush1.msra.mxu0 %v2373
        %2402 = vmatprep.subr.mxu0 0.0
        %2403 = vmatpush1.msra.mxu0 %v2374
        %2404 = vmatprep.subr.mxu0 0.0
        %2405 = vmatpush1.msra.mxu0 %v2375
        %2406 = vmatprep.subr.mxu0 0.0
        %2407 = vmatpush1.msra.mxu0 %v2376
        %2408 = vmatprep.subr.mxu0 0.0
        %2409 = vmatpush1.msra.mxu0 %v2377
        %2410 = vmatprep.subr.mxu0 0.0
        %2411 = vmatpush1.msra.mxu0 0.0
        %2412 = vmatprep.subr.mxu0 0.0
        %2413 = vmatpush1.msra.mxu0 0.0
        %2414 = vmatprep.subr.mxu0 0.0
        %2415 = vmatpush1.msra.mxu0 0.0
        %2416 = vmatprep.subr.mxu0 0.0
        %2417 = vmatpush1.msra.mxu0 0.0
        %2418 = vmatprep.subr.mxu0 0.0
        %2419 = vmatpush1.msra.mxu0 0.0
        %2420 = vmatprep.subr.mxu0 0.0
        %2421 = vmatpush1.msra.mxu0 0.0
        %2422 = vmatprep.subr.mxu0 0.0
        %2423 = vmatpush1.msra.mxu0 0.0
        %2424 = vmatprep.subr.mxu0 0.0
        %2425 = vmatpush1.msra.mxu0 0.0
        %2426 = vmatprep.subr.mxu0 0.0
        %2427 = vmatpush1.msra.mxu0 0.0
        %2428 = vmatprep.subr.mxu0 0.0
        %2429 = vmatpush1.msra.mxu0 0.0
        %2430 = vmatprep.subr.mxu0 0.0
        %2431 = vmatpush1.msra.mxu0 0.0
        %2432 = vmatprep.subr.mxu0 0.0
        %2433 = vmatpush1.msra.mxu0 0.0
        %2434 = vmatprep.subr.mxu0 0.0
        %2435 = vmatpush1.msra.mxu0 0.0
        %2436 = vmatprep.subr.mxu0 0.0
        %2437 = vmatpush1.msra.mxu0 0.0
        %2438 = vmatprep.subr.mxu0 0.0
        %2439 = vmatpush1.msra.mxu0 0.0
        %2440 = vmatprep.subr.mxu0 0.0
        %2441 = vmatpush1.msra.mxu0 0.0
        %2442 = vmatprep.mubr.f32.mxu0 0.0
        %2443 = vmatmul.mubr.f32.gmra.mrb[0].mxu0 %v2273
        %v2444 = vpop.f32.mrb[0].mxu0
        %v2445 = vadd.f32 0.0, %v2444
        %v2446 = vpop.f32.mrb[0].mxu0
        %2447 = vdwg.mxu0
        %v2448 = vmul.f32 %v2445, 0.0009765625
        %2449 = vmatprep.subr.mxu0 0.0
        %2450 = vmatpush1.msra.mxu0 %v2362
        %2451 = vmatprep.subr.mxu0 0.0
        %2452 = vmatpush1.msra.mxu0 %v2363
        %2453 = vmatprep.subr.mxu0 0.0
        %2454 = vmatpush1.msra.mxu0 %v2364
        %2455 = vmatprep.subr.mxu0 0.0
        %2456 = vmatpush1.msra.mxu0 %v2365
        %2457 = vmatprep.subr.mxu0 0.0
        %2458 = vmatpush1.msra.mxu0 %v2366
        %2459 = vmatprep.subr.mxu0 0.0
        %2460 = vmatpush1.msra.mxu0 %v2367
        %2461 = vmatprep.subr.mxu0 0.0
        %2462 = vmatpush1.msra.mxu0 %v2368
        %2463 = vmatprep.subr.mxu0 0.0
        %2464 = vmatpush1.msra.mxu0 %v2369
        %2465 = vmatprep.subr.mxu0 0.0
        %2466 = vmatpush1.msra.mxu0 %v2370
        %2467 = vmatprep.subr.mxu0 0.0
        %2468 = vmatpush1.msra.mxu0 %v2371
        %2469 = vmatprep.subr.mxu0 0.0
        %2470 = vmatpush1.msra.mxu0 %v2372
        %2471 = vmatprep.subr.mxu0 0.0
        %2472 = vmatpush1.msra.mxu0 %v2373
        %2473 = vmatprep.subr.mxu0 0.0
        %2474 = vmatpush1.msra.mxu0 %v2374
        %2475 = vmatprep.subr.mxu0 0.0
        %2476 = vmatpush1.msra.mxu0 %v2375
        %2477 = vmatprep.subr.mxu0 0.0
        %2478 = vmatpush1.msra.mxu0 %v2376
        %2479 = vmatprep.subr.mxu0 0.0
        %2480 = vmatpush1.msra.mxu0 %v2377
        %2481 = vmatprep.subr.mxu0 0.0
        %2482 = vmatpush1.msra.mxu0 0.0
        %2483 = vmatprep.subr.mxu0 0.0
        %2484 = vmatpush1.msra.mxu0 0.0
        %2485 = vmatprep.subr.mxu0 0.0
        %2486 = vmatpush1.msra.mxu0 0.0
        %2487 = vmatprep.subr.mxu0 0.0
        %2488 = vmatpush1.msra.mxu0 0.0
        %2489 = vmatprep.subr.mxu0 0.0
        %2490 = vmatpush1.msra.mxu0 0.0
        %2491 = vmatprep.subr.mxu0 0.0
        %2492 = vmatpush1.msra.mxu0 0.0
        %2493 = vmatprep.subr.mxu0 0.0
        %2494 = vmatpush1.msra.mxu0 0.0
        %2495 = vmatprep.subr.mxu0 0.0
        %2496 = vmatpush1.msra.mxu0 0.0
        %2497 = vmatprep.subr.mxu0 0.0
        %2498 = vmatpush1.msra.mxu0 0.0
        %2499 = vmatprep.subr.mxu0 0.0
        %2500 = vmatpush1.msra.mxu0 0.0
        %2501 = vmatprep.subr.mxu0 0.0
        %2502 = vmatpush1.msra.mxu0 0.0
        %2503 = vmatprep.subr.mxu0 0.0
        %2504 = vmatpush1.msra.mxu0 0.0
        %2505 = vmatprep.subr.mxu0 0.0
        %2506 = vmatpush1.msra.mxu0 0.0
        %2507 = vmatprep.subr.mxu0 0.0
        %2508 = vmatpush1.msra.mxu0 0.0
        %2509 = vmatprep.subr.mxu0 0.0
        %2510 = vmatpush1.msra.mxu0 0.0
        %2511 = vmatprep.subr.mxu0 0.0
        %2512 = vmatpush1.msra.mxu0 0.0
        %2513 = vmatprep.mubr.f32.mxu0 0.0
        %2514 = vmatmul.mubr.f32.gmra.mrb[0].mxu0 %v2359
        %v2515 = vpop.f32.mrb[0].mxu0
        %v2516 = vadd.f32 0.0, %v2515
        %v2517 = vpop.f32.mrb[0].mxu0
        %2518 = vdwg.mxu0
        %v2519 = vmul.f32 %v2516, 0.0009765625
        %v2520 = vmul.f32 %v2448, %v2448
        %v2521 = vsub.f32 %v2519, %v2520
        %v2522 = vlaneseq
        %v2523 = vshrl.u32 %v2522, 7
        %v2524 = vsub.s32 0, %v2523
        %v2525 = vrot.slane %v2448, %v2524
        %v2526 = vsub.f32 %v2190, %v2525
        %v2527 = vsub.f32 %v2191, %v2525
        %v2528 = vsub.f32 %v2192, %v2525
        %v2529 = vsub.f32 %v2193, %v2525
        %v2530 = vsub.f32 %v2194, %v2525
        %v2531 = vsub.f32 %v2195, %v2525
        %v2532 = vsub.f32 %v2196, %v2525
        %v2533 = vsub.f32 %v2197, %v2525
        %v2534 = vsub.f32 %v2198, %v2525
        %v2535 = vsub.f32 %v2199, %v2525
        %v2536 = vsub.f32 %v2200, %v2525
        %v2537 = vsub.f32 %v2201, %v2525
        %v2538 = vsub.f32 %v2202, %v2525
        %v2539 = vsub.f32 %v2203, %v2525
        %v2540 = vsub.f32 %v2204, %v2525
        %v2541 = vsub.f32 %v2205, %v2525
        %v2542 = vadd.f32 %v2521, 1e-05
        %v2543 = vrsqrt.pop %v2542
        %v2544 = vlaneseq
        %v2545 = vshrl.u32 %v2544, 7
        %v2546 = vsub.s32 0, %v2545
        %v2547 = vrot.slane %v2543, %v2546
        %v2548 = vmul.f32 %v2526, %v2547
        %v2549 = vmul.f32 %v2527, %v2547
        %v2550 = vmul.f32 %v2528, %v2547
        %v2551 = vmul.f32 %v2529, %v2547
        %v2552 = vmul.f32 %v2530, %v2547
        %v2553 = vmul.f32 %v2531, %v2547
        %v2554 = vmul.f32 %v2532, %v2547
        %v2555 = vmul.f32 %v2533, %v2547
        %v2556 = vmul.f32 %v2534, %v2547
        %v2557 = vmul.f32 %v2535, %v2547
        %v2558 = vmul.f32 %v2536, %v2547
        %v2559 = vmul.f32 %v2537, %v2547
        %v2560 = vmul.f32 %v2538, %v2547
        %v2561 = vmul.f32 %v2539, %v2547
        %v2562 = vmul.f32 %v2540, %v2547
        %v2563 = vmul.f32 %v2541, %v2547
        %v2564 = vld [vmem:[%s3] sm:$0x1]
        %v2566 = vlaneseq
        %v2567 = vshrl.u32 %v2566, 7
        %v2568 = vsub.s32 0, %v2567
        %v2569 = vrot.slane %v2564, %v2568
        %v2571 = vmul.f32 %v2548, %v2569
        %v2572 = vmul.f32 %v2549, %v2569
        %v2573 = vmul.f32 %v2550, %v2569
        %v2574 = vmul.f32 %v2551, %v2569
        %v2575 = vmul.f32 %v2552, %v2569
        %v2576 = vmul.f32 %v2553, %v2569
        %v2577 = vmul.f32 %v2554, %v2569
        %v2578 = vmul.f32 %v2555, %v2569
        %v2579 = vmul.f32 %v2556, %v2569
        %v2580 = vmul.f32 %v2557, %v2569
        %v2581 = vmul.f32 %v2558, %v2569
        %v2582 = vmul.f32 %v2559, %v2569
        %v2583 = vmul.f32 %v2560, %v2569
        %v2584 = vmul.f32 %v2561, %v2569
        %v2585 = vmul.f32 %v2562, %v2569
        %v2586 = vmul.f32 %v2563, %v2569
        %v2587 = vld [vmem:[%s4] sm:$0x1]
        %v2589 = vlaneseq
        %v2590 = vshrl.u32 %v2589, 7
        %v2591 = vsub.s32 0, %v2590
        %v2592 = vrot.slane %v2587, %v2591
        %v2594 = vadd.f32 %v2571, %v2592
        %v2595 = vadd.f32 %v2572, %v2592
        %v2596 = vadd.f32 %v2573, %v2592
        %v2597 = vadd.f32 %v2574, %v2592
        %v2598 = vadd.f32 %v2575, %v2592
        %v2599 = vadd.f32 %v2576, %v2592
        %v2600 = vadd.f32 %v2577, %v2592
        %v2601 = vadd.f32 %v2578, %v2592
        %v2602 = vadd.f32 %v2579, %v2592
        %v2603 = vadd.f32 %v2580, %v2592
        %v2604 = vadd.f32 %v2581, %v2592
        %v2605 = vadd.f32 %v2582, %v2592
        %v2606 = vadd.f32 %v2583, %v2592
        %v2607 = vadd.f32 %v2584, %v2592
        %v2608 = vadd.f32 %v2585, %v2592
        %v2609 = vadd.f32 %v2586, %v2592
        %v2610 = vld [vmem:[%s6] sm:$0x3]
        %2611 = vmatprep.subr.mxu0 0.0
        %2612 = vmatpush1.msra.mxu0 %v2594
        %2613 = vmatprep.subr.mxu0 0.0
        %2614 = vmatpush1.msra.mxu0 %v2595
        %2615 = vmatprep.subr.mxu0 0.0
        %2616 = vmatpush1.msra.mxu0 %v2596
        %2617 = vmatprep.subr.mxu0 0.0
        %2618 = vmatpush1.msra.mxu0 %v2597
        %2619 = vmatprep.subr.mxu0 0.0
        %2620 = vmatpush1.msra.mxu0 %v2598
        %2621 = vmatprep.subr.mxu0 0.0
        %2622 = vmatpush1.msra.mxu0 %v2599
        %2623 = vmatprep.subr.mxu0 0.0
        %2624 = vmatpush1.msra.mxu0 %v2600
        %2625 = vmatprep.subr.mxu0 0.0
        %2626 = vmatpush1.msra.mxu0 %v2601
        %2627 = vmatprep.subr.mxu0 0.0
        %2628 = vmatpush1.msra.mxu0 %v2602
        %2629 = vmatprep.subr.mxu0 0.0
        %2630 = vmatpush1.msra.mxu0 %v2603
        %2631 = vmatprep.subr.mxu0 0.0
        %2632 = vmatpush1.msra.mxu0 %v2604
        %2633 = vmatprep.subr.mxu0 0.0
        %2634 = vmatpush1.msra.mxu0 %v2605
        %2635 = vmatprep.subr.mxu0 0.0
        %2636 = vmatpush1.msra.mxu0 %v2606
        %2637 = vmatprep.subr.mxu0 0.0
        %2638 = vmatpush1.msra.mxu0 %v2607
        %2639 = vmatprep.subr.mxu0 0.0
        %2640 = vmatpush1.msra.mxu0 %v2608
        %2641 = vmatprep.subr.mxu0 0.0
        %2642 = vmatpush1.msra.mxu0 %v2609
        %2643 = vmatprep.subr.mxu0 0.0
        %2644 = vmatpush1.msra.mxu0 0.0
        %2645 = vmatprep.subr.mxu0 0.0
        %2646 = vmatpush1.msra.mxu0 0.0
        %2647 = vmatprep.subr.mxu0 0.0
        %2648 = vmatpush1.msra.mxu0 0.0
        %2649 = vmatprep.subr.mxu0 0.0
        %2650 = vmatpush1.msra.mxu0 0.0
        %2651 = vmatprep.subr.mxu0 0.0
        %2652 = vmatpush1.msra.mxu0 0.0
        %2653 = vmatprep.subr.mxu0 0.0
        %2654 = vmatpush1.msra.mxu0 0.0
        %2655 = vmatprep.subr.mxu0 0.0
        %2656 = vmatpush1.msra.mxu0 0.0
        %2657 = vmatprep.subr.mxu0 0.0
        %2658 = vmatpush1.msra.mxu0 0.0
        %2659 = vmatprep.subr.mxu0 0.0
        %2660 = vmatpush1.msra.mxu0 0.0
        %2661 = vmatprep.subr.mxu0 0.0
        %2662 = vmatpush1.msra.mxu0 0.0
        %2663 = vmatprep.subr.mxu0 0.0
        %2664 = vmatpush1.msra.mxu0 0.0
        %2665 = vmatprep.subr.mxu0 0.0
        %2666 = vmatpush1.msra.mxu0 0.0
        %2667 = vmatprep.subr.mxu0 0.0
        %2668 = vmatpush1.msra.mxu0 0.0
        %2669 = vmatprep.subr.mxu0 0.0
        %2670 = vmatpush1.msra.mxu0 0.0
        %2671 = vmatprep.subr.mxu0 0.0
        %2672 = vmatpush1.msra.mxu0 0.0
        %2673 = vmatprep.subr.mxu0 0.0
        %2674 = vmatpush1.msra.mxu0 0.0
        %2675 = vmatprep.mubr.f32.mxu0 0.0
        %2676 = vmatmul.mubr.f32.gmra.mrb[0].mxu0 %v2610
        %v2677 = vpop.f32.mrb[0].mxu0
        %v2678 = vadd.f32 0.0, %v2677
        %v2679 = vpop.f32.mrb[0].mxu0
        %2680 = vdwg.mxu0
        %v2681 = vld [vmem:[%s8] sm:$0xff]
        %v2682 = vld [vmem:[%s8 + $0x8] sm:$0xff]
        %v2683 = vld [vmem:[%s8 + $0x10] sm:$0xff]
        %v2684 = vld [vmem:[%s8 + $0x18] sm:$0xff]
        %v2685 = vld [vmem:[%s8 + $0x20] sm:$0xff]
        %v2686 = vld [vmem:[%s8 + $0x28] sm:$0xff]
        %v2687 = vld [vmem:[%s8 + $0x30] sm:$0xff]
        %v2688 = vld [vmem:[%s8 + $0x38] sm:$0xff]
        %v2689 = vld [vmem:[%s8 + $0x40] sm:$0xff]
        %v2690 = vld [vmem:[%s8 + $0x48] sm:$0xff]
        %v2691 = vld [vmem:[%s8 + $0x50] sm:$0xff]
        %v2692 = vld [vmem:[%s8 + $0x58] sm:$0xff]
        %v2693 = vld [vmem:[%s8 + $0x60] sm:$0xff]
        %v2694 = vld [vmem:[%s8 + $0x68] sm:$0xff]
        %v2695 = vld [vmem:[%s8 + $0x70] sm:$0xff]
        %v2696 = vld [vmem:[%s8 + $0x78] sm:$0xff]
        %2697 = vmatprep.subr.mxu0 0.0
        %2698 = vmatpush1.msra.mxu0 %v2681
        %2699 = vmatprep.subr.mxu0 0.0
        %2700 = vmatpush1.msra.mxu0 %v2682
        %2701 = vmatprep.subr.mxu0 0.0
        %2702 = vmatpush1.msra.mxu0 %v2683
        %2703 = vmatprep.subr.mxu0 0.0
        %2704 = vmatpush1.msra.mxu0 %v2684
        %2705 = vmatprep.subr.mxu0 0.0
        %2706 = vmatpush1.msra.mxu0 %v2685
        %2707 = vmatprep.subr.mxu0 0.0
        %2708 = vmatpush1.msra.mxu0 %v2686
        %2709 = vmatprep.subr.mxu0 0.0
        %2710 = vmatpush1.msra.mxu0 %v2687
        %2711 = vmatprep.subr.mxu0 0.0
        %2712 = vmatpush1.msra.mxu0 %v2688
        %2713 = vmatprep.subr.mxu0 0.0
        %2714 = vmatpush1.msra.mxu0 %v2689
        %2715 = vmatprep.subr.mxu0 0.0
        %2716 = vmatpush1.msra.mxu0 %v2690
        %2717 = vmatprep.subr.mxu0 0.0
        %2718 = vmatpush1.msra.mxu0 %v2691
        %2719 = vmatprep.subr.mxu0 0.0
        %2720 = vmatpush1.msra.mxu0 %v2692
        %2721 = vmatprep.subr.mxu0 0.0
        %2722 = vmatpush1.msra.mxu0 %v2693
        %2723 = vmatprep.subr.mxu0 0.0
        %2724 = vmatpush1.msra.mxu0 %v2694
        %2725 = vmatprep.subr.mxu0 0.0
        %2726 = vmatpush1.msra.mxu0 %v2695
        %2727 = vmatprep.subr.mxu0 0.0
        %2728 = vmatpush1.msra.mxu0 %v2696
        %2729 = vmatprep.subr.mxu0 0.0
        %2730 = vmatpush1.msra.mxu0 0.0
        %2731 = vmatprep.subr.mxu0 0.0
        %2732 = vmatpush1.msra.mxu0 0.0
        %2733 = vmatprep.subr.mxu0 0.0
        %2734 = vmatpush1.msra.mxu0 0.0
        %2735 = vmatprep.subr.mxu0 0.0
        %2736 = vmatpush1.msra.mxu0 0.0
        %2737 = vmatprep.subr.mxu0 0.0
        %2738 = vmatpush1.msra.mxu0 0.0
        %2739 = vmatprep.subr.mxu0 0.0
        %2740 = vmatpush1.msra.mxu0 0.0
        %2741 = vmatprep.subr.mxu0 0.0
        %2742 = vmatpush1.msra.mxu0 0.0
        %2743 = vmatprep.subr.mxu0 0.0
        %2744 = vmatpush1.msra.mxu0 0.0
        %2745 = vmatprep.subr.mxu0 0.0
        %2746 = vmatpush1.msra.mxu0 0.0
        %2747 = vmatprep.subr.mxu0 0.0
        %2748 = vmatpush1.msra.mxu0 0.0
        %2749 = vmatprep.subr.mxu0 0.0
        %2750 = vmatpush1.msra.mxu0 0.0
        %2751 = vmatprep.subr.mxu0 0.0
        %2752 = vmatpush1.msra.mxu0 0.0
        %2753 = vmatprep.subr.mxu0 0.0
        %2754 = vmatpush1.msra.mxu0 0.0
        %2755 = vmatprep.subr.mxu0 0.0
        %2756 = vmatpush1.msra.mxu0 0.0
        %2757 = vmatprep.subr.mxu0 0.0
        %2758 = vmatpush1.msra.mxu0 0.0
        %2759 = vmatprep.subr.mxu0 0.0
        %2760 = vmatpush1.msra.mxu0 0.0
        %2761 = vmatprep.mubr.f32.mxu0 0.0
        %2762 = vmatmul.mubr.f32.gmra.mrb[0].mxu0 %v2678
        %v2763 = vpop.f32.mrb[0].mxu0
        %v2764 = vadd.f32 0.0, %v2763
        %v2765 = vpop.f32.mrb[0].mxu0
        %2766 = vdwg.mxu0
        %v2767 = vld [vmem:[%s10] sm:$0x1]
        %v2769 = vlaneseq
        %v2770 = vshrl.u32 %v2769, 7
        %v2771 = vsub.s32 0, %v2770
        %v2772 = vrot.slane %v2767, %v2771
        %v2774 = vmul.f32 %v2764, %v2772
        %vm2775 = vcmask 123904
        %v2776 = vsel %vm2775, %v2774, 0.0
        %2777 = vadd.xlane.f32.xlu0 %v2776
        %v2778 = vpop.xlane.xlu0 %2777
        %v2779 = vld [vmem:[#allocation3] sm:$0x1]
        %v2781 = vlaneseq
        %v2782 = vshrl.u32 %v2781, 7
        %v2783 = vsub.s32 0, %v2782
        %v2784 = vrot.slane %v2779, %v2783
        %v2786 = vadd.f32 %v2778, %v2784
        %v2787 = vmax.f32 %v2786, 0.0
        %v2788 = vld [vmem:[%s12] sm:$0x1]
        %2790 = vset.pattern.permute.xlu0 0
        %2791 = vperm.xlu0 %2790, %v2787
        %v2792 = vpop.permute.xlu0 %2791
        %v2795 = vlaneseq
        %v2796 = vshrl.u32 %v2795, 7
        %v2797 = vsub.s32 0, %v2796
        %v2798 = vrot.slane %v2788, %v2797
        %v2800 = vmul.f32 %v2792, %v2798
        %v2801 = vld [vmem:[%s13] sm:$0x1]
        %v2803 = vlaneseq
        %v2804 = vshrl.u32 %v2803, 7
        %v2805 = vsub.s32 0, %v2804
        %v2806 = vrot.slane %v2801, %v2805
        %v2808 = vadd.f32 %v2800, %v2806
        %v2809 = vxor.u32 %v2808, 2147483648
        %v2810 = vmul.f32 %v2809, 1.442695
        %v2811 = vpow.pop %v2810
        %v2812 = vadd.f32 %v2811, 1.0
        %v2813 = vrcp.pop %v2812
        %v2814 = vmul.f32 1.0, %v2813
        %v2815 = vld [vmem:[%s9] sm:$0xff]
        %v2816 = vld [vmem:[%s9 + $0x8] sm:$0xff]
        %vm2817 = vcmask 130048
        %v2819 = vsel %vm2817, %v2814, 0
        %2821 = vmatprep.subr.mxu0 0.0
        %2822 = vmatpush1.msra.mxu0 %v2815
        %2823 = vmatprep.subr.mxu0 0.0
        %2824 = vmatpush1.msra.mxu0 %v2816
        %2825 = vmatprep.subr.mxu0 0.0
        %2826 = vmatpush1.msra.mxu0 0.0
        %2827 = vmatprep.subr.mxu0 0.0
        %2828 = vmatpush1.msra.mxu0 0.0
        %2829 = vmatprep.subr.mxu0 0.0
        %2830 = vmatpush1.msra.mxu0 0.0
        %2831 = vmatprep.subr.mxu0 0.0
        %2832 = vmatpush1.msra.mxu0 0.0
        %2833 = vmatprep.subr.mxu0 0.0
        %2834 = vmatpush1.msra.mxu0 0.0
        %2835 = vmatprep.subr.mxu0 0.0
        %2836 = vmatpush1.msra.mxu0 0.0
        %2837 = vmatprep.subr.mxu0 0.0
        %2838 = vmatpush1.msra.mxu0 0.0
        %2839 = vmatprep.subr.mxu0 0.0
        %2840 = vmatpush1.msra.mxu0 0.0
        %2841 = vmatprep.subr.mxu0 0.0
        %2842 = vmatpush1.msra.mxu0 0.0
        %2843 = vmatprep.subr.mxu0 0.0
        %2844 = vmatpush1.msra.mxu0 0.0
        %2845 = vmatprep.subr.mxu0 0.0
        %2846 = vmatpush1.msra.mxu0 0.0
        %2847 = vmatprep.subr.mxu0 0.0
        %2848 = vmatpush1.msra.mxu0 0.0
        %2849 = vmatprep.subr.mxu0 0.0
        %2850 = vmatpush1.msra.mxu0 0.0
        %2851 = vmatprep.subr.mxu0 0.0
        %2852 = vmatpush1.msra.mxu0 0.0
        %2853 = vmatprep.subr.mxu0 0.0
        %2854 = vmatpush1.msra.mxu0 0.0
        %2855 = vmatprep.subr.mxu0 0.0
        %2856 = vmatpush1.msra.mxu0 0.0
        %2857 = vmatprep.subr.mxu0 0.0
        %2858 = vmatpush1.msra.mxu0 0.0
        %2859 = vmatprep.subr.mxu0 0.0
        %2860 = vmatpush1.msra.mxu0 0.0
        %2861 = vmatprep.subr.mxu0 0.0
        %2862 = vmatpush1.msra.mxu0 0.0
        %2863 = vmatprep.subr.mxu0 0.0
        %2864 = vmatpush1.msra.mxu0 0.0
        %2865 = vmatprep.subr.mxu0 0.0
        %2866 = vmatpush1.msra.mxu0 0.0
        %2867 = vmatprep.subr.mxu0 0.0
        %2868 = vmatpush1.msra.mxu0 0.0
        %2869 = vmatprep.subr.mxu0 0.0
        %2870 = vmatpush1.msra.mxu0 0.0
        %2871 = vmatprep.subr.mxu0 0.0
        %2872 = vmatpush1.msra.mxu0 0.0
        %2873 = vmatprep.subr.mxu0 0.0
        %2874 = vmatpush1.msra.mxu0 0.0
        %2875 = vmatprep.subr.mxu0 0.0
        %2876 = vmatpush1.msra.mxu0 0.0
        %2877 = vmatprep.subr.mxu0 0.0
        %2878 = vmatpush1.msra.mxu0 0.0
        %2879 = vmatprep.subr.mxu0 0.0
        %2880 = vmatpush1.msra.mxu0 0.0
        %2881 = vmatprep.subr.mxu0 0.0
        %2882 = vmatpush1.msra.mxu0 0.0
        %2883 = vmatprep.subr.mxu0 0.0
        %2884 = vmatpush1.msra.mxu0 0.0
        %2885 = vmatprep.mubr.f32.mxu0 0.0
        %2886 = vmatmul.mubr.f32.gmra.mrb[0].mxu0 %v2819
        %v2887 = vpop.f32.mrb[0].mxu0
        %v2888 = vadd.f32 0.0, %v2887
        %v2889 = vpop.f32.mrb[0].mxu0
        %2890 = vdwg.mxu0
        %v2891 = vld [vmem:[%s7] sm:$0xff]
        %v2892 = vld [vmem:[%s7 + $0x8] sm:$0xff]
        %v2893 = vld [vmem:[%s7 + $0x10] sm:$0xff]
        %v2894 = vld [vmem:[%s7 + $0x18] sm:$0xff]
        %v2895 = vld [vmem:[%s7 + $0x20] sm:$0xff]
        %v2896 = vld [vmem:[%s7 + $0x28] sm:$0xff]
        %v2897 = vld [vmem:[%s7 + $0x30] sm:$0xff]
        %v2898 = vld [vmem:[%s7 + $0x38] sm:$0xff]
        %v2899 = vld [vmem:[%s7 + $0x40] sm:$0xff]
        %v2900 = vld [vmem:[%s7 + $0x48] sm:$0xff]
        %v2901 = vld [vmem:[%s7 + $0x50] sm:$0xff]
        %v2902 = vld [vmem:[%s7 + $0x58] sm:$0xff]
        %v2903 = vld [vmem:[%s7 + $0x60] sm:$0xff]
        %v2904 = vld [vmem:[%s7 + $0x68] sm:$0xff]
        %v2905 = vld [vmem:[%s7 + $0x70] sm:$0xff]
        %v2906 = vld [vmem:[%s7 + $0x78] sm:$0xff]
        %vm2907 = vcmask 15360
        %v2909 = vsel %vm2907, %v2891, 0
        %v2912 = vsel %vm2907, %v2892, 0
        %v2915 = vsel %vm2907, %v2893, 0
        %v2918 = vsel %vm2907, %v2894, 0
        %v2921 = vsel %vm2907, %v2895, 0
        %v2924 = vsel %vm2907, %v2896, 0
        %v2927 = vsel %vm2907, %v2897, 0
        %v2930 = vsel %vm2907, %v2898, 0
        %v2933 = vsel %vm2907, %v2899, 0
        %v2936 = vsel %vm2907, %v2900, 0
        %v2939 = vsel %vm2907, %v2901, 0
        %v2942 = vsel %vm2907, %v2902, 0
        %v2945 = vsel %vm2907, %v2903, 0
        %v2948 = vsel %vm2907, %v2904, 0
        %v2951 = vsel %vm2907, %v2905, 0
        %v2954 = vsel %vm2907, %v2906, 0
        %vm2956 = vcmask 1041408
        %v2958 = vsel %vm2956, %v2888, 0
        %2960 = vmatprep.subr.mxu0 0.0
        %2961 = vmatpush1.msra.mxu0 %v2958
        %2962 = vmatprep.subr.mxu0 0.0
        %2963 = vmatpush1.msra.mxu0 0.0
        %2964 = vmatprep.subr.mxu0 0.0
        %2965 = vmatpush1.msra.mxu0 0.0
        %2966 = vmatprep.subr.mxu0 0.0
        %2967 = vmatpush1.msra.mxu0 0.0
        %2968 = vmatprep.subr.mxu0 0.0
        %2969 = vmatpush1.msra.mxu0 0.0
        %2970 = vmatprep.subr.mxu0 0.0
        %2971 = vmatpush1.msra.mxu0 0.0
        %2972 = vmatprep.subr.mxu0 0.0
        %2973 = vmatpush1.msra.mxu0 0.0
        %2974 = vmatprep.subr.mxu0 0.0
        %2975 = vmatpush1.msra.mxu0 0.0
        %2976 = vmatprep.subr.mxu0 0.0
        %2977 = vmatpush1.msra.mxu0 0.0
        %2978 = vmatprep.subr.mxu0 0.0
        %2979 = vmatpush1.msra.mxu0 0.0
        %2980 = vmatprep.subr.mxu0 0.0
        %2981 = vmatpush1.msra.mxu0 0.0
        %2982 = vmatprep.subr.mxu0 0.0
        %2983 = vmatpush1.msra.mxu0 0.0
        %2984 = vmatprep.subr.mxu0 0.0
        %2985 = vmatpush1.msra.mxu0 0.0
        %2986 = vmatprep.subr.mxu0 0.0
        %2987 = vmatpush1.msra.mxu0 0.0
        %2988 = vmatprep.subr.mxu0 0.0
        %2989 = vmatpush1.msra.mxu0 0.0
        %2990 = vmatprep.subr.mxu0 0.0
        %2991 = vmatpush1.msra.mxu0 0.0
        %2992 = vmatprep.subr.mxu0 0.0
        %2993 = vmatpush1.msra.mxu0 0.0
        %2994 = vmatprep.subr.mxu0 0.0
        %2995 = vmatpush1.msra.mxu0 0.0
        %2996 = vmatprep.subr.mxu0 0.0
        %2997 = vmatpush1.msra.mxu0 0.0
        %2998 = vmatprep.subr.mxu0 0.0
        %2999 = vmatpush1.msra.mxu0 0.0
        %3000 = vmatprep.subr.mxu0 0.0
        %3001 = vmatpush1.msra.mxu0 0.0
        %3002 = vmatprep.subr.mxu0 0.0
        %3003 = vmatpush1.msra.mxu0 0.0
        %3004 = vmatprep.subr.mxu0 0.0
        %3005 = vmatpush1.msra.mxu0 0.0
        %3006 = vmatprep.subr.mxu0 0.0
        %3007 = vmatpush1.msra.mxu0 0.0
        %3008 = vmatprep.subr.mxu0 0.0
        %3009 = vmatpush1.msra.mxu0 0.0
        %3010 = vmatprep.subr.mxu0 0.0
        %3011 = vmatpush1.msra.mxu0 0.0
        %3012 = vmatprep.subr.mxu0 0.0
        %3013 = vmatpush1.msra.mxu0 0.0
        %3014 = vmatprep.subr.mxu0 0.0
        %3015 = vmatpush1.msra.mxu0 0.0
        %3016 = vmatprep.subr.mxu0 0.0
        %3017 = vmatpush1.msra.mxu0 0.0
        %3018 = vmatprep.subr.mxu0 0.0
        %3019 = vmatpush1.msra.mxu0 0.0
        %3020 = vmatprep.subr.mxu0 0.0
        %3021 = vmatpush1.msra.mxu0 0.0
        %3022 = vmatprep.subr.mxu0 0.0
        %3023 = vmatpush1.msra.mxu0 0.0
        %3024 = vmatprep.mubr.f32.mxu0 0.0
        %3025 = vmatmul.mubr.f32.gmra.mrb[0].mxu0 %v2909
        %v3026 = vpop.f32.mrb[0].mxu0
        %v3027 = vadd.f32 0.0, %v3026
        %v3028 = vpop.f32.mrb[0].mxu0
        %3029 = vmatprep.mubr.f32.mxu0 0.0
        %3030 = vmatmul.mubr.f32.gmra.mrb[0].mxu0 %v2912
        %v3031 = vpop.f32.mrb[0].mxu0
        %v3032 = vadd.f32 0.0, %v3031
        %v3033 = vpop.f32.mrb[0].mxu0
        %3034 = vmatprep.mubr.f32.mxu0 0.0
        %3035 = vmatmul.mubr.f32.gmra.mrb[0].mxu0 %v2915
        %v3036 = vpop.f32.mrb[0].mxu0
        %v3037 = vadd.f32 0.0, %v3036
        %v3038 = vpop.f32.mrb[0].mxu0
        %3039 = vmatprep.mubr.f32.mxu0 0.0
        %3040 = vmatmul.mubr.f32.gmra.mrb[0].mxu0 %v2918
        %v3041 = vpop.f32.mrb[0].mxu0
        %v3042 = vadd.f32 0.0, %v3041
        %v3043 = vpop.f32.mrb[0].mxu0
        %3044 = vmatprep.mubr.f32.mxu0 0.0
        %3045 = vmatmul.mubr.f32.gmra.mrb[0].mxu0 %v2921
        %v3046 = vpop.f32.mrb[0].mxu0
        %v3047 = vadd.f32 0.0, %v3046
        %v3048 = vpop.f32.mrb[0].mxu0
        %3049 = vmatprep.mubr.f32.mxu0 0.0
        %3050 = vmatmul.mubr.f32.gmra.mrb[0].mxu0 %v2924
        %v3051 = vpop.f32.mrb[0].mxu0
        %v3052 = vadd.f32 0.0, %v3051
        %v3053 = vpop.f32.mrb[0].mxu0
        %3054 = vmatprep.mubr.f32.mxu0 0.0
        %3055 = vmatmul.mubr.f32.gmra.mrb[0].mxu0 %v2927
        %v3056 = vpop.f32.mrb[0].mxu0
        %v3057 = vadd.f32 0.0, %v3056
        %v3058 = vpop.f32.mrb[0].mxu0
        %3059 = vmatprep.mubr.f32.mxu0 0.0
        %3060 = vmatmul.mubr.f32.gmra.mrb[0].mxu0 %v2930
        %v3061 = vpop.f32.mrb[0].mxu0
        %v3062 = vadd.f32 0.0, %v3061
        %v3063 = vpop.f32.mrb[0].mxu0
        %3064 = vmatprep.mubr.f32.mxu0 0.0
        %3065 = vmatmul.mubr.f32.gmra.mrb[0].mxu0 %v2933
        %v3066 = vpop.f32.mrb[0].mxu0
        %v3067 = vadd.f32 0.0, %v3066
        %v3068 = vpop.f32.mrb[0].mxu0
        %3069 = vmatprep.mubr.f32.mxu0 0.0
        %3070 = vmatmul.mubr.f32.gmra.mrb[0].mxu0 %v2936
        %v3071 = vpop.f32.mrb[0].mxu0
        %v3072 = vadd.f32 0.0, %v3071
        %v3073 = vpop.f32.mrb[0].mxu0
        %3074 = vmatprep.mubr.f32.mxu0 0.0
        %3075 = vmatmul.mubr.f32.gmra.mrb[0].mxu0 %v2939
        %v3076 = vpop.f32.mrb[0].mxu0
        %v3077 = vadd.f32 0.0, %v3076
        %v3078 = vpop.f32.mrb[0].mxu0
        %3079 = vmatprep.mubr.f32.mxu0 0.0
        %3080 = vmatmul.mubr.f32.gmra.mrb[0].mxu0 %v2942
        %v3081 = vpop.f32.mrb[0].mxu0
        %v3082 = vadd.f32 0.0, %v3081
        %v3083 = vpop.f32.mrb[0].mxu0
        %3084 = vmatprep.mubr.f32.mxu0 0.0
        %3085 = vmatmul.mubr.f32.gmra.mrb[0].mxu0 %v2945
        %v3086 = vpop.f32.mrb[0].mxu0
        %v3087 = vadd.f32 0.0, %v3086
        %v3088 = vpop.f32.mrb[0].mxu0
        %3089 = vmatprep.mubr.f32.mxu0 0.0
        %3090 = vmatmul.mubr.f32.gmra.mrb[0].mxu0 %v2948
        %v3091 = vpop.f32.mrb[0].mxu0
        %v3092 = vadd.f32 0.0, %v3091
        %v3093 = vpop.f32.mrb[0].mxu0
        %3094 = vmatprep.mubr.f32.mxu0 0.0
        %3095 = vmatmul.mubr.f32.gmra.mrb[0].mxu0 %v2951
        %v3096 = vpop.f32.mrb[0].mxu0
        %v3097 = vadd.f32 0.0, %v3096
        %v3098 = vpop.f32.mrb[0].mxu0
        %3099 = vmatprep.mubr.f32.mxu0 0.0
        %3100 = vmatmul.mubr.f32.gmra.mrb[0].mxu0 %v2954
        %v3101 = vpop.f32.mrb[0].mxu0
        %v3102 = vadd.f32 0.0, %v3101
        %v3103 = vpop.f32.mrb[0].mxu0
        %3104 = vdwg.mxu0
        %v3105 = vmul.f32 %v2594, %v3027
        %v3106 = vmul.f32 %v2595, %v3032
        %v3107 = vmul.f32 %v2596, %v3037
        %v3108 = vmul.f32 %v2597, %v3042
        %v3109 = vmul.f32 %v2598, %v3047
        %v3110 = vmul.f32 %v2599, %v3052
        %v3111 = vmul.f32 %v2600, %v3057
        %v3112 = vmul.f32 %v2601, %v3062
        %v3113 = vmul.f32 %v2602, %v3067
        %v3114 = vmul.f32 %v2603, %v3072
        %v3115 = vmul.f32 %v2604, %v3077
        %v3116 = vmul.f32 %v2605, %v3082
        %v3117 = vmul.f32 %v2606, %v3087
        %v3118 = vmul.f32 %v2607, %v3092
        %v3119 = vmul.f32 %v2608, %v3097
        %v3120 = vmul.f32 %v2609, %v3102
        %v3121 = vld [vmem:[%s14] sm:$0xff]
        %v3122 = vld [vmem:[%s14 + $0x8] sm:$0xff]
        %v3123 = vld [vmem:[%s14 + $0x10] sm:$0xff]
        %v3124 = vld [vmem:[%s14 + $0x18] sm:$0xff]
        %v3125 = vld [vmem:[%s14 + $0x20] sm:$0xff]
        %v3126 = vld [vmem:[%s14 + $0x28] sm:$0xff]
        %v3127 = vld [vmem:[%s14 + $0x30] sm:$0xff]
        %v3128 = vld [vmem:[%s14 + $0x38] sm:$0xff]
        %v3129 = vld [vmem:[%s14 + $0x40] sm:$0xff]
        %v3130 = vld [vmem:[%s14 + $0x48] sm:$0xff]
        %v3131 = vld [vmem:[%s14 + $0x50] sm:$0xff]
        %v3132 = vld [vmem:[%s14 + $0x58] sm:$0xff]
        %v3133 = vld [vmem:[%s14 + $0x60] sm:$0xff]
        %v3134 = vld [vmem:[%s14 + $0x68] sm:$0xff]
        %v3135 = vld [vmem:[%s14 + $0x70] sm:$0xff]
        %v3136 = vld [vmem:[%s14 + $0x78] sm:$0xff]
        %v3137 = vadd.f32 %v3105, %v3121
        %v3138 = vadd.f32 %v3106, %v3122
        %v3139 = vadd.f32 %v3107, %v3123
        %v3140 = vadd.f32 %v3108, %v3124
        %v3141 = vadd.f32 %v3109, %v3125
        %v3142 = vadd.f32 %v3110, %v3126
        %v3143 = vadd.f32 %v3111, %v3127
        %v3144 = vadd.f32 %v3112, %v3128
        %v3145 = vadd.f32 %v3113, %v3129
        %v3146 = vadd.f32 %v3114, %v3130
        %v3147 = vadd.f32 %v3115, %v3131
        %v3148 = vadd.f32 %v3116, %v3132
        %v3149 = vadd.f32 %v3117, %v3133
        %v3150 = vadd.f32 %v3118, %v3134
        %v3151 = vadd.f32 %v3119, %v3135
        %v3152 = vadd.f32 %v3120, %v3136
        %v3153 = vmax.f32 %v3137, 0.0
        %v3154 = vmax.f32 %v3138, 0.0
        %v3155 = vmax.f32 %v3139, 0.0
        %v3156 = vmax.f32 %v3140, 0.0
        %v3157 = vmax.f32 %v3141, 0.0
        %v3158 = vmax.f32 %v3142, 0.0
        %v3159 = vmax.f32 %v3143, 0.0
        %v3160 = vmax.f32 %v3144, 0.0
        %v3161 = vmax.f32 %v3145, 0.0
        %v3162 = vmax.f32 %v3146, 0.0
        %v3163 = vmax.f32 %v3147, 0.0
        %v3164 = vmax.f32 %v3148, 0.0
        %v3165 = vmax.f32 %v3149, 0.0
        %v3166 = vmax.f32 %v3150, 0.0
        %v3167 = vmax.f32 %v3151, 0.0
        %v3168 = vmax.f32 %v3152, 0.0
        %3169 = vst [vmem:[%s15] sm:$0xff] %v3153
        %3170 = vst [vmem:[%s15 + $0x8] sm:$0xff] %v3154
        %3171 = vst [vmem:[%s15 + $0x10] sm:$0xff] %v3155
        %3172 = vst [vmem:[%s15 + $0x18] sm:$0xff] %v3156
        %3173 = vst [vmem:[%s15 + $0x20] sm:$0xff] %v3157
        %3174 = vst [vmem:[%s15 + $0x28] sm:$0xff] %v3158
        %3175 = vst [vmem:[%s15 + $0x30] sm:$0xff] %v3159
        %3176 = vst [vmem:[%s15 + $0x38] sm:$0xff] %v3160
        %3177 = vst [vmem:[%s15 + $0x40] sm:$0xff] %v3161
        %3178 = vst [vmem:[%s15 + $0x48] sm:$0xff] %v3162
        %3179 = vst [vmem:[%s15 + $0x50] sm:$0xff] %v3163
        %3180 = vst [vmem:[%s15 + $0x58] sm:$0xff] %v3164
        %3181 = vst [vmem:[%s15 + $0x60] sm:$0xff] %v3165
        %3182 = vst [vmem:[%s15 + $0x68] sm:$0xff] %v3166
        %3183 = vst [vmem:[%s15 + $0x70] sm:$0xff] %v3167
        %3184 = vst [vmem:[%s15 + $0x78] sm:$0xff] %v3168
      $region88: #{inres_forward.5} parent=79 // pred_fallthru
        _
      // Predicated region
      $region89: #{inres_forward.5} parent=79 // pred_check
        %p3185 = pneg %p366
      $region90: #{inres_forward.5} parent=79 // pred_check_branch
        %3187 = sbr.rel (%p3185) target = $region92
      $region91: #{inres_forward.5} parent=79 // pred_region
        _
      $region92: #{inres_forward.5} parent=79 // pred_fallthru
        _
      // Predicated region
      $region93: #{inres_forward.5} parent=79 // pred_check
        %p3188 = pneg %p366
      $region94: #{inres_forward.5} parent=79 // pred_check_branch
        %3190 = sbr.rel (%p3188) target = $region96
      $region95: #{inres_forward.5} parent=79 // pred_region
        _
      $region96: #{inres_forward.5} parent=79 // pred_fallthru
        _
    $region80: #{inres_forward.5} parent=5 // pred_fallthru
      _
    %p3191 = scmp.le.s32.totalorder 2, %s23
    // Predicated region
    $region97: #{inres_forward.5} parent=5 // pred_check
      %p3192 = pneg %p3191
    $region98: #{inres_forward.5} parent=5 // pred_check_branch
      %3194 = sbr.rel (%p3192) target = $region100
    $region99: #{inres_forward.5} parent=5 // pred_region
      %s3195 = ssub.s32 %s23, 2
    $region100: #{inres_forward.5} parent=5 // pred_fallthru
      _
  $region6: #{inres_forward.5} parent=0 // loop_footer
    %s27 = sadd.s32 1, %s23
  $region7: #{inres_forward.5} parent=0 // loop_footer_branch
    %22 = sbr.rel target = $region3
  $region8: #{inres_forward.5} parent=0 // loop_exit
    _

// kernel: inres_forward.6
$region0: #{inres_forward.6}
  #allocation0 [shape = 'u32[]', space=smem, size = 0x4, offset = 0x4, fixed_abs, tag = 'smem constant byte address 0x4 - core index']
  #allocation1 [shape = 'u32[144,128]{1,0:T(1,128)}', space=vmem, size = 0x12000, scoped, tag = 'internal scratch']
  #allocation2 [shape = 'f32[128,128]{1,0:T(8,128)}', space=vmem, size = 0x10000, scoped, tag = 'scratch operand']
  %s0 = inlined_call_operand.vmem [shape: bf16[9,128,320], index: 0, kind: input, shape index: {}]
  %s1 = inlined_call_operand.vmem [shape: bf16[9,320,128], index: 1, kind: input, shape index: {}]
  %s2 = inlined_call_operand.vmem [shape: f32[1,128], index: 2, kind: input, shape index: {}]
  %s3 = inlined_call_operand.vmem [shape: f32[1,128], index: 3, kind: input, shape index: {}]
  %s4 = inlined_call_operand.vmem [shape: f32[1,128], index: 4, kind: input, shape index: {}]
  %s5 = inlined_call_operand.vmem [shape: f32[128,128], index: 5, kind: input, shape index: {}]
  %s6 = inlined_call_operand.vmem [shape: f32[128,128], index: 6, kind: output, shape index: {}]
  %s7 = sld [smem:[#allocation0]]
  $region65: #{inres_forward.6} parent=0
    _
  %s9 = ssub.s32 1, %s7
  %s10 = scalar_select 0, %s9, %s7
  loop: start=0, step=1, limit=5
  $region2: #{inres_forward.6} parent=0 // loop_pre_header
    _
  $region3: #{inres_forward.6} parent=0 // loop_header
    %s12 = sphi 0, %s16
    %p13 = scmp.ge.s32.totalorder %s12, 5
    %s22 = sphi 0, %s24
    %s25 = sphi 0, %s22
    %s26 = sphi 0, %s25
    %s42 = sphi 0, %s26
    %s48 = sphi 0, %s50
    %s51 = sphi 0, %s48
    %s52 = sphi 0, %s51
    %s68 = sphi 0, %s52
    %s72 = sphi 0, %s72
    %s74 = sphi 0, %s72
    %s75 = sphi 0, %s74
    %s89 = sphi 0, %s75
    %s93 = sphi 0, %s93
    %s95 = sphi 0, %s93
    %s96 = sphi 0, %s95
    %s110 = sphi 0, %s96
    %s114 = sphi 0, %s114
    %s116 = sphi 0, %s114
    %s117 = sphi 0, %s116
    %s131 = sphi 0, %s117
    %s135 = sphi 0, %s135
    %s137 = sphi 0, %s135
    %s138 = sphi 0, %s137
    %s152 = sphi 0, %s138
    %s156 = sphi 0, %s156
    %s158 = sphi 0, %s156
    %s159 = sphi 0, %s158
    %s173 = sphi 0, %s159
  $region4: #{inres_forward.6} parent=0 // loop_header_branch
    %15 = sbr.rel (%p13) target = $region8
  $region5: #{inres_forward.6} parent=0 // loop_body
    %s17 = ssub.s32 %s12, 1
    %s18 = ssub.s32 %s12, 2
    %s19 = sadd.s32 %s12, 1
    %s20 = ssub.s32 %s12, %s19
    %p21 = scmp.eq.s32.totalorder %s20, 0
    %s23 = sadd.s32 %s22, 1
    %s24 = scalar_select %p21, %s22, %s23
    %p27 = pneg %p21
    %p28 = scmp.eq.s32.totalorder %s12, 2
    %p29 = por %p27, %p28
    %p30 = scmp.ne.s32.totalorder %s22, %s25
    %p31 = scmp.eq.s32.totalorder %s12, 0
    %p32 = por %p30, %p31
    %p33 = scmp.ne.s32.totalorder %s22, %s25
    %p34 = scmp.eq.s32.totalorder %s17, 2
    %p35 = por %p33, %p34
    %p36 = scmp.ne.s32.totalorder %s25, %s26
    %p37 = scmp.eq.s32.totalorder %s17, 0
    %p38 = por %p36, %p37
    %p39 = scmp.ne.s32.totalorder %s25, %s26
    %p40 = scmp.eq.s32.totalorder %s18, 2
    %p41 = por %p39, %p40
    %p43 = scmp.ne.s32.totalorder %s26, %s42
    %p44 = scmp.eq.s32.totalorder %s18, 0
    %p45 = por %p43, %p44
    %s46 = ssub.s32 %s12, %s19
    %p47 = scmp.eq.s32.totalorder %s46, 0
    %s49 = sadd.s32 %s48, 1
    %s50 = scalar_select %p47, %s48, %s49
    %p53 = pneg %p47
    %p54 = scmp.eq.s32.totalorder %s12, 2
    %p55 = por %p53, %p54
    %p56 = scmp.ne.s32.totalorder %s48, %s51
    %p57 = scmp.eq.s32.totalorder %s12, 0
    %p58 = por %p56, %p57
    %p59 = scmp.ne.s32.totalorder %s48, %s51
    %p60 = scmp.eq.s32.totalorder %s17, 2
    %p61 = por %p59, %p60
    %p62 = scmp.ne.s32.totalorder %s51, %s52
    %p63 = scmp.eq.s32.totalorder %s17, 0
    %p64 = por %p62, %p63
    %p65 = scmp.ne.s32.totalorder %s51, %s52
    %p66 = scmp.eq.s32.totalorder %s18, 2
    %p67 = por %p65, %p66
    %p69 = scmp.ne.s32.totalorder %s52, %s68
    %p70 = scmp.eq.s32.totalorder %s18, 0
    %p71 = por %p69, %p70
    %s73 = sadd.s32 %s72, 1
    %p76 = scmp.eq.s32.totalorder %s12, 2
    %p77 = scmp.ne.s32.totalorder %s72, %s74
    %p78 = scmp.eq.s32.totalorder %s12, 0
    %p79 = por %p77, %p78
    %p80 = scmp.ne.s32.totalorder %s72, %s74
    %p81 = scmp.eq.s32.totalorder %s17, 2
    %p82 = por %p80, %p81
    %p83 = scmp.ne.s32.totalorder %s74, %s75
    %p84 = scmp.eq.s32.totalorder %s17, 0
    %p85 = por %p83, %p84
    %p86 = scmp.ne.s32.totalorder %s74, %s75
    %p87 = scmp.eq.s32.totalorder %s18, 2
    %p88 = por %p86, %p87
    %p90 = scmp.ne.s32.totalorder %s75, %s89
    %p91 = scmp.eq.s32.totalorder %s18, 0
    %p92 = por %p90, %p91
    %s94 = sadd.s32 %s93, 1
    %p97 = scmp.eq.s32.totalorder %s12, 2
    %p98 = scmp.ne.s32.totalorder %s93, %s95
    %p99 = scmp.eq.s32.totalorder %s12, 0
    %p100 = por %p98, %p99
    %p101 = scmp.ne.s32.totalorder %s93, %s95
    %p102 = scmp.eq.s32.totalorder %s17, 2
    %p103 = por %p101, %p102
    %p104 = scmp.ne.s32.totalorder %s95, %s96
    %p105 = scmp.eq.s32.totalorder %s17, 0
    %p106 = por %p104, %p105
    %p107 = scmp.ne.s32.totalorder %s95, %s96
    %p108 = scmp.eq.s32.totalorder %s18, 2
    %p109 = por %p107, %p108
    %p111 = scmp.ne.s32.totalorder %s96, %s110
    %p112 = scmp.eq.s32.totalorder %s18, 0
    %p113 = por %p111, %p112
    %s115 = sadd.s32 %s114, 1
    %p118 = scmp.eq.s32.totalorder %s12, 2
    %p119 = scmp.ne.s32.totalorder %s114, %s116
    %p120 = scmp.eq.s32.totalorder %s12, 0
    %p121 = por %p119, %p120
    %p122 = scmp.ne.s32.totalorder %s114, %s116
    %p123 = scmp.eq.s32.totalorder %s17, 2
    %p124 = por %p122, %p123
    %p125 = scmp.ne.s32.totalorder %s116, %s117
    %p126 = scmp.eq.s32.totalorder %s17, 0
    %p127 = por %p125, %p126
    %p128 = scmp.ne.s32.totalorder %s116, %s117
    %p129 = scmp.eq.s32.totalorder %s18, 2
    %p130 = por %p128, %p129
    %p132 = scmp.ne.s32.totalorder %s117, %s131
    %p133 = scmp.eq.s32.totalorder %s18, 0
    %p134 = por %p132, %p133
    %s136 = sadd.s32 %s135, 1
    %p139 = scmp.eq.s32.totalorder %s12, 2
    %p140 = scmp.ne.s32.totalorder %s135, %s137
    %p141 = scmp.eq.s32.totalorder %s12, 0
    %p142 = por %p140, %p141
    %p143 = scmp.ne.s32.totalorder %s135, %s137
    %p144 = scmp.eq.s32.totalorder %s17, 2
    %p145 = por %p143, %p144
    %p146 = scmp.ne.s32.totalorder %s137, %s138
    %p147 = scmp.eq.s32.totalorder %s17, 0
    %p148 = por %p146, %p147
    %p149 = scmp.ne.s32.totalorder %s137, %s138
    %p150 = scmp.eq.s32.totalorder %s18, 2
    %p151 = por %p149, %p150
    %p153 = scmp.ne.s32.totalorder %s138, %s152
    %p154 = scmp.eq.s32.totalorder %s18, 0
    %p155 = por %p153, %p154
    %s157 = sadd.s32 %s156, 1
    %p160 = scmp.eq.s32.totalorder %s12, 2
    %p161 = scmp.ne.s32.totalorder %s156, %s158
    %p162 = scmp.eq.s32.totalorder %s12, 0
    %p163 = por %p161, %p162
    %p164 = scmp.ne.s32.totalorder %s156, %s158
    %p165 = scmp.eq.s32.totalorder %s17, 2
    %p166 = por %p164, %p165
    %p167 = scmp.ne.s32.totalorder %s158, %s159
    %p168 = scmp.eq.s32.totalorder %s17, 0
    %p169 = por %p167, %p168
    %p170 = scmp.ne.s32.totalorder %s158, %s159
    %p171 = scmp.eq.s32.totalorder %s18, 2
    %p172 = por %p170, %p171
    %p174 = scmp.ne.s32.totalorder %s159, %s173
    %p175 = scmp.eq.s32.totalorder %s18, 0
    %p176 = por %p174, %p175
    %p177 = scmp.le.s32.totalorder 1, %s12
    %p178 = scmp.lt.s32.totalorder %s12, 4
    %p179 = pnand %p177, %p178
    %p180 = pneg %p179
    // Predicated region
    $region9: #{inres_forward.6} parent=5 // pred_check
      _
    $region10: #{inres_forward.6} parent=5 // pred_check_branch
      %182 = sbr.rel (%p179) target = $region12
    $region11: #{inres_forward.6} parent=5 // pred_region
      %s183 = ssub.s32 %s12, 1
      // Predicated region
      $region13: #{inres_forward.6} parent=11 // pred_check
        %p184 = pneg %p85
      $region14: #{inres_forward.6} parent=11 // pred_check_branch
        %186 = sbr.rel (%p184) target = $region16
      $region15: #{inres_forward.6} parent=11 // pred_region
        _
      $region16: #{inres_forward.6} parent=11 // pred_fallthru
        _
      // Predicated region
      $region17: #{inres_forward.6} parent=11 // pred_check
        %p187 = pneg %p106
      $region18: #{inres_forward.6} parent=11 // pred_check_branch
        %189 = sbr.rel (%p187) target = $region20
      $region19: #{inres_forward.6} parent=11 // pred_region
        _
      $region20: #{inres_forward.6} parent=11 // pred_fallthru
        _
      // Predicated region
      $region21: #{inres_forward.6} parent=11 // pred_check
        %p190 = pneg %p127
      $region22: #{inres_forward.6} parent=11 // pred_check_branch
        %192 = sbr.rel (%p190) target = $region24
      $region23: #{inres_forward.6} parent=11 // pred_region
        _
      $region24: #{inres_forward.6} parent=11 // pred_fallthru
        _
      // Predicated region
      $region25: #{inres_forward.6} parent=11 // pred_check
        %p193 = pneg %p148
      $region26: #{inres_forward.6} parent=11 // pred_check_branch
        %195 = sbr.rel (%p193) target = $region28
      $region27: #{inres_forward.6} parent=11 // pred_region
        _
      $region28: #{inres_forward.6} parent=11 // pred_fallthru
        _
    $region12: #{inres_forward.6} parent=5 // pred_fallthru
      _
    %p196 = scmp.lt.s32.totalorder %s12, 3
    // Predicated region
    $region29: #{inres_forward.6} parent=5 // pred_check
      %p197 = pneg %p196
    $region30: #{inres_forward.6} parent=5 // pred_check_branch
      %199 = sbr.rel (%p197) target = $region32
    $region31: #{inres_forward.6} parent=5 // pred_region
      // Predicated region
      $region33: #{inres_forward.6} parent=31 // pred_check
        %p200 = pneg %p32
      $region34: #{inres_forward.6} parent=31 // pred_check_branch
        %202 = sbr.rel (%p200) target = $region36
      $region35: #{inres_forward.6} parent=31 // pred_region
        %s203 = smul.u32 3, %s12
        %p204 = scmp.lt.s32.totalorder %s203, 8
        %s205 = scalar_select %p204, %s203, 8
        %s206 = smul.addr %s205, 48
        %s207 = smul.addr %s206, 4
        %s208 = scalar_lea.vmem %s0, %s207
        %s209 = smul.u32 3, %s12
      $region36: #{inres_forward.6} parent=31 // pred_fallthru
        _
      // Predicated region
      $region37: #{inres_forward.6} parent=31 // pred_check
        %p210 = pneg %p58
      $region38: #{inres_forward.6} parent=31 // pred_check_branch
        %212 = sbr.rel (%p210) target = $region40
      $region39: #{inres_forward.6} parent=31 // pred_region
        %s213 = smul.u32 3, %s12
        %p214 = scmp.lt.s32.totalorder %s213, 8
        %s215 = scalar_select %p214, %s213, 8
        %s216 = smul.addr %s215, 40
        %s217 = smul.addr %s216, 4
        %s218 = scalar_lea.vmem %s1, %s217
        %s219 = smul.u32 3, %s12
      $region40: #{inres_forward.6} parent=31 // pred_fallthru
        _
    $region32: #{inres_forward.6} parent=5 // pred_fallthru
      _
    %p220 = scmp.le.s32.totalorder 1, %s12
    %p221 = scmp.lt.s32.totalorder %s12, 4
    %p222 = pnand %p220, %p221
    %p223 = pneg %p222
    // Predicated region
    $region41: #{inres_forward.6} parent=5 // pred_check
      _
    $region42: #{inres_forward.6} parent=5 // pred_check_branch
      %225 = sbr.rel (%p222) target = $region44
    $region43: #{inres_forward.6} parent=5 // pred_region
      %s226 = ssub.s32 %s12, 1
      %s227 = smul.u32 3, %s17
      %p228 = scmp.lt.s32.totalorder %s227, 8
      %s229 = scalar_select %p228, %s227, 8
      %s230 = smul.addr %s229, 48
      %s231 = smul.addr %s230, 4
      %s232 = scalar_lea.vmem %s0, %s231
      %p233 = pneg %p38
      %p234 = pneg %p35
      %s235 = smul.u32 3, %s17
      %p236 = scmp.lt.s32.totalorder %s235, 8
      %s237 = scalar_select %p236, %s235, 8
      %s238 = smul.addr %s237, 40
      %s239 = smul.addr %s238, 4
      %s240 = scalar_lea.vmem %s1, %s239
      %p241 = pneg %p64
      %p242 = pneg %p61
      %p243 = pneg %p85
      %p244 = pneg %p82
      %p245 = pneg %p106
      %p246 = pneg %p103
      %p247 = pneg %p127
      %p248 = pneg %p124
      %p249 = pneg %p148
      %p250 = pneg %p145
      %p251 = pneg %p169
      %p252 = pneg %p166
      %s253 = smul.u32 3, %s17
      %p254 = scmp.lt.s32.totalorder %s253, 8
      %s255 = scalar_select %p254, %s253, 8
      %s256 = smul.addr %s255, 48
      %s257 = smul.addr %s256, 4
      %s258 = scalar_lea.vmem %s0, %s257
      %s259 = smul.u32 3, %s17
      %s260 = smul.u32 3, %s17
      %p261 = scmp.lt.s32.totalorder %s260, 8
      %s262 = scalar_select %p261, %s260, 8
      %s263 = smul.addr %s262, 40
      %s264 = smul.addr %s263, 4
      %s265 = scalar_lea.vmem %s1, %s264
      %s266 = smul.u32 3, %s17
      %p268 = scmp.eq.s32.totalorder %s17, 0
      // Predicated region
      $region45: #{inres_forward.6} parent=43 // pred_check
        %p269 = pneg %p268
      $region46: #{inres_forward.6} parent=43 // pred_check_branch
        %271 = sbr.rel (%p269) target = $region48
      $region47: #{inres_forward.6} parent=43 // pred_region
        %272 = vst [vmem:[#allocation2] sm:$0xff] 0.0
        %273 = vst [vmem:[#allocation2 + $0x8] sm:$0xff] 0.0
        %274 = vst [vmem:[#allocation2 + $0x10] sm:$0xff] 0.0
        %275 = vst [vmem:[#allocation2 + $0x18] sm:$0xff] 0.0
        %276 = vst [vmem:[#allocation2 + $0x20] sm:$0xff] 0.0
        %277 = vst [vmem:[#allocation2 + $0x28] sm:$0xff] 0.0
        %278 = vst [vmem:[#allocation2 + $0x30] sm:$0xff] 0.0
        %279 = vst [vmem:[#allocation2 + $0x38] sm:$0xff] 0.0
        %280 = vst [vmem:[#allocation2 + $0x40] sm:$0xff] 0.0
        %281 = vst [vmem:[#allocation2 + $0x48] sm:$0xff] 0.0
        %282 = vst [vmem:[#allocation2 + $0x50] sm:$0xff] 0.0
        %283 = vst [vmem:[#allocation2 + $0x58] sm:$0xff] 0.0
        %284 = vst [vmem:[#allocation2 + $0x60] sm:$0xff] 0.0
        %285 = vst [vmem:[#allocation2 + $0x68] sm:$0xff] 0.0
        %286 = vst [vmem:[#allocation2 + $0x70] sm:$0xff] 0.0
        %287 = vst [vmem:[#allocation2 + $0x78] sm:$0xff] 0.0
      $region48: #{inres_forward.6} parent=43 // pred_fallthru
        _
      %v288 = vld [vmem:[%s258] sm:$0xff]
      %v289 = vld [vmem:[%s258 + $0x8] sm:$0xf]
      %v290 = vld [vmem:[%s258 + $0xc] sm:$0xff]
      %v291 = vld [vmem:[%s258 + $0x14] sm:$0xf]
      %v292 = vld [vmem:[%s258 + $0x18] sm:$0xff]
      %v293 = vld [vmem:[%s258 + $0x20] sm:$0xf]
      %v294 = vld [vmem:[%s258 + $0x24] sm:$0xff]
      %v295 = vld [vmem:[%s258 + $0x2c] sm:$0xf]
      %v296 = vld [vmem:[%s258 + $0x30] sm:$0xff]
      %v297 = vld [vmem:[%s258 + $0x38] sm:$0xf]
      %v298 = vld [vmem:[%s258 + $0x3c] sm:$0xff]
      %v299 = vld [vmem:[%s258 + $0x44] sm:$0xf]
      %v300 = vld [vmem:[%s258 + $0x48] sm:$0xff]
      %v301 = vld [vmem:[%s258 + $0x50] sm:$0xf]
      %v302 = vld [vmem:[%s258 + $0x54] sm:$0xff]
      %v303 = vld [vmem:[%s258 + $0x5c] sm:$0xf]
      %v304 = vld [vmem:[%s258 + $0x60] sm:$0xff]
      %v305 = vld [vmem:[%s258 + $0x68] sm:$0xf]
      %v306 = vld [vmem:[%s258 + $0x6c] sm:$0xff]
      %v307 = vld [vmem:[%s258 + $0x74] sm:$0xf]
      %v308 = vld [vmem:[%s258 + $0x78] sm:$0xff]
      %v309 = vld [vmem:[%s258 + $0x80] sm:$0xf]
      %v310 = vld [vmem:[%s258 + $0x84] sm:$0xff]
      %v311 = vld [vmem:[%s258 + $0x8c] sm:$0xf]
      %v312 = vld [vmem:[%s258 + $0x90] sm:$0xff]
      %v313 = vld [vmem:[%s258 + $0x98] sm:$0xf]
      %v314 = vld [vmem:[%s258 + $0x9c] sm:$0xff]
      %v315 = vld [vmem:[%s258 + $0xa4] sm:$0xf]
      %v316 = vld [vmem:[%s258 + $0xa8] sm:$0xff]
      %v317 = vld [vmem:[%s258 + $0xb0] sm:$0xf]
      %v318 = vld [vmem:[%s258 + $0xb4] sm:$0xff]
      %v319 = vld [vmem:[%s258 + $0xbc] sm:$0xf]
      %v320 = vld [vmem:[%s265] sm:$0xf]
      %v321 = vld [vmem:[%s265 + $0x4] sm:$0xf]
      %v322 = vld [vmem:[%s265 + $0x8] sm:$0xf]
      %v323 = vld [vmem:[%s265 + $0xc] sm:$0xf]
      %v324 = vld [vmem:[%s265 + $0x10] sm:$0xf]
      %v325 = vld [vmem:[%s265 + $0x14] sm:$0xf]
      %v326 = vld [vmem:[%s265 + $0x18] sm:$0xf]
      %v327 = vld [vmem:[%s265 + $0x1c] sm:$0xf]
      %v328 = vld [vmem:[%s265 + $0x20] sm:$0xf]
      %v329 = vld [vmem:[%s265 + $0x24] sm:$0xf]
      %v330 = vld [vmem:[%s265 + $0x28] sm:$0xf]
      %v331 = vld [vmem:[%s265 + $0x2c] sm:$0xf]
      %v332 = vld [vmem:[%s265 + $0x30] sm:$0xf]
      %v333 = vld [vmem:[%s265 + $0x34] sm:$0xf]
      %v334 = vld [vmem:[%s265 + $0x38] sm:$0xf]
      %v335 = vld [vmem:[%s265 + $0x3c] sm:$0xf]
      %v336 = vld [vmem:[%s265 + $0x40] sm:$0xf]
      %v337 = vld [vmem:[%s265 + $0x44] sm:$0xf]
      %v338 = vld [vmem:[%s265 + $0x48] sm:$0xf]
      %v339 = vld [vmem:[%s265 + $0x4c] sm:$0xf]
      %v340 = vld [vmem:[%s265 + $0x50] sm:$0xf]
      %v341 = vld [vmem:[%s265 + $0x54] sm:$0xf]
      %v342 = vld [vmem:[%s265 + $0x58] sm:$0xf]
      %v343 = vld [vmem:[%s265 + $0x5c] sm:$0xf]
      %v344 = vld [vmem:[%s265 + $0x60] sm:$0xf]
      %v345 = vld [vmem:[%s265 + $0x64] sm:$0xf]
      %v346 = vld [vmem:[%s265 + $0x68] sm:$0xf]
      %v347 = vld [vmem:[%s265 + $0x6c] sm:$0xf]
      %v348 = vld [vmem:[%s265 + $0x70] sm:$0xf]
      %v349 = vld [vmem:[%s265 + $0x74] sm:$0xf]
      %v350 = vld [vmem:[%s265 + $0x78] sm:$0xf]
      %v351 = vld [vmem:[%s265 + $0x7c] sm:$0xf]
      %v352 = vld [vmem:[%s265 + $0x80] sm:$0xf]
      %v353 = vld [vmem:[%s265 + $0x84] sm:$0xf]
      %v354 = vld [vmem:[%s265 + $0x88] sm:$0xf]
      %v355 = vld [vmem:[%s265 + $0x8c] sm:$0xf]
      %v356 = vld [vmem:[%s265 + $0x90] sm:$0xf]
      %v357 = vld [vmem:[%s265 + $0x94] sm:$0xf]
      %v358 = vld [vmem:[%s265 + $0x98] sm:$0xf]
      %v359 = vld [vmem:[%s265 + $0x9c] sm:$0xf]
      %s360 = scalar_lea.vmem %s258, 192
      %v361 = vld [vmem:[%s360] sm:$0xff]
      %v362 = vld [vmem:[%s360 + $0x8] sm:$0xf]
      %v363 = vld [vmem:[%s360 + $0xc] sm:$0xff]
      %v364 = vld [vmem:[%s360 + $0x14] sm:$0xf]
      %v365 = vld [vmem:[%s360 + $0x18] sm:$0xff]
      %v366 = vld [vmem:[%s360 + $0x20] sm:$0xf]
      %v367 = vld [vmem:[%s360 + $0x24] sm:$0xff]
      %v368 = vld [vmem:[%s360 + $0x2c] sm:$0xf]
      %v369 = vld [vmem:[%s360 + $0x30] sm:$0xff]
      %v370 = vld [vmem:[%s360 + $0x38] sm:$0xf]
      %v371 = vld [vmem:[%s360 + $0x3c] sm:$0xff]
      %v372 = vld [vmem:[%s360 + $0x44] sm:$0xf]
      %v373 = vld [vmem:[%s360 + $0x48] sm:$0xff]
      %v374 = vld [vmem:[%s360 + $0x50] sm:$0xf]
      %v375 = vld [vmem:[%s360 + $0x54] sm:$0xff]
      %v376 = vld [vmem:[%s360 + $0x5c] sm:$0xf]
      %v377 = vld [vmem:[%s360 + $0x60] sm:$0xff]
      %v378 = vld [vmem:[%s360 + $0x68] sm:$0xf]
      %v379 = vld [vmem:[%s360 + $0x6c] sm:$0xff]
      %v380 = vld [vmem:[%s360 + $0x74] sm:$0xf]
      %v381 = vld [vmem:[%s360 + $0x78] sm:$0xff]
      %v382 = vld [vmem:[%s360 + $0x80] sm:$0xf]
      %v383 = vld [vmem:[%s360 + $0x84] sm:$0xff]
      %v384 = vld [vmem:[%s360 + $0x8c] sm:$0xf]
      %v385 = vld [vmem:[%s360 + $0x90] sm:$0xff]
      %v386 = vld [vmem:[%s360 + $0x98] sm:$0xf]
      %v387 = vld [vmem:[%s360 + $0x9c] sm:$0xff]
      %v388 = vld [vmem:[%s360 + $0xa4] sm:$0xf]
      %v389 = vld [vmem:[%s360 + $0xa8] sm:$0xff]
      %v390 = vld [vmem:[%s360 + $0xb0] sm:$0xf]
      %v391 = vld [vmem:[%s360 + $0xb4] sm:$0xff]
      %v392 = vld [vmem:[%s360 + $0xbc] sm:$0xf]
      %s393 = scalar_lea.vmem %s265, 160
      %v394 = vld [vmem:[%s393] sm:$0xf]
      %v395 = vld [vmem:[%s393 + $0x4] sm:$0xf]
      %v396 = vld [vmem:[%s393 + $0x8] sm:$0xf]
      %v397 = vld [vmem:[%s393 + $0xc] sm:$0xf]
      %v398 = vld [vmem:[%s393 + $0x10] sm:$0xf]
      %v399 = vld [vmem:[%s393 + $0x14] sm:$0xf]
      %v400 = vld [vmem:[%s393 + $0x18] sm:$0xf]
      %v401 = vld [vmem:[%s393 + $0x1c] sm:$0xf]
      %v402 = vld [vmem:[%s393 + $0x20] sm:$0xf]
      %v403 = vld [vmem:[%s393 + $0x24] sm:$0xf]
      %v404 = vld [vmem:[%s393 + $0x28] sm:$0xf]
      %v405 = vld [vmem:[%s393 + $0x2c] sm:$0xf]
      %v406 = vld [vmem:[%s393 + $0x30] sm:$0xf]
      %v407 = vld [vmem:[%s393 + $0x34] sm:$0xf]
      %v408 = vld [vmem:[%s393 + $0x38] sm:$0xf]
      %v409 = vld [vmem:[%s393 + $0x3c] sm:$0xf]
      %v410 = vld [vmem:[%s393 + $0x40] sm:$0xf]
      %v411 = vld [vmem:[%s393 + $0x44] sm:$0xf]
      %v412 = vld [vmem:[%s393 + $0x48] sm:$0xf]
      %v413 = vld [vmem:[%s393 + $0x4c] sm:$0xf]
      %v414 = vld [vmem:[%s393 + $0x50] sm:$0xf]
      %v415 = vld [vmem:[%s393 + $0x54] sm:$0xf]
      %v416 = vld [vmem:[%s393 + $0x58] sm:$0xf]
      %v417 = vld [vmem:[%s393 + $0x5c] sm:$0xf]
      %v418 = vld [vmem:[%s393 + $0x60] sm:$0xf]
      %v419 = vld [vmem:[%s393 + $0x64] sm:$0xf]
      %v420 = vld [vmem:[%s393 + $0x68] sm:$0xf]
      %v421 = vld [vmem:[%s393 + $0x6c] sm:$0xf]
      %v422 = vld [vmem:[%s393 + $0x70] sm:$0xf]
      %v423 = vld [vmem:[%s393 + $0x74] sm:$0xf]
      %v424 = vld [vmem:[%s393 + $0x78] sm:$0xf]
      %v425 = vld [vmem:[%s393 + $0x7c] sm:$0xf]
      %v426 = vld [vmem:[%s393 + $0x80] sm:$0xf]
      %v427 = vld [vmem:[%s393 + $0x84] sm:$0xf]
      %v428 = vld [vmem:[%s393 + $0x88] sm:$0xf]
      %v429 = vld [vmem:[%s393 + $0x8c] sm:$0xf]
      %v430 = vld [vmem:[%s393 + $0x90] sm:$0xf]
      %v431 = vld [vmem:[%s393 + $0x94] sm:$0xf]
      %v432 = vld [vmem:[%s393 + $0x98] sm:$0xf]
      %v433 = vld [vmem:[%s393 + $0x9c] sm:$0xf]
      %v466 = vunpack.c.l.b16 %v361
      %v467 = vunpack.c.h.b16 %v361
      %v468 = vunpack.c.l.b16 %v362
      %v469 = vunpack.c.l.b16 %v363
      %v470 = vunpack.c.h.b16 %v363
      %v471 = vunpack.c.l.b16 %v364
      %v472 = vunpack.c.l.b16 %v365
      %v473 = vunpack.c.h.b16 %v365
      %v474 = vunpack.c.l.b16 %v366
      %v475 = vunpack.c.l.b16 %v367
      %v476 = vunpack.c.h.b16 %v367
      %v477 = vunpack.c.l.b16 %v368
      %v478 = vunpack.c.l.b16 %v369
      %v479 = vunpack.c.h.b16 %v369
      %v480 = vunpack.c.l.b16 %v370
      %v481 = vunpack.c.l.b16 %v371
      %v482 = vunpack.c.h.b16 %v371
      %v483 = vunpack.c.l.b16 %v372
      %v484 = vunpack.c.l.b16 %v373
      %v485 = vunpack.c.h.b16 %v373
      %v486 = vunpack.c.l.b16 %v374
      %v487 = vunpack.c.l.b16 %v375
      %v488 = vunpack.c.h.b16 %v375
      %v489 = vunpack.c.l.b16 %v376
      %v490 = vunpack.c.l.b16 %v377
      %v491 = vunpack.c.h.b16 %v377
      %v492 = vunpack.c.l.b16 %v378
      %v493 = vunpack.c.l.b16 %v379
      %v494 = vunpack.c.h.b16 %v379
      %v495 = vunpack.c.l.b16 %v380
      %v496 = vunpack.c.l.b16 %v381
      %v497 = vunpack.c.h.b16 %v381
      %v498 = vunpack.c.l.b16 %v382
      %v499 = vunpack.c.l.b16 %v383
      %v500 = vunpack.c.h.b16 %v383
      %v501 = vunpack.c.l.b16 %v384
      %v502 = vunpack.c.l.b16 %v385
      %v503 = vunpack.c.h.b16 %v385
      %v504 = vunpack.c.l.b16 %v386
      %v505 = vunpack.c.l.b16 %v387
      %v506 = vunpack.c.h.b16 %v387
      %v507 = vunpack.c.l.b16 %v388
      %v508 = vunpack.c.l.b16 %v389
      %v509 = vunpack.c.h.b16 %v389
      %v510 = vunpack.c.l.b16 %v390
      %v511 = vunpack.c.l.b16 %v391
      %v512 = vunpack.c.h.b16 %v391
      %v513 = vunpack.c.l.b16 %v392
      %v514 = vpack.c.b16 %v469, %v466
      %v515 = vpack.c.b16 %v470, %v467
      %v516 = vpack.c.b16 %v471, %v468
      %v517 = vpack.c.b16 %v475, %v472
      %v518 = vpack.c.b16 %v476, %v473
      %v519 = vpack.c.b16 %v477, %v474
      %v520 = vpack.c.b16 %v481, %v478
      %v521 = vpack.c.b16 %v482, %v479
      %v522 = vpack.c.b16 %v483, %v480
      %v523 = vpack.c.b16 %v487, %v484
      %v524 = vpack.c.b16 %v488, %v485
      %v525 = vpack.c.b16 %v489, %v486
      %v526 = vpack.c.b16 %v493, %v490
      %v527 = vpack.c.b16 %v494, %v491
      %v528 = vpack.c.b16 %v495, %v492
      %v529 = vpack.c.b16 %v499, %v496
      %v530 = vpack.c.b16 %v500, %v497
      %v531 = vpack.c.b16 %v501, %v498
      %v532 = vpack.c.b16 %v505, %v502
      %v533 = vpack.c.b16 %v506, %v503
      %v534 = vpack.c.b16 %v507, %v504
      %v535 = vpack.c.b16 %v511, %v508
      %v536 = vpack.c.b16 %v512, %v509
      %v537 = vpack.c.b16 %v513, %v510
      %v594 = vunpack.c.l.b16 %v394
      %v595 = vunpack.c.l.b16 %v395
      %v596 = vunpack.c.l.b16 %v396
      %v597 = vunpack.c.l.b16 %v397
      %v598 = vunpack.c.l.b16 %v398
      %v599 = vunpack.c.l.b16 %v399
      %v600 = vunpack.c.l.b16 %v400
      %v601 = vunpack.c.l.b16 %v401
      %v602 = vunpack.c.l.b16 %v402
      %v603 = vunpack.c.l.b16 %v403
      %v604 = vunpack.c.l.b16 %v404
      %v605 = vunpack.c.l.b16 %v405
      %v606 = vunpack.c.l.b16 %v406
      %v607 = vunpack.c.l.b16 %v407
      %v608 = vunpack.c.l.b16 %v408
      %v609 = vunpack.c.l.b16 %v409
      %v610 = vunpack.c.l.b16 %v410
      %v611 = vunpack.c.l.b16 %v411
      %v612 = vunpack.c.l.b16 %v412
      %v613 = vunpack.c.l.b16 %v413
      %v614 = vunpack.c.l.b16 %v414
      %v615 = vunpack.c.l.b16 %v415
      %v616 = vunpack.c.l.b16 %v416
      %v617 = vunpack.c.l.b16 %v417
      %v618 = vunpack.c.l.b16 %v418
      %v619 = vunpack.c.l.b16 %v419
      %v620 = vunpack.c.l.b16 %v420
      %v621 = vunpack.c.l.b16 %v421
      %v622 = vunpack.c.l.b16 %v422
      %v623 = vunpack.c.l.b16 %v423
      %v624 = vunpack.c.l.b16 %v424
      %v625 = vunpack.c.l.b16 %v425
      %v626 = vunpack.c.l.b16 %v426
      %v627 = vunpack.c.l.b16 %v427
      %v628 = vunpack.c.l.b16 %v428
      %v629 = vunpack.c.l.b16 %v429
      %v630 = vunpack.c.l.b16 %v430
      %v631 = vunpack.c.l.b16 %v431
      %v632 = vunpack.c.l.b16 %v432
      %v633 = vunpack.c.l.b16 %v433
      %v634 = vpack.c.b16 %v595, %v594
      %v635 = vpack.c.b16 %v597, %v596
      %v636 = vpack.c.b16 %v599, %v598
      %v637 = vpack.c.b16 %v601, %v600
      %v638 = vpack.c.b16 %v603, %v602
      %v639 = vpack.c.b16 %v605, %v604
      %v640 = vpack.c.b16 %v607, %v606
      %v641 = vpack.c.b16 %v609, %v608
      %v642 = vpack.c.b16 %v611, %v610
      %v643 = vpack.c.b16 %v613, %v612
      %v644 = vpack.c.b16 %v615, %v614
      %v645 = vpack.c.b16 %v617, %v616
      %v646 = vpack.c.b16 %v619, %v618
      %v647 = vpack.c.b16 %v621, %v620
      %v648 = vpack.c.b16 %v623, %v622
      %v649 = vpack.c.b16 %v625, %v624
      %v650 = vpack.c.b16 %v627, %v626
      %v651 = vpack.c.b16 %v629, %v628
      %v652 = vpack.c.b16 %v631, %v630
      %v653 = vpack.c.b16 %v633, %v632
      %vm674 = vcmask 523264
      %v676 = vsel %vm674, %v516, 0
      %v679 = vsel %vm674, %v519, 0
      %v682 = vsel %vm674, %v522, 0
      %v685 = vsel %vm674, %v525, 0
      %v688 = vsel %vm674, %v528, 0
      %v691 = vsel %vm674, %v531, 0
      %v694 = vsel %vm674, %v534, 0
      %v697 = vsel %vm674, %v537, 0
      %699 = vmatprep.subr.bf16.mxu0 0
      %700 = vmatpush1.bf16.msra.mxu0 %v634
      %701 = vmatprep.subr.bf16.mxu0 0
      %702 = vmatpush1.bf16.msra.mxu0 %v635
      %703 = vmatprep.subr.bf16.mxu0 0
      %704 = vmatpush1.bf16.msra.mxu0 %v636
      %705 = vmatprep.subr.bf16.mxu0 0
      %706 = vmatpush1.bf16.msra.mxu0 %v637
      %707 = vmatprep.subr.bf16.mxu0 0
      %708 = vmatpush1.bf16.msra.mxu0 %v638
      %709 = vmatprep.subr.bf16.mxu0 0
      %710 = vmatpush1.bf16.msra.mxu0 %v639
      %711 = vmatprep.subr.bf16.mxu0 0
      %712 = vmatpush1.bf16.msra.mxu0 %v640
      %713 = vmatprep.subr.bf16.mxu0 0
      %714 = vmatpush1.bf16.msra.mxu0 %v641
      %715 = vmatprep.subr.bf16.mxu0 0
      %716 = vmatpush1.bf16.msra.mxu0 %v642
      %717 = vmatprep.subr.bf16.mxu0 0
      %718 = vmatpush1.bf16.msra.mxu0 %v643
      %719 = vmatprep.subr.bf16.mxu0 0
      %720 = vmatpush1.bf16.msra.mxu0 %v644
      %721 = vmatprep.subr.bf16.mxu0 0
      %722 = vmatpush1.bf16.msra.mxu0 %v645
      %723 = vmatprep.subr.bf16.mxu0 0
      %724 = vmatpush1.bf16.msra.mxu0 %v646
      %725 = vmatprep.subr.bf16.mxu0 0
      %726 = vmatpush1.bf16.msra.mxu0 %v647
      %727 = vmatprep.subr.bf16.mxu0 0
      %728 = vmatpush1.bf16.msra.mxu0 %v648
      %729 = vmatprep.subr.bf16.mxu0 0
      %730 = vmatpush1.bf16.msra.mxu0 %v649
      %731 = vmatprep.mubr.bf16.mxu0 %v515
      %732 = vmatmul.mubr.bf16.gmra.mrb[0].mxu0 %v514
      %v733 = vpop.f32.mrb[0].mxu0
      %v734 = vadd.f32 0.0, %v733
      %v735 = vpop.f32.mrb[0].mxu0
      %v736 = vpop.f32.mrb[0].mxu0
      %v737 = vadd.f32 0.0, %v736
      %v738 = vpop.f32.mrb[0].mxu0
      %739 = vmatprep.mubr.bf16.mxu0 %v518
      %740 = vmatmul.mubr.bf16.gmra.mrb[0].mxu0 %v517
      %v741 = vpop.f32.mrb[0].mxu0
      %v742 = vadd.f32 0.0, %v741
      %v743 = vpop.f32.mrb[0].mxu0
      %v744 = vpop.f32.mrb[0].mxu0
      %v745 = vadd.f32 0.0, %v744
      %v746 = vpop.f32.mrb[0].mxu0
      %747 = vmatprep.mubr.bf16.mxu0 %v521
      %748 = vmatmul.mubr.bf16.gmra.mrb[0].mxu0 %v520
      %v749 = vpop.f32.mrb[0].mxu0
      %v750 = vadd.f32 0.0, %v749
      %v751 = vpop.f32.mrb[0].mxu0
      %v752 = vpop.f32.mrb[0].mxu0
      %v753 = vadd.f32 0.0, %v752
      %v754 = vpop.f32.mrb[0].mxu0
      %755 = vmatprep.mubr.bf16.mxu0 %v524
      %756 = vmatmul.mubr.bf16.gmra.mrb[0].mxu0 %v523
      %v757 = vpop.f32.mrb[0].mxu0
      %v758 = vadd.f32 0.0, %v757
      %v759 = vpop.f32.mrb[0].mxu0
      %v760 = vpop.f32.mrb[0].mxu0
      %v761 = vadd.f32 0.0, %v760
      %v762 = vpop.f32.mrb[0].mxu0
      %763 = vmatprep.mubr.bf16.mxu0 %v527
      %764 = vmatmul.mubr.bf16.gmra.mrb[0].mxu0 %v526
      %v765 = vpop.f32.mrb[0].mxu0
      %v766 = vadd.f32 0.0, %v765
      %v767 = vpop.f32.mrb[0].mxu0
      %v768 = vpop.f32.mrb[0].mxu0
      %v769 = vadd.f32 0.0, %v768
      %v770 = vpop.f32.mrb[0].mxu0
      %771 = vmatprep.mubr.bf16.mxu0 %v530
      %772 = vmatmul.mubr.bf16.gmra.mrb[0].mxu0 %v529
      %v773 = vpop.f32.mrb[0].mxu0
      %v774 = vadd.f32 0.0, %v773
      %v775 = vpop.f32.mrb[0].mxu0
      %v776 = vpop.f32.mrb[0].mxu0
      %v777 = vadd.f32 0.0, %v776
      %v778 = vpop.f32.mrb[0].mxu0
      %779 = vmatprep.mubr.bf16.mxu0 %v533
      %780 = vmatmul.mubr.bf16.gmra.mrb[0].mxu0 %v532
      %v781 = vpop.f32.mrb[0].mxu0
      %v782 = vadd.f32 0.0, %v781
      %v783 = vpop.f32.mrb[0].mxu0
      %v784 = vpop.f32.mrb[0].mxu0
      %v785 = vadd.f32 0.0, %v784
      %v786 = vpop.f32.mrb[0].mxu0
      %787 = vmatprep.mubr.bf16.mxu0 %v536
      %788 = vmatmul.mubr.bf16.gmra.mrb[0].mxu0 %v535
      %v789 = vpop.f32.mrb[0].mxu0
      %v790 = vadd.f32 0.0, %v789
      %v791 = vpop.f32.mrb[0].mxu0
      %v792 = vpop.f32.mrb[0].mxu0
      %v793 = vadd.f32 0.0, %v792
      %v794 = vpop.f32.mrb[0].mxu0
      %795 = vdwg.mxu0
      %796 = vmatprep.subr.bf16.mxu0 0
      %797 = vmatpush1.bf16.msra.mxu0 %v650
      %798 = vmatprep.subr.bf16.mxu0 0
      %799 = vmatpush1.bf16.msra.mxu0 %v651
      %800 = vmatprep.subr.bf16.mxu0 0
      %801 = vmatpush1.bf16.msra.mxu0 %v652
      %802 = vmatprep.subr.bf16.mxu0 0
      %803 = vmatpush1.bf16.msra.mxu0 %v653
      %804 = vmatprep.subr.bf16.mxu0 0
      %805 = vmatpush1.bf16.msra.mxu0 0
      %806 = vmatprep.subr.bf16.mxu0 0
      %807 = vmatpush1.bf16.msra.mxu0 0
      %808 = vmatprep.subr.bf16.mxu0 0
      %809 = vmatpush1.bf16.msra.mxu0 0
      %810 = vmatprep.subr.bf16.mxu0 0
      %811 = vmatpush1.bf16.msra.mxu0 0
      %812 = vmatprep.subr.bf16.mxu0 0
      %813 = vmatpush1.bf16.msra.mxu0 0
      %814 = vmatprep.subr.bf16.mxu0 0
      %815 = vmatpush1.bf16.msra.mxu0 0
      %816 = vmatprep.subr.bf16.mxu0 0
      %817 = vmatpush1.bf16.msra.mxu0 0
      %818 = vmatprep.subr.bf16.mxu0 0
      %819 = vmatpush1.bf16.msra.mxu0 0
      %820 = vmatprep.subr.bf16.mxu0 0
      %821 = vmatpush1.bf16.msra.mxu0 0
      %822 = vmatprep.subr.bf16.mxu0 0
      %823 = vmatpush1.bf16.msra.mxu0 0
      %824 = vmatprep.subr.bf16.mxu0 0
      %825 = vmatpush1.bf16.msra.mxu0 0
      %826 = vmatprep.subr.bf16.mxu0 0
      %827 = vmatpush1.bf16.msra.mxu0 0
      %828 = vmatprep.mubr.bf16.mxu0 0
      %829 = vmatmul.mubr.bf16.gmra.mrb[0].mxu0 %v676
      %v830 = vpop.f32.mrb[0].mxu0
      %v831 = vadd.f32 %v734, %v830
      %v832 = vpop.f32.mrb[0].mxu0
      %v833 = vpop.f32.mrb[0].mxu0
      %v834 = vadd.f32 %v737, %v833
      %v835 = vpop.f32.mrb[0].mxu0
      %836 = vmatprep.mubr.bf16.mxu0 0
      %837 = vmatmul.mubr.bf16.gmra.mrb[0].mxu0 %v679
      %v838 = vpop.f32.mrb[0].mxu0
      %v839 = vadd.f32 %v742, %v838
      %v840 = vpop.f32.mrb[0].mxu0
      %v841 = vpop.f32.mrb[0].mxu0
      %v842 = vadd.f32 %v745, %v841
      %v843 = vpop.f32.mrb[0].mxu0
      %844 = vmatprep.mubr.bf16.mxu0 0
      %845 = vmatmul.mubr.bf16.gmra.mrb[0].mxu0 %v682
      %v846 = vpop.f32.mrb[0].mxu0
      %v847 = vadd.f32 %v750, %v846
      %v848 = vpop.f32.mrb[0].mxu0
      %v849 = vpop.f32.mrb[0].mxu0
      %v850 = vadd.f32 %v753, %v849
      %v851 = vpop.f32.mrb[0].mxu0
      %852 = vmatprep.mubr.bf16.mxu0 0
      %853 = vmatmul.mubr.bf16.gmra.mrb[0].mxu0 %v685
      %v854 = vpop.f32.mrb[0].mxu0
      %v855 = vadd.f32 %v758, %v854
      %v856 = vpop.f32.mrb[0].mxu0
      %v857 = vpop.f32.mrb[0].mxu0
      %v858 = vadd.f32 %v761, %v857
      %v859 = vpop.f32.mrb[0].mxu0
      %860 = vmatprep.mubr.bf16.mxu0 0
      %861 = vmatmul.mubr.bf16.gmra.mrb[0].mxu0 %v688
      %v862 = vpop.f32.mrb[0].mxu0
      %v863 = vadd.f32 %v766, %v862
      %v864 = vpop.f32.mrb[0].mxu0
      %v865 = vpop.f32.mrb[0].mxu0
      %v866 = vadd.f32 %v769, %v865
      %v867 = vpop.f32.mrb[0].mxu0
      %868 = vmatprep.mubr.bf16.mxu0 0
      %869 = vmatmul.mubr.bf16.gmra.mrb[0].mxu0 %v691
      %v870 = vpop.f32.mrb[0].mxu0
      %v871 = vadd.f32 %v774, %v870
      %v872 = vpop.f32.mrb[0].mxu0
      %v873 = vpop.f32.mrb[0].mxu0
      %v874 = vadd.f32 %v777, %v873
      %v875 = vpop.f32.mrb[0].mxu0
      %876 = vmatprep.mubr.bf16.mxu0 0
      %877 = vmatmul.mubr.bf16.gmra.mrb[0].mxu0 %v694
      %v878 = vpop.f32.mrb[0].mxu0
      %v879 = vadd.f32 %v782, %v878
      %v880 = vpop.f32.mrb[0].mxu0
      %v881 = vpop.f32.mrb[0].mxu0
      %v882 = vadd.f32 %v785, %v881
      %v883 = vpop.f32.mrb[0].mxu0
      %884 = vmatprep.mubr.bf16.mxu0 0
      %885 = vmatmul.mubr.bf16.gmra.mrb[0].mxu0 %v697
      %v886 = vpop.f32.mrb[0].mxu0
      %v887 = vadd.f32 %v790, %v886
      %v888 = vpop.f32.mrb[0].mxu0
      %v889 = vpop.f32.mrb[0].mxu0
      %v890 = vadd.f32 %v793, %v889
      %v891 = vpop.f32.mrb[0].mxu0
      %892 = vdwg.mxu0
      %v925 = vunpack.c.l.b16 %v288
      %v926 = vunpack.c.h.b16 %v288
      %v927 = vunpack.c.l.b16 %v289
      %v928 = vunpack.c.l.b16 %v290
      %v929 = vunpack.c.h.b16 %v290
      %v930 = vunpack.c.l.b16 %v291
      %v931 = vunpack.c.l.b16 %v292
      %v932 = vunpack.c.h.b16 %v292
      %v933 = vunpack.c.l.b16 %v293
      %v934 = vunpack.c.l.b16 %v294
      %v935 = vunpack.c.h.b16 %v294
      %v936 = vunpack.c.l.b16 %v295
      %v937 = vunpack.c.l.b16 %v296
      %v938 = vunpack.c.h.b16 %v296
      %v939 = vunpack.c.l.b16 %v297
      %v940 = vunpack.c.l.b16 %v298
      %v941 = vunpack.c.h.b16 %v298
      %v942 = vunpack.c.l.b16 %v299
      %v943 = vunpack.c.l.b16 %v300
      %v944 = vunpack.c.h.b16 %v300
      %v945 = vunpack.c.l.b16 %v301
      %v946 = vunpack.c.l.b16 %v302
      %v947 = vunpack.c.h.b16 %v302
      %v948 = vunpack.c.l.b16 %v303
      %v949 = vunpack.c.l.b16 %v304
      %v950 = vunpack.c.h.b16 %v304
      %v951 = vunpack.c.l.b16 %v305
      %v952 = vunpack.c.l.b16 %v306
      %v953 = vunpack.c.h.b16 %v306
      %v954 = vunpack.c.l.b16 %v307
      %v955 = vunpack.c.l.b16 %v308
      %v956 = vunpack.c.h.b16 %v308
      %v957 = vunpack.c.l.b16 %v309
      %v958 = vunpack.c.l.b16 %v310
      %v959 = vunpack.c.h.b16 %v310
      %v960 = vunpack.c.l.b16 %v311
      %v961 = vunpack.c.l.b16 %v312
      %v962 = vunpack.c.h.b16 %v312
      %v963 = vunpack.c.l.b16 %v313
      %v964 = vunpack.c.l.b16 %v314
      %v965 = vunpack.c.h.b16 %v314
      %v966 = vunpack.c.l.b16 %v315
      %v967 = vunpack.c.l.b16 %v316
      %v968 = vunpack.c.h.b16 %v316
      %v969 = vunpack.c.l.b16 %v317
      %v970 = vunpack.c.l.b16 %v318
      %v971 = vunpack.c.h.b16 %v318
      %v972 = vunpack.c.l.b16 %v319
      %v973 = vpack.c.b16 %v928, %v925
      %v974 = vpack.c.b16 %v929, %v926
      %v975 = vpack.c.b16 %v930, %v927
      %v976 = vpack.c.b16 %v934, %v931
      %v977 = vpack.c.b16 %v935, %v932
      %v978 = vpack.c.b16 %v936, %v933
      %v979 = vpack.c.b16 %v940, %v937
      %v980 = vpack.c.b16 %v941, %v938
      %v981 = vpack.c.b16 %v942, %v939
      %v982 = vpack.c.b16 %v946, %v943
      %v983 = vpack.c.b16 %v947, %v944
      %v984 = vpack.c.b16 %v948, %v945
      %v985 = vpack.c.b16 %v952, %v949
      %v986 = vpack.c.b16 %v953, %v950
      %v987 = vpack.c.b16 %v954, %v951
      %v988 = vpack.c.b16 %v958, %v955
      %v989 = vpack.c.b16 %v959, %v956
      %v990 = vpack.c.b16 %v960, %v957
      %v991 = vpack.c.b16 %v964, %v961
      %v992 = vpack.c.b16 %v965, %v962
      %v993 = vpack.c.b16 %v966, %v963
      %v994 = vpack.c.b16 %v970, %v967
      %v995 = vpack.c.b16 %v971, %v968
      %v996 = vpack.c.b16 %v972, %v969
      %v1053 = vunpack.c.l.b16 %v320
      %v1054 = vunpack.c.l.b16 %v321
      %v1055 = vunpack.c.l.b16 %v322
      %v1056 = vunpack.c.l.b16 %v323
      %v1057 = vunpack.c.l.b16 %v324
      %v1058 = vunpack.c.l.b16 %v325
      %v1059 = vunpack.c.l.b16 %v326
      %v1060 = vunpack.c.l.b16 %v327
      %v1061 = vunpack.c.l.b16 %v328
      %v1062 = vunpack.c.l.b16 %v329
      %v1063 = vunpack.c.l.b16 %v330
      %v1064 = vunpack.c.l.b16 %v331
      %v1065 = vunpack.c.l.b16 %v332
      %v1066 = vunpack.c.l.b16 %v333
      %v1067 = vunpack.c.l.b16 %v334
      %v1068 = vunpack.c.l.b16 %v335
      %v1069 = vunpack.c.l.b16 %v336
      %v1070 = vunpack.c.l.b16 %v337
      %v1071 = vunpack.c.l.b16 %v338
      %v1072 = vunpack.c.l.b16 %v339
      %v1073 = vunpack.c.l.b16 %v340
      %v1074 = vunpack.c.l.b16 %v341
      %v1075 = vunpack.c.l.b16 %v342
      %v1076 = vunpack.c.l.b16 %v343
      %v1077 = vunpack.c.l.b16 %v344
      %v1078 = vunpack.c.l.b16 %v345
      %v1079 = vunpack.c.l.b16 %v346
      %v1080 = vunpack.c.l.b16 %v347
      %v1081 = vunpack.c.l.b16 %v348
      %v1082 = vunpack.c.l.b16 %v349
      %v1083 = vunpack.c.l.b16 %v350
      %v1084 = vunpack.c.l.b16 %v351
      %v1085 = vunpack.c.l.b16 %v352
      %v1086 = vunpack.c.l.b16 %v353
      %v1087 = vunpack.c.l.b16 %v354
      %v1088 = vunpack.c.l.b16 %v355
      %v1089 = vunpack.c.l.b16 %v356
      %v1090 = vunpack.c.l.b16 %v357
      %v1091 = vunpack.c.l.b16 %v358
      %v1092 = vunpack.c.l.b16 %v359
      %v1093 = vpack.c.b16 %v1054, %v1053
      %v1094 = vpack.c.b16 %v1056, %v1055
      %v1095 = vpack.c.b16 %v1058, %v1057
      %v1096 = vpack.c.b16 %v1060, %v1059
      %v1097 = vpack.c.b16 %v1062, %v1061
      %v1098 = vpack.c.b16 %v1064, %v1063
      %v1099 = vpack.c.b16 %v1066, %v1065
      %v1100 = vpack.c.b16 %v1068, %v1067
      %v1101 = vpack.c.b16 %v1070, %v1069
      %v1102 = vpack.c.b16 %v1072, %v1071
      %v1103 = vpack.c.b16 %v1074, %v1073
      %v1104 = vpack.c.b16 %v1076, %v1075
      %v1105 = vpack.c.b16 %v1078, %v1077
      %v1106 = vpack.c.b16 %v1080, %v1079
      %v1107 = vpack.c.b16 %v1082, %v1081
      %v1108 = vpack.c.b16 %v1084, %v1083
      %v1109 = vpack.c.b16 %v1086, %v1085
      %v1110 = vpack.c.b16 %v1088, %v1087
      %v1111 = vpack.c.b16 %v1090, %v1089
      %v1112 = vpack.c.b16 %v1092, %v1091
      %v1134 = vsel %vm674, %v975, 0
      %v1137 = vsel %vm674, %v978, 0
      %v1140 = vsel %vm674, %v981, 0
      %v1143 = vsel %vm674, %v984, 0
      %v1146 = vsel %vm674, %v987, 0
      %v1149 = vsel %vm674, %v990, 0
      %v1152 = vsel %vm674, %v993, 0
      %v1155 = vsel %vm674, %v996, 0
      %1157 = vmatprep.subr.bf16.mxu0 0
      %1158 = vmatpush1.bf16.msra.mxu0 %v1093
      %1159 = vmatprep.subr.bf16.mxu0 0
      %1160 = vmatpush1.bf16.msra.mxu0 %v1094
      %1161 = vmatprep.subr.bf16.mxu0 0
      %1162 = vmatpush1.bf16.msra.mxu0 %v1095
      %1163 = vmatprep.subr.bf16.mxu0 0
      %1164 = vmatpush1.bf16.msra.mxu0 %v1096
      %1165 = vmatprep.subr.bf16.mxu0 0
      %1166 = vmatpush1.bf16.msra.mxu0 %v1097
      %1167 = vmatprep.subr.bf16.mxu0 0
      %1168 = vmatpush1.bf16.msra.mxu0 %v1098
      %1169 = vmatprep.subr.bf16.mxu0 0
      %1170 = vmatpush1.bf16.msra.mxu0 %v1099
      %1171 = vmatprep.subr.bf16.mxu0 0
      %1172 = vmatpush1.bf16.msra.mxu0 %v1100
      %1173 = vmatprep.subr.bf16.mxu0 0
      %1174 = vmatpush1.bf16.msra.mxu0 %v1101
      %1175 = vmatprep.subr.bf16.mxu0 0
      %1176 = vmatpush1.bf16.msra.mxu0 %v1102
      %1177 = vmatprep.subr.bf16.mxu0 0
      %1178 = vmatpush1.bf16.msra.mxu0 %v1103
      %1179 = vmatprep.subr.bf16.mxu0 0
      %1180 = vmatpush1.bf16.msra.mxu0 %v1104
      %1181 = vmatprep.subr.bf16.mxu0 0
      %1182 = vmatpush1.bf16.msra.mxu0 %v1105
      %1183 = vmatprep.subr.bf16.mxu0 0
      %1184 = vmatpush1.bf16.msra.mxu0 %v1106
      %1185 = vmatprep.subr.bf16.mxu0 0
      %1186 = vmatpush1.bf16.msra.mxu0 %v1107
      %1187 = vmatprep.subr.bf16.mxu0 0
      %1188 = vmatpush1.bf16.msra.mxu0 %v1108
      %1189 = vmatprep.mubr.bf16.mxu0 %v974
      %1190 = vmatmul.mubr.bf16.gmra.mrb[0].mxu0 %v973
      %v1191 = vpop.f32.mrb[0].mxu0
      %v1192 = vadd.f32 %v831, %v1191
      %v1193 = vpop.f32.mrb[0].mxu0
      %v1194 = vpop.f32.mrb[0].mxu0
      %v1195 = vadd.f32 %v834, %v1194
      %v1196 = vpop.f32.mrb[0].mxu0
      %1197 = vmatprep.mubr.bf16.mxu0 %v977
      %1198 = vmatmul.mubr.bf16.gmra.mrb[0].mxu0 %v976
      %v1199 = vpop.f32.mrb[0].mxu0
      %v1200 = vadd.f32 %v839, %v1199
      %v1201 = vpop.f32.mrb[0].mxu0
      %v1202 = vpop.f32.mrb[0].mxu0
      %v1203 = vadd.f32 %v842, %v1202
      %v1204 = vpop.f32.mrb[0].mxu0
      %1205 = vmatprep.mubr.bf16.mxu0 %v980
      %1206 = vmatmul.mubr.bf16.gmra.mrb[0].mxu0 %v979
      %v1207 = vpop.f32.mrb[0].mxu0
      %v1208 = vadd.f32 %v847, %v1207
      %v1209 = vpop.f32.mrb[0].mxu0
      %v1210 = vpop.f32.mrb[0].mxu0
      %v1211 = vadd.f32 %v850, %v1210
      %v1212 = vpop.f32.mrb[0].mxu0
      %1213 = vmatprep.mubr.bf16.mxu0 %v983
      %1214 = vmatmul.mubr.bf16.gmra.mrb[0].mxu0 %v982
      %v1215 = vpop.f32.mrb[0].mxu0
      %v1216 = vadd.f32 %v855, %v1215
      %v1217 = vpop.f32.mrb[0].mxu0
      %v1218 = vpop.f32.mrb[0].mxu0
      %v1219 = vadd.f32 %v858, %v1218
      %v1220 = vpop.f32.mrb[0].mxu0
      %1221 = vmatprep.mubr.bf16.mxu0 %v986
      %1222 = vmatmul.mubr.bf16.gmra.mrb[0].mxu0 %v985
      %v1223 = vpop.f32.mrb[0].mxu0
      %v1224 = vadd.f32 %v863, %v1223
      %v1225 = vpop.f32.mrb[0].mxu0
      %v1226 = vpop.f32.mrb[0].mxu0
      %v1227 = vadd.f32 %v866, %v1226
      %v1228 = vpop.f32.mrb[0].mxu0
      %1229 = vmatprep.mubr.bf16.mxu0 %v989
      %1230 = vmatmul.mubr.bf16.gmra.mrb[0].mxu0 %v988
      %v1231 = vpop.f32.mrb[0].mxu0
      %v1232 = vadd.f32 %v871, %v1231
      %v1233 = vpop.f32.mrb[0].mxu0
      %v1234 = vpop.f32.mrb[0].mxu0
      %v1235 = vadd.f32 %v874, %v1234
      %v1236 = vpop.f32.mrb[0].mxu0
      %1237 = vmatprep.mubr.bf16.mxu0 %v992
      %1238 = vmatmul.mubr.bf16.gmra.mrb[0].mxu0 %v991
      %v1239 = vpop.f32.mrb[0].mxu0
      %v1240 = vadd.f32 %v879, %v1239
      %v1241 = vpop.f32.mrb[0].mxu0
      %v1242 = vpop.f32.mrb[0].mxu0
      %v1243 = vadd.f32 %v882, %v1242
      %v1244 = vpop.f32.mrb[0].mxu0
      %1245 = vmatprep.mubr.bf16.mxu0 %v995
      %1246 = vmatmul.mubr.bf16.gmra.mrb[0].mxu0 %v994
      %v1247 = vpop.f32.mrb[0].mxu0
      %v1248 = vadd.f32 %v887, %v1247
      %v1249 = vpop.f32.mrb[0].mxu0
      %v1250 = vpop.f32.mrb[0].mxu0
      %v1251 = vadd.f32 %v890, %v1250
      %v1252 = vpop.f32.mrb[0].mxu0
      %1253 = vdwg.mxu0
      %1254 = vmatprep.subr.bf16.mxu0 0
      %1255 = vmatpush1.bf16.msra.mxu0 %v1109
      %1256 = vmatprep.subr.bf16.mxu0 0
      %1257 = vmatpush1.bf16.msra.mxu0 %v1110
      %1258 = vmatprep.subr.bf16.mxu0 0
      %1259 = vmatpush1.bf16.msra.mxu0 %v1111
      %1260 = vmatprep.subr.bf16.mxu0 0
      %1261 = vmatpush1.bf16.msra.mxu0 %v1112
      %1262 = vmatprep.subr.bf16.mxu0 0
      %1263 = vmatpush1.bf16.msra.mxu0 0
      %1264 = vmatprep.subr.bf16.mxu0 0
      %1265 = vmatpush1.bf16.msra.mxu0 0
      %1266 = vmatprep.subr.bf16.mxu0 0
      %1267 = vmatpush1.bf16.msra.mxu0 0
      %1268 = vmatprep.subr.bf16.mxu0 0
      %1269 = vmatpush1.bf16.msra.mxu0 0
      %1270 = vmatprep.subr.bf16.mxu0 0
      %1271 = vmatpush1.bf16.msra.mxu0 0
      %1272 = vmatprep.subr.bf16.mxu0 0
      %1273 = vmatpush1.bf16.msra.mxu0 0
      %1274 = vmatprep.subr.bf16.mxu0 0
      %1275 = vmatpush1.bf16.msra.mxu0 0
      %1276 = vmatprep.subr.bf16.mxu0 0
      %1277 = vmatpush1.bf16.msra.mxu0 0
      %1278 = vmatprep.subr.bf16.mxu0 0
      %1279 = vmatpush1.bf16.msra.mxu0 0
      %1280 = vmatprep.subr.bf16.mxu0 0
      %1281 = vmatpush1.bf16.msra.mxu0 0
      %1282 = vmatprep.subr.bf16.mxu0 0
      %1283 = vmatpush1.bf16.msra.mxu0 0
      %1284 = vmatprep.subr.bf16.mxu0 0
      %1285 = vmatpush1.bf16.msra.mxu0 0
      %1286 = vmatprep.mubr.bf16.mxu0 0
      %1287 = vmatmul.mubr.bf16.gmra.mrb[0].mxu0 %v1134
      %v1288 = vpop.f32.mrb[0].mxu0
      %v1289 = vadd.f32 %v1192, %v1288
      %v1290 = vpop.f32.mrb[0].mxu0
      %v1291 = vpop.f32.mrb[0].mxu0
      %v1292 = vadd.f32 %v1195, %v1291
      %v1293 = vpop.f32.mrb[0].mxu0
      %1294 = vmatprep.mubr.bf16.mxu0 0
      %1295 = vmatmul.mubr.bf16.gmra.mrb[0].mxu0 %v1137
      %v1296 = vpop.f32.mrb[0].mxu0
      %v1297 = vadd.f32 %v1200, %v1296
      %v1298 = vpop.f32.mrb[0].mxu0
      %v1299 = vpop.f32.mrb[0].mxu0
      %v1300 = vadd.f32 %v1203, %v1299
      %v1301 = vpop.f32.mrb[0].mxu0
      %1302 = vmatprep.mubr.bf16.mxu0 0
      %1303 = vmatmul.mubr.bf16.gmra.mrb[0].mxu0 %v1140
      %v1304 = vpop.f32.mrb[0].mxu0
      %v1305 = vadd.f32 %v1208, %v1304
      %v1306 = vpop.f32.mrb[0].mxu0
      %v1307 = vpop.f32.mrb[0].mxu0
      %v1308 = vadd.f32 %v1211, %v1307
      %v1309 = vpop.f32.mrb[0].mxu0
      %1310 = vmatprep.mubr.bf16.mxu0 0
      %1311 = vmatmul.mubr.bf16.gmra.mrb[0].mxu0 %v1143
      %v1312 = vpop.f32.mrb[0].mxu0
      %v1313 = vadd.f32 %v1216, %v1312
      %v1314 = vpop.f32.mrb[0].mxu0
      %v1315 = vpop.f32.mrb[0].mxu0
      %v1316 = vadd.f32 %v1219, %v1315
      %v1317 = vpop.f32.mrb[0].mxu0
      %1318 = vmatprep.mubr.bf16.mxu0 0
      %1319 = vmatmul.mubr.bf16.gmra.mrb[0].mxu0 %v1146
      %v1320 = vpop.f32.mrb[0].mxu0
      %v1321 = vadd.f32 %v1224, %v1320
      %v1322 = vpop.f32.mrb[0].mxu0
      %v1323 = vpop.f32.mrb[0].mxu0
      %v1324 = vadd.f32 %v1227, %v1323
      %v1325 = vpop.f32.mrb[0].mxu0
      %1326 = vmatprep.mubr.bf16.mxu0 0
      %1327 = vmatmul.mubr.bf16.gmra.mrb[0].mxu0 %v1149
      %v1328 = vpop.f32.mrb[0].mxu0
      %v1329 = vadd.f32 %v1232, %v1328
      %v1330 = vpop.f32.mrb[0].mxu0
      %v1331 = vpop.f32.mrb[0].mxu0
      %v1332 = vadd.f32 %v1235, %v1331
      %v1333 = vpop.f32.mrb[0].mxu0
      %1334 = vmatprep.mubr.bf16.mxu0 0
      %1335 = vmatmul.mubr.bf16.gmra.mrb[0].mxu0 %v1152
      %v1336 = vpop.f32.mrb[0].mxu0
      %v1337 = vadd.f32 %v1240, %v1336
      %v1338 = vpop.f32.mrb[0].mxu0
      %v1339 = vpop.f32.mrb[0].mxu0
      %v1340 = vadd.f32 %v1243, %v1339
      %v1341 = vpop.f32.mrb[0].mxu0
      %1342 = vmatprep.mubr.bf16.mxu0 0
      %1343 = vmatmul.mubr.bf16.gmra.mrb[0].mxu0 %v1155
      %v1344 = vpop.f32.mrb[0].mxu0
      %v1345 = vadd.f32 %v1248, %v1344
      %v1346 = vpop.f32.mrb[0].mxu0
      %v1347 = vpop.f32.mrb[0].mxu0
      %v1348 = vadd.f32 %v1251, %v1347
      %v1349 = vpop.f32.mrb[0].mxu0
      %1350 = vdwg.mxu0
      %s1351 = scalar_lea.vmem %s258, 384
      %v1352 = vld [vmem:[%s1351] sm:$0xff]
      %v1353 = vld [vmem:[%s1351 + $0x8] sm:$0xf]
      %v1354 = vld [vmem:[%s1351 + $0xc] sm:$0xff]
      %v1355 = vld [vmem:[%s1351 + $0x14] sm:$0xf]
      %v1356 = vld [vmem:[%s1351 + $0x18] sm:$0xff]
      %v1357 = vld [vmem:[%s1351 + $0x20] sm:$0xf]
      %v1358 = vld [vmem:[%s1351 + $0x24] sm:$0xff]
      %v1359 = vld [vmem:[%s1351 + $0x2c] sm:$0xf]
      %v1360 = vld [vmem:[%s1351 + $0x30] sm:$0xff]
      %v1361 = vld [vmem:[%s1351 + $0x38] sm:$0xf]
      %v1362 = vld [vmem:[%s1351 + $0x3c] sm:$0xff]
      %v1363 = vld [vmem:[%s1351 + $0x44] sm:$0xf]
      %v1364 = vld [vmem:[%s1351 + $0x48] sm:$0xff]
      %v1365 = vld [vmem:[%s1351 + $0x50] sm:$0xf]
      %v1366 = vld [vmem:[%s1351 + $0x54] sm:$0xff]
      %v1367 = vld [vmem:[%s1351 + $0x5c] sm:$0xf]
      %v1368 = vld [vmem:[%s1351 + $0x60] sm:$0xff]
      %v1369 = vld [vmem:[%s1351 + $0x68] sm:$0xf]
      %v1370 = vld [vmem:[%s1351 + $0x6c] sm:$0xff]
      %v1371 = vld [vmem:[%s1351 + $0x74] sm:$0xf]
      %v1372 = vld [vmem:[%s1351 + $0x78] sm:$0xff]
      %v1373 = vld [vmem:[%s1351 + $0x80] sm:$0xf]
      %v1374 = vld [vmem:[%s1351 + $0x84] sm:$0xff]
      %v1375 = vld [vmem:[%s1351 + $0x8c] sm:$0xf]
      %v1376 = vld [vmem:[%s1351 + $0x90] sm:$0xff]
      %v1377 = vld [vmem:[%s1351 + $0x98] sm:$0xf]
      %v1378 = vld [vmem:[%s1351 + $0x9c] sm:$0xff]
      %v1379 = vld [vmem:[%s1351 + $0xa4] sm:$0xf]
      %v1380 = vld [vmem:[%s1351 + $0xa8] sm:$0xff]
      %v1381 = vld [vmem:[%s1351 + $0xb0] sm:$0xf]
      %v1382 = vld [vmem:[%s1351 + $0xb4] sm:$0xff]
      %v1383 = vld [vmem:[%s1351 + $0xbc] sm:$0xf]
      %s1384 = scalar_lea.vmem %s265, 320
      %v1385 = vld [vmem:[%s1384] sm:$0xf]
      %v1386 = vld [vmem:[%s1384 + $0x4] sm:$0xf]
      %v1387 = vld [vmem:[%s1384 + $0x8] sm:$0xf]
      %v1388 = vld [vmem:[%s1384 + $0xc] sm:$0xf]
      %v1389 = vld [vmem:[%s1384 + $0x10] sm:$0xf]
      %v1390 = vld [vmem:[%s1384 + $0x14] sm:$0xf]
      %v1391 = vld [vmem:[%s1384 + $0x18] sm:$0xf]
      %v1392 = vld [vmem:[%s1384 + $0x1c] sm:$0xf]
      %v1393 = vld [vmem:[%s1384 + $0x20] sm:$0xf]
      %v1394 = vld [vmem:[%s1384 + $0x24] sm:$0xf]
      %v1395 = vld [vmem:[%s1384 + $0x28] sm:$0xf]
      %v1396 = vld [vmem:[%s1384 + $0x2c] sm:$0xf]
      %v1397 = vld [vmem:[%s1384 + $0x30] sm:$0xf]
      %v1398 = vld [vmem:[%s1384 + $0x34] sm:$0xf]
      %v1399 = vld [vmem:[%s1384 + $0x38] sm:$0xf]
      %v1400 = vld [vmem:[%s1384 + $0x3c] sm:$0xf]
      %v1401 = vld [vmem:[%s1384 + $0x40] sm:$0xf]
      %v1402 = vld [vmem:[%s1384 + $0x44] sm:$0xf]
      %v1403 = vld [vmem:[%s1384 + $0x48] sm:$0xf]
      %v1404 = vld [vmem:[%s1384 + $0x4c] sm:$0xf]
      %v1405 = vld [vmem:[%s1384 + $0x50] sm:$0xf]
      %v1406 = vld [vmem:[%s1384 + $0x54] sm:$0xf]
      %v1407 = vld [vmem:[%s1384 + $0x58] sm:$0xf]
      %v1408 = vld [vmem:[%s1384 + $0x5c] sm:$0xf]
      %v1409 = vld [vmem:[%s1384 + $0x60] sm:$0xf]
      %v1410 = vld [vmem:[%s1384 + $0x64] sm:$0xf]
      %v1411 = vld [vmem:[%s1384 + $0x68] sm:$0xf]
      %v1412 = vld [vmem:[%s1384 + $0x6c] sm:$0xf]
      %v1413 = vld [vmem:[%s1384 + $0x70] sm:$0xf]
      %v1414 = vld [vmem:[%s1384 + $0x74] sm:$0xf]
      %v1415 = vld [vmem:[%s1384 + $0x78] sm:$0xf]
      %v1416 = vld [vmem:[%s1384 + $0x7c] sm:$0xf]
      %v1417 = vld [vmem:[%s1384 + $0x80] sm:$0xf]
      %v1418 = vld [vmem:[%s1384 + $0x84] sm:$0xf]
      %v1419 = vld [vmem:[%s1384 + $0x88] sm:$0xf]
      %v1420 = vld [vmem:[%s1384 + $0x8c] sm:$0xf]
      %v1421 = vld [vmem:[%s1384 + $0x90] sm:$0xf]
      %v1422 = vld [vmem:[%s1384 + $0x94] sm:$0xf]
      %v1423 = vld [vmem:[%s1384 + $0x98] sm:$0xf]
      %v1424 = vld [vmem:[%s1384 + $0x9c] sm:$0xf]
      %v1457 = vunpack.c.l.b16 %v1352
      %v1458 = vunpack.c.h.b16 %v1352
      %v1459 = vunpack.c.l.b16 %v1353
      %v1460 = vunpack.c.l.b16 %v1354
      %v1461 = vunpack.c.h.b16 %v1354
      %v1462 = vunpack.c.l.b16 %v1355
      %v1463 = vunpack.c.l.b16 %v1356
      %v1464 = vunpack.c.h.b16 %v1356
      %v1465 = vunpack.c.l.b16 %v1357
      %v1466 = vunpack.c.l.b16 %v1358
      %v1467 = vunpack.c.h.b16 %v1358
      %v1468 = vunpack.c.l.b16 %v1359
      %v1469 = vunpack.c.l.b16 %v1360
      %v1470 = vunpack.c.h.b16 %v1360
      %v1471 = vunpack.c.l.b16 %v1361
      %v1472 = vunpack.c.l.b16 %v1362
      %v1473 = vunpack.c.h.b16 %v1362
      %v1474 = vunpack.c.l.b16 %v1363
      %v1475 = vunpack.c.l.b16 %v1364
      %v1476 = vunpack.c.h.b16 %v1364
      %v1477 = vunpack.c.l.b16 %v1365
      %v1478 = vunpack.c.l.b16 %v1366
      %v1479 = vunpack.c.h.b16 %v1366
      %v1480 = vunpack.c.l.b16 %v1367
      %v1481 = vunpack.c.l.b16 %v1368
      %v1482 = vunpack.c.h.b16 %v1368
      %v1483 = vunpack.c.l.b16 %v1369
      %v1484 = vunpack.c.l.b16 %v1370
      %v1485 = vunpack.c.h.b16 %v1370
      %v1486 = vunpack.c.l.b16 %v1371
      %v1487 = vunpack.c.l.b16 %v1372
      %v1488 = vunpack.c.h.b16 %v1372
      %v1489 = vunpack.c.l.b16 %v1373
      %v1490 = vunpack.c.l.b16 %v1374
      %v1491 = vunpack.c.h.b16 %v1374
      %v1492 = vunpack.c.l.b16 %v1375
      %v1493 = vunpack.c.l.b16 %v1376
      %v1494 = vunpack.c.h.b16 %v1376
      %v1495 = vunpack.c.l.b16 %v1377
      %v1496 = vunpack.c.l.b16 %v1378
      %v1497 = vunpack.c.h.b16 %v1378
      %v1498 = vunpack.c.l.b16 %v1379
      %v1499 = vunpack.c.l.b16 %v1380
      %v1500 = vunpack.c.h.b16 %v1380
      %v1501 = vunpack.c.l.b16 %v1381
      %v1502 = vunpack.c.l.b16 %v1382
      %v1503 = vunpack.c.h.b16 %v1382
      %v1504 = vunpack.c.l.b16 %v1383
      %v1505 = vpack.c.b16 %v1460, %v1457
      %v1506 = vpack.c.b16 %v1461, %v1458
      %v1507 = vpack.c.b16 %v1462, %v1459
      %v1508 = vpack.c.b16 %v1466, %v1463
      %v1509 = vpack.c.b16 %v1467, %v1464
      %v1510 = vpack.c.b16 %v1468, %v1465
      %v1511 = vpack.c.b16 %v1472, %v1469
      %v1512 = vpack.c.b16 %v1473, %v1470
      %v1513 = vpack.c.b16 %v1474, %v1471
      %v1514 = vpack.c.b16 %v1478, %v1475
      %v1515 = vpack.c.b16 %v1479, %v1476
      %v1516 = vpack.c.b16 %v1480, %v1477
      %v1517 = vpack.c.b16 %v1484, %v1481
      %v1518 = vpack.c.b16 %v1485, %v1482
      %v1519 = vpack.c.b16 %v1486, %v1483
      %v1520 = vpack.c.b16 %v1490, %v1487
      %v1521 = vpack.c.b16 %v1491, %v1488
      %v1522 = vpack.c.b16 %v1492, %v1489
      %v1523 = vpack.c.b16 %v1496, %v1493
      %v1524 = vpack.c.b16 %v1497, %v1494
      %v1525 = vpack.c.b16 %v1498, %v1495
      %v1526 = vpack.c.b16 %v1502, %v1499
      %v1527 = vpack.c.b16 %v1503, %v1500
      %v1528 = vpack.c.b16 %v1504, %v1501
      %v1585 = vunpack.c.l.b16 %v1385
      %v1586 = vunpack.c.l.b16 %v1386
      %v1587 = vunpack.c.l.b16 %v1387
      %v1588 = vunpack.c.l.b16 %v1388
      %v1589 = vunpack.c.l.b16 %v1389
      %v1590 = vunpack.c.l.b16 %v1390
      %v1591 = vunpack.c.l.b16 %v1391
      %v1592 = vunpack.c.l.b16 %v1392
      %v1593 = vunpack.c.l.b16 %v1393
      %v1594 = vunpack.c.l.b16 %v1394
      %v1595 = vunpack.c.l.b16 %v1395
      %v1596 = vunpack.c.l.b16 %v1396
      %v1597 = vunpack.c.l.b16 %v1397
      %v1598 = vunpack.c.l.b16 %v1398
      %v1599 = vunpack.c.l.b16 %v1399
      %v1600 = vunpack.c.l.b16 %v1400
      %v1601 = vunpack.c.l.b16 %v1401
      %v1602 = vunpack.c.l.b16 %v1402
      %v1603 = vunpack.c.l.b16 %v1403
      %v1604 = vunpack.c.l.b16 %v1404
      %v1605 = vunpack.c.l.b16 %v1405
      %v1606 = vunpack.c.l.b16 %v1406
      %v1607 = vunpack.c.l.b16 %v1407
      %v1608 = vunpack.c.l.b16 %v1408
      %v1609 = vunpack.c.l.b16 %v1409
      %v1610 = vunpack.c.l.b16 %v1410
      %v1611 = vunpack.c.l.b16 %v1411
      %v1612 = vunpack.c.l.b16 %v1412
      %v1613 = vunpack.c.l.b16 %v1413
      %v1614 = vunpack.c.l.b16 %v1414
      %v1615 = vunpack.c.l.b16 %v1415
      %v1616 = vunpack.c.l.b16 %v1416
      %v1617 = vunpack.c.l.b16 %v1417
      %v1618 = vunpack.c.l.b16 %v1418
      %v1619 = vunpack.c.l.b16 %v1419
      %v1620 = vunpack.c.l.b16 %v1420
      %v1621 = vunpack.c.l.b16 %v1421
      %v1622 = vunpack.c.l.b16 %v1422
      %v1623 = vunpack.c.l.b16 %v1423
      %v1624 = vunpack.c.l.b16 %v1424
      %v1625 = vpack.c.b16 %v1586, %v1585
      %v1626 = vpack.c.b16 %v1588, %v1587
      %v1627 = vpack.c.b16 %v1590, %v1589
      %v1628 = vpack.c.b16 %v1592, %v1591
      %v1629 = vpack.c.b16 %v1594, %v1593
      %v1630 = vpack.c.b16 %v1596, %v1595
      %v1631 = vpack.c.b16 %v1598, %v1597
      %v1632 = vpack.c.b16 %v1600, %v1599
      %v1633 = vpack.c.b16 %v1602, %v1601
      %v1634 = vpack.c.b16 %v1604, %v1603
      %v1635 = vpack.c.b16 %v1606, %v1605
      %v1636 = vpack.c.b16 %v1608, %v1607
      %v1637 = vpack.c.b16 %v1610, %v1609
      %v1638 = vpack.c.b16 %v1612, %v1611
      %v1639 = vpack.c.b16 %v1614, %v1613
      %v1640 = vpack.c.b16 %v1616, %v1615
      %v1641 = vpack.c.b16 %v1618, %v1617
      %v1642 = vpack.c.b16 %v1620, %v1619
      %v1643 = vpack.c.b16 %v1622, %v1621
      %v1644 = vpack.c.b16 %v1624, %v1623
      %v1666 = vsel %vm674, %v1507, 0
      %v1669 = vsel %vm674, %v1510, 0
      %v1672 = vsel %vm674, %v1513, 0
      %v1675 = vsel %vm674, %v1516, 0
      %v1678 = vsel %vm674, %v1519, 0
      %v1681 = vsel %vm674, %v1522, 0
      %v1684 = vsel %vm674, %v1525, 0
      %v1687 = vsel %vm674, %v1528, 0
      %1689 = vmatprep.subr.bf16.mxu0 0
      %1690 = vmatpush1.bf16.msra.mxu0 %v1625
      %1691 = vmatprep.subr.bf16.mxu0 0
      %1692 = vmatpush1.bf16.msra.mxu0 %v1626
      %1693 = vmatprep.subr.bf16.mxu0 0
      %1694 = vmatpush1.bf16.msra.mxu0 %v1627
      %1695 = vmatprep.subr.bf16.mxu0 0
      %1696 = vmatpush1.bf16.msra.mxu0 %v1628
      %1697 = vmatprep.subr.bf16.mxu0 0
      %1698 = vmatpush1.bf16.msra.mxu0 %v1629
      %1699 = vmatprep.subr.bf16.mxu0 0
      %1700 = vmatpush1.bf16.msra.mxu0 %v1630
      %1701 = vmatprep.subr.bf16.mxu0 0
      %1702 = vmatpush1.bf16.msra.mxu0 %v1631
      %1703 = vmatprep.subr.bf16.mxu0 0
      %1704 = vmatpush1.bf16.msra.mxu0 %v1632
      %1705 = vmatprep.subr.bf16.mxu0 0
      %1706 = vmatpush1.bf16.msra.mxu0 %v1633
      %1707 = vmatprep.subr.bf16.mxu0 0
      %1708 = vmatpush1.bf16.msra.mxu0 %v1634
      %1709 = vmatprep.subr.bf16.mxu0 0
      %1710 = vmatpush1.bf16.msra.mxu0 %v1635
      %1711 = vmatprep.subr.bf16.mxu0 0
      %1712 = vmatpush1.bf16.msra.mxu0 %v1636
      %1713 = vmatprep.subr.bf16.mxu0 0
      %1714 = vmatpush1.bf16.msra.mxu0 %v1637
      %1715 = vmatprep.subr.bf16.mxu0 0
      %1716 = vmatpush1.bf16.msra.mxu0 %v1638
      %1717 = vmatprep.subr.bf16.mxu0 0
      %1718 = vmatpush1.bf16.msra.mxu0 %v1639
      %1719 = vmatprep.subr.bf16.mxu0 0
      %1720 = vmatpush1.bf16.msra.mxu0 %v1640
      %1721 = vmatprep.mubr.bf16.mxu0 %v1506
      %1722 = vmatmul.mubr.bf16.gmra.mrb[0].mxu0 %v1505
      %v1723 = vpop.f32.mrb[0].mxu0
      %v1724 = vadd.f32 0.0, %v1723
      %v1725 = vpop.f32.mrb[0].mxu0
      %v1726 = vpop.f32.mrb[0].mxu0
      %v1727 = vadd.f32 0.0, %v1726
      %v1728 = vpop.f32.mrb[0].mxu0
      %1729 = vmatprep.mubr.bf16.mxu0 %v1509
      %1730 = vmatmul.mubr.bf16.gmra.mrb[0].mxu0 %v1508
      %v1731 = vpop.f32.mrb[0].mxu0
      %v1732 = vadd.f32 0.0, %v1731
      %v1733 = vpop.f32.mrb[0].mxu0
      %v1734 = vpop.f32.mrb[0].mxu0
      %v1735 = vadd.f32 0.0, %v1734
      %v1736 = vpop.f32.mrb[0].mxu0
      %1737 = vmatprep.mubr.bf16.mxu0 %v1512
      %1738 = vmatmul.mubr.bf16.gmra.mrb[0].mxu0 %v1511
      %v1739 = vpop.f32.mrb[0].mxu0
      %v1740 = vadd.f32 0.0, %v1739
      %v1741 = vpop.f32.mrb[0].mxu0
      %v1742 = vpop.f32.mrb[0].mxu0
      %v1743 = vadd.f32 0.0, %v1742
      %v1744 = vpop.f32.mrb[0].mxu0
      %1745 = vmatprep.mubr.bf16.mxu0 %v1515
      %1746 = vmatmul.mubr.bf16.gmra.mrb[0].mxu0 %v1514
      %v1747 = vpop.f32.mrb[0].mxu0
      %v1748 = vadd.f32 0.0, %v1747
      %v1749 = vpop.f32.mrb[0].mxu0
      %v1750 = vpop.f32.mrb[0].mxu0
      %v1751 = vadd.f32 0.0, %v1750
      %v1752 = vpop.f32.mrb[0].mxu0
      %1753 = vmatprep.mubr.bf16.mxu0 %v1518
      %1754 = vmatmul.mubr.bf16.gmra.mrb[0].mxu0 %v1517
      %v1755 = vpop.f32.mrb[0].mxu0
      %v1756 = vadd.f32 0.0, %v1755
      %v1757 = vpop.f32.mrb[0].mxu0
      %v1758 = vpop.f32.mrb[0].mxu0
      %v1759 = vadd.f32 0.0, %v1758
      %v1760 = vpop.f32.mrb[0].mxu0
      %1761 = vmatprep.mubr.bf16.mxu0 %v1521
      %1762 = vmatmul.mubr.bf16.gmra.mrb[0].mxu0 %v1520
      %v1763 = vpop.f32.mrb[0].mxu0
      %v1764 = vadd.f32 0.0, %v1763
      %v1765 = vpop.f32.mrb[0].mxu0
      %v1766 = vpop.f32.mrb[0].mxu0
      %v1767 = vadd.f32 0.0, %v1766
      %v1768 = vpop.f32.mrb[0].mxu0
      %1769 = vmatprep.mubr.bf16.mxu0 %v1524
      %1770 = vmatmul.mubr.bf16.gmra.mrb[0].mxu0 %v1523
      %v1771 = vpop.f32.mrb[0].mxu0
      %v1772 = vadd.f32 0.0, %v1771
      %v1773 = vpop.f32.mrb[0].mxu0
      %v1774 = vpop.f32.mrb[0].mxu0
      %v1775 = vadd.f32 0.0, %v1774
      %v1776 = vpop.f32.mrb[0].mxu0
      %1777 = vmatprep.mubr.bf16.mxu0 %v1527
      %1778 = vmatmul.mubr.bf16.gmra.mrb[0].mxu0 %v1526
      %v1779 = vpop.f32.mrb[0].mxu0
      %v1780 = vadd.f32 0.0, %v1779
      %v1781 = vpop.f32.mrb[0].mxu0
      %v1782 = vpop.f32.mrb[0].mxu0
      %v1783 = vadd.f32 0.0, %v1782
      %v1784 = vpop.f32.mrb[0].mxu0
      %1785 = vdwg.mxu0
      %1786 = vmatprep.subr.bf16.mxu0 0
      %1787 = vmatpush1.bf16.msra.mxu0 %v1641
      %1788 = vmatprep.subr.bf16.mxu0 0
      %1789 = vmatpush1.bf16.msra.mxu0 %v1642
      %1790 = vmatprep.subr.bf16.mxu0 0
      %1791 = vmatpush1.bf16.msra.mxu0 %v1643
      %1792 = vmatprep.subr.bf16.mxu0 0
      %1793 = vmatpush1.bf16.msra.mxu0 %v1644
      %1794 = vmatprep.subr.bf16.mxu0 0
      %1795 = vmatpush1.bf16.msra.mxu0 0
      %1796 = vmatprep.subr.bf16.mxu0 0
      %1797 = vmatpush1.bf16.msra.mxu0 0
      %1798 = vmatprep.subr.bf16.mxu0 0
      %1799 = vmatpush1.bf16.msra.mxu0 0
      %1800 = vmatprep.subr.bf16.mxu0 0
      %1801 = vmatpush1.bf16.msra.mxu0 0
      %1802 = vmatprep.subr.bf16.mxu0 0
      %1803 = vmatpush1.bf16.msra.mxu0 0
      %1804 = vmatprep.subr.bf16.mxu0 0
      %1805 = vmatpush1.bf16.msra.mxu0 0
      %1806 = vmatprep.subr.bf16.mxu0 0
      %1807 = vmatpush1.bf16.msra.mxu0 0
      %1808 = vmatprep.subr.bf16.mxu0 0
      %1809 = vmatpush1.bf16.msra.mxu0 0
      %1810 = vmatprep.subr.bf16.mxu0 0
      %1811 = vmatpush1.bf16.msra.mxu0 0
      %1812 = vmatprep.subr.bf16.mxu0 0
      %1813 = vmatpush1.bf16.msra.mxu0 0
      %1814 = vmatprep.subr.bf16.mxu0 0
      %1815 = vmatpush1.bf16.msra.mxu0 0
      %1816 = vmatprep.subr.bf16.mxu0 0
      %1817 = vmatpush1.bf16.msra.mxu0 0
      %1818 = vmatprep.mubr.bf16.mxu0 0
      %1819 = vmatmul.mubr.bf16.gmra.mrb[0].mxu0 %v1666
      %v1820 = vpop.f32.mrb[0].mxu0
      %v1821 = vadd.f32 %v1724, %v1820
      %v1822 = vpop.f32.mrb[0].mxu0
      %v1823 = vpop.f32.mrb[0].mxu0
      %v1824 = vadd.f32 %v1727, %v1823
      %v1825 = vpop.f32.mrb[0].mxu0
      %1826 = vmatprep.mubr.bf16.mxu0 0
      %1827 = vmatmul.mubr.bf16.gmra.mrb[0].mxu0 %v1669
      %v1828 = vpop.f32.mrb[0].mxu0
      %v1829 = vadd.f32 %v1732, %v1828
      %v1830 = vpop.f32.mrb[0].mxu0
      %v1831 = vpop.f32.mrb[0].mxu0
      %v1832 = vadd.f32 %v1735, %v1831
      %v1833 = vpop.f32.mrb[0].mxu0
      %1834 = vmatprep.mubr.bf16.mxu0 0
      %1835 = vmatmul.mubr.bf16.gmra.mrb[0].mxu0 %v1672
      %v1836 = vpop.f32.mrb[0].mxu0
      %v1837 = vadd.f32 %v1740, %v1836
      %v1838 = vpop.f32.mrb[0].mxu0
      %v1839 = vpop.f32.mrb[0].mxu0
      %v1840 = vadd.f32 %v1743, %v1839
      %v1841 = vpop.f32.mrb[0].mxu0
      %1842 = vmatprep.mubr.bf16.mxu0 0
      %1843 = vmatmul.mubr.bf16.gmra.mrb[0].mxu0 %v1675
      %v1844 = vpop.f32.mrb[0].mxu0
      %v1845 = vadd.f32 %v1748, %v1844
      %v1846 = vpop.f32.mrb[0].mxu0
      %v1847 = vpop.f32.mrb[0].mxu0
      %v1848 = vadd.f32 %v1751, %v1847
      %v1849 = vpop.f32.mrb[0].mxu0
      %1850 = vmatprep.mubr.bf16.mxu0 0
      %1851 = vmatmul.mubr.bf16.gmra.mrb[0].mxu0 %v1678
      %v1852 = vpop.f32.mrb[0].mxu0
      %v1853 = vadd.f32 %v1756, %v1852
      %v1854 = vpop.f32.mrb[0].mxu0
      %v1855 = vpop.f32.mrb[0].mxu0
      %v1856 = vadd.f32 %v1759, %v1855
      %v1857 = vpop.f32.mrb[0].mxu0
      %1858 = vmatprep.mubr.bf16.mxu0 0
      %1859 = vmatmul.mubr.bf16.gmra.mrb[0].mxu0 %v1681
      %v1860 = vpop.f32.mrb[0].mxu0
      %v1861 = vadd.f32 %v1764, %v1860
      %v1862 = vpop.f32.mrb[0].mxu0
      %v1863 = vpop.f32.mrb[0].mxu0
      %v1864 = vadd.f32 %v1767, %v1863
      %v1865 = vpop.f32.mrb[0].mxu0
      %1866 = vmatprep.mubr.bf16.mxu0 0
      %1867 = vmatmul.mubr.bf16.gmra.mrb[0].mxu0 %v1684
      %v1868 = vpop.f32.mrb[0].mxu0
      %v1869 = vadd.f32 %v1772, %v1868
      %v1870 = vpop.f32.mrb[0].mxu0
      %v1871 = vpop.f32.mrb[0].mxu0
      %v1872 = vadd.f32 %v1775, %v1871
      %v1873 = vpop.f32.mrb[0].mxu0
      %1874 = vmatprep.mubr.bf16.mxu0 0
      %1875 = vmatmul.mubr.bf16.gmra.mrb[0].mxu0 %v1687
      %v1876 = vpop.f32.mrb[0].mxu0
      %v1877 = vadd.f32 %v1780, %v1876
      %v1878 = vpop.f32.mrb[0].mxu0
      %v1879 = vpop.f32.mrb[0].mxu0
      %v1880 = vadd.f32 %v1783, %v1879
      %v1881 = vpop.f32.mrb[0].mxu0
      %1882 = vdwg.mxu0
      %v1883 = vadd.f32 %v1289, %v1821
      %v1884 = vadd.f32 %v1292, %v1824
      %v1885 = vadd.f32 %v1297, %v1829
      %v1886 = vadd.f32 %v1300, %v1832
      %v1887 = vadd.f32 %v1305, %v1837
      %v1888 = vadd.f32 %v1308, %v1840
      %v1889 = vadd.f32 %v1313, %v1845
      %v1890 = vadd.f32 %v1316, %v1848
      %v1891 = vadd.f32 %v1321, %v1853
      %v1892 = vadd.f32 %v1324, %v1856
      %v1893 = vadd.f32 %v1329, %v1861
      %v1894 = vadd.f32 %v1332, %v1864
      %v1895 = vadd.f32 %v1337, %v1869
      %v1896 = vadd.f32 %v1340, %v1872
      %v1897 = vadd.f32 %v1345, %v1877
      %v1898 = vadd.f32 %v1348, %v1880
      %v1899 = vld [vmem:[#allocation2] sm:$0xff]
      %v1900 = vld [vmem:[#allocation2 + $0x8] sm:$0xff]
      %v1901 = vld [vmem:[#allocation2 + $0x10] sm:$0xff]
      %v1902 = vld [vmem:[#allocation2 + $0x18] sm:$0xff]
      %v1903 = vld [vmem:[#allocation2 + $0x20] sm:$0xff]
      %v1904 = vld [vmem:[#allocation2 + $0x28] sm:$0xff]
      %v1905 = vld [vmem:[#allocation2 + $0x30] sm:$0xff]
      %v1906 = vld [vmem:[#allocation2 + $0x38] sm:$0xff]
      %v1907 = vld [vmem:[#allocation2 + $0x40] sm:$0xff]
      %v1908 = vld [vmem:[#allocation2 + $0x48] sm:$0xff]
      %v1909 = vld [vmem:[#allocation2 + $0x50] sm:$0xff]
      %v1910 = vld [vmem:[#allocation2 + $0x58] sm:$0xff]
      %v1911 = vld [vmem:[#allocation2 + $0x60] sm:$0xff]
      %v1912 = vld [vmem:[#allocation2 + $0x68] sm:$0xff]
      %v1913 = vld [vmem:[#allocation2 + $0x70] sm:$0xff]
      %v1914 = vld [vmem:[#allocation2 + $0x78] sm:$0xff]
      %v1915 = vadd.f32 %v1899, %v1883
      %v1916 = vadd.f32 %v1900, %v1884
      %v1917 = vadd.f32 %v1901, %v1885
      %v1918 = vadd.f32 %v1902, %v1886
      %v1919 = vadd.f32 %v1903, %v1887
      %v1920 = vadd.f32 %v1904, %v1888
      %v1921 = vadd.f32 %v1905, %v1889
      %v1922 = vadd.f32 %v1906, %v1890
      %v1923 = vadd.f32 %v1907, %v1891
      %v1924 = vadd.f32 %v1908, %v1892
      %v1925 = vadd.f32 %v1909, %v1893
      %v1926 = vadd.f32 %v1910, %v1894
      %v1927 = vadd.f32 %v1911, %v1895
      %v1928 = vadd.f32 %v1912, %v1896
      %v1929 = vadd.f32 %v1913, %v1897
      %v1930 = vadd.f32 %v1914, %v1898
      %1931 = vst [vmem:[#allocation2] sm:$0xff] %v1915
      %1932 = vst [vmem:[#allocation2 + $0x8] sm:$0xff] %v1916
      %1933 = vst [vmem:[#allocation2 + $0x10] sm:$0xff] %v1917
      %1934 = vst [vmem:[#allocation2 + $0x18] sm:$0xff] %v1918
      %1935 = vst [vmem:[#allocation2 + $0x20] sm:$0xff] %v1919
      %1936 = vst [vmem:[#allocation2 + $0x28] sm:$0xff] %v1920
      %1937 = vst [vmem:[#allocation2 + $0x30] sm:$0xff] %v1921
      %1938 = vst [vmem:[#allocation2 + $0x38] sm:$0xff] %v1922
      %1939 = vst [vmem:[#allocation2 + $0x40] sm:$0xff] %v1923
      %1940 = vst [vmem:[#allocation2 + $0x48] sm:$0xff] %v1924
      %1941 = vst [vmem:[#allocation2 + $0x50] sm:$0xff] %v1925
      %1942 = vst [vmem:[#allocation2 + $0x58] sm:$0xff] %v1926
      %1943 = vst [vmem:[#allocation2 + $0x60] sm:$0xff] %v1927
      %1944 = vst [vmem:[#allocation2 + $0x68] sm:$0xff] %v1928
      %1945 = vst [vmem:[#allocation2 + $0x70] sm:$0xff] %v1929
      %1946 = vst [vmem:[#allocation2 + $0x78] sm:$0xff] %v1930
      %p1947 = scmp.eq.s32.totalorder %s17, 2
      // Predicated region
      $region49: #{inres_forward.6} parent=43 // pred_check
        %p1948 = pneg %p1947
      $region50: #{inres_forward.6} parent=43 // pred_check_branch
        %1950 = sbr.rel (%p1948) target = $region52
      $region51: #{inres_forward.6} parent=43 // pred_region
        %v1951 = vld [vmem:[#allocation2] sm:$0xff]
        %v1952 = vld [vmem:[#allocation2 + $0x8] sm:$0xff]
        %v1953 = vld [vmem:[#allocation2 + $0x10] sm:$0xff]
        %v1954 = vld [vmem:[#allocation2 + $0x18] sm:$0xff]
        %v1955 = vld [vmem:[#allocation2 + $0x20] sm:$0xff]
        %v1956 = vld [vmem:[#allocation2 + $0x28] sm:$0xff]
        %v1957 = vld [vmem:[#allocation2 + $0x30] sm:$0xff]
        %v1958 = vld [vmem:[#allocation2 + $0x38] sm:$0xff]
        %v1959 = vld [vmem:[#allocation2 + $0x40] sm:$0xff]
        %v1960 = vld [vmem:[#allocation2 + $0x48] sm:$0xff]
        %v1961 = vld [vmem:[#allocation2 + $0x50] sm:$0xff]
        %v1962 = vld [vmem:[#allocation2 + $0x58] sm:$0xff]
        %v1963 = vld [vmem:[#allocation2 + $0x60] sm:$0xff]
        %v1964 = vld [vmem:[#allocation2 + $0x68] sm:$0xff]
        %v1965 = vld [vmem:[#allocation2 + $0x70] sm:$0xff]
        %v1966 = vld [vmem:[#allocation2 + $0x78] sm:$0xff]
        %v1967 = vld [vmem:[%s2] sm:$0x1]
        %v1969 = vlaneseq
        %v1970 = vshrl.u32 %v1969, 7
        %v1971 = vsub.s32 0, %v1970
        %v1972 = vrot.slane %v1967, %v1971
        %v1974 = vadd.f32 %v1951, %v1972
        %v1975 = vadd.f32 %v1952, %v1972
        %v1976 = vadd.f32 %v1953, %v1972
        %v1977 = vadd.f32 %v1954, %v1972
        %v1978 = vadd.f32 %v1955, %v1972
        %v1979 = vadd.f32 %v1956, %v1972
        %v1980 = vadd.f32 %v1957, %v1972
        %v1981 = vadd.f32 %v1958, %v1972
        %v1982 = vadd.f32 %v1959, %v1972
        %v1983 = vadd.f32 %v1960, %v1972
        %v1984 = vadd.f32 %v1961, %v1972
        %v1985 = vadd.f32 %v1962, %v1972
        %v1986 = vadd.f32 %v1963, %v1972
        %v1987 = vadd.f32 %v1964, %v1972
        %v1988 = vadd.f32 %v1965, %v1972
        %v1989 = vadd.f32 %v1966, %v1972
        %1990 = vmatprep.subr.mxu0 0.0
        %1991 = vmatpush1.msra.mxu0 %v1974
        %1992 = vmatprep.subr.mxu0 0.0
        %1993 = vmatpush1.msra.mxu0 %v1975
        %1994 = vmatprep.subr.mxu0 0.0
        %1995 = vmatpush1.msra.mxu0 %v1976
        %1996 = vmatprep.subr.mxu0 0.0
        %1997 = vmatpush1.msra.mxu0 %v1977
        %1998 = vmatprep.subr.mxu0 0.0
        %1999 = vmatpush1.msra.mxu0 %v1978
        %2000 = vmatprep.subr.mxu0 0.0
        %2001 = vmatpush1.msra.mxu0 %v1979
        %2002 = vmatprep.subr.mxu0 0.0
        %2003 = vmatpush1.msra.mxu0 %v1980
        %2004 = vmatprep.subr.mxu0 0.0
        %2005 = vmatpush1.msra.mxu0 %v1981
        %2006 = vmatprep.subr.mxu0 0.0
        %2007 = vmatpush1.msra.mxu0 %v1982
        %2008 = vmatprep.subr.mxu0 0.0
        %2009 = vmatpush1.msra.mxu0 %v1983
        %2010 = vmatprep.subr.mxu0 0.0
        %2011 = vmatpush1.msra.mxu0 %v1984
        %2012 = vmatprep.subr.mxu0 0.0
        %2013 = vmatpush1.msra.mxu0 %v1985
        %2014 = vmatprep.subr.mxu0 0.0
        %2015 = vmatpush1.msra.mxu0 %v1986
        %2016 = vmatprep.subr.mxu0 0.0
        %2017 = vmatpush1.msra.mxu0 %v1987
        %2018 = vmatprep.subr.mxu0 0.0
        %2019 = vmatpush1.msra.mxu0 %v1988
        %2020 = vmatprep.subr.mxu0 0.0
        %2021 = vmatpush1.msra.mxu0 %v1989
        %2022 = vmatprep.subr.mxu0 0.0
        %2023 = vmatpush1.msra.mxu0 0.0
        %2024 = vmatprep.subr.mxu0 0.0
        %2025 = vmatpush1.msra.mxu0 0.0
        %2026 = vmatprep.subr.mxu0 0.0
        %2027 = vmatpush1.msra.mxu0 0.0
        %2028 = vmatprep.subr.mxu0 0.0
        %2029 = vmatpush1.msra.mxu0 0.0
        %2030 = vmatprep.subr.mxu0 0.0
        %2031 = vmatpush1.msra.mxu0 0.0
        %2032 = vmatprep.subr.mxu0 0.0
        %2033 = vmatpush1.msra.mxu0 0.0
        %2034 = vmatprep.subr.mxu0 0.0
        %2035 = vmatpush1.msra.mxu0 0.0
        %2036 = vmatprep.subr.mxu0 0.0
        %2037 = vmatpush1.msra.mxu0 0.0
        %2038 = vmatprep.subr.mxu0 0.0
        %2039 = vmatpush1.msra.mxu0 0.0
        %2040 = vmatprep.subr.mxu0 0.0
        %2041 = vmatpush1.msra.mxu0 0.0
        %2042 = vmatprep.subr.mxu0 0.0
        %2043 = vmatpush1.msra.mxu0 0.0
        %2044 = vmatprep.subr.mxu0 0.0
        %2045 = vmatpush1.msra.mxu0 0.0
        %2046 = vmatprep.subr.mxu0 0.0
        %2047 = vmatpush1.msra.mxu0 0.0
        %2048 = vmatprep.subr.mxu0 0.0
        %2049 = vmatpush1.msra.mxu0 0.0
        %2050 = vmatprep.subr.mxu0 0.0
        %2051 = vmatpush1.msra.mxu0 0.0
        %2052 = vmatprep.subr.mxu0 0.0
        %2053 = vmatpush1.msra.mxu0 0.0
        %2054 = vmatprep.mubr.f32.mxu0 0.0
        %2055 = vmatmul.mubr.f32.gmra.mrb[0].mxu0 1.0
        %v2056 = vpop.f32.mrb[0].mxu0
        %v2057 = vadd.f32 0.0, %v2056
        %v2058 = vpop.f32.mrb[0].mxu0
        %2059 = vdwg.mxu0
        %v2060 = vmul.f32 %v1974, %v1974
        %v2061 = vmul.f32 %v1975, %v1975
        %v2062 = vmul.f32 %v1976, %v1976
        %v2063 = vmul.f32 %v1977, %v1977
        %v2064 = vmul.f32 %v1978, %v1978
        %v2065 = vmul.f32 %v1979, %v1979
        %v2066 = vmul.f32 %v1980, %v1980
        %v2067 = vmul.f32 %v1981, %v1981
        %v2068 = vmul.f32 %v1982, %v1982
        %v2069 = vmul.f32 %v1983, %v1983
        %v2070 = vmul.f32 %v1984, %v1984
        %v2071 = vmul.f32 %v1985, %v1985
        %v2072 = vmul.f32 %v1986, %v1986
        %v2073 = vmul.f32 %v1987, %v1987
        %v2074 = vmul.f32 %v1988, %v1988
        %v2075 = vmul.f32 %v1989, %v1989
        %2076 = vmatprep.subr.mxu0 0.0
        %2077 = vmatpush1.msra.mxu0 %v2060
        %2078 = vmatprep.subr.mxu0 0.0
        %2079 = vmatpush1.msra.mxu0 %v2061
        %2080 = vmatprep.subr.mxu0 0.0
        %2081 = vmatpush1.msra.mxu0 %v2062
        %2082 = vmatprep.subr.mxu0 0.0
        %2083 = vmatpush1.msra.mxu0 %v2063
        %2084 = vmatprep.subr.mxu0 0.0
        %2085 = vmatpush1.msra.mxu0 %v2064
        %2086 = vmatprep.subr.mxu0 0.0
        %2087 = vmatpush1.msra.mxu0 %v2065
        %2088 = vmatprep.subr.mxu0 0.0
        %2089 = vmatpush1.msra.mxu0 %v2066
        %2090 = vmatprep.subr.mxu0 0.0
        %2091 = vmatpush1.msra.mxu0 %v2067
        %2092 = vmatprep.subr.mxu0 0.0
        %2093 = vmatpush1.msra.mxu0 %v2068
        %2094 = vmatprep.subr.mxu0 0.0
        %2095 = vmatpush1.msra.mxu0 %v2069
        %2096 = vmatprep.subr.mxu0 0.0
        %2097 = vmatpush1.msra.mxu0 %v2070
        %2098 = vmatprep.subr.mxu0 0.0
        %2099 = vmatpush1.msra.mxu0 %v2071
        %2100 = vmatprep.subr.mxu0 0.0
        %2101 = vmatpush1.msra.mxu0 %v2072
        %2102 = vmatprep.subr.mxu0 0.0
        %2103 = vmatpush1.msra.mxu0 %v2073
        %2104 = vmatprep.subr.mxu0 0.0
        %2105 = vmatpush1.msra.mxu0 %v2074
        %2106 = vmatprep.subr.mxu0 0.0
        %2107 = vmatpush1.msra.mxu0 %v2075
        %2108 = vmatprep.subr.mxu0 0.0
        %2109 = vmatpush1.msra.mxu0 0.0
        %2110 = vmatprep.subr.mxu0 0.0
        %2111 = vmatpush1.msra.mxu0 0.0
        %2112 = vmatprep.subr.mxu0 0.0
        %2113 = vmatpush1.msra.mxu0 0.0
        %2114 = vmatprep.subr.mxu0 0.0
        %2115 = vmatpush1.msra.mxu0 0.0
        %2116 = vmatprep.subr.mxu0 0.0
        %2117 = vmatpush1.msra.mxu0 0.0
        %2118 = vmatprep.subr.mxu0 0.0
        %2119 = vmatpush1.msra.mxu0 0.0
        %2120 = vmatprep.subr.mxu0 0.0
        %2121 = vmatpush1.msra.mxu0 0.0
        %2122 = vmatprep.subr.mxu0 0.0
        %2123 = vmatpush1.msra.mxu0 0.0
        %2124 = vmatprep.subr.mxu0 0.0
        %2125 = vmatpush1.msra.mxu0 0.0
        %2126 = vmatprep.subr.mxu0 0.0
        %2127 = vmatpush1.msra.mxu0 0.0
        %2128 = vmatprep.subr.mxu0 0.0
        %2129 = vmatpush1.msra.mxu0 0.0
        %2130 = vmatprep.subr.mxu0 0.0
        %2131 = vmatpush1.msra.mxu0 0.0
        %2132 = vmatprep.subr.mxu0 0.0
        %2133 = vmatpush1.msra.mxu0 0.0
        %2134 = vmatprep.subr.mxu0 0.0
        %2135 = vmatpush1.msra.mxu0 0.0
        %2136 = vmatprep.subr.mxu0 0.0
        %2137 = vmatpush1.msra.mxu0 0.0
        %2138 = vmatprep.subr.mxu0 0.0
        %2139 = vmatpush1.msra.mxu0 0.0
        %2140 = vmatprep.mubr.f32.mxu0 0.0
        %2141 = vmatmul.mubr.f32.gmra.mrb[0].mxu0 1.0
        %v2142 = vpop.f32.mrb[0].mxu0
        %v2143 = vadd.f32 0.0, %v2142
        %v2144 = vpop.f32.mrb[0].mxu0
        %2145 = vdwg.mxu0
        %v2146 = vld [vmem:[%s5] sm:$0xff]
        %v2147 = vld [vmem:[%s5 + $0x8] sm:$0xff]
        %v2148 = vld [vmem:[%s5 + $0x10] sm:$0xff]
        %v2149 = vld [vmem:[%s5 + $0x18] sm:$0xff]
        %v2150 = vld [vmem:[%s5 + $0x20] sm:$0xff]
        %v2151 = vld [vmem:[%s5 + $0x28] sm:$0xff]
        %v2152 = vld [vmem:[%s5 + $0x30] sm:$0xff]
        %v2153 = vld [vmem:[%s5 + $0x38] sm:$0xff]
        %v2154 = vld [vmem:[%s5 + $0x40] sm:$0xff]
        %v2155 = vld [vmem:[%s5 + $0x48] sm:$0xff]
        %v2156 = vld [vmem:[%s5 + $0x50] sm:$0xff]
        %v2157 = vld [vmem:[%s5 + $0x58] sm:$0xff]
        %v2158 = vld [vmem:[%s5 + $0x60] sm:$0xff]
        %v2159 = vld [vmem:[%s5 + $0x68] sm:$0xff]
        %v2160 = vld [vmem:[%s5 + $0x70] sm:$0xff]
        %v2161 = vld [vmem:[%s5 + $0x78] sm:$0xff]
        %2162 = vmatprep.subr.mxu0 0.0
        %2163 = vmatpush1.msra.mxu0 %v2146
        %2164 = vmatprep.subr.mxu0 0.0
        %2165 = vmatpush1.msra.mxu0 %v2147
        %2166 = vmatprep.subr.mxu0 0.0
        %2167 = vmatpush1.msra.mxu0 %v2148
        %2168 = vmatprep.subr.mxu0 0.0
        %2169 = vmatpush1.msra.mxu0 %v2149
        %2170 = vmatprep.subr.mxu0 0.0
        %2171 = vmatpush1.msra.mxu0 %v2150
        %2172 = vmatprep.subr.mxu0 0.0
        %2173 = vmatpush1.msra.mxu0 %v2151
        %2174 = vmatprep.subr.mxu0 0.0
        %2175 = vmatpush1.msra.mxu0 %v2152
        %2176 = vmatprep.subr.mxu0 0.0
        %2177 = vmatpush1.msra.mxu0 %v2153
        %2178 = vmatprep.subr.mxu0 0.0
        %2179 = vmatpush1.msra.mxu0 %v2154
        %2180 = vmatprep.subr.mxu0 0.0
        %2181 = vmatpush1.msra.mxu0 %v2155
        %2182 = vmatprep.subr.mxu0 0.0
        %2183 = vmatpush1.msra.mxu0 %v2156
        %2184 = vmatprep.subr.mxu0 0.0
        %2185 = vmatpush1.msra.mxu0 %v2157
        %2186 = vmatprep.subr.mxu0 0.0
        %2187 = vmatpush1.msra.mxu0 %v2158
        %2188 = vmatprep.subr.mxu0 0.0
        %2189 = vmatpush1.msra.mxu0 %v2159
        %2190 = vmatprep.subr.mxu0 0.0
        %2191 = vmatpush1.msra.mxu0 %v2160
        %2192 = vmatprep.subr.mxu0 0.0
        %2193 = vmatpush1.msra.mxu0 %v2161
        %2194 = vmatprep.subr.mxu0 0.0
        %2195 = vmatpush1.msra.mxu0 0.0
        %2196 = vmatprep.subr.mxu0 0.0
        %2197 = vmatpush1.msra.mxu0 0.0
        %2198 = vmatprep.subr.mxu0 0.0
        %2199 = vmatpush1.msra.mxu0 0.0
        %2200 = vmatprep.subr.mxu0 0.0
        %2201 = vmatpush1.msra.mxu0 0.0
        %2202 = vmatprep.subr.mxu0 0.0
        %2203 = vmatpush1.msra.mxu0 0.0
        %2204 = vmatprep.subr.mxu0 0.0
        %2205 = vmatpush1.msra.mxu0 0.0
        %2206 = vmatprep.subr.mxu0 0.0
        %2207 = vmatpush1.msra.mxu0 0.0
        %2208 = vmatprep.subr.mxu0 0.0
        %2209 = vmatpush1.msra.mxu0 0.0
        %2210 = vmatprep.subr.mxu0 0.0
        %2211 = vmatpush1.msra.mxu0 0.0
        %2212 = vmatprep.subr.mxu0 0.0
        %2213 = vmatpush1.msra.mxu0 0.0
        %2214 = vmatprep.subr.mxu0 0.0
        %2215 = vmatpush1.msra.mxu0 0.0
        %2216 = vmatprep.subr.mxu0 0.0
        %2217 = vmatpush1.msra.mxu0 0.0
        %2218 = vmatprep.subr.mxu0 0.0
        %2219 = vmatpush1.msra.mxu0 0.0
        %2220 = vmatprep.subr.mxu0 0.0
        %2221 = vmatpush1.msra.mxu0 0.0
        %2222 = vmatprep.subr.mxu0 0.0
        %2223 = vmatpush1.msra.mxu0 0.0
        %2224 = vmatprep.subr.mxu0 0.0
        %2225 = vmatpush1.msra.mxu0 0.0
        %2226 = vmatprep.mubr.f32.mxu0 0.0
        %2227 = vmatmul.mubr.f32.gmra.mrb[0].mxu0 %v2057
        %v2228 = vpop.f32.mrb[0].mxu0
        %v2229 = vadd.f32 0.0, %v2228
        %v2230 = vpop.f32.mrb[0].mxu0
        %2231 = vdwg.mxu0
        %v2232 = vmul.f32 %v2229, 0.0009765625
        %2233 = vmatprep.subr.mxu0 0.0
        %2234 = vmatpush1.msra.mxu0 %v2146
        %2235 = vmatprep.subr.mxu0 0.0
        %2236 = vmatpush1.msra.mxu0 %v2147
        %2237 = vmatprep.subr.mxu0 0.0
        %2238 = vmatpush1.msra.mxu0 %v2148
        %2239 = vmatprep.subr.mxu0 0.0
        %2240 = vmatpush1.msra.mxu0 %v2149
        %2241 = vmatprep.subr.mxu0 0.0
        %2242 = vmatpush1.msra.mxu0 %v2150
        %2243 = vmatprep.subr.mxu0 0.0
        %2244 = vmatpush1.msra.mxu0 %v2151
        %2245 = vmatprep.subr.mxu0 0.0
        %2246 = vmatpush1.msra.mxu0 %v2152
        %2247 = vmatprep.subr.mxu0 0.0
        %2248 = vmatpush1.msra.mxu0 %v2153
        %2249 = vmatprep.subr.mxu0 0.0
        %2250 = vmatpush1.msra.mxu0 %v2154
        %2251 = vmatprep.subr.mxu0 0.0
        %2252 = vmatpush1.msra.mxu0 %v2155
        %2253 = vmatprep.subr.mxu0 0.0
        %2254 = vmatpush1.msra.mxu0 %v2156
        %2255 = vmatprep.subr.mxu0 0.0
        %2256 = vmatpush1.msra.mxu0 %v2157
        %2257 = vmatprep.subr.mxu0 0.0
        %2258 = vmatpush1.msra.mxu0 %v2158
        %2259 = vmatprep.subr.mxu0 0.0
        %2260 = vmatpush1.msra.mxu0 %v2159
        %2261 = vmatprep.subr.mxu0 0.0
        %2262 = vmatpush1.msra.mxu0 %v2160
        %2263 = vmatprep.subr.mxu0 0.0
        %2264 = vmatpush1.msra.mxu0 %v2161
        %2265 = vmatprep.subr.mxu0 0.0
        %2266 = vmatpush1.msra.mxu0 0.0
        %2267 = vmatprep.subr.mxu0 0.0
        %2268 = vmatpush1.msra.mxu0 0.0
        %2269 = vmatprep.subr.mxu0 0.0
        %2270 = vmatpush1.msra.mxu0 0.0
        %2271 = vmatprep.subr.mxu0 0.0
        %2272 = vmatpush1.msra.mxu0 0.0
        %2273 = vmatprep.subr.mxu0 0.0
        %2274 = vmatpush1.msra.mxu0 0.0
        %2275 = vmatprep.subr.mxu0 0.0
        %2276 = vmatpush1.msra.mxu0 0.0
        %2277 = vmatprep.subr.mxu0 0.0
        %2278 = vmatpush1.msra.mxu0 0.0
        %2279 = vmatprep.subr.mxu0 0.0
        %2280 = vmatpush1.msra.mxu0 0.0
        %2281 = vmatprep.subr.mxu0 0.0
        %2282 = vmatpush1.msra.mxu0 0.0
        %2283 = vmatprep.subr.mxu0 0.0
        %2284 = vmatpush1.msra.mxu0 0.0
        %2285 = vmatprep.subr.mxu0 0.0
        %2286 = vmatpush1.msra.mxu0 0.0
        %2287 = vmatprep.subr.mxu0 0.0
        %2288 = vmatpush1.msra.mxu0 0.0
        %2289 = vmatprep.subr.mxu0 0.0
        %2290 = vmatpush1.msra.mxu0 0.0
        %2291 = vmatprep.subr.mxu0 0.0
        %2292 = vmatpush1.msra.mxu0 0.0
        %2293 = vmatprep.subr.mxu0 0.0
        %2294 = vmatpush1.msra.mxu0 0.0
        %2295 = vmatprep.subr.mxu0 0.0
        %2296 = vmatpush1.msra.mxu0 0.0
        %2297 = vmatprep.mubr.f32.mxu0 0.0
        %2298 = vmatmul.mubr.f32.gmra.mrb[0].mxu0 %v2143
        %v2299 = vpop.f32.mrb[0].mxu0
        %v2300 = vadd.f32 0.0, %v2299
        %v2301 = vpop.f32.mrb[0].mxu0
        %2302 = vdwg.mxu0
        %v2303 = vmul.f32 %v2300, 0.0009765625
        %v2304 = vmul.f32 %v2232, %v2232
        %v2305 = vsub.f32 %v2303, %v2304
        %v2306 = vlaneseq
        %v2307 = vshrl.u32 %v2306, 7
        %v2308 = vsub.s32 0, %v2307
        %v2309 = vrot.slane %v2232, %v2308
        %v2310 = vsub.f32 %v1974, %v2309
        %v2311 = vsub.f32 %v1975, %v2309
        %v2312 = vsub.f32 %v1976, %v2309
        %v2313 = vsub.f32 %v1977, %v2309
        %v2314 = vsub.f32 %v1978, %v2309
        %v2315 = vsub.f32 %v1979, %v2309
        %v2316 = vsub.f32 %v1980, %v2309
        %v2317 = vsub.f32 %v1981, %v2309
        %v2318 = vsub.f32 %v1982, %v2309
        %v2319 = vsub.f32 %v1983, %v2309
        %v2320 = vsub.f32 %v1984, %v2309
        %v2321 = vsub.f32 %v1985, %v2309
        %v2322 = vsub.f32 %v1986, %v2309
        %v2323 = vsub.f32 %v1987, %v2309
        %v2324 = vsub.f32 %v1988, %v2309
        %v2325 = vsub.f32 %v1989, %v2309
        %v2326 = vadd.f32 %v2305, 1e-05
        %v2327 = vrsqrt.pop %v2326
        %v2328 = vlaneseq
        %v2329 = vshrl.u32 %v2328, 7
        %v2330 = vsub.s32 0, %v2329
        %v2331 = vrot.slane %v2327, %v2330
        %v2332 = vmul.f32 %v2310, %v2331
        %v2333 = vmul.f32 %v2311, %v2331
        %v2334 = vmul.f32 %v2312, %v2331
        %v2335 = vmul.f32 %v2313, %v2331
        %v2336 = vmul.f32 %v2314, %v2331
        %v2337 = vmul.f32 %v2315, %v2331
        %v2338 = vmul.f32 %v2316, %v2331
        %v2339 = vmul.f32 %v2317, %v2331
        %v2340 = vmul.f32 %v2318, %v2331
        %v2341 = vmul.f32 %v2319, %v2331
        %v2342 = vmul.f32 %v2320, %v2331
        %v2343 = vmul.f32 %v2321, %v2331
        %v2344 = vmul.f32 %v2322, %v2331
        %v2345 = vmul.f32 %v2323, %v2331
        %v2346 = vmul.f32 %v2324, %v2331
        %v2347 = vmul.f32 %v2325, %v2331
        %v2348 = vld [vmem:[%s3] sm:$0x1]
        %v2350 = vlaneseq
        %v2351 = vshrl.u32 %v2350, 7
        %v2352 = vsub.s32 0, %v2351
        %v2353 = vrot.slane %v2348, %v2352
        %v2355 = vmul.f32 %v2332, %v2353
        %v2356 = vmul.f32 %v2333, %v2353
        %v2357 = vmul.f32 %v2334, %v2353
        %v2358 = vmul.f32 %v2335, %v2353
        %v2359 = vmul.f32 %v2336, %v2353
        %v2360 = vmul.f32 %v2337, %v2353
        %v2361 = vmul.f32 %v2338, %v2353
        %v2362 = vmul.f32 %v2339, %v2353
        %v2363 = vmul.f32 %v2340, %v2353
        %v2364 = vmul.f32 %v2341, %v2353
        %v2365 = vmul.f32 %v2342, %v2353
        %v2366 = vmul.f32 %v2343, %v2353
        %v2367 = vmul.f32 %v2344, %v2353
        %v2368 = vmul.f32 %v2345, %v2353
        %v2369 = vmul.f32 %v2346, %v2353
        %v2370 = vmul.f32 %v2347, %v2353
        %v2371 = vld [vmem:[%s4] sm:$0x1]
        %v2373 = vlaneseq
        %v2374 = vshrl.u32 %v2373, 7
        %v2375 = vsub.s32 0, %v2374
        %v2376 = vrot.slane %v2371, %v2375
        %v2378 = vadd.f32 %v2355, %v2376
        %v2379 = vadd.f32 %v2356, %v2376
        %v2380 = vadd.f32 %v2357, %v2376
        %v2381 = vadd.f32 %v2358, %v2376
        %v2382 = vadd.f32 %v2359, %v2376
        %v2383 = vadd.f32 %v2360, %v2376
        %v2384 = vadd.f32 %v2361, %v2376
        %v2385 = vadd.f32 %v2362, %v2376
        %v2386 = vadd.f32 %v2363, %v2376
        %v2387 = vadd.f32 %v2364, %v2376
        %v2388 = vadd.f32 %v2365, %v2376
        %v2389 = vadd.f32 %v2366, %v2376
        %v2390 = vadd.f32 %v2367, %v2376
        %v2391 = vadd.f32 %v2368, %v2376
        %v2392 = vadd.f32 %v2369, %v2376
        %v2393 = vadd.f32 %v2370, %v2376
        %v2394 = vmax.f32 %v2378, 0.0
        %v2395 = vmax.f32 %v2379, 0.0
        %v2396 = vmax.f32 %v2380, 0.0
        %v2397 = vmax.f32 %v2381, 0.0
        %v2398 = vmax.f32 %v2382, 0.0
        %v2399 = vmax.f32 %v2383, 0.0
        %v2400 = vmax.f32 %v2384, 0.0
        %v2401 = vmax.f32 %v2385, 0.0
        %v2402 = vmax.f32 %v2386, 0.0
        %v2403 = vmax.f32 %v2387, 0.0
        %v2404 = vmax.f32 %v2388, 0.0
        %v2405 = vmax.f32 %v2389, 0.0
        %v2406 = vmax.f32 %v2390, 0.0
        %v2407 = vmax.f32 %v2391, 0.0
        %v2408 = vmax.f32 %v2392, 0.0
        %v2409 = vmax.f32 %v2393, 0.0
        %2410 = vst [vmem:[%s6] sm:$0xff] %v2394
        %2411 = vst [vmem:[%s6 + $0x8] sm:$0xff] %v2395
        %2412 = vst [vmem:[%s6 + $0x10] sm:$0xff] %v2396
        %2413 = vst [vmem:[%s6 + $0x18] sm:$0xff] %v2397
        %2414 = vst [vmem:[%s6 + $0x20] sm:$0xff] %v2398
        %2415 = vst [vmem:[%s6 + $0x28] sm:$0xff] %v2399
        %2416 = vst [vmem:[%s6 + $0x30] sm:$0xff] %v2400
        %2417 = vst [vmem:[%s6 + $0x38] sm:$0xff] %v2401
        %2418 = vst [vmem:[%s6 + $0x40] sm:$0xff] %v2402
        %2419 = vst [vmem:[%s6 + $0x48] sm:$0xff] %v2403
        %2420 = vst [vmem:[%s6 + $0x50] sm:$0xff] %v2404
        %2421 = vst [vmem:[%s6 + $0x58] sm:$0xff] %v2405
        %2422 = vst [vmem:[%s6 + $0x60] sm:$0xff] %v2406
        %2423 = vst [vmem:[%s6 + $0x68] sm:$0xff] %v2407
        %2424 = vst [vmem:[%s6 + $0x70] sm:$0xff] %v2408
        %2425 = vst [vmem:[%s6 + $0x78] sm:$0xff] %v2409
      $region52: #{inres_forward.6} parent=43 // pred_fallthru
        _
      // Predicated region
      $region53: #{inres_forward.6} parent=43 // pred_check
        %p2426 = pneg %p166
      $region54: #{inres_forward.6} parent=43 // pred_check_branch
        %2428 = sbr.rel (%p2426) target = $region56
      $region55: #{inres_forward.6} parent=43 // pred_region
        _
      $region56: #{inres_forward.6} parent=43 // pred_fallthru
        _
      // Predicated region
      $region57: #{inres_forward.6} parent=43 // pred_check
        %p2429 = pneg %p166
      $region58: #{inres_forward.6} parent=43 // pred_check_branch
        %2431 = sbr.rel (%p2429) target = $region60
      $region59: #{inres_forward.6} parent=43 // pred_region
        _
      $region60: #{inres_forward.6} parent=43 // pred_fallthru
        _
    $region44: #{inres_forward.6} parent=5 // pred_fallthru
      _
    %p2432 = scmp.le.s32.totalorder 2, %s12
    // Predicated region
    $region61: #{inres_forward.6} parent=5 // pred_check
      %p2433 = pneg %p2432
    $region62: #{inres_forward.6} parent=5 // pred_check_branch
      %2435 = sbr.rel (%p2433) target = $region64
    $region63: #{inres_forward.6} parent=5 // pred_region
      %s2436 = ssub.s32 %s12, 2
    $region64: #{inres_forward.6} parent=5 // pred_fallthru
      _
  $region6: #{inres_forward.6} parent=0 // loop_footer
    %s16 = sadd.s32 1, %s12
  $region7: #{inres_forward.6} parent=0 // loop_footer_branch
    %11 = sbr.rel target = $region3
  $region8: #{inres_forward.6} parent=0 // loop_exit
    _

// kernel: inres_forward.7
$region0: #{inres_forward.7}
  #allocation0 [shape = 'u32[]', space=smem, size = 0x4, offset = 0x4, fixed_abs, tag = 'smem constant byte address 0x4 - core index']
  #allocation1 [shape = 'u32[144,128]{1,0:T(1,128)}', space=vmem, size = 0x12000, scoped, tag = 'internal scratch']
  #allocation2 [shape = 'f32[128,128]{1,0:T(8,128)}', space=vmem, size = 0x10000, scoped, tag = 'scratch operand']
  #allocation3 [shape = 'f32[1,1]{1,0:T(1,128)S(1)}', space=vmem, size = 0x200, scoped, tag = 'scoped memory for inres_forward.7']
  %s0 = inlined_call_operand.vmem [shape: bf16[9,128,160], index: 0, kind: input, shape index: {}]
  %s1 = inlined_call_operand.vmem [shape: bf16[9,160,128], index: 1, kind: input, shape index: {}]
  %s2 = inlined_call_operand.vmem [shape: f32[1,128], index: 2, kind: input, shape index: {}]
  %s3 = inlined_call_operand.vmem [shape: f32[1,128], index: 3, kind: input, shape index: {}]
  %s4 = inlined_call_operand.vmem [shape: f32[1,128], index: 4, kind: input, shape index: {}]
  %s5 = inlined_call_operand.vmem [shape: f32[128,128], index: 5, kind: input, shape index: {}]
  %s6 = inlined_call_operand.vmem [shape: f32[2,128], index: 6, kind: input, shape index: {}]
  %s7 = inlined_call_operand.vmem [shape: f32[128,2], index: 7, kind: input, shape index: {}]
  %s8 = inlined_call_operand.vmem [shape: f32[128,16], index: 8, kind: input, shape index: {}]
  %s9 = inlined_call_operand.vmem [shape: f32[16,128], index: 9, kind: input, shape index: {}]
  %s10 = inlined_call_operand.vmem [shape: f32[1,16], index: 10, kind: input, shape index: {}]
  %s11 = inlined_call_operand.<no memory space> [shape: f32[1,1], index: 11, kind: input, shape index: {}]
  %s12 = inlined_call_operand.vmem [shape: f32[1,16], index: 12, kind: input, shape index: {}]
  %s13 = inlined_call_operand.vmem [shape: f32[1,16], index: 13, kind: input, shape index: {}]
  %s14 = inlined_call_operand.vmem [shape: f32[128,128], index: 14, kind: input, shape index: {}]
  %s15 = inlined_call_operand.vmem [shape: f32[128,128], index: 15, kind: output, shape index: {}]
  %s16 = sld [smem:[#allocation0]]
  $region101: #{inres_forward.7} parent=0
    _
  %s18 = ssub.s32 1, %s16
  %s19 = scalar_select 0, %s18, %s16
  %v20 = vstv %s11
  %21 = vst [vmem:[#allocation3] sm:$0x1] %v20
  loop: start=0, step=1, limit=5
  $region2: #{inres_forward.7} parent=0 // loop_pre_header
    _
  $region3: #{inres_forward.7} parent=0 // loop_header
    %s23 = sphi 0, %s27
    %p24 = scmp.ge.s32.totalorder %s23, 5
    %s33 = sphi 0, %s35
    %s36 = sphi 0, %s33
    %s37 = sphi 0, %s36
    %s53 = sphi 0, %s37
    %s59 = sphi 0, %s61
    %s62 = sphi 0, %s59
    %s63 = sphi 0, %s62
    %s79 = sphi 0, %s63
    %s83 = sphi 0, %s83
    %s85 = sphi 0, %s83
    %s86 = sphi 0, %s85
    %s100 = sphi 0, %s86
    %s104 = sphi 0, %s104
    %s106 = sphi 0, %s104
    %s107 = sphi 0, %s106
    %s121 = sphi 0, %s107
    %s125 = sphi 0, %s125
    %s127 = sphi 0, %s125
    %s128 = sphi 0, %s127
    %s142 = sphi 0, %s128
    %s146 = sphi 0, %s146
    %s148 = sphi 0, %s146
    %s149 = sphi 0, %s148
    %s163 = sphi 0, %s149
    %s167 = sphi 0, %s167
    %s169 = sphi 0, %s167
    %s170 = sphi 0, %s169
    %s184 = sphi 0, %s170
    %s188 = sphi 0, %s188
    %s190 = sphi 0, %s188
    %s191 = sphi 0, %s190
    %s205 = sphi 0, %s191
    %s209 = sphi 0, %s209
    %s211 = sphi 0, %s209
    %s212 = sphi 0, %s211
    %s226 = sphi 0, %s212
    %s230 = sphi 0, %s230
    %s232 = sphi 0, %s230
    %s233 = sphi 0, %s232
    %s247 = sphi 0, %s233
    %s251 = sphi 0, %s251
    %s253 = sphi 0, %s251
    %s254 = sphi 0, %s253
    %s268 = sphi 0, %s254
    %s272 = sphi 0, %s272
    %s274 = sphi 0, %s272
    %s275 = sphi 0, %s274
    %s289 = sphi 0, %s275
    %s293 = sphi 0, %s293
    %s295 = sphi 0, %s293
    %s296 = sphi 0, %s295
    %s310 = sphi 0, %s296
    %s314 = sphi 0, %s314
    %s316 = sphi 0, %s314
    %s317 = sphi 0, %s316
    %s331 = sphi 0, %s317
    %s335 = sphi 0, %s335
    %s337 = sphi 0, %s335
    %s338 = sphi 0, %s337
    %s352 = sphi 0, %s338
    %s356 = sphi 0, %s356
    %s358 = sphi 0, %s356
    %s359 = sphi 0, %s358
    %s373 = sphi 0, %s359
  $region4: #{inres_forward.7} parent=0 // loop_header_branch
    %26 = sbr.rel (%p24) target = $region8
  $region5: #{inres_forward.7} parent=0 // loop_body
    %s28 = ssub.s32 %s23, 1
    %s29 = ssub.s32 %s23, 2
    %s30 = sadd.s32 %s23, 1
    %s31 = ssub.s32 %s23, %s30
    %p32 = scmp.eq.s32.totalorder %s31, 0
    %s34 = sadd.s32 %s33, 1
    %s35 = scalar_select %p32, %s33, %s34
    %p38 = pneg %p32
    %p39 = scmp.eq.s32.totalorder %s23, 2
    %p40 = por %p38, %p39
    %p41 = scmp.ne.s32.totalorder %s33, %s36
    %p42 = scmp.eq.s32.totalorder %s23, 0
    %p43 = por %p41, %p42
    %p44 = scmp.ne.s32.totalorder %s33, %s36
    %p45 = scmp.eq.s32.totalorder %s28, 2
    %p46 = por %p44, %p45
    %p47 = scmp.ne.s32.totalorder %s36, %s37
    %p48 = scmp.eq.s32.totalorder %s28, 0
    %p49 = por %p47, %p48
    %p50 = scmp.ne.s32.totalorder %s36, %s37
    %p51 = scmp.eq.s32.totalorder %s29, 2
    %p52 = por %p50, %p51
    %p54 = scmp.ne.s32.totalorder %s37, %s53
    %p55 = scmp.eq.s32.totalorder %s29, 0
    %p56 = por %p54, %p55
    %s57 = ssub.s32 %s23, %s30
    %p58 = scmp.eq.s32.totalorder %s57, 0
    %s60 = sadd.s32 %s59, 1
    %s61 = scalar_select %p58, %s59, %s60
    %p64 = pneg %p58
    %p65 = scmp.eq.s32.totalorder %s23, 2
    %p66 = por %p64, %p65
    %p67 = scmp.ne.s32.totalorder %s59, %s62
    %p68 = scmp.eq.s32.totalorder %s23, 0
    %p69 = por %p67, %p68
    %p70 = scmp.ne.s32.totalorder %s59, %s62
    %p71 = scmp.eq.s32.totalorder %s28, 2
    %p72 = por %p70, %p71
    %p73 = scmp.ne.s32.totalorder %s62, %s63
    %p74 = scmp.eq.s32.totalorder %s28, 0
    %p75 = por %p73, %p74
    %p76 = scmp.ne.s32.totalorder %s62, %s63
    %p77 = scmp.eq.s32.totalorder %s29, 2
    %p78 = por %p76, %p77
    %p80 = scmp.ne.s32.totalorder %s63, %s79
    %p81 = scmp.eq.s32.totalorder %s29, 0
    %p82 = por %p80, %p81
    %s84 = sadd.s32 %s83, 1
    %p87 = scmp.eq.s32.totalorder %s23, 2
    %p88 = scmp.ne.s32.totalorder %s83, %s85
    %p89 = scmp.eq.s32.totalorder %s23, 0
    %p90 = por %p88, %p89
    %p91 = scmp.ne.s32.totalorder %s83, %s85
    %p92 = scmp.eq.s32.totalorder %s28, 2
    %p93 = por %p91, %p92
    %p94 = scmp.ne.s32.totalorder %s85, %s86
    %p95 = scmp.eq.s32.totalorder %s28, 0
    %p96 = por %p94, %p95
    %p97 = scmp.ne.s32.totalorder %s85, %s86
    %p98 = scmp.eq.s32.totalorder %s29, 2
    %p99 = por %p97, %p98
    %p101 = scmp.ne.s32.totalorder %s86, %s100
    %p102 = scmp.eq.s32.totalorder %s29, 0
    %p103 = por %p101, %p102
    %s105 = sadd.s32 %s104, 1
    %p108 = scmp.eq.s32.totalorder %s23, 2
    %p109 = scmp.ne.s32.totalorder %s104, %s106
    %p110 = scmp.eq.s32.totalorder %s23, 0
    %p111 = por %p109, %p110
    %p112 = scmp.ne.s32.totalorder %s104, %s106
    %p113 = scmp.eq.s32.totalorder %s28, 2
    %p114 = por %p112, %p113
    %p115 = scmp.ne.s32.totalorder %s106, %s107
    %p116 = scmp.eq.s32.totalorder %s28, 0
    %p117 = por %p115, %p116
    %p118 = scmp.ne.s32.totalorder %s106, %s107
    %p119 = scmp.eq.s32.totalorder %s29, 2
    %p120 = por %p118, %p119
    %p122 = scmp.ne.s32.totalorder %s107, %s121
    %p123 = scmp.eq.s32.totalorder %s29, 0
    %p124 = por %p122, %p123
    %s126 = sadd.s32 %s125, 1
    %p129 = scmp.eq.s32.totalorder %s23, 2
    %p130 = scmp.ne.s32.totalorder %s125, %s127
    %p131 = scmp.eq.s32.totalorder %s23, 0
    %p132 = por %p130, %p131
    %p133 = scmp.ne.s32.totalorder %s125, %s127
    %p134 = scmp.eq.s32.totalorder %s28, 2
    %p135 = por %p133, %p134
    %p136 = scmp.ne.s32.totalorder %s127, %s128
    %p137 = scmp.eq.s32.totalorder %s28, 0
    %p138 = por %p136, %p137
    %p139 = scmp.ne.s32.totalorder %s127, %s128
    %p140 = scmp.eq.s32.totalorder %s29, 2
    %p141 = por %p139, %p140
    %p143 = scmp.ne.s32.totalorder %s128, %s142
    %p144 = scmp.eq.s32.totalorder %s29, 0
    %p145 = por %p143, %p144
    %s147 = sadd.s32 %s146, 1
    %p150 = scmp.eq.s32.totalorder %s23, 2
    %p151 = scmp.ne.s32.totalorder %s146, %s148
    %p152 = scmp.eq.s32.totalorder %s23, 0
    %p153 = por %p151, %p152
    %p154 = scmp.ne.s32.totalorder %s146, %s148
    %p155 = scmp.eq.s32.totalorder %s28, 2
    %p156 = por %p154, %p155
    %p157 = scmp.ne.s32.totalorder %s148, %s149
    %p158 = scmp.eq.s32.totalorder %s28, 0
    %p159 = por %p157, %p158
    %p160 = scmp.ne.s32.totalorder %s148, %s149
    %p161 = scmp.eq.s32.totalorder %s29, 2
    %p162 = por %p160, %p161
    %p164 = scmp.ne.s32.totalorder %s149, %s163
    %p165 = scmp.eq.s32.totalorder %s29, 0
    %p166 = por %p164, %p165
    %s168 = sadd.s32 %s167, 1
    %p171 = scmp.eq.s32.totalorder %s23, 2
    %p172 = scmp.ne.s32.totalorder %s167, %s169
    %p173 = scmp.eq.s32.totalorder %s23, 0
    %p174 = por %p172, %p173
    %p175 = scmp.ne.s32.totalorder %s167, %s169
    %p176 = scmp.eq.s32.totalorder %s28, 2
    %p177 = por %p175, %p176
    %p178 = scmp.ne.s32.totalorder %s169, %s170
    %p179 = scmp.eq.s32.totalorder %s28, 0
    %p180 = por %p178, %p179
    %p181 = scmp.ne.s32.totalorder %s169, %s170
    %p182 = scmp.eq.s32.totalorder %s29, 2
    %p183 = por %p181, %p182
    %p185 = scmp.ne.s32.totalorder %s170, %s184
    %p186 = scmp.eq.s32.totalorder %s29, 0
    %p187 = por %p185, %p186
    %s189 = sadd.s32 %s188, 1
    %p192 = scmp.eq.s32.totalorder %s23, 2
    %p193 = scmp.ne.s32.totalorder %s188, %s190
    %p194 = scmp.eq.s32.totalorder %s23, 0
    %p195 = por %p193, %p194
    %p196 = scmp.ne.s32.totalorder %s188, %s190
    %p197 = scmp.eq.s32.totalorder %s28, 2
    %p198 = por %p196, %p197
    %p199 = scmp.ne.s32.totalorder %s190, %s191
    %p200 = scmp.eq.s32.totalorder %s28, 0
    %p201 = por %p199, %p200
    %p202 = scmp.ne.s32.totalorder %s190, %s191
    %p203 = scmp.eq.s32.totalorder %s29, 2
    %p204 = por %p202, %p203
    %p206 = scmp.ne.s32.totalorder %s191, %s205
    %p207 = scmp.eq.s32.totalorder %s29, 0
    %p208 = por %p206, %p207
    %s210 = sadd.s32 %s209, 1
    %p213 = scmp.eq.s32.totalorder %s23, 2
    %p214 = scmp.ne.s32.totalorder %s209, %s211
    %p215 = scmp.eq.s32.totalorder %s23, 0
    %p216 = por %p214, %p215
    %p217 = scmp.ne.s32.totalorder %s209, %s211
    %p218 = scmp.eq.s32.totalorder %s28, 2
    %p219 = por %p217, %p218
    %p220 = scmp.ne.s32.totalorder %s211, %s212
    %p221 = scmp.eq.s32.totalorder %s28, 0
    %p222 = por %p220, %p221
    %p223 = scmp.ne.s32.totalorder %s211, %s212
    %p224 = scmp.eq.s32.totalorder %s29, 2
    %p225 = por %p223, %p224
    %p227 = scmp.ne.s32.totalorder %s212, %s226
    %p228 = scmp.eq.s32.totalorder %s29, 0
    %p229 = por %p227, %p228
    %s231 = sadd.s32 %s230, 1
    %p234 = scmp.eq.s32.totalorder %s23, 2
    %p235 = scmp.ne.s32.totalorder %s230, %s232
    %p236 = scmp.eq.s32.totalorder %s23, 0
    %p237 = por %p235, %p236
    %p238 = scmp.ne.s32.totalorder %s230, %s232
    %p239 = scmp.eq.s32.totalorder %s28, 2
    %p240 = por %p238, %p239
    %p241 = scmp.ne.s32.totalorder %s232, %s233
    %p242 = scmp.eq.s32.totalorder %s28, 0
    %p243 = por %p241, %p242
    %p244 = scmp.ne.s32.totalorder %s232, %s233
    %p245 = scmp.eq.s32.totalorder %s29, 2
    %p246 = por %p244, %p245
    %p248 = scmp.ne.s32.totalorder %s233, %s247
    %p249 = scmp.eq.s32.totalorder %s29, 0
    %p250 = por %p248, %p249
    %s252 = sadd.s32 %s251, 1
    %p255 = scmp.eq.s32.totalorder %s23, 2
    %p256 = scmp.ne.s32.totalorder %s251, %s253
    %p257 = scmp.eq.s32.totalorder %s23, 0
    %p258 = por %p256, %p257
    %p259 = scmp.ne.s32.totalorder %s251, %s253
    %p260 = scmp.eq.s32.totalorder %s28, 2
    %p261 = por %p259, %p260
    %p262 = scmp.ne.s32.totalorder %s253, %s254
    %p263 = scmp.eq.s32.totalorder %s28, 0
    %p264 = por %p262, %p263
    %p265 = scmp.ne.s32.totalorder %s253, %s254
    %p266 = scmp.eq.s32.totalorder %s29, 2
    %p267 = por %p265, %p266
    %p269 = scmp.ne.s32.totalorder %s254, %s268
    %p270 = scmp.eq.s32.totalorder %s29, 0
    %p271 = por %p269, %p270
    %s273 = sadd.s32 %s272, 1
    %p276 = scmp.eq.s32.totalorder %s23, 2
    %p277 = scmp.ne.s32.totalorder %s272, %s274
    %p278 = scmp.eq.s32.totalorder %s23, 0
    %p279 = por %p277, %p278
    %p280 = scmp.ne.s32.totalorder %s272, %s274
    %p281 = scmp.eq.s32.totalorder %s28, 2
    %p282 = por %p280, %p281
    %p283 = scmp.ne.s32.totalorder %s274, %s275
    %p284 = scmp.eq.s32.totalorder %s28, 0
    %p285 = por %p283, %p284
    %p286 = scmp.ne.s32.totalorder %s274, %s275
    %p287 = scmp.eq.s32.totalorder %s29, 2
    %p288 = por %p286, %p287
    %p290 = scmp.ne.s32.totalorder %s275, %s289
    %p291 = scmp.eq.s32.totalorder %s29, 0
    %p292 = por %p290, %p291
    %s294 = sadd.s32 %s293, 1
    %p297 = scmp.eq.s32.totalorder %s23, 2
    %p298 = scmp.ne.s32.totalorder %s293, %s295
    %p299 = scmp.eq.s32.totalorder %s23, 0
    %p300 = por %p298, %p299
    %p301 = scmp.ne.s32.totalorder %s293, %s295
    %p302 = scmp.eq.s32.totalorder %s28, 2
    %p303 = por %p301, %p302
    %p304 = scmp.ne.s32.totalorder %s295, %s296
    %p305 = scmp.eq.s32.totalorder %s28, 0
    %p306 = por %p304, %p305
    %p307 = scmp.ne.s32.totalorder %s295, %s296
    %p308 = scmp.eq.s32.totalorder %s29, 2
    %p309 = por %p307, %p308
    %p311 = scmp.ne.s32.totalorder %s296, %s310
    %p312 = scmp.eq.s32.totalorder %s29, 0
    %p313 = por %p311, %p312
    %s315 = sadd.s32 %s314, 1
    %p318 = scmp.eq.s32.totalorder %s23, 2
    %p319 = scmp.ne.s32.totalorder %s314, %s316
    %p320 = scmp.eq.s32.totalorder %s23, 0
    %p321 = por %p319, %p320
    %p322 = scmp.ne.s32.totalorder %s314, %s316
    %p323 = scmp.eq.s32.totalorder %s28, 2
    %p324 = por %p322, %p323
    %p325 = scmp.ne.s32.totalorder %s316, %s317
    %p326 = scmp.eq.s32.totalorder %s28, 0
    %p327 = por %p325, %p326
    %p328 = scmp.ne.s32.totalorder %s316, %s317
    %p329 = scmp.eq.s32.totalorder %s29, 2
    %p330 = por %p328, %p329
    %p332 = scmp.ne.s32.totalorder %s317, %s331
    %p333 = scmp.eq.s32.totalorder %s29, 0
    %p334 = por %p332, %p333
    %s336 = sadd.s32 %s335, 1
    %p339 = scmp.eq.s32.totalorder %s23, 2
    %p340 = scmp.ne.s32.totalorder %s335, %s337
    %p341 = scmp.eq.s32.totalorder %s23, 0
    %p342 = por %p340, %p341
    %p343 = scmp.ne.s32.totalorder %s335, %s337
    %p344 = scmp.eq.s32.totalorder %s28, 2
    %p345 = por %p343, %p344
    %p346 = scmp.ne.s32.totalorder %s337, %s338
    %p347 = scmp.eq.s32.totalorder %s28, 0
    %p348 = por %p346, %p347
    %p349 = scmp.ne.s32.totalorder %s337, %s338
    %p350 = scmp.eq.s32.totalorder %s29, 2
    %p351 = por %p349, %p350
    %p353 = scmp.ne.s32.totalorder %s338, %s352
    %p354 = scmp.eq.s32.totalorder %s29, 0
    %p355 = por %p353, %p354
    %s357 = sadd.s32 %s356, 1
    %p360 = scmp.eq.s32.totalorder %s23, 2
    %p361 = scmp.ne.s32.totalorder %s356, %s358
    %p362 = scmp.eq.s32.totalorder %s23, 0
    %p363 = por %p361, %p362
    %p364 = scmp.ne.s32.totalorder %s356, %s358
    %p365 = scmp.eq.s32.totalorder %s28, 2
    %p366 = por %p364, %p365
    %p367 = scmp.ne.s32.totalorder %s358, %s359
    %p368 = scmp.eq.s32.totalorder %s28, 0
    %p369 = por %p367, %p368
    %p370 = scmp.ne.s32.totalorder %s358, %s359
    %p371 = scmp.eq.s32.totalorder %s29, 2
    %p372 = por %p370, %p371
    %p374 = scmp.ne.s32.totalorder %s359, %s373
    %p375 = scmp.eq.s32.totalorder %s29, 0
    %p376 = por %p374, %p375
    %p377 = scmp.le.s32.totalorder 1, %s23
    %p378 = scmp.lt.s32.totalorder %s23, 4
    %p379 = pnand %p377, %p378
    %p380 = pneg %p379
    // Predicated region
    $region9: #{inres_forward.7} parent=5 // pred_check
      _
    $region10: #{inres_forward.7} parent=5 // pred_check_branch
      %382 = sbr.rel (%p379) target = $region12
    $region11: #{inres_forward.7} parent=5 // pred_region
      %s383 = ssub.s32 %s23, 1
      // Predicated region
      $region13: #{inres_forward.7} parent=11 // pred_check
        %p384 = pneg %p96
      $region14: #{inres_forward.7} parent=11 // pred_check_branch
        %386 = sbr.rel (%p384) target = $region16
      $region15: #{inres_forward.7} parent=11 // pred_region
        _
      $region16: #{inres_forward.7} parent=11 // pred_fallthru
        _
      // Predicated region
      $region17: #{inres_forward.7} parent=11 // pred_check
        %p387 = pneg %p117
      $region18: #{inres_forward.7} parent=11 // pred_check_branch
        %389 = sbr.rel (%p387) target = $region20
      $region19: #{inres_forward.7} parent=11 // pred_region
        _
      $region20: #{inres_forward.7} parent=11 // pred_fallthru
        _
      // Predicated region
      $region21: #{inres_forward.7} parent=11 // pred_check
        %p390 = pneg %p138
      $region22: #{inres_forward.7} parent=11 // pred_check_branch
        %392 = sbr.rel (%p390) target = $region24
      $region23: #{inres_forward.7} parent=11 // pred_region
        _
      $region24: #{inres_forward.7} parent=11 // pred_fallthru
        _
      // Predicated region
      $region25: #{inres_forward.7} parent=11 // pred_check
        %p393 = pneg %p159
      $region26: #{inres_forward.7} parent=11 // pred_check_branch
        %395 = sbr.rel (%p393) target = $region28
      $region27: #{inres_forward.7} parent=11 // pred_region
        _
      $region28: #{inres_forward.7} parent=11 // pred_fallthru
        _
      // Predicated region
      $region29: #{inres_forward.7} parent=11 // pred_check
        %p396 = pneg %p180
      $region30: #{inres_forward.7} parent=11 // pred_check_branch
        %398 = sbr.rel (%p396) target = $region32
      $region31: #{inres_forward.7} parent=11 // pred_region
        _
      $region32: #{inres_forward.7} parent=11 // pred_fallthru
        _
      // Predicated region
      $region33: #{inres_forward.7} parent=11 // pred_check
        %p399 = pneg %p201
      $region34: #{inres_forward.7} parent=11 // pred_check_branch
        %401 = sbr.rel (%p399) target = $region36
      $region35: #{inres_forward.7} parent=11 // pred_region
        _
      $region36: #{inres_forward.7} parent=11 // pred_fallthru
        _
      // Predicated region
      $region37: #{inres_forward.7} parent=11 // pred_check
        %p402 = pneg %p222
      $region38: #{inres_forward.7} parent=11 // pred_check_branch
        %404 = sbr.rel (%p402) target = $region40
      $region39: #{inres_forward.7} parent=11 // pred_region
        _
      $region40: #{inres_forward.7} parent=11 // pred_fallthru
        _
      // Predicated region
      $region41: #{inres_forward.7} parent=11 // pred_check
        %p405 = pneg %p243
      $region42: #{inres_forward.7} parent=11 // pred_check_branch
        %407 = sbr.rel (%p405) target = $region44
      $region43: #{inres_forward.7} parent=11 // pred_region
        _
      $region44: #{inres_forward.7} parent=11 // pred_fallthru
        _
      // Predicated region
      $region45: #{inres_forward.7} parent=11 // pred_check
        %p408 = pneg %p264
      $region46: #{inres_forward.7} parent=11 // pred_check_branch
        %410 = sbr.rel (%p408) target = $region48
      $region47: #{inres_forward.7} parent=11 // pred_region
        _
      $region48: #{inres_forward.7} parent=11 // pred_fallthru
        _
      // Predicated region
      $region49: #{inres_forward.7} parent=11 // pred_check
        %p411 = pneg %p285
      $region50: #{inres_forward.7} parent=11 // pred_check_branch
        %413 = sbr.rel (%p411) target = $region52
      $region51: #{inres_forward.7} parent=11 // pred_region
        _
      $region52: #{inres_forward.7} parent=11 // pred_fallthru
        _
      // Predicated region
      $region53: #{inres_forward.7} parent=11 // pred_check
        %p414 = pneg %p306
      $region54: #{inres_forward.7} parent=11 // pred_check_branch
        %416 = sbr.rel (%p414) target = $region56
      $region55: #{inres_forward.7} parent=11 // pred_region
        _
      $region56: #{inres_forward.7} parent=11 // pred_fallthru
        _
      // Predicated region
      $region57: #{inres_forward.7} parent=11 // pred_check
        %p417 = pneg %p327
      $region58: #{inres_forward.7} parent=11 // pred_check_branch
        %419 = sbr.rel (%p417) target = $region60
      $region59: #{inres_forward.7} parent=11 // pred_region
        _
      $region60: #{inres_forward.7} parent=11 // pred_fallthru
        _
      // Predicated region
      $region61: #{inres_forward.7} parent=11 // pred_check
        %p420 = pneg %p348
      $region62: #{inres_forward.7} parent=11 // pred_check_branch
        %422 = sbr.rel (%p420) target = $region64
      $region63: #{inres_forward.7} parent=11 // pred_region
        _
      $region64: #{inres_forward.7} parent=11 // pred_fallthru
        _
    $region12: #{inres_forward.7} parent=5 // pred_fallthru
      _
    %p423 = scmp.lt.s32.totalorder %s23, 3
    // Predicated region
    $region65: #{inres_forward.7} parent=5 // pred_check
      %p424 = pneg %p423
    $region66: #{inres_forward.7} parent=5 // pred_check_branch
      %426 = sbr.rel (%p424) target = $region68
    $region67: #{inres_forward.7} parent=5 // pred_region
      // Predicated region
      $region69: #{inres_forward.7} parent=67 // pred_check
        %p427 = pneg %p43
      $region70: #{inres_forward.7} parent=67 // pred_check_branch
        %429 = sbr.rel (%p427) target = $region72
      $region71: #{inres_forward.7} parent=67 // pred_region
        %s430 = smul.u32 3, %s23
        %p431 = scmp.lt.s32.totalorder %s430, 8
        %s432 = scalar_select %p431, %s430, 8
        %s433 = smul.addr %s432, 32
        %s434 = smul.addr %s433, 4
        %s435 = scalar_lea.vmem %s0, %s434
        %s436 = smul.u32 3, %s23
      $region72: #{inres_forward.7} parent=67 // pred_fallthru
        _
      // Predicated region
      $region73: #{inres_forward.7} parent=67 // pred_check
        %p437 = pneg %p69
      $region74: #{inres_forward.7} parent=67 // pred_check_branch
        %439 = sbr.rel (%p437) target = $region76
      $region75: #{inres_forward.7} parent=67 // pred_region
        %s440 = smul.u32 3, %s23
        %p441 = scmp.lt.s32.totalorder %s440, 8
        %s442 = scalar_select %p441, %s440, 8
        %s443 = smul.addr %s442, 20
        %s444 = smul.addr %s443, 4
        %s445 = scalar_lea.vmem %s1, %s444
        %s446 = smul.u32 3, %s23
      $region76: #{inres_forward.7} parent=67 // pred_fallthru
        _
    $region68: #{inres_forward.7} parent=5 // pred_fallthru
      _
    %p447 = scmp.le.s32.totalorder 1, %s23
    %p448 = scmp.lt.s32.totalorder %s23, 4
    %p449 = pnand %p447, %p448
    %p450 = pneg %p449
    // Predicated region
    $region77: #{inres_forward.7} parent=5 // pred_check
      _
    $region78: #{inres_forward.7} parent=5 // pred_check_branch
      %452 = sbr.rel (%p449) target = $region80
    $region79: #{inres_forward.7} parent=5 // pred_region
      %s453 = ssub.s32 %s23, 1
      %s454 = smul.u32 3, %s28
      %p455 = scmp.lt.s32.totalorder %s454, 8
      %s456 = scalar_select %p455, %s454, 8
      %s457 = smul.addr %s456, 32
      %s458 = smul.addr %s457, 4
      %s459 = scalar_lea.vmem %s0, %s458
      %p460 = pneg %p49
      %p461 = pneg %p46
      %s462 = smul.u32 3, %s28
      %p463 = scmp.lt.s32.totalorder %s462, 8
      %s464 = scalar_select %p463, %s462, 8
      %s465 = smul.addr %s464, 20
      %s466 = smul.addr %s465, 4
      %s467 = scalar_lea.vmem %s1, %s466
      %p468 = pneg %p75
      %p469 = pneg %p72
      %p470 = pneg %p96
      %p471 = pneg %p93
      %p472 = pneg %p117
      %p473 = pneg %p114
      %p474 = pneg %p138
      %p475 = pneg %p135
      %p476 = pneg %p159
      %p477 = pneg %p156
      %p478 = pneg %p180
      %p479 = pneg %p177
      %p480 = pneg %p201
      %p481 = pneg %p198
      %p482 = pneg %p222
      %p483 = pneg %p219
      %p484 = pneg %p243
      %p485 = pneg %p240
      %p486 = pneg %p264
      %p487 = pneg %p261
      %p488 = pneg %p285
      %p489 = pneg %p282
      %p490 = pneg %p306
      %p491 = pneg %p303
      %p492 = pneg %p327
      %p493 = pneg %p324
      %p494 = pneg %p348
      %p495 = pneg %p345
      %p496 = pneg %p369
      %p497 = pneg %p366
      %s498 = smul.u32 3, %s28
      %p499 = scmp.lt.s32.totalorder %s498, 8
      %s500 = scalar_select %p499, %s498, 8
      %s501 = smul.addr %s500, 32
      %s502 = smul.addr %s501, 4
      %s503 = scalar_lea.vmem %s0, %s502
      %s504 = smul.u32 3, %s28
      %s505 = smul.u32 3, %s28
      %p506 = scmp.lt.s32.totalorder %s505, 8
      %s507 = scalar_select %p506, %s505, 8
      %s508 = smul.addr %s507, 20
      %s509 = smul.addr %s508, 4
      %s510 = scalar_lea.vmem %s1, %s509
      %s511 = smul.u32 3, %s28
      %p513 = scmp.eq.s32.totalorder %s28, 0
      // Predicated region
      $region81: #{inres_forward.7} parent=79 // pred_check
        %p514 = pneg %p513
      $region82: #{inres_forward.7} parent=79 // pred_check_branch
        %516 = sbr.rel (%p514) target = $region84
      $region83: #{inres_forward.7} parent=79 // pred_region
        %517 = vst [vmem:[#allocation2] sm:$0xff] 0.0
        %518 = vst [vmem:[#allocation2 + $0x8] sm:$0xff] 0.0
        %519 = vst [vmem:[#allocation2 + $0x10] sm:$0xff] 0.0
        %520 = vst [vmem:[#allocation2 + $0x18] sm:$0xff] 0.0
        %521 = vst [vmem:[#allocation2 + $0x20] sm:$0xff] 0.0
        %522 = vst [vmem:[#allocation2 + $0x28] sm:$0xff] 0.0
        %523 = vst [vmem:[#allocation2 + $0x30] sm:$0xff] 0.0
        %524 = vst [vmem:[#allocation2 + $0x38] sm:$0xff] 0.0
        %525 = vst [vmem:[#allocation2 + $0x40] sm:$0xff] 0.0
        %526 = vst [vmem:[#allocation2 + $0x48] sm:$0xff] 0.0
        %527 = vst [vmem:[#allocation2 + $0x50] sm:$0xff] 0.0
        %528 = vst [vmem:[#allocation2 + $0x58] sm:$0xff] 0.0
        %529 = vst [vmem:[#allocation2 + $0x60] sm:$0xff] 0.0
        %530 = vst [vmem:[#allocation2 + $0x68] sm:$0xff] 0.0
        %531 = vst [vmem:[#allocation2 + $0x70] sm:$0xff] 0.0
        %532 = vst [vmem:[#allocation2 + $0x78] sm:$0xff] 0.0
      $region84: #{inres_forward.7} parent=79 // pred_fallthru
        _
      %v533 = vld [vmem:[%s503] sm:$0xff]
      %v534 = vld [vmem:[%s503 + $0x8] sm:$0xff]
      %v535 = vld [vmem:[%s503 + $0x10] sm:$0xff]
      %v536 = vld [vmem:[%s503 + $0x18] sm:$0xff]
      %v537 = vld [vmem:[%s503 + $0x20] sm:$0xff]
      %v538 = vld [vmem:[%s503 + $0x28] sm:$0xff]
      %v539 = vld [vmem:[%s503 + $0x30] sm:$0xff]
      %v540 = vld [vmem:[%s503 + $0x38] sm:$0xff]
      %v541 = vld [vmem:[%s503 + $0x40] sm:$0xff]
      %v542 = vld [vmem:[%s503 + $0x48] sm:$0xff]
      %v543 = vld [vmem:[%s503 + $0x50] sm:$0xff]
      %v544 = vld [vmem:[%s503 + $0x58] sm:$0xff]
      %v545 = vld [vmem:[%s503 + $0x60] sm:$0xff]
      %v546 = vld [vmem:[%s503 + $0x68] sm:$0xff]
      %v547 = vld [vmem:[%s503 + $0x70] sm:$0xff]
      %v548 = vld [vmem:[%s503 + $0x78] sm:$0xff]
      %v549 = vld [vmem:[%s510] sm:$0xf]
      %v550 = vld [vmem:[%s510 + $0x4] sm:$0xf]
      %v551 = vld [vmem:[%s510 + $0x8] sm:$0xf]
      %v552 = vld [vmem:[%s510 + $0xc] sm:$0xf]
      %v553 = vld [vmem:[%s510 + $0x10] sm:$0xf]
      %v554 = vld [vmem:[%s510 + $0x14] sm:$0xf]
      %v555 = vld [vmem:[%s510 + $0x18] sm:$0xf]
      %v556 = vld [vmem:[%s510 + $0x1c] sm:$0xf]
      %v557 = vld [vmem:[%s510 + $0x20] sm:$0xf]
      %v558 = vld [vmem:[%s510 + $0x24] sm:$0xf]
      %v559 = vld [vmem:[%s510 + $0x28] sm:$0xf]
      %v560 = vld [vmem:[%s510 + $0x2c] sm:$0xf]
      %v561 = vld [vmem:[%s510 + $0x30] sm:$0xf]
      %v562 = vld [vmem:[%s510 + $0x34] sm:$0xf]
      %v563 = vld [vmem:[%s510 + $0x38] sm:$0xf]
      %v564 = vld [vmem:[%s510 + $0x3c] sm:$0xf]
      %v565 = vld [vmem:[%s510 + $0x40] sm:$0xf]
      %v566 = vld [vmem:[%s510 + $0x44] sm:$0xf]
      %v567 = vld [vmem:[%s510 + $0x48] sm:$0xf]
      %v568 = vld [vmem:[%s510 + $0x4c] sm:$0xf]
      %s569 = scalar_lea.vmem %s503, 128
      %v570 = vld [vmem:[%s569] sm:$0xff]
      %v571 = vld [vmem:[%s569 + $0x8] sm:$0xff]
      %v572 = vld [vmem:[%s569 + $0x10] sm:$0xff]
      %v573 = vld [vmem:[%s569 + $0x18] sm:$0xff]
      %v574 = vld [vmem:[%s569 + $0x20] sm:$0xff]
      %v575 = vld [vmem:[%s569 + $0x28] sm:$0xff]
      %v576 = vld [vmem:[%s569 + $0x30] sm:$0xff]
      %v577 = vld [vmem:[%s569 + $0x38] sm:$0xff]
      %v578 = vld [vmem:[%s569 + $0x40] sm:$0xff]
      %v579 = vld [vmem:[%s569 + $0x48] sm:$0xff]
      %v580 = vld [vmem:[%s569 + $0x50] sm:$0xff]
      %v581 = vld [vmem:[%s569 + $0x58] sm:$0xff]
      %v582 = vld [vmem:[%s569 + $0x60] sm:$0xff]
      %v583 = vld [vmem:[%s569 + $0x68] sm:$0xff]
      %v584 = vld [vmem:[%s569 + $0x70] sm:$0xff]
      %v585 = vld [vmem:[%s569 + $0x78] sm:$0xff]
      %s586 = scalar_lea.vmem %s510, 80
      %v587 = vld [vmem:[%s586] sm:$0xf]
      %v588 = vld [vmem:[%s586 + $0x4] sm:$0xf]
      %v589 = vld [vmem:[%s586 + $0x8] sm:$0xf]
      %v590 = vld [vmem:[%s586 + $0xc] sm:$0xf]
      %v591 = vld [vmem:[%s586 + $0x10] sm:$0xf]
      %v592 = vld [vmem:[%s586 + $0x14] sm:$0xf]
      %v593 = vld [vmem:[%s586 + $0x18] sm:$0xf]
      %v594 = vld [vmem:[%s586 + $0x1c] sm:$0xf]
      %v595 = vld [vmem:[%s586 + $0x20] sm:$0xf]
      %v596 = vld [vmem:[%s586 + $0x24] sm:$0xf]
      %v597 = vld [vmem:[%s586 + $0x28] sm:$0xf]
      %v598 = vld [vmem:[%s586 + $0x2c] sm:$0xf]
      %v599 = vld [vmem:[%s586 + $0x30] sm:$0xf]
      %v600 = vld [vmem:[%s586 + $0x34] sm:$0xf]
      %v601 = vld [vmem:[%s586 + $0x38] sm:$0xf]
      %v602 = vld [vmem:[%s586 + $0x3c] sm:$0xf]
      %v603 = vld [vmem:[%s586 + $0x40] sm:$0xf]
      %v604 = vld [vmem:[%s586 + $0x44] sm:$0xf]
      %v605 = vld [vmem:[%s586 + $0x48] sm:$0xf]
      %v606 = vld [vmem:[%s586 + $0x4c] sm:$0xf]
      %v623 = vunpack.c.l.b16 %v570
      %v624 = vunpack.c.h.b16 %v570
      %v625 = vunpack.c.l.b16 %v571
      %v626 = vunpack.c.h.b16 %v571
      %v627 = vunpack.c.l.b16 %v572
      %v628 = vunpack.c.h.b16 %v572
      %v629 = vunpack.c.l.b16 %v573
      %v630 = vunpack.c.h.b16 %v573
      %v631 = vunpack.c.l.b16 %v574
      %v632 = vunpack.c.h.b16 %v574
      %v633 = vunpack.c.l.b16 %v575
      %v634 = vunpack.c.h.b16 %v575
      %v635 = vunpack.c.l.b16 %v576
      %v636 = vunpack.c.h.b16 %v576
      %v637 = vunpack.c.l.b16 %v577
      %v638 = vunpack.c.h.b16 %v577
      %v639 = vunpack.c.l.b16 %v578
      %v640 = vunpack.c.h.b16 %v578
      %v641 = vunpack.c.l.b16 %v579
      %v642 = vunpack.c.h.b16 %v579
      %v643 = vunpack.c.l.b16 %v580
      %v644 = vunpack.c.h.b16 %v580
      %v645 = vunpack.c.l.b16 %v581
      %v646 = vunpack.c.h.b16 %v581
      %v647 = vunpack.c.l.b16 %v582
      %v648 = vunpack.c.h.b16 %v582
      %v649 = vunpack.c.l.b16 %v583
      %v650 = vunpack.c.h.b16 %v583
      %v651 = vunpack.c.l.b16 %v584
      %v652 = vunpack.c.h.b16 %v584
      %v653 = vunpack.c.l.b16 %v585
      %v654 = vunpack.c.h.b16 %v585
      %v655 = vpack.c.b16 %v625, %v623
      %v656 = vpack.c.b16 %v626, %v624
      %v657 = vpack.c.b16 %v629, %v627
      %v658 = vpack.c.b16 %v630, %v628
      %v659 = vpack.c.b16 %v633, %v631
      %v660 = vpack.c.b16 %v634, %v632
      %v661 = vpack.c.b16 %v637, %v635
      %v662 = vpack.c.b16 %v638, %v636
      %v663 = vpack.c.b16 %v641, %v639
      %v664 = vpack.c.b16 %v642, %v640
      %v665 = vpack.c.b16 %v645, %v643
      %v666 = vpack.c.b16 %v646, %v644
      %v667 = vpack.c.b16 %v649, %v647
      %v668 = vpack.c.b16 %v650, %v648
      %v669 = vpack.c.b16 %v653, %v651
      %v670 = vpack.c.b16 %v654, %v652
      %v699 = vunpack.c.l.b16 %v587
      %v700 = vunpack.c.l.b16 %v588
      %v701 = vunpack.c.l.b16 %v589
      %v702 = vunpack.c.l.b16 %v590
      %v703 = vunpack.c.l.b16 %v591
      %v704 = vunpack.c.l.b16 %v592
      %v705 = vunpack.c.l.b16 %v593
      %v706 = vunpack.c.l.b16 %v594
      %v707 = vunpack.c.l.b16 %v595
      %v708 = vunpack.c.l.b16 %v596
      %v709 = vunpack.c.l.b16 %v597
      %v710 = vunpack.c.l.b16 %v598
      %v711 = vunpack.c.l.b16 %v599
      %v712 = vunpack.c.l.b16 %v600
      %v713 = vunpack.c.l.b16 %v601
      %v714 = vunpack.c.l.b16 %v602
      %v715 = vunpack.c.l.b16 %v603
      %v716 = vunpack.c.l.b16 %v604
      %v717 = vunpack.c.l.b16 %v605
      %v718 = vunpack.c.l.b16 %v606
      %v719 = vpack.c.b16 %v700, %v699
      %v720 = vpack.c.b16 %v702, %v701
      %v721 = vpack.c.b16 %v704, %v703
      %v722 = vpack.c.b16 %v706, %v705
      %v723 = vpack.c.b16 %v708, %v707
      %v724 = vpack.c.b16 %v710, %v709
      %v725 = vpack.c.b16 %v712, %v711
      %v726 = vpack.c.b16 %v714, %v713
      %v727 = vpack.c.b16 %v716, %v715
      %v728 = vpack.c.b16 %v718, %v717
      %vm739 = vcmask 261120
      %v741 = vsel %vm739, %v656, 0
      %v744 = vsel %vm739, %v658, 0
      %v747 = vsel %vm739, %v660, 0
      %v750 = vsel %vm739, %v662, 0
      %v753 = vsel %vm739, %v664, 0
      %v756 = vsel %vm739, %v666, 0
      %v759 = vsel %vm739, %v668, 0
      %v762 = vsel %vm739, %v670, 0
      %764 = vmatprep.subr.bf16.mxu0 0
      %765 = vmatpush1.bf16.msra.mxu0 %v719
      %766 = vmatprep.subr.bf16.mxu0 0
      %767 = vmatpush1.bf16.msra.mxu0 %v720
      %768 = vmatprep.subr.bf16.mxu0 0
      %769 = vmatpush1.bf16.msra.mxu0 %v721
      %770 = vmatprep.subr.bf16.mxu0 0
      %771 = vmatpush1.bf16.msra.mxu0 %v722
      %772 = vmatprep.subr.bf16.mxu0 0
      %773 = vmatpush1.bf16.msra.mxu0 %v723
      %774 = vmatprep.subr.bf16.mxu0 0
      %775 = vmatpush1.bf16.msra.mxu0 %v724
      %776 = vmatprep.subr.bf16.mxu0 0
      %777 = vmatpush1.bf16.msra.mxu0 %v725
      %778 = vmatprep.subr.bf16.mxu0 0
      %779 = vmatpush1.bf16.msra.mxu0 %v726
      %780 = vmatprep.subr.bf16.mxu0 0
      %781 = vmatpush1.bf16.msra.mxu0 %v727
      %782 = vmatprep.subr.bf16.mxu0 0
      %783 = vmatpush1.bf16.msra.mxu0 %v728
      %784 = vmatprep.subr.bf16.mxu0 0
      %785 = vmatpush1.bf16.msra.mxu0 0
      %786 = vmatprep.subr.bf16.mxu0 0
      %787 = vmatpush1.bf16.msra.mxu0 0
      %788 = vmatprep.subr.bf16.mxu0 0
      %789 = vmatpush1.bf16.msra.mxu0 0
      %790 = vmatprep.subr.bf16.mxu0 0
      %791 = vmatpush1.bf16.msra.mxu0 0
      %792 = vmatprep.subr.bf16.mxu0 0
      %793 = vmatpush1.bf16.msra.mxu0 0
      %794 = vmatprep.subr.bf16.mxu0 0
      %795 = vmatpush1.bf16.msra.mxu0 0
      %796 = vmatprep.mubr.bf16.mxu0 %v741
      %797 = vmatmul.mubr.bf16.gmra.mrb[0].mxu0 %v655
      %v798 = vpop.f32.mrb[0].mxu0
      %v799 = vadd.f32 0.0, %v798
      %v800 = vpop.f32.mrb[0].mxu0
      %v801 = vpop.f32.mrb[0].mxu0
      %v802 = vadd.f32 0.0, %v801
      %v803 = vpop.f32.mrb[0].mxu0
      %804 = vmatprep.mubr.bf16.mxu0 %v744
      %805 = vmatmul.mubr.bf16.gmra.mrb[0].mxu0 %v657
      %v806 = vpop.f32.mrb[0].mxu0
      %v807 = vadd.f32 0.0, %v806
      %v808 = vpop.f32.mrb[0].mxu0
      %v809 = vpop.f32.mrb[0].mxu0
      %v810 = vadd.f32 0.0, %v809
      %v811 = vpop.f32.mrb[0].mxu0
      %812 = vmatprep.mubr.bf16.mxu0 %v747
      %813 = vmatmul.mubr.bf16.gmra.mrb[0].mxu0 %v659
      %v814 = vpop.f32.mrb[0].mxu0
      %v815 = vadd.f32 0.0, %v814
      %v816 = vpop.f32.mrb[0].mxu0
      %v817 = vpop.f32.mrb[0].mxu0
      %v818 = vadd.f32 0.0, %v817
      %v819 = vpop.f32.mrb[0].mxu0
      %820 = vmatprep.mubr.bf16.mxu0 %v750
      %821 = vmatmul.mubr.bf16.gmra.mrb[0].mxu0 %v661
      %v822 = vpop.f32.mrb[0].mxu0
      %v823 = vadd.f32 0.0, %v822
      %v824 = vpop.f32.mrb[0].mxu0
      %v825 = vpop.f32.mrb[0].mxu0
      %v826 = vadd.f32 0.0, %v825
      %v827 = vpop.f32.mrb[0].mxu0
      %828 = vmatprep.mubr.bf16.mxu0 %v753
      %829 = vmatmul.mubr.bf16.gmra.mrb[0].mxu0 %v663
      %v830 = vpop.f32.mrb[0].mxu0
      %v831 = vadd.f32 0.0, %v830
      %v832 = vpop.f32.mrb[0].mxu0
      %v833 = vpop.f32.mrb[0].mxu0
      %v834 = vadd.f32 0.0, %v833
      %v835 = vpop.f32.mrb[0].mxu0
      %836 = vmatprep.mubr.bf16.mxu0 %v756
      %837 = vmatmul.mubr.bf16.gmra.mrb[0].mxu0 %v665
      %v838 = vpop.f32.mrb[0].mxu0
      %v839 = vadd.f32 0.0, %v838
      %v840 = vpop.f32.mrb[0].mxu0
      %v841 = vpop.f32.mrb[0].mxu0
      %v842 = vadd.f32 0.0, %v841
      %v843 = vpop.f32.mrb[0].mxu0
      %844 = vmatprep.mubr.bf16.mxu0 %v759
      %845 = vmatmul.mubr.bf16.gmra.mrb[0].mxu0 %v667
      %v846 = vpop.f32.mrb[0].mxu0
      %v847 = vadd.f32 0.0, %v846
      %v848 = vpop.f32.mrb[0].mxu0
      %v849 = vpop.f32.mrb[0].mxu0
      %v850 = vadd.f32 0.0, %v849
      %v851 = vpop.f32.mrb[0].mxu0
      %852 = vmatprep.mubr.bf16.mxu0 %v762
      %853 = vmatmul.mubr.bf16.gmra.mrb[0].mxu0 %v669
      %v854 = vpop.f32.mrb[0].mxu0
      %v855 = vadd.f32 0.0, %v854
      %v856 = vpop.f32.mrb[0].mxu0
      %v857 = vpop.f32.mrb[0].mxu0
      %v858 = vadd.f32 0.0, %v857
      %v859 = vpop.f32.mrb[0].mxu0
      %860 = vdwg.mxu0
      %v877 = vunpack.c.l.b16 %v533
      %v878 = vunpack.c.h.b16 %v533
      %v879 = vunpack.c.l.b16 %v534
      %v880 = vunpack.c.h.b16 %v534
      %v881 = vunpack.c.l.b16 %v535
      %v882 = vunpack.c.h.b16 %v535
      %v883 = vunpack.c.l.b16 %v536
      %v884 = vunpack.c.h.b16 %v536
      %v885 = vunpack.c.l.b16 %v537
      %v886 = vunpack.c.h.b16 %v537
      %v887 = vunpack.c.l.b16 %v538
      %v888 = vunpack.c.h.b16 %v538
      %v889 = vunpack.c.l.b16 %v539
      %v890 = vunpack.c.h.b16 %v539
      %v891 = vunpack.c.l.b16 %v540
      %v892 = vunpack.c.h.b16 %v540
      %v893 = vunpack.c.l.b16 %v541
      %v894 = vunpack.c.h.b16 %v541
      %v895 = vunpack.c.l.b16 %v542
      %v896 = vunpack.c.h.b16 %v542
      %v897 = vunpack.c.l.b16 %v543
      %v898 = vunpack.c.h.b16 %v543
      %v899 = vunpack.c.l.b16 %v544
      %v900 = vunpack.c.h.b16 %v544
      %v901 = vunpack.c.l.b16 %v545
      %v902 = vunpack.c.h.b16 %v545
      %v903 = vunpack.c.l.b16 %v546
      %v904 = vunpack.c.h.b16 %v546
      %v905 = vunpack.c.l.b16 %v547
      %v906 = vunpack.c.h.b16 %v547
      %v907 = vunpack.c.l.b16 %v548
      %v908 = vunpack.c.h.b16 %v548
      %v909 = vpack.c.b16 %v879, %v877
      %v910 = vpack.c.b16 %v880, %v878
      %v911 = vpack.c.b16 %v883, %v881
      %v912 = vpack.c.b16 %v884, %v882
      %v913 = vpack.c.b16 %v887, %v885
      %v914 = vpack.c.b16 %v888, %v886
      %v915 = vpack.c.b16 %v891, %v889
      %v916 = vpack.c.b16 %v892, %v890
      %v917 = vpack.c.b16 %v895, %v893
      %v918 = vpack.c.b16 %v896, %v894
      %v919 = vpack.c.b16 %v899, %v897
      %v920 = vpack.c.b16 %v900, %v898
      %v921 = vpack.c.b16 %v903, %v901
      %v922 = vpack.c.b16 %v904, %v902
      %v923 = vpack.c.b16 %v907, %v905
      %v924 = vpack.c.b16 %v908, %v906
      %v953 = vunpack.c.l.b16 %v549
      %v954 = vunpack.c.l.b16 %v550
      %v955 = vunpack.c.l.b16 %v551
      %v956 = vunpack.c.l.b16 %v552
      %v957 = vunpack.c.l.b16 %v553
      %v958 = vunpack.c.l.b16 %v554
      %v959 = vunpack.c.l.b16 %v555
      %v960 = vunpack.c.l.b16 %v556
      %v961 = vunpack.c.l.b16 %v557
      %v962 = vunpack.c.l.b16 %v558
      %v963 = vunpack.c.l.b16 %v559
      %v964 = vunpack.c.l.b16 %v560
      %v965 = vunpack.c.l.b16 %v561
      %v966 = vunpack.c.l.b16 %v562
      %v967 = vunpack.c.l.b16 %v563
      %v968 = vunpack.c.l.b16 %v564
      %v969 = vunpack.c.l.b16 %v565
      %v970 = vunpack.c.l.b16 %v566
      %v971 = vunpack.c.l.b16 %v567
      %v972 = vunpack.c.l.b16 %v568
      %v973 = vpack.c.b16 %v954, %v953
      %v974 = vpack.c.b16 %v956, %v955
      %v975 = vpack.c.b16 %v958, %v957
      %v976 = vpack.c.b16 %v960, %v959
      %v977 = vpack.c.b16 %v962, %v961
      %v978 = vpack.c.b16 %v964, %v963
      %v979 = vpack.c.b16 %v966, %v965
      %v980 = vpack.c.b16 %v968, %v967
      %v981 = vpack.c.b16 %v970, %v969
      %v982 = vpack.c.b16 %v972, %v971
      %v994 = vsel %vm739, %v910, 0
      %v997 = vsel %vm739, %v912, 0
      %v1000 = vsel %vm739, %v914, 0
      %v1003 = vsel %vm739, %v916, 0
      %v1006 = vsel %vm739, %v918, 0
      %v1009 = vsel %vm739, %v920, 0
      %v1012 = vsel %vm739, %v922, 0
      %v1015 = vsel %vm739, %v924, 0
      %1017 = vmatprep.subr.bf16.mxu0 0
      %1018 = vmatpush1.bf16.msra.mxu0 %v973
      %1019 = vmatprep.subr.bf16.mxu0 0
      %1020 = vmatpush1.bf16.msra.mxu0 %v974
      %1021 = vmatprep.subr.bf16.mxu0 0
      %1022 = vmatpush1.bf16.msra.mxu0 %v975
      %1023 = vmatprep.subr.bf16.mxu0 0
      %1024 = vmatpush1.bf16.msra.mxu0 %v976
      %1025 = vmatprep.subr.bf16.mxu0 0
      %1026 = vmatpush1.bf16.msra.mxu0 %v977
      %1027 = vmatprep.subr.bf16.mxu0 0
      %1028 = vmatpush1.bf16.msra.mxu0 %v978
      %1029 = vmatprep.subr.bf16.mxu0 0
      %1030 = vmatpush1.bf16.msra.mxu0 %v979
      %1031 = vmatprep.subr.bf16.mxu0 0
      %1032 = vmatpush1.bf16.msra.mxu0 %v980
      %1033 = vmatprep.subr.bf16.mxu0 0
      %1034 = vmatpush1.bf16.msra.mxu0 %v981
      %1035 = vmatprep.subr.bf16.mxu0 0
      %1036 = vmatpush1.bf16.msra.mxu0 %v982
      %1037 = vmatprep.subr.bf16.mxu0 0
      %1038 = vmatpush1.bf16.msra.mxu0 0
      %1039 = vmatprep.subr.bf16.mxu0 0
      %1040 = vmatpush1.bf16.msra.mxu0 0
      %1041 = vmatprep.subr.bf16.mxu0 0
      %1042 = vmatpush1.bf16.msra.mxu0 0
      %1043 = vmatprep.subr.bf16.mxu0 0
      %1044 = vmatpush1.bf16.msra.mxu0 0
      %1045 = vmatprep.subr.bf16.mxu0 0
      %1046 = vmatpush1.bf16.msra.mxu0 0
      %1047 = vmatprep.subr.bf16.mxu0 0
      %1048 = vmatpush1.bf16.msra.mxu0 0
      %1049 = vmatprep.mubr.bf16.mxu0 %v994
      %1050 = vmatmul.mubr.bf16.gmra.mrb[0].mxu0 %v909
      %v1051 = vpop.f32.mrb[0].mxu0
      %v1052 = vadd.f32 %v799, %v1051
      %v1053 = vpop.f32.mrb[0].mxu0
      %v1054 = vpop.f32.mrb[0].mxu0
      %v1055 = vadd.f32 %v802, %v1054
      %v1056 = vpop.f32.mrb[0].mxu0
      %1057 = vmatprep.mubr.bf16.mxu0 %v997
      %1058 = vmatmul.mubr.bf16.gmra.mrb[0].mxu0 %v911
      %v1059 = vpop.f32.mrb[0].mxu0
      %v1060 = vadd.f32 %v807, %v1059
      %v1061 = vpop.f32.mrb[0].mxu0
      %v1062 = vpop.f32.mrb[0].mxu0
      %v1063 = vadd.f32 %v810, %v1062
      %v1064 = vpop.f32.mrb[0].mxu0
      %1065 = vmatprep.mubr.bf16.mxu0 %v1000
      %1066 = vmatmul.mubr.bf16.gmra.mrb[0].mxu0 %v913
      %v1067 = vpop.f32.mrb[0].mxu0
      %v1068 = vadd.f32 %v815, %v1067
      %v1069 = vpop.f32.mrb[0].mxu0
      %v1070 = vpop.f32.mrb[0].mxu0
      %v1071 = vadd.f32 %v818, %v1070
      %v1072 = vpop.f32.mrb[0].mxu0
      %1073 = vmatprep.mubr.bf16.mxu0 %v1003
      %1074 = vmatmul.mubr.bf16.gmra.mrb[0].mxu0 %v915
      %v1075 = vpop.f32.mrb[0].mxu0
      %v1076 = vadd.f32 %v823, %v1075
      %v1077 = vpop.f32.mrb[0].mxu0
      %v1078 = vpop.f32.mrb[0].mxu0
      %v1079 = vadd.f32 %v826, %v1078
      %v1080 = vpop.f32.mrb[0].mxu0
      %1081 = vmatprep.mubr.bf16.mxu0 %v1006
      %1082 = vmatmul.mubr.bf16.gmra.mrb[0].mxu0 %v917
      %v1083 = vpop.f32.mrb[0].mxu0
      %v1084 = vadd.f32 %v831, %v1083
      %v1085 = vpop.f32.mrb[0].mxu0
      %v1086 = vpop.f32.mrb[0].mxu0
      %v1087 = vadd.f32 %v834, %v1086
      %v1088 = vpop.f32.mrb[0].mxu0
      %1089 = vmatprep.mubr.bf16.mxu0 %v1009
      %1090 = vmatmul.mubr.bf16.gmra.mrb[0].mxu0 %v919
      %v1091 = vpop.f32.mrb[0].mxu0
      %v1092 = vadd.f32 %v839, %v1091
      %v1093 = vpop.f32.mrb[0].mxu0
      %v1094 = vpop.f32.mrb[0].mxu0
      %v1095 = vadd.f32 %v842, %v1094
      %v1096 = vpop.f32.mrb[0].mxu0
      %1097 = vmatprep.mubr.bf16.mxu0 %v1012
      %1098 = vmatmul.mubr.bf16.gmra.mrb[0].mxu0 %v921
      %v1099 = vpop.f32.mrb[0].mxu0
      %v1100 = vadd.f32 %v847, %v1099
      %v1101 = vpop.f32.mrb[0].mxu0
      %v1102 = vpop.f32.mrb[0].mxu0
      %v1103 = vadd.f32 %v850, %v1102
      %v1104 = vpop.f32.mrb[0].mxu0
      %1105 = vmatprep.mubr.bf16.mxu0 %v1015
      %1106 = vmatmul.mubr.bf16.gmra.mrb[0].mxu0 %v923
      %v1107 = vpop.f32.mrb[0].mxu0
      %v1108 = vadd.f32 %v855, %v1107
      %v1109 = vpop.f32.mrb[0].mxu0
      %v1110 = vpop.f32.mrb[0].mxu0
      %v1111 = vadd.f32 %v858, %v1110
      %v1112 = vpop.f32.mrb[0].mxu0
      %1113 = vdwg.mxu0
      %s1114 = scalar_lea.vmem %s503, 256
      %v1115 = vld [vmem:[%s1114] sm:$0xff]
      %v1116 = vld [vmem:[%s1114 + $0x8] sm:$0xff]
      %v1117 = vld [vmem:[%s1114 + $0x10] sm:$0xff]
      %v1118 = vld [vmem:[%s1114 + $0x18] sm:$0xff]
      %v1119 = vld [vmem:[%s1114 + $0x20] sm:$0xff]
      %v1120 = vld [vmem:[%s1114 + $0x28] sm:$0xff]
      %v1121 = vld [vmem:[%s1114 + $0x30] sm:$0xff]
      %v1122 = vld [vmem:[%s1114 + $0x38] sm:$0xff]
      %v1123 = vld [vmem:[%s1114 + $0x40] sm:$0xff]
      %v1124 = vld [vmem:[%s1114 + $0x48] sm:$0xff]
      %v1125 = vld [vmem:[%s1114 + $0x50] sm:$0xff]
      %v1126 = vld [vmem:[%s1114 + $0x58] sm:$0xff]
      %v1127 = vld [vmem:[%s1114 + $0x60] sm:$0xff]
      %v1128 = vld [vmem:[%s1114 + $0x68] sm:$0xff]
      %v1129 = vld [vmem:[%s1114 + $0x70] sm:$0xff]
      %v1130 = vld [vmem:[%s1114 + $0x78] sm:$0xff]
      %s1131 = scalar_lea.vmem %s510, 160
      %v1132 = vld [vmem:[%s1131] sm:$0xf]
      %v1133 = vld [vmem:[%s1131 + $0x4] sm:$0xf]
      %v1134 = vld [vmem:[%s1131 + $0x8] sm:$0xf]
      %v1135 = vld [vmem:[%s1131 + $0xc] sm:$0xf]
      %v1136 = vld [vmem:[%s1131 + $0x10] sm:$0xf]
      %v1137 = vld [vmem:[%s1131 + $0x14] sm:$0xf]
      %v1138 = vld [vmem:[%s1131 + $0x18] sm:$0xf]
      %v1139 = vld [vmem:[%s1131 + $0x1c] sm:$0xf]
      %v1140 = vld [vmem:[%s1131 + $0x20] sm:$0xf]
      %v1141 = vld [vmem:[%s1131 + $0x24] sm:$0xf]
      %v1142 = vld [vmem:[%s1131 + $0x28] sm:$0xf]
      %v1143 = vld [vmem:[%s1131 + $0x2c] sm:$0xf]
      %v1144 = vld [vmem:[%s1131 + $0x30] sm:$0xf]
      %v1145 = vld [vmem:[%s1131 + $0x34] sm:$0xf]
      %v1146 = vld [vmem:[%s1131 + $0x38] sm:$0xf]
      %v1147 = vld [vmem:[%s1131 + $0x3c] sm:$0xf]
      %v1148 = vld [vmem:[%s1131 + $0x40] sm:$0xf]
      %v1149 = vld [vmem:[%s1131 + $0x44] sm:$0xf]
      %v1150 = vld [vmem:[%s1131 + $0x48] sm:$0xf]
      %v1151 = vld [vmem:[%s1131 + $0x4c] sm:$0xf]
      %v1168 = vunpack.c.l.b16 %v1115
      %v1169 = vunpack.c.h.b16 %v1115
      %v1170 = vunpack.c.l.b16 %v1116
      %v1171 = vunpack.c.h.b16 %v1116
      %v1172 = vunpack.c.l.b16 %v1117
      %v1173 = vunpack.c.h.b16 %v1117
      %v1174 = vunpack.c.l.b16 %v1118
      %v1175 = vunpack.c.h.b16 %v1118
      %v1176 = vunpack.c.l.b16 %v1119
      %v1177 = vunpack.c.h.b16 %v1119
      %v1178 = vunpack.c.l.b16 %v1120
      %v1179 = vunpack.c.h.b16 %v1120
      %v1180 = vunpack.c.l.b16 %v1121
      %v1181 = vunpack.c.h.b16 %v1121
      %v1182 = vunpack.c.l.b16 %v1122
      %v1183 = vunpack.c.h.b16 %v1122
      %v1184 = vunpack.c.l.b16 %v1123
      %v1185 = vunpack.c.h.b16 %v1123
      %v1186 = vunpack.c.l.b16 %v1124
      %v1187 = vunpack.c.h.b16 %v1124
      %v1188 = vunpack.c.l.b16 %v1125
      %v1189 = vunpack.c.h.b16 %v1125
      %v1190 = vunpack.c.l.b16 %v1126
      %v1191 = vunpack.c.h.b16 %v1126
      %v1192 = vunpack.c.l.b16 %v1127
      %v1193 = vunpack.c.h.b16 %v1127
      %v1194 = vunpack.c.l.b16 %v1128
      %v1195 = vunpack.c.h.b16 %v1128
      %v1196 = vunpack.c.l.b16 %v1129
      %v1197 = vunpack.c.h.b16 %v1129
      %v1198 = vunpack.c.l.b16 %v1130
      %v1199 = vunpack.c.h.b16 %v1130
      %v1200 = vpack.c.b16 %v1170, %v1168
      %v1201 = vpack.c.b16 %v1171, %v1169
      %v1202 = vpack.c.b16 %v1174, %v1172
      %v1203 = vpack.c.b16 %v1175, %v1173
      %v1204 = vpack.c.b16 %v1178, %v1176
      %v1205 = vpack.c.b16 %v1179, %v1177
      %v1206 = vpack.c.b16 %v1182, %v1180
      %v1207 = vpack.c.b16 %v1183, %v1181
      %v1208 = vpack.c.b16 %v1186, %v1184
      %v1209 = vpack.c.b16 %v1187, %v1185
      %v1210 = vpack.c.b16 %v1190, %v1188
      %v1211 = vpack.c.b16 %v1191, %v1189
      %v1212 = vpack.c.b16 %v1194, %v1192
      %v1213 = vpack.c.b16 %v1195, %v1193
      %v1214 = vpack.c.b16 %v1198, %v1196
      %v1215 = vpack.c.b16 %v1199, %v1197
      %v1244 = vunpack.c.l.b16 %v1132
      %v1245 = vunpack.c.l.b16 %v1133
      %v1246 = vunpack.c.l.b16 %v1134
      %v1247 = vunpack.c.l.b16 %v1135
      %v1248 = vunpack.c.l.b16 %v1136
      %v1249 = vunpack.c.l.b16 %v1137
      %v1250 = vunpack.c.l.b16 %v1138
      %v1251 = vunpack.c.l.b16 %v1139
      %v1252 = vunpack.c.l.b16 %v1140
      %v1253 = vunpack.c.l.b16 %v1141
      %v1254 = vunpack.c.l.b16 %v1142
      %v1255 = vunpack.c.l.b16 %v1143
      %v1256 = vunpack.c.l.b16 %v1144
      %v1257 = vunpack.c.l.b16 %v1145
      %v1258 = vunpack.c.l.b16 %v1146
      %v1259 = vunpack.c.l.b16 %v1147
      %v1260 = vunpack.c.l.b16 %v1148
      %v1261 = vunpack.c.l.b16 %v1149
      %v1262 = vunpack.c.l.b16 %v1150
      %v1263 = vunpack.c.l.b16 %v1151
      %v1264 = vpack.c.b16 %v1245, %v1244
      %v1265 = vpack.c.b16 %v1247, %v1246
      %v1266 = vpack.c.b16 %v1249, %v1248
      %v1267 = vpack.c.b16 %v1251, %v1250
      %v1268 = vpack.c.b16 %v1253, %v1252
      %v1269 = vpack.c.b16 %v1255, %v1254
      %v1270 = vpack.c.b16 %v1257, %v1256
      %v1271 = vpack.c.b16 %v1259, %v1258
      %v1272 = vpack.c.b16 %v1261, %v1260
      %v1273 = vpack.c.b16 %v1263, %v1262
      %v1285 = vsel %vm739, %v1201, 0
      %v1288 = vsel %vm739, %v1203, 0
      %v1291 = vsel %vm739, %v1205, 0
      %v1294 = vsel %vm739, %v1207, 0
      %v1297 = vsel %vm739, %v1209, 0
      %v1300 = vsel %vm739, %v1211, 0
      %v1303 = vsel %vm739, %v1213, 0
      %v1306 = vsel %vm739, %v1215, 0
      %1308 = vmatprep.subr.bf16.mxu0 0
      %1309 = vmatpush1.bf16.msra.mxu0 %v1264
      %1310 = vmatprep.subr.bf16.mxu0 0
      %1311 = vmatpush1.bf16.msra.mxu0 %v1265
      %1312 = vmatprep.subr.bf16.mxu0 0
      %1313 = vmatpush1.bf16.msra.mxu0 %v1266
      %1314 = vmatprep.subr.bf16.mxu0 0
      %1315 = vmatpush1.bf16.msra.mxu0 %v1267
      %1316 = vmatprep.subr.bf16.mxu0 0
      %1317 = vmatpush1.bf16.msra.mxu0 %v1268
      %1318 = vmatprep.subr.bf16.mxu0 0
      %1319 = vmatpush1.bf16.msra.mxu0 %v1269
      %1320 = vmatprep.subr.bf16.mxu0 0
      %1321 = vmatpush1.bf16.msra.mxu0 %v1270
      %1322 = vmatprep.subr.bf16.mxu0 0
      %1323 = vmatpush1.bf16.msra.mxu0 %v1271
      %1324 = vmatprep.subr.bf16.mxu0 0
      %1325 = vmatpush1.bf16.msra.mxu0 %v1272
      %1326 = vmatprep.subr.bf16.mxu0 0
      %1327 = vmatpush1.bf16.msra.mxu0 %v1273
      %1328 = vmatprep.subr.bf16.mxu0 0
      %1329 = vmatpush1.bf16.msra.mxu0 0
      %1330 = vmatprep.subr.bf16.mxu0 0
      %1331 = vmatpush1.bf16.msra.mxu0 0
      %1332 = vmatprep.subr.bf16.mxu0 0
      %1333 = vmatpush1.bf16.msra.mxu0 0
      %1334 = vmatprep.subr.bf16.mxu0 0
      %1335 = vmatpush1.bf16.msra.mxu0 0
      %1336 = vmatprep.subr.bf16.mxu0 0
      %1337 = vmatpush1.bf16.msra.mxu0 0
      %1338 = vmatprep.subr.bf16.mxu0 0
      %1339 = vmatpush1.bf16.msra.mxu0 0
      %1340 = vmatprep.mubr.bf16.mxu0 %v1285
      %1341 = vmatmul.mubr.bf16.gmra.mrb[0].mxu0 %v1200
      %v1342 = vpop.f32.mrb[0].mxu0
      %v1343 = vadd.f32 0.0, %v1342
      %v1344 = vpop.f32.mrb[0].mxu0
      %v1345 = vpop.f32.mrb[0].mxu0
      %v1346 = vadd.f32 0.0, %v1345
      %v1347 = vpop.f32.mrb[0].mxu0
      %1348 = vmatprep.mubr.bf16.mxu0 %v1288
      %1349 = vmatmul.mubr.bf16.gmra.mrb[0].mxu0 %v1202
      %v1350 = vpop.f32.mrb[0].mxu0
      %v1351 = vadd.f32 0.0, %v1350
      %v1352 = vpop.f32.mrb[0].mxu0
      %v1353 = vpop.f32.mrb[0].mxu0
      %v1354 = vadd.f32 0.0, %v1353
      %v1355 = vpop.f32.mrb[0].mxu0
      %1356 = vmatprep.mubr.bf16.mxu0 %v1291
      %1357 = vmatmul.mubr.bf16.gmra.mrb[0].mxu0 %v1204
      %v1358 = vpop.f32.mrb[0].mxu0
      %v1359 = vadd.f32 0.0, %v1358
      %v1360 = vpop.f32.mrb[0].mxu0
      %v1361 = vpop.f32.mrb[0].mxu0
      %v1362 = vadd.f32 0.0, %v1361
      %v1363 = vpop.f32.mrb[0].mxu0
      %1364 = vmatprep.mubr.bf16.mxu0 %v1294
      %1365 = vmatmul.mubr.bf16.gmra.mrb[0].mxu0 %v1206
      %v1366 = vpop.f32.mrb[0].mxu0
      %v1367 = vadd.f32 0.0, %v1366
      %v1368 = vpop.f32.mrb[0].mxu0
      %v1369 = vpop.f32.mrb[0].mxu0
      %v1370 = vadd.f32 0.0, %v1369
      %v1371 = vpop.f32.mrb[0].mxu0
      %1372 = vmatprep.mubr.bf16.mxu0 %v1297
      %1373 = vmatmul.mubr.bf16.gmra.mrb[0].mxu0 %v1208
      %v1374 = vpop.f32.mrb[0].mxu0
      %v1375 = vadd.f32 0.0, %v1374
      %v1376 = vpop.f32.mrb[0].mxu0
      %v1377 = vpop.f32.mrb[0].mxu0
      %v1378 = vadd.f32 0.0, %v1377
      %v1379 = vpop.f32.mrb[0].mxu0
      %1380 = vmatprep.mubr.bf16.mxu0 %v1300
      %1381 = vmatmul.mubr.bf16.gmra.mrb[0].mxu0 %v1210
      %v1382 = vpop.f32.mrb[0].mxu0
      %v1383 = vadd.f32 0.0, %v1382
      %v1384 = vpop.f32.mrb[0].mxu0
      %v1385 = vpop.f32.mrb[0].mxu0
      %v1386 = vadd.f32 0.0, %v1385
      %v1387 = vpop.f32.mrb[0].mxu0
      %1388 = vmatprep.mubr.bf16.mxu0 %v1303
      %1389 = vmatmul.mubr.bf16.gmra.mrb[0].mxu0 %v1212
      %v1390 = vpop.f32.mrb[0].mxu0
      %v1391 = vadd.f32 0.0, %v1390
      %v1392 = vpop.f32.mrb[0].mxu0
      %v1393 = vpop.f32.mrb[0].mxu0
      %v1394 = vadd.f32 0.0, %v1393
      %v1395 = vpop.f32.mrb[0].mxu0
      %1396 = vmatprep.mubr.bf16.mxu0 %v1306
      %1397 = vmatmul.mubr.bf16.gmra.mrb[0].mxu0 %v1214
      %v1398 = vpop.f32.mrb[0].mxu0
      %v1399 = vadd.f32 0.0, %v1398
      %v1400 = vpop.f32.mrb[0].mxu0
      %v1401 = vpop.f32.mrb[0].mxu0
      %v1402 = vadd.f32 0.0, %v1401
      %v1403 = vpop.f32.mrb[0].mxu0
      %1404 = vdwg.mxu0
      %v1405 = vadd.f32 %v1052, %v1343
      %v1406 = vadd.f32 %v1055, %v1346
      %v1407 = vadd.f32 %v1060, %v1351
      %v1408 = vadd.f32 %v1063, %v1354
      %v1409 = vadd.f32 %v1068, %v1359
      %v1410 = vadd.f32 %v1071, %v1362
      %v1411 = vadd.f32 %v1076, %v1367
      %v1412 = vadd.f32 %v1079, %v1370
      %v1413 = vadd.f32 %v1084, %v1375
      %v1414 = vadd.f32 %v1087, %v1378
      %v1415 = vadd.f32 %v1092, %v1383
      %v1416 = vadd.f32 %v1095, %v1386
      %v1417 = vadd.f32 %v1100, %v1391
      %v1418 = vadd.f32 %v1103, %v1394
      %v1419 = vadd.f32 %v1108, %v1399
      %v1420 = vadd.f32 %v1111, %v1402
      %v1421 = vld [vmem:[#allocation2] sm:$0xff]
      %v1422 = vld [vmem:[#allocation2 + $0x8] sm:$0xff]
      %v1423 = vld [vmem:[#allocation2 + $0x10] sm:$0xff]
      %v1424 = vld [vmem:[#allocation2 + $0x18] sm:$0xff]
      %v1425 = vld [vmem:[#allocation2 + $0x20] sm:$0xff]
      %v1426 = vld [vmem:[#allocation2 + $0x28] sm:$0xff]
      %v1427 = vld [vmem:[#allocation2 + $0x30] sm:$0xff]
      %v1428 = vld [vmem:[#allocation2 + $0x38] sm:$0xff]
      %v1429 = vld [vmem:[#allocation2 + $0x40] sm:$0xff]
      %v1430 = vld [vmem:[#allocation2 + $0x48] sm:$0xff]
      %v1431 = vld [vmem:[#allocation2 + $0x50] sm:$0xff]
      %v1432 = vld [vmem:[#allocation2 + $0x58] sm:$0xff]
      %v1433 = vld [vmem:[#allocation2 + $0x60] sm:$0xff]
      %v1434 = vld [vmem:[#allocation2 + $0x68] sm:$0xff]
      %v1435 = vld [vmem:[#allocation2 + $0x70] sm:$0xff]
      %v1436 = vld [vmem:[#allocation2 + $0x78] sm:$0xff]
      %v1437 = vadd.f32 %v1421, %v1405
      %v1438 = vadd.f32 %v1422, %v1406
      %v1439 = vadd.f32 %v1423, %v1407
      %v1440 = vadd.f32 %v1424, %v1408
      %v1441 = vadd.f32 %v1425, %v1409
      %v1442 = vadd.f32 %v1426, %v1410
      %v1443 = vadd.f32 %v1427, %v1411
      %v1444 = vadd.f32 %v1428, %v1412
      %v1445 = vadd.f32 %v1429, %v1413
      %v1446 = vadd.f32 %v1430, %v1414
      %v1447 = vadd.f32 %v1431, %v1415
      %v1448 = vadd.f32 %v1432, %v1416
      %v1449 = vadd.f32 %v1433, %v1417
      %v1450 = vadd.f32 %v1434, %v1418
      %v1451 = vadd.f32 %v1435, %v1419
      %v1452 = vadd.f32 %v1436, %v1420
      %1453 = vst [vmem:[#allocation2] sm:$0xff] %v1437
      %1454 = vst [vmem:[#allocation2 + $0x8] sm:$0xff] %v1438
      %1455 = vst [vmem:[#allocation2 + $0x10] sm:$0xff] %v1439
      %1456 = vst [vmem:[#allocation2 + $0x18] sm:$0xff] %v1440
      %1457 = vst [vmem:[#allocation2 + $0x20] sm:$0xff] %v1441
      %1458 = vst [vmem:[#allocation2 + $0x28] sm:$0xff] %v1442
      %1459 = vst [vmem:[#allocation2 + $0x30] sm:$0xff] %v1443
      %1460 = vst [vmem:[#allocation2 + $0x38] sm:$0xff] %v1444
      %1461 = vst [vmem:[#allocation2 + $0x40] sm:$0xff] %v1445
      %1462 = vst [vmem:[#allocation2 + $0x48] sm:$0xff] %v1446
      %1463 = vst [vmem:[#allocation2 + $0x50] sm:$0xff] %v1447
      %1464 = vst [vmem:[#allocation2 + $0x58] sm:$0xff] %v1448
      %1465 = vst [vmem:[#allocation2 + $0x60] sm:$0xff] %v1449
      %1466 = vst [vmem:[#allocation2 + $0x68] sm:$0xff] %v1450
      %1467 = vst [vmem:[#allocation2 + $0x70] sm:$0xff] %v1451
      %1468 = vst [vmem:[#allocation2 + $0x78] sm:$0xff] %v1452
      %p1469 = scmp.eq.s32.totalorder %s28, 2
      // Predicated region
      $region85: #{inres_forward.7} parent=79 // pred_check
        %p1470 = pneg %p1469
      $region86: #{inres_forward.7} parent=79 // pred_check_branch
        %1472 = sbr.rel (%p1470) target = $region88
      $region87: #{inres_forward.7} parent=79 // pred_region
        %v1473 = vld [vmem:[#allocation2] sm:$0xff]
        %v1474 = vld [vmem:[#allocation2 + $0x8] sm:$0xff]
        %v1475 = vld [vmem:[#allocation2 + $0x10] sm:$0xff]
        %v1476 = vld [vmem:[#allocation2 + $0x18] sm:$0xff]
        %v1477 = vld [vmem:[#allocation2 + $0x20] sm:$0xff]
        %v1478 = vld [vmem:[#allocation2 + $0x28] sm:$0xff]
        %v1479 = vld [vmem:[#allocation2 + $0x30] sm:$0xff]
        %v1480 = vld [vmem:[#allocation2 + $0x38] sm:$0xff]
        %v1481 = vld [vmem:[#allocation2 + $0x40] sm:$0xff]
        %v1482 = vld [vmem:[#allocation2 + $0x48] sm:$0xff]
        %v1483 = vld [vmem:[#allocation2 + $0x50] sm:$0xff]
        %v1484 = vld [vmem:[#allocation2 + $0x58] sm:$0xff]
        %v1485 = vld [vmem:[#allocation2 + $0x60] sm:$0xff]
        %v1486 = vld [vmem:[#allocation2 + $0x68] sm:$0xff]
        %v1487 = vld [vmem:[#allocation2 + $0x70] sm:$0xff]
        %v1488 = vld [vmem:[#allocation2 + $0x78] sm:$0xff]
        %v1489 = vld [vmem:[%s2] sm:$0x1]
        %v1491 = vlaneseq
        %v1492 = vshrl.u32 %v1491, 7
        %v1493 = vsub.s32 0, %v1492
        %v1494 = vrot.slane %v1489, %v1493
        %v1496 = vadd.f32 %v1473, %v1494
        %v1497 = vadd.f32 %v1474, %v1494
        %v1498 = vadd.f32 %v1475, %v1494
        %v1499 = vadd.f32 %v1476, %v1494
        %v1500 = vadd.f32 %v1477, %v1494
        %v1501 = vadd.f32 %v1478, %v1494
        %v1502 = vadd.f32 %v1479, %v1494
        %v1503 = vadd.f32 %v1480, %v1494
        %v1504 = vadd.f32 %v1481, %v1494
        %v1505 = vadd.f32 %v1482, %v1494
        %v1506 = vadd.f32 %v1483, %v1494
        %v1507 = vadd.f32 %v1484, %v1494
        %v1508 = vadd.f32 %v1485, %v1494
        %v1509 = vadd.f32 %v1486, %v1494
        %v1510 = vadd.f32 %v1487, %v1494
        %v1511 = vadd.f32 %v1488, %v1494
        %1512 = vmatprep.subr.mxu0 0.0
        %1513 = vmatpush1.msra.mxu0 %v1496
        %1514 = vmatprep.subr.mxu0 0.0
        %1515 = vmatpush1.msra.mxu0 %v1497
        %1516 = vmatprep.subr.mxu0 0.0
        %1517 = vmatpush1.msra.mxu0 %v1498
        %1518 = vmatprep.subr.mxu0 0.0
        %1519 = vmatpush1.msra.mxu0 %v1499
        %1520 = vmatprep.subr.mxu0 0.0
        %1521 = vmatpush1.msra.mxu0 %v1500
        %1522 = vmatprep.subr.mxu0 0.0
        %1523 = vmatpush1.msra.mxu0 %v1501
        %1524 = vmatprep.subr.mxu0 0.0
        %1525 = vmatpush1.msra.mxu0 %v1502
        %1526 = vmatprep.subr.mxu0 0.0
        %1527 = vmatpush1.msra.mxu0 %v1503
        %1528 = vmatprep.subr.mxu0 0.0
        %1529 = vmatpush1.msra.mxu0 %v1504
        %1530 = vmatprep.subr.mxu0 0.0
        %1531 = vmatpush1.msra.mxu0 %v1505
        %1532 = vmatprep.subr.mxu0 0.0
        %1533 = vmatpush1.msra.mxu0 %v1506
        %1534 = vmatprep.subr.mxu0 0.0
        %1535 = vmatpush1.msra.mxu0 %v1507
        %1536 = vmatprep.subr.mxu0 0.0
        %1537 = vmatpush1.msra.mxu0 %v1508
        %1538 = vmatprep.subr.mxu0 0.0
        %1539 = vmatpush1.msra.mxu0 %v1509
        %1540 = vmatprep.subr.mxu0 0.0
        %1541 = vmatpush1.msra.mxu0 %v1510
        %1542 = vmatprep.subr.mxu0 0.0
        %1543 = vmatpush1.msra.mxu0 %v1511
        %1544 = vmatprep.subr.mxu0 0.0
        %1545 = vmatpush1.msra.mxu0 0.0
        %1546 = vmatprep.subr.mxu0 0.0
        %1547 = vmatpush1.msra.mxu0 0.0
        %1548 = vmatprep.subr.mxu0 0.0
        %1549 = vmatpush1.msra.mxu0 0.0
        %1550 = vmatprep.subr.mxu0 0.0
        %1551 = vmatpush1.msra.mxu0 0.0
        %1552 = vmatprep.subr.mxu0 0.0
        %1553 = vmatpush1.msra.mxu0 0.0
        %1554 = vmatprep.subr.mxu0 0.0
        %1555 = vmatpush1.msra.mxu0 0.0
        %1556 = vmatprep.subr.mxu0 0.0
        %1557 = vmatpush1.msra.mxu0 0.0
        %1558 = vmatprep.subr.mxu0 0.0
        %1559 = vmatpush1.msra.mxu0 0.0
        %1560 = vmatprep.subr.mxu0 0.0
        %1561 = vmatpush1.msra.mxu0 0.0
        %1562 = vmatprep.subr.mxu0 0.0
        %1563 = vmatpush1.msra.mxu0 0.0
        %1564 = vmatprep.subr.mxu0 0.0
        %1565 = vmatpush1.msra.mxu0 0.0
        %1566 = vmatprep.subr.mxu0 0.0
        %1567 = vmatpush1.msra.mxu0 0.0
        %1568 = vmatprep.subr.mxu0 0.0
        %1569 = vmatpush1.msra.mxu0 0.0
        %1570 = vmatprep.subr.mxu0 0.0
        %1571 = vmatpush1.msra.mxu0 0.0
        %1572 = vmatprep.subr.mxu0 0.0
        %1573 = vmatpush1.msra.mxu0 0.0
        %1574 = vmatprep.subr.mxu0 0.0
        %1575 = vmatpush1.msra.mxu0 0.0
        %1576 = vmatprep.mubr.f32.mxu0 0.0
        %1577 = vmatmul.mubr.f32.gmra.mrb[0].mxu0 1.0
        %v1578 = vpop.f32.mrb[0].mxu0
        %v1579 = vadd.f32 0.0, %v1578
        %v1580 = vpop.f32.mrb[0].mxu0
        %1581 = vdwg.mxu0
        %v1582 = vmul.f32 %v1496, %v1496
        %v1583 = vmul.f32 %v1497, %v1497
        %v1584 = vmul.f32 %v1498, %v1498
        %v1585 = vmul.f32 %v1499, %v1499
        %v1586 = vmul.f32 %v1500, %v1500
        %v1587 = vmul.f32 %v1501, %v1501
        %v1588 = vmul.f32 %v1502, %v1502
        %v1589 = vmul.f32 %v1503, %v1503
        %v1590 = vmul.f32 %v1504, %v1504
        %v1591 = vmul.f32 %v1505, %v1505
        %v1592 = vmul.f32 %v1506, %v1506
        %v1593 = vmul.f32 %v1507, %v1507
        %v1594 = vmul.f32 %v1508, %v1508
        %v1595 = vmul.f32 %v1509, %v1509
        %v1596 = vmul.f32 %v1510, %v1510
        %v1597 = vmul.f32 %v1511, %v1511
        %1598 = vmatprep.subr.mxu0 0.0
        %1599 = vmatpush1.msra.mxu0 %v1582
        %1600 = vmatprep.subr.mxu0 0.0
        %1601 = vmatpush1.msra.mxu0 %v1583
        %1602 = vmatprep.subr.mxu0 0.0
        %1603 = vmatpush1.msra.mxu0 %v1584
        %1604 = vmatprep.subr.mxu0 0.0
        %1605 = vmatpush1.msra.mxu0 %v1585
        %1606 = vmatprep.subr.mxu0 0.0
        %1607 = vmatpush1.msra.mxu0 %v1586
        %1608 = vmatprep.subr.mxu0 0.0
        %1609 = vmatpush1.msra.mxu0 %v1587
        %1610 = vmatprep.subr.mxu0 0.0
        %1611 = vmatpush1.msra.mxu0 %v1588
        %1612 = vmatprep.subr.mxu0 0.0
        %1613 = vmatpush1.msra.mxu0 %v1589
        %1614 = vmatprep.subr.mxu0 0.0
        %1615 = vmatpush1.msra.mxu0 %v1590
        %1616 = vmatprep.subr.mxu0 0.0
        %1617 = vmatpush1.msra.mxu0 %v1591
        %1618 = vmatprep.subr.mxu0 0.0
        %1619 = vmatpush1.msra.mxu0 %v1592
        %1620 = vmatprep.subr.mxu0 0.0
        %1621 = vmatpush1.msra.mxu0 %v1593
        %1622 = vmatprep.subr.mxu0 0.0
        %1623 = vmatpush1.msra.mxu0 %v1594
        %1624 = vmatprep.subr.mxu0 0.0
        %1625 = vmatpush1.msra.mxu0 %v1595
        %1626 = vmatprep.subr.mxu0 0.0
        %1627 = vmatpush1.msra.mxu0 %v1596
        %1628 = vmatprep.subr.mxu0 0.0
        %1629 = vmatpush1.msra.mxu0 %v1597
        %1630 = vmatprep.subr.mxu0 0.0
        %1631 = vmatpush1.msra.mxu0 0.0
        %1632 = vmatprep.subr.mxu0 0.0
        %1633 = vmatpush1.msra.mxu0 0.0
        %1634 = vmatprep.subr.mxu0 0.0
        %1635 = vmatpush1.msra.mxu0 0.0
        %1636 = vmatprep.subr.mxu0 0.0
        %1637 = vmatpush1.msra.mxu0 0.0
        %1638 = vmatprep.subr.mxu0 0.0
        %1639 = vmatpush1.msra.mxu0 0.0
        %1640 = vmatprep.subr.mxu0 0.0
        %1641 = vmatpush1.msra.mxu0 0.0
        %1642 = vmatprep.subr.mxu0 0.0
        %1643 = vmatpush1.msra.mxu0 0.0
        %1644 = vmatprep.subr.mxu0 0.0
        %1645 = vmatpush1.msra.mxu0 0.0
        %1646 = vmatprep.subr.mxu0 0.0
        %1647 = vmatpush1.msra.mxu0 0.0
        %1648 = vmatprep.subr.mxu0 0.0
        %1649 = vmatpush1.msra.mxu0 0.0
        %1650 = vmatprep.subr.mxu0 0.0
        %1651 = vmatpush1.msra.mxu0 0.0
        %1652 = vmatprep.subr.mxu0 0.0
        %1653 = vmatpush1.msra.mxu0 0.0
        %1654 = vmatprep.subr.mxu0 0.0
        %1655 = vmatpush1.msra.mxu0 0.0
        %1656 = vmatprep.subr.mxu0 0.0
        %1657 = vmatpush1.msra.mxu0 0.0
        %1658 = vmatprep.subr.mxu0 0.0
        %1659 = vmatpush1.msra.mxu0 0.0
        %1660 = vmatprep.subr.mxu0 0.0
        %1661 = vmatpush1.msra.mxu0 0.0
        %1662 = vmatprep.mubr.f32.mxu0 0.0
        %1663 = vmatmul.mubr.f32.gmra.mrb[0].mxu0 1.0
        %v1664 = vpop.f32.mrb[0].mxu0
        %v1665 = vadd.f32 0.0, %v1664
        %v1666 = vpop.f32.mrb[0].mxu0
        %1667 = vdwg.mxu0
        %v1668 = vld [vmem:[%s5] sm:$0xff]
        %v1669 = vld [vmem:[%s5 + $0x8] sm:$0xff]
        %v1670 = vld [vmem:[%s5 + $0x10] sm:$0xff]
        %v1671 = vld [vmem:[%s5 + $0x18] sm:$0xff]
        %v1672 = vld [vmem:[%s5 + $0x20] sm:$0xff]
        %v1673 = vld [vmem:[%s5 + $0x28] sm:$0xff]
        %v1674 = vld [vmem:[%s5 + $0x30] sm:$0xff]
        %v1675 = vld [vmem:[%s5 + $0x38] sm:$0xff]
        %v1676 = vld [vmem:[%s5 + $0x40] sm:$0xff]
        %v1677 = vld [vmem:[%s5 + $0x48] sm:$0xff]
        %v1678 = vld [vmem:[%s5 + $0x50] sm:$0xff]
        %v1679 = vld [vmem:[%s5 + $0x58] sm:$0xff]
        %v1680 = vld [vmem:[%s5 + $0x60] sm:$0xff]
        %v1681 = vld [vmem:[%s5 + $0x68] sm:$0xff]
        %v1682 = vld [vmem:[%s5 + $0x70] sm:$0xff]
        %v1683 = vld [vmem:[%s5 + $0x78] sm:$0xff]
        %1684 = vmatprep.subr.mxu0 0.0
        %1685 = vmatpush1.msra.mxu0 %v1668
        %1686 = vmatprep.subr.mxu0 0.0
        %1687 = vmatpush1.msra.mxu0 %v1669
        %1688 = vmatprep.subr.mxu0 0.0
        %1689 = vmatpush1.msra.mxu0 %v1670
        %1690 = vmatprep.subr.mxu0 0.0
        %1691 = vmatpush1.msra.mxu0 %v1671
        %1692 = vmatprep.subr.mxu0 0.0
        %1693 = vmatpush1.msra.mxu0 %v1672
        %1694 = vmatprep.subr.mxu0 0.0
        %1695 = vmatpush1.msra.mxu0 %v1673
        %1696 = vmatprep.subr.mxu0 0.0
        %1697 = vmatpush1.msra.mxu0 %v1674
        %1698 = vmatprep.subr.mxu0 0.0
        %1699 = vmatpush1.msra.mxu0 %v1675
        %1700 = vmatprep.subr.mxu0 0.0
        %1701 = vmatpush1.msra.mxu0 %v1676
        %1702 = vmatprep.subr.mxu0 0.0
        %1703 = vmatpush1.msra.mxu0 %v1677
        %1704 = vmatprep.subr.mxu0 0.0
        %1705 = vmatpush1.msra.mxu0 %v1678
        %1706 = vmatprep.subr.mxu0 0.0
        %1707 = vmatpush1.msra.mxu0 %v1679
        %1708 = vmatprep.subr.mxu0 0.0
        %1709 = vmatpush1.msra.mxu0 %v1680
        %1710 = vmatprep.subr.mxu0 0.0
        %1711 = vmatpush1.msra.mxu0 %v1681
        %1712 = vmatprep.subr.mxu0 0.0
        %1713 = vmatpush1.msra.mxu0 %v1682
        %1714 = vmatprep.subr.mxu0 0.0
        %1715 = vmatpush1.msra.mxu0 %v1683
        %1716 = vmatprep.subr.mxu0 0.0
        %1717 = vmatpush1.msra.mxu0 0.0
        %1718 = vmatprep.subr.mxu0 0.0
        %1719 = vmatpush1.msra.mxu0 0.0
        %1720 = vmatprep.subr.mxu0 0.0
        %1721 = vmatpush1.msra.mxu0 0.0
        %1722 = vmatprep.subr.mxu0 0.0
        %1723 = vmatpush1.msra.mxu0 0.0
        %1724 = vmatprep.subr.mxu0 0.0
        %1725 = vmatpush1.msra.mxu0 0.0
        %1726 = vmatprep.subr.mxu0 0.0
        %1727 = vmatpush1.msra.mxu0 0.0
        %1728 = vmatprep.subr.mxu0 0.0
        %1729 = vmatpush1.msra.mxu0 0.0
        %1730 = vmatprep.subr.mxu0 0.0
        %1731 = vmatpush1.msra.mxu0 0.0
        %1732 = vmatprep.subr.mxu0 0.0
        %1733 = vmatpush1.msra.mxu0 0.0
        %1734 = vmatprep.subr.mxu0 0.0
        %1735 = vmatpush1.msra.mxu0 0.0
        %1736 = vmatprep.subr.mxu0 0.0
        %1737 = vmatpush1.msra.mxu0 0.0
        %1738 = vmatprep.subr.mxu0 0.0
        %1739 = vmatpush1.msra.mxu0 0.0
        %1740 = vmatprep.subr.mxu0 0.0
        %1741 = vmatpush1.msra.mxu0 0.0
        %1742 = vmatprep.subr.mxu0 0.0
        %1743 = vmatpush1.msra.mxu0 0.0
        %1744 = vmatprep.subr.mxu0 0.0
        %1745 = vmatpush1.msra.mxu0 0.0
        %1746 = vmatprep.subr.mxu0 0.0
        %1747 = vmatpush1.msra.mxu0 0.0
        %1748 = vmatprep.mubr.f32.mxu0 0.0
        %1749 = vmatmul.mubr.f32.gmra.mrb[0].mxu0 %v1579
        %v1750 = vpop.f32.mrb[0].mxu0
        %v1751 = vadd.f32 0.0, %v1750
        %v1752 = vpop.f32.mrb[0].mxu0
        %1753 = vdwg.mxu0
        %v1754 = vmul.f32 %v1751, 0.0009765625
        %1755 = vmatprep.subr.mxu0 0.0
        %1756 = vmatpush1.msra.mxu0 %v1668
        %1757 = vmatprep.subr.mxu0 0.0
        %1758 = vmatpush1.msra.mxu0 %v1669
        %1759 = vmatprep.subr.mxu0 0.0
        %1760 = vmatpush1.msra.mxu0 %v1670
        %1761 = vmatprep.subr.mxu0 0.0
        %1762 = vmatpush1.msra.mxu0 %v1671
        %1763 = vmatprep.subr.mxu0 0.0
        %1764 = vmatpush1.msra.mxu0 %v1672
        %1765 = vmatprep.subr.mxu0 0.0
        %1766 = vmatpush1.msra.mxu0 %v1673
        %1767 = vmatprep.subr.mxu0 0.0
        %1768 = vmatpush1.msra.mxu0 %v1674
        %1769 = vmatprep.subr.mxu0 0.0
        %1770 = vmatpush1.msra.mxu0 %v1675
        %1771 = vmatprep.subr.mxu0 0.0
        %1772 = vmatpush1.msra.mxu0 %v1676
        %1773 = vmatprep.subr.mxu0 0.0
        %1774 = vmatpush1.msra.mxu0 %v1677
        %1775 = vmatprep.subr.mxu0 0.0
        %1776 = vmatpush1.msra.mxu0 %v1678
        %1777 = vmatprep.subr.mxu0 0.0
        %1778 = vmatpush1.msra.mxu0 %v1679
        %1779 = vmatprep.subr.mxu0 0.0
        %1780 = vmatpush1.msra.mxu0 %v1680
        %1781 = vmatprep.subr.mxu0 0.0
        %1782 = vmatpush1.msra.mxu0 %v1681
        %1783 = vmatprep.subr.mxu0 0.0
        %1784 = vmatpush1.msra.mxu0 %v1682
        %1785 = vmatprep.subr.mxu0 0.0
        %1786 = vmatpush1.msra.mxu0 %v1683
        %1787 = vmatprep.subr.mxu0 0.0
        %1788 = vmatpush1.msra.mxu0 0.0
        %1789 = vmatprep.subr.mxu0 0.0
        %1790 = vmatpush1.msra.mxu0 0.0
        %1791 = vmatprep.subr.mxu0 0.0
        %1792 = vmatpush1.msra.mxu0 0.0
        %1793 = vmatprep.subr.mxu0 0.0
        %1794 = vmatpush1.msra.mxu0 0.0
        %1795 = vmatprep.subr.mxu0 0.0
        %1796 = vmatpush1.msra.mxu0 0.0
        %1797 = vmatprep.subr.mxu0 0.0
        %1798 = vmatpush1.msra.mxu0 0.0
        %1799 = vmatprep.subr.mxu0 0.0
        %1800 = vmatpush1.msra.mxu0 0.0
        %1801 = vmatprep.subr.mxu0 0.0
        %1802 = vmatpush1.msra.mxu0 0.0
        %1803 = vmatprep.subr.mxu0 0.0
        %1804 = vmatpush1.msra.mxu0 0.0
        %1805 = vmatprep.subr.mxu0 0.0
        %1806 = vmatpush1.msra.mxu0 0.0
        %1807 = vmatprep.subr.mxu0 0.0
        %1808 = vmatpush1.msra.mxu0 0.0
        %1809 = vmatprep.subr.mxu0 0.0
        %1810 = vmatpush1.msra.mxu0 0.0
        %1811 = vmatprep.subr.mxu0 0.0
        %1812 = vmatpush1.msra.mxu0 0.0
        %1813 = vmatprep.subr.mxu0 0.0
        %1814 = vmatpush1.msra.mxu0 0.0
        %1815 = vmatprep.subr.mxu0 0.0
        %1816 = vmatpush1.msra.mxu0 0.0
        %1817 = vmatprep.subr.mxu0 0.0
        %1818 = vmatpush1.msra.mxu0 0.0
        %1819 = vmatprep.mubr.f32.mxu0 0.0
        %1820 = vmatmul.mubr.f32.gmra.mrb[0].mxu0 %v1665
        %v1821 = vpop.f32.mrb[0].mxu0
        %v1822 = vadd.f32 0.0, %v1821
        %v1823 = vpop.f32.mrb[0].mxu0
        %1824 = vdwg.mxu0
        %v1825 = vmul.f32 %v1822, 0.0009765625
        %v1826 = vmul.f32 %v1754, %v1754
        %v1827 = vsub.f32 %v1825, %v1826
        %v1828 = vlaneseq
        %v1829 = vshrl.u32 %v1828, 7
        %v1830 = vsub.s32 0, %v1829
        %v1831 = vrot.slane %v1754, %v1830
        %v1832 = vsub.f32 %v1496, %v1831
        %v1833 = vsub.f32 %v1497, %v1831
        %v1834 = vsub.f32 %v1498, %v1831
        %v1835 = vsub.f32 %v1499, %v1831
        %v1836 = vsub.f32 %v1500, %v1831
        %v1837 = vsub.f32 %v1501, %v1831
        %v1838 = vsub.f32 %v1502, %v1831
        %v1839 = vsub.f32 %v1503, %v1831
        %v1840 = vsub.f32 %v1504, %v1831
        %v1841 = vsub.f32 %v1505, %v1831
        %v1842 = vsub.f32 %v1506, %v1831
        %v1843 = vsub.f32 %v1507, %v1831
        %v1844 = vsub.f32 %v1508, %v1831
        %v1845 = vsub.f32 %v1509, %v1831
        %v1846 = vsub.f32 %v1510, %v1831
        %v1847 = vsub.f32 %v1511, %v1831
        %v1848 = vadd.f32 %v1827, 1e-05
        %v1849 = vrsqrt.pop %v1848
        %v1850 = vlaneseq
        %v1851 = vshrl.u32 %v1850, 7
        %v1852 = vsub.s32 0, %v1851
        %v1853 = vrot.slane %v1849, %v1852
        %v1854 = vmul.f32 %v1832, %v1853
        %v1855 = vmul.f32 %v1833, %v1853
        %v1856 = vmul.f32 %v1834, %v1853
        %v1857 = vmul.f32 %v1835, %v1853
        %v1858 = vmul.f32 %v1836, %v1853
        %v1859 = vmul.f32 %v1837, %v1853
        %v1860 = vmul.f32 %v1838, %v1853
        %v1861 = vmul.f32 %v1839, %v1853
        %v1862 = vmul.f32 %v1840, %v1853
        %v1863 = vmul.f32 %v1841, %v1853
        %v1864 = vmul.f32 %v1842, %v1853
        %v1865 = vmul.f32 %v1843, %v1853
        %v1866 = vmul.f32 %v1844, %v1853
        %v1867 = vmul.f32 %v1845, %v1853
        %v1868 = vmul.f32 %v1846, %v1853
        %v1869 = vmul.f32 %v1847, %v1853
        %v1870 = vld [vmem:[%s3] sm:$0x1]
        %v1872 = vlaneseq
        %v1873 = vshrl.u32 %v1872, 7
        %v1874 = vsub.s32 0, %v1873
        %v1875 = vrot.slane %v1870, %v1874
        %v1877 = vmul.f32 %v1854, %v1875
        %v1878 = vmul.f32 %v1855, %v1875
        %v1879 = vmul.f32 %v1856, %v1875
        %v1880 = vmul.f32 %v1857, %v1875
        %v1881 = vmul.f32 %v1858, %v1875
        %v1882 = vmul.f32 %v1859, %v1875
        %v1883 = vmul.f32 %v1860, %v1875
        %v1884 = vmul.f32 %v1861, %v1875
        %v1885 = vmul.f32 %v1862, %v1875
        %v1886 = vmul.f32 %v1863, %v1875
        %v1887 = vmul.f32 %v1864, %v1875
        %v1888 = vmul.f32 %v1865, %v1875
        %v1889 = vmul.f32 %v1866, %v1875
        %v1890 = vmul.f32 %v1867, %v1875
        %v1891 = vmul.f32 %v1868, %v1875
        %v1892 = vmul.f32 %v1869, %v1875
        %v1893 = vld [vmem:[%s4] sm:$0x1]
        %v1895 = vlaneseq
        %v1896 = vshrl.u32 %v1895, 7
        %v1897 = vsub.s32 0, %v1896
        %v1898 = vrot.slane %v1893, %v1897
        %v1900 = vadd.f32 %v1877, %v1898
        %v1901 = vadd.f32 %v1878, %v1898
        %v1902 = vadd.f32 %v1879, %v1898
        %v1903 = vadd.f32 %v1880, %v1898
        %v1904 = vadd.f32 %v1881, %v1898
        %v1905 = vadd.f32 %v1882, %v1898
        %v1906 = vadd.f32 %v1883, %v1898
        %v1907 = vadd.f32 %v1884, %v1898
        %v1908 = vadd.f32 %v1885, %v1898
        %v1909 = vadd.f32 %v1886, %v1898
        %v1910 = vadd.f32 %v1887, %v1898
        %v1911 = vadd.f32 %v1888, %v1898
        %v1912 = vadd.f32 %v1889, %v1898
        %v1913 = vadd.f32 %v1890, %v1898
        %v1914 = vadd.f32 %v1891, %v1898
        %v1915 = vadd.f32 %v1892, %v1898
        %v1916 = vld [vmem:[%s6] sm:$0x3]
        %1917 = vmatprep.subr.mxu0 0.0
        %1918 = vmatpush1.msra.mxu0 %v1900
        %1919 = vmatprep.subr.mxu0 0.0
        %1920 = vmatpush1.msra.mxu0 %v1901
        %1921 = vmatprep.subr.mxu0 0.0
        %1922 = vmatpush1.msra.mxu0 %v1902
        %1923 = vmatprep.subr.mxu0 0.0
        %1924 = vmatpush1.msra.mxu0 %v1903
        %1925 = vmatprep.subr.mxu0 0.0
        %1926 = vmatpush1.msra.mxu0 %v1904
        %1927 = vmatprep.subr.mxu0 0.0
        %1928 = vmatpush1.msra.mxu0 %v1905
        %1929 = vmatprep.subr.mxu0 0.0
        %1930 = vmatpush1.msra.mxu0 %v1906
        %1931 = vmatprep.subr.mxu0 0.0
        %1932 = vmatpush1.msra.mxu0 %v1907
        %1933 = vmatprep.subr.mxu0 0.0
        %1934 = vmatpush1.msra.mxu0 %v1908
        %1935 = vmatprep.subr.mxu0 0.0
        %1936 = vmatpush1.msra.mxu0 %v1909
        %1937 = vmatprep.subr.mxu0 0.0
        %1938 = vmatpush1.msra.mxu0 %v1910
        %1939 = vmatprep.subr.mxu0 0.0
        %1940 = vmatpush1.msra.mxu0 %v1911
        %1941 = vmatprep.subr.mxu0 0.0
        %1942 = vmatpush1.msra.mxu0 %v1912
        %1943 = vmatprep.subr.mxu0 0.0
        %1944 = vmatpush1.msra.mxu0 %v1913
        %1945 = vmatprep.subr.mxu0 0.0
        %1946 = vmatpush1.msra.mxu0 %v1914
        %1947 = vmatprep.subr.mxu0 0.0
        %1948 = vmatpush1.msra.mxu0 %v1915
        %1949 = vmatprep.subr.mxu0 0.0
        %1950 = vmatpush1.msra.mxu0 0.0
        %1951 = vmatprep.subr.mxu0 0.0
        %1952 = vmatpush1.msra.mxu0 0.0
        %1953 = vmatprep.subr.mxu0 0.0
        %1954 = vmatpush1.msra.mxu0 0.0
        %1955 = vmatprep.subr.mxu0 0.0
        %1956 = vmatpush1.msra.mxu0 0.0
        %1957 = vmatprep.subr.mxu0 0.0
        %1958 = vmatpush1.msra.mxu0 0.0
        %1959 = vmatprep.subr.mxu0 0.0
        %1960 = vmatpush1.msra.mxu0 0.0
        %1961 = vmatprep.subr.mxu0 0.0
        %1962 = vmatpush1.msra.mxu0 0.0
        %1963 = vmatprep.subr.mxu0 0.0
        %1964 = vmatpush1.msra.mxu0 0.0
        %1965 = vmatprep.subr.mxu0 0.0
        %1966 = vmatpush1.msra.mxu0 0.0
        %1967 = vmatprep.subr.mxu0 0.0
        %1968 = vmatpush1.msra.mxu0 0.0
        %1969 = vmatprep.subr.mxu0 0.0
        %1970 = vmatpush1.msra.mxu0 0.0
        %1971 = vmatprep.subr.mxu0 0.0
        %1972 = vmatpush1.msra.mxu0 0.0
        %1973 = vmatprep.subr.mxu0 0.0
        %1974 = vmatpush1.msra.mxu0 0.0
        %1975 = vmatprep.subr.mxu0 0.0
        %1976 = vmatpush1.msra.mxu0 0.0
        %1977 = vmatprep.subr.mxu0 0.0
        %1978 = vmatpush1.msra.mxu0 0.0
        %1979 = vmatprep.subr.mxu0 0.0
        %1980 = vmatpush1.msra.mxu0 0.0
        %1981 = vmatprep.mubr.f32.mxu0 0.0
        %1982 = vmatmul.mubr.f32.gmra.mrb[0].mxu0 %v1916
        %v1983 = vpop.f32.mrb[0].mxu0
        %v1984 = vadd.f32 0.0, %v1983
        %v1985 = vpop.f32.mrb[0].mxu0
        %1986 = vdwg.mxu0
        %v1987 = vld [vmem:[%s8] sm:$0xff]
        %v1988 = vld [vmem:[%s8 + $0x8] sm:$0xff]
        %v1989 = vld [vmem:[%s8 + $0x10] sm:$0xff]
        %v1990 = vld [vmem:[%s8 + $0x18] sm:$0xff]
        %v1991 = vld [vmem:[%s8 + $0x20] sm:$0xff]
        %v1992 = vld [vmem:[%s8 + $0x28] sm:$0xff]
        %v1993 = vld [vmem:[%s8 + $0x30] sm:$0xff]
        %v1994 = vld [vmem:[%s8 + $0x38] sm:$0xff]
        %v1995 = vld [vmem:[%s8 + $0x40] sm:$0xff]
        %v1996 = vld [vmem:[%s8 + $0x48] sm:$0xff]
        %v1997 = vld [vmem:[%s8 + $0x50] sm:$0xff]
        %v1998 = vld [vmem:[%s8 + $0x58] sm:$0xff]
        %v1999 = vld [vmem:[%s8 + $0x60] sm:$0xff]
        %v2000 = vld [vmem:[%s8 + $0x68] sm:$0xff]
        %v2001 = vld [vmem:[%s8 + $0x70] sm:$0xff]
        %v2002 = vld [vmem:[%s8 + $0x78] sm:$0xff]
        %2003 = vmatprep.subr.mxu0 0.0
        %2004 = vmatpush1.msra.mxu0 %v1987
        %2005 = vmatprep.subr.mxu0 0.0
        %2006 = vmatpush1.msra.mxu0 %v1988
        %2007 = vmatprep.subr.mxu0 0.0
        %2008 = vmatpush1.msra.mxu0 %v1989
        %2009 = vmatprep.subr.mxu0 0.0
        %2010 = vmatpush1.msra.mxu0 %v1990
        %2011 = vmatprep.subr.mxu0 0.0
        %2012 = vmatpush1.msra.mxu0 %v1991
        %2013 = vmatprep.subr.mxu0 0.0
        %2014 = vmatpush1.msra.mxu0 %v1992
        %2015 = vmatprep.subr.mxu0 0.0
        %2016 = vmatpush1.msra.mxu0 %v1993
        %2017 = vmatprep.subr.mxu0 0.0
        %2018 = vmatpush1.msra.mxu0 %v1994
        %2019 = vmatprep.subr.mxu0 0.0
        %2020 = vmatpush1.msra.mxu0 %v1995
        %2021 = vmatprep.subr.mxu0 0.0
        %2022 = vmatpush1.msra.mxu0 %v1996
        %2023 = vmatprep.subr.mxu0 0.0
        %2024 = vmatpush1.msra.mxu0 %v1997
        %2025 = vmatprep.subr.mxu0 0.0
        %2026 = vmatpush1.msra.mxu0 %v1998
        %2027 = vmatprep.subr.mxu0 0.0
        %2028 = vmatpush1.msra.mxu0 %v1999
        %2029 = vmatprep.subr.mxu0 0.0
        %2030 = vmatpush1.msra.mxu0 %v2000
        %2031 = vmatprep.subr.mxu0 0.0
        %2032 = vmatpush1.msra.mxu0 %v2001
        %2033 = vmatprep.subr.mxu0 0.0
        %2034 = vmatpush1.msra.mxu0 %v2002
        %2035 = vmatprep.subr.mxu0 0.0
        %2036 = vmatpush1.msra.mxu0 0.0
        %2037 = vmatprep.subr.mxu0 0.0
        %2038 = vmatpush1.msra.mxu0 0.0
        %2039 = vmatprep.subr.mxu0 0.0
        %2040 = vmatpush1.msra.mxu0 0.0
        %2041 = vmatprep.subr.mxu0 0.0
        %2042 = vmatpush1.msra.mxu0 0.0
        %2043 = vmatprep.subr.mxu0 0.0
        %2044 = vmatpush1.msra.mxu0 0.0
        %2045 = vmatprep.subr.mxu0 0.0
        %2046 = vmatpush1.msra.mxu0 0.0
        %2047 = vmatprep.subr.mxu0 0.0
        %2048 = vmatpush1.msra.mxu0 0.0
        %2049 = vmatprep.subr.mxu0 0.0
        %2050 = vmatpush1.msra.mxu0 0.0
        %2051 = vmatprep.subr.mxu0 0.0
        %2052 = vmatpush1.msra.mxu0 0.0
        %2053 = vmatprep.subr.mxu0 0.0
        %2054 = vmatpush1.msra.mxu0 0.0
        %2055 = vmatprep.subr.mxu0 0.0
        %2056 = vmatpush1.msra.mxu0 0.0
        %2057 = vmatprep.subr.mxu0 0.0
        %2058 = vmatpush1.msra.mxu0 0.0
        %2059 = vmatprep.subr.mxu0 0.0
        %2060 = vmatpush1.msra.mxu0 0.0
        %2061 = vmatprep.subr.mxu0 0.0
        %2062 = vmatpush1.msra.mxu0 0.0
        %2063 = vmatprep.subr.mxu0 0.0
        %2064 = vmatpush1.msra.mxu0 0.0
        %2065 = vmatprep.subr.mxu0 0.0
        %2066 = vmatpush1.msra.mxu0 0.0
        %2067 = vmatprep.mubr.f32.mxu0 0.0
        %2068 = vmatmul.mubr.f32.gmra.mrb[0].mxu0 %v1984
        %v2069 = vpop.f32.mrb[0].mxu0
        %v2070 = vadd.f32 0.0, %v2069
        %v2071 = vpop.f32.mrb[0].mxu0
        %2072 = vdwg.mxu0
        %v2073 = vld [vmem:[%s10] sm:$0x1]
        %v2075 = vlaneseq
        %v2076 = vshrl.u32 %v2075, 7
        %v2077 = vsub.s32 0, %v2076
        %v2078 = vrot.slane %v2073, %v2077
        %v2080 = vmul.f32 %v2070, %v2078
        %vm2081 = vcmask 123904
        %v2082 = vsel %vm2081, %v2080, 0.0
        %2083 = vadd.xlane.f32.xlu0 %v2082
        %v2084 = vpop.xlane.xlu0 %2083
        %v2085 = vld [vmem:[#allocation3] sm:$0x1]
        %v2087 = vlaneseq
        %v2088 = vshrl.u32 %v2087, 7
        %v2089 = vsub.s32 0, %v2088
        %v2090 = vrot.slane %v2085, %v2089
        %v2092 = vadd.f32 %v2084, %v2090
        %v2093 = vmax.f32 %v2092, 0.0
        %v2094 = vld [vmem:[%s12] sm:$0x1]
        %2096 = vset.pattern.permute.xlu0 0
        %2097 = vperm.xlu0 %2096, %v2093
        %v2098 = vpop.permute.xlu0 %2097
        %v2101 = vlaneseq
        %v2102 = vshrl.u32 %v2101, 7
        %v2103 = vsub.s32 0, %v2102
        %v2104 = vrot.slane %v2094, %v2103
        %v2106 = vmul.f32 %v2098, %v2104
        %v2107 = vld [vmem:[%s13] sm:$0x1]
        %v2109 = vlaneseq
        %v2110 = vshrl.u32 %v2109, 7
        %v2111 = vsub.s32 0, %v2110
        %v2112 = vrot.slane %v2107, %v2111
        %v2114 = vadd.f32 %v2106, %v2112
        %v2115 = vxor.u32 %v2114, 2147483648
        %v2116 = vmul.f32 %v2115, 1.442695
        %v2117 = vpow.pop %v2116
        %v2118 = vadd.f32 %v2117, 1.0
        %v2119 = vrcp.pop %v2118
        %v2120 = vmul.f32 1.0, %v2119
        %v2121 = vld [vmem:[%s9] sm:$0xff]
        %v2122 = vld [vmem:[%s9 + $0x8] sm:$0xff]
        %vm2123 = vcmask 130048
        %v2125 = vsel %vm2123, %v2120, 0
        %2127 = vmatprep.subr.mxu0 0.0
        %2128 = vmatpush1.msra.mxu0 %v2121
        %2129 = vmatprep.subr.mxu0 0.0
        %2130 = vmatpush1.msra.mxu0 %v2122
        %2131 = vmatprep.subr.mxu0 0.0
        %2132 = vmatpush1.msra.mxu0 0.0
        %2133 = vmatprep.subr.mxu0 0.0
        %2134 = vmatpush1.msra.mxu0 0.0
        %2135 = vmatprep.subr.mxu0 0.0
        %2136 = vmatpush1.msra.mxu0 0.0
        %2137 = vmatprep.subr.mxu0 0.0
        %2138 = vmatpush1.msra.mxu0 0.0
        %2139 = vmatprep.subr.mxu0 0.0
        %2140 = vmatpush1.msra.mxu0 0.0
        %2141 = vmatprep.subr.mxu0 0.0
        %2142 = vmatpush1.msra.mxu0 0.0
        %2143 = vmatprep.subr.mxu0 0.0
        %2144 = vmatpush1.msra.mxu0 0.0
        %2145 = vmatprep.subr.mxu0 0.0
        %2146 = vmatpush1.msra.mxu0 0.0
        %2147 = vmatprep.subr.mxu0 0.0
        %2148 = vmatpush1.msra.mxu0 0.0
        %2149 = vmatprep.subr.mxu0 0.0
        %2150 = vmatpush1.msra.mxu0 0.0
        %2151 = vmatprep.subr.mxu0 0.0
        %2152 = vmatpush1.msra.mxu0 0.0
        %2153 = vmatprep.subr.mxu0 0.0
        %2154 = vmatpush1.msra.mxu0 0.0
        %2155 = vmatprep.subr.mxu0 0.0
        %2156 = vmatpush1.msra.mxu0 0.0
        %2157 = vmatprep.subr.mxu0 0.0
        %2158 = vmatpush1.msra.mxu0 0.0
        %2159 = vmatprep.subr.mxu0 0.0
        %2160 = vmatpush1.msra.mxu0 0.0
        %2161 = vmatprep.subr.mxu0 0.0
        %2162 = vmatpush1.msra.mxu0 0.0
        %2163 = vmatprep.subr.mxu0 0.0
        %2164 = vmatpush1.msra.mxu0 0.0
        %2165 = vmatprep.subr.mxu0 0.0
        %2166 = vmatpush1.msra.mxu0 0.0
        %2167 = vmatprep.subr.mxu0 0.0
        %2168 = vmatpush1.msra.mxu0 0.0
        %2169 = vmatprep.subr.mxu0 0.0
        %2170 = vmatpush1.msra.mxu0 0.0
        %2171 = vmatprep.subr.mxu0 0.0
        %2172 = vmatpush1.msra.mxu0 0.0
        %2173 = vmatprep.subr.mxu0 0.0
        %2174 = vmatpush1.msra.mxu0 0.0
        %2175 = vmatprep.subr.mxu0 0.0
        %2176 = vmatpush1.msra.mxu0 0.0
        %2177 = vmatprep.subr.mxu0 0.0
        %2178 = vmatpush1.msra.mxu0 0.0
        %2179 = vmatprep.subr.mxu0 0.0
        %2180 = vmatpush1.msra.mxu0 0.0
        %2181 = vmatprep.subr.mxu0 0.0
        %2182 = vmatpush1.msra.mxu0 0.0
        %2183 = vmatprep.subr.mxu0 0.0
        %2184 = vmatpush1.msra.mxu0 0.0
        %2185 = vmatprep.subr.mxu0 0.0
        %2186 = vmatpush1.msra.mxu0 0.0
        %2187 = vmatprep.subr.mxu0 0.0
        %2188 = vmatpush1.msra.mxu0 0.0
        %2189 = vmatprep.subr.mxu0 0.0
        %2190 = vmatpush1.msra.mxu0 0.0
        %2191 = vmatprep.mubr.f32.mxu0 0.0
        %2192 = vmatmul.mubr.f32.gmra.mrb[0].mxu0 %v2125
        %v2193 = vpop.f32.mrb[0].mxu0
        %v2194 = vadd.f32 0.0, %v2193
        %v2195 = vpop.f32.mrb[0].mxu0
        %2196 = vdwg.mxu0
        %v2197 = vld [vmem:[%s7] sm:$0xff]
        %v2198 = vld [vmem:[%s7 + $0x8] sm:$0xff]
        %v2199 = vld [vmem:[%s7 + $0x10] sm:$0xff]
        %v2200 = vld [vmem:[%s7 + $0x18] sm:$0xff]
        %v2201 = vld [vmem:[%s7 + $0x20] sm:$0xff]
        %v2202 = vld [vmem:[%s7 + $0x28] sm:$0xff]
        %v2203 = vld [vmem:[%s7 + $0x30] sm:$0xff]
        %v2204 = vld [vmem:[%s7 + $0x38] sm:$0xff]
        %v2205 = vld [vmem:[%s7 + $0x40] sm:$0xff]
        %v2206 = vld [vmem:[%s7 + $0x48] sm:$0xff]
        %v2207 = vld [vmem:[%s7 + $0x50] sm:$0xff]
        %v2208 = vld [vmem:[%s7 + $0x58] sm:$0xff]
        %v2209 = vld [vmem:[%s7 + $0x60] sm:$0xff]
        %v2210 = vld [vmem:[%s7 + $0x68] sm:$0xff]
        %v2211 = vld [vmem:[%s7 + $0x70] sm:$0xff]
        %v2212 = vld [vmem:[%s7 + $0x78] sm:$0xff]
        %vm2213 = vcmask 15360
        %v2215 = vsel %vm2213, %v2197, 0
        %v2218 = vsel %vm2213, %v2198, 0
        %v2221 = vsel %vm2213, %v2199, 0
        %v2224 = vsel %vm2213, %v2200, 0
        %v2227 = vsel %vm2213, %v2201, 0
        %v2230 = vsel %vm2213, %v2202, 0
        %v2233 = vsel %vm2213, %v2203, 0
        %v2236 = vsel %vm2213, %v2204, 0
        %v2239 = vsel %vm2213, %v2205, 0
        %v2242 = vsel %vm2213, %v2206, 0
        %v2245 = vsel %vm2213, %v2207, 0
        %v2248 = vsel %vm2213, %v2208, 0
        %v2251 = vsel %vm2213, %v2209, 0
        %v2254 = vsel %vm2213, %v2210, 0
        %v2257 = vsel %vm2213, %v2211, 0
        %v2260 = vsel %vm2213, %v2212, 0
        %vm2262 = vcmask 1041408
        %v2264 = vsel %vm2262, %v2194, 0
        %2266 = vmatprep.subr.mxu0 0.0
        %2267 = vmatpush1.msra.mxu0 %v2264
        %2268 = vmatprep.subr.mxu0 0.0
        %2269 = vmatpush1.msra.mxu0 0.0
        %2270 = vmatprep.subr.mxu0 0.0
        %2271 = vmatpush1.msra.mxu0 0.0
        %2272 = vmatprep.subr.mxu0 0.0
        %2273 = vmatpush1.msra.mxu0 0.0
        %2274 = vmatprep.subr.mxu0 0.0
        %2275 = vmatpush1.msra.mxu0 0.0
        %2276 = vmatprep.subr.mxu0 0.0
        %2277 = vmatpush1.msra.mxu0 0.0
        %2278 = vmatprep.subr.mxu0 0.0
        %2279 = vmatpush1.msra.mxu0 0.0
        %2280 = vmatprep.subr.mxu0 0.0
        %2281 = vmatpush1.msra.mxu0 0.0
        %2282 = vmatprep.subr.mxu0 0.0
        %2283 = vmatpush1.msra.mxu0 0.0
        %2284 = vmatprep.subr.mxu0 0.0
        %2285 = vmatpush1.msra.mxu0 0.0
        %2286 = vmatprep.subr.mxu0 0.0
        %2287 = vmatpush1.msra.mxu0 0.0
        %2288 = vmatprep.subr.mxu0 0.0
        %2289 = vmatpush1.msra.mxu0 0.0
        %2290 = vmatprep.subr.mxu0 0.0
        %2291 = vmatpush1.msra.mxu0 0.0
        %2292 = vmatprep.subr.mxu0 0.0
        %2293 = vmatpush1.msra.mxu0 0.0
        %2294 = vmatprep.subr.mxu0 0.0
        %2295 = vmatpush1.msra.mxu0 0.0
        %2296 = vmatprep.subr.mxu0 0.0
        %2297 = vmatpush1.msra.mxu0 0.0
        %2298 = vmatprep.subr.mxu0 0.0
        %2299 = vmatpush1.msra.mxu0 0.0
        %2300 = vmatprep.subr.mxu0 0.0
        %2301 = vmatpush1.msra.mxu0 0.0
        %2302 = vmatprep.subr.mxu0 0.0
        %2303 = vmatpush1.msra.mxu0 0.0
        %2304 = vmatprep.subr.mxu0 0.0
        %2305 = vmatpush1.msra.mxu0 0.0
        %2306 = vmatprep.subr.mxu0 0.0
        %2307 = vmatpush1.msra.mxu0 0.0
        %2308 = vmatprep.subr.mxu0 0.0
        %2309 = vmatpush1.msra.mxu0 0.0
        %2310 = vmatprep.subr.mxu0 0.0
        %2311 = vmatpush1.msra.mxu0 0.0
        %2312 = vmatprep.subr.mxu0 0.0
        %2313 = vmatpush1.msra.mxu0 0.0
        %2314 = vmatprep.subr.mxu0 0.0
        %2315 = vmatpush1.msra.mxu0 0.0
        %2316 = vmatprep.subr.mxu0 0.0
        %2317 = vmatpush1.msra.mxu0 0.0
        %2318 = vmatprep.subr.mxu0 0.0
        %2319 = vmatpush1.msra.mxu0 0.0
        %2320 = vmatprep.subr.mxu0 0.0
        %2321 = vmatpush1.msra.mxu0 0.0
        %2322 = vmatprep.subr.mxu0 0.0
        %2323 = vmatpush1.msra.mxu0 0.0
        %2324 = vmatprep.subr.mxu0 0.0
        %2325 = vmatpush1.msra.mxu0 0.0
        %2326 = vmatprep.subr.mxu0 0.0
        %2327 = vmatpush1.msra.mxu0 0.0
        %2328 = vmatprep.subr.mxu0 0.0
        %2329 = vmatpush1.msra.mxu0 0.0
        %2330 = vmatprep.mubr.f32.mxu0 0.0
        %2331 = vmatmul.mubr.f32.gmra.mrb[0].mxu0 %v2215
        %v2332 = vpop.f32.mrb[0].mxu0
        %v2333 = vadd.f32 0.0, %v2332
        %v2334 = vpop.f32.mrb[0].mxu0
        %2335 = vmatprep.mubr.f32.mxu0 0.0
        %2336 = vmatmul.mubr.f32.gmra.mrb[0].mxu0 %v2218
        %v2337 = vpop.f32.mrb[0].mxu0
        %v2338 = vadd.f32 0.0, %v2337
        %v2339 = vpop.f32.mrb[0].mxu0
        %2340 = vmatprep.mubr.f32.mxu0 0.0
        %2341 = vmatmul.mubr.f32.gmra.mrb[0].mxu0 %v2221
        %v2342 = vpop.f32.mrb[0].mxu0
        %v2343 = vadd.f32 0.0, %v2342
        %v2344 = vpop.f32.mrb[0].mxu0
        %2345 = vmatprep.mubr.f32.mxu0 0.0
        %2346 = vmatmul.mubr.f32.gmra.mrb[0].mxu0 %v2224
        %v2347 = vpop.f32.mrb[0].mxu0
        %v2348 = vadd.f32 0.0, %v2347
        %v2349 = vpop.f32.mrb[0].mxu0
        %2350 = vmatprep.mubr.f32.mxu0 0.0
        %2351 = vmatmul.mubr.f32.gmra.mrb[0].mxu0 %v2227
        %v2352 = vpop.f32.mrb[0].mxu0
        %v2353 = vadd.f32 0.0, %v2352
        %v2354 = vpop.f32.mrb[0].mxu0
        %2355 = vmatprep.mubr.f32.mxu0 0.0
        %2356 = vmatmul.mubr.f32.gmra.mrb[0].mxu0 %v2230
        %v2357 = vpop.f32.mrb[0].mxu0
        %v2358 = vadd.f32 0.0, %v2357
        %v2359 = vpop.f32.mrb[0].mxu0
        %2360 = vmatprep.mubr.f32.mxu0 0.0
        %2361 = vmatmul.mubr.f32.gmra.mrb[0].mxu0 %v2233
        %v2362 = vpop.f32.mrb[0].mxu0
        %v2363 = vadd.f32 0.0, %v2362
        %v2364 = vpop.f32.mrb[0].mxu0
        %2365 = vmatprep.mubr.f32.mxu0 0.0
        %2366 = vmatmul.mubr.f32.gmra.mrb[0].mxu0 %v2236
        %v2367 = vpop.f32.mrb[0].mxu0
        %v2368 = vadd.f32 0.0, %v2367
        %v2369 = vpop.f32.mrb[0].mxu0
        %2370 = vmatprep.mubr.f32.mxu0 0.0
        %2371 = vmatmul.mubr.f32.gmra.mrb[0].mxu0 %v2239
        %v2372 = vpop.f32.mrb[0].mxu0
        %v2373 = vadd.f32 0.0, %v2372
        %v2374 = vpop.f32.mrb[0].mxu0
        %2375 = vmatprep.mubr.f32.mxu0 0.0
        %2376 = vmatmul.mubr.f32.gmra.mrb[0].mxu0 %v2242
        %v2377 = vpop.f32.mrb[0].mxu0
        %v2378 = vadd.f32 0.0, %v2377
        %v2379 = vpop.f32.mrb[0].mxu0
        %2380 = vmatprep.mubr.f32.mxu0 0.0
        %2381 = vmatmul.mubr.f32.gmra.mrb[0].mxu0 %v2245
        %v2382 = vpop.f32.mrb[0].mxu0
        %v2383 = vadd.f32 0.0, %v2382
        %v2384 = vpop.f32.mrb[0].mxu0
        %2385 = vmatprep.mubr.f32.mxu0 0.0
        %2386 = vmatmul.mubr.f32.gmra.mrb[0].mxu0 %v2248
        %v2387 = vpop.f32.mrb[0].mxu0
        %v2388 = vadd.f32 0.0, %v2387
        %v2389 = vpop.f32.mrb[0].mxu0
        %2390 = vmatprep.mubr.f32.mxu0 0.0
        %2391 = vmatmul.mubr.f32.gmra.mrb[0].mxu0 %v2251
        %v2392 = vpop.f32.mrb[0].mxu0
        %v2393 = vadd.f32 0.0, %v2392
        %v2394 = vpop.f32.mrb[0].mxu0
        %2395 = vmatprep.mubr.f32.mxu0 0.0
        %2396 = vmatmul.mubr.f32.gmra.mrb[0].mxu0 %v2254
        %v2397 = vpop.f32.mrb[0].mxu0
        %v2398 = vadd.f32 0.0, %v2397
        %v2399 = vpop.f32.mrb[0].mxu0
        %2400 = vmatprep.mubr.f32.mxu0 0.0
        %2401 = vmatmul.mubr.f32.gmra.mrb[0].mxu0 %v2257
        %v2402 = vpop.f32.mrb[0].mxu0
        %v2403 = vadd.f32 0.0, %v2402
        %v2404 = vpop.f32.mrb[0].mxu0
        %2405 = vmatprep.mubr.f32.mxu0 0.0
        %2406 = vmatmul.mubr.f32.gmra.mrb[0].mxu0 %v2260
        %v2407 = vpop.f32.mrb[0].mxu0
        %v2408 = vadd.f32 0.0, %v2407
        %v2409 = vpop.f32.mrb[0].mxu0
        %2410 = vdwg.mxu0
        %v2411 = vmul.f32 %v1900, %v2333
        %v2412 = vmul.f32 %v1901, %v2338
        %v2413 = vmul.f32 %v1902, %v2343
        %v2414 = vmul.f32 %v1903, %v2348
        %v2415 = vmul.f32 %v1904, %v2353
        %v2416 = vmul.f32 %v1905, %v2358
        %v2417 = vmul.f32 %v1906, %v2363
        %v2418 = vmul.f32 %v1907, %v2368
        %v2419 = vmul.f32 %v1908, %v2373
        %v2420 = vmul.f32 %v1909, %v2378
        %v2421 = vmul.f32 %v1910, %v2383
        %v2422 = vmul.f32 %v1911, %v2388
        %v2423 = vmul.f32 %v1912, %v2393
        %v2424 = vmul.f32 %v1913, %v2398
        %v2425 = vmul.f32 %v1914, %v2403
        %v2426 = vmul.f32 %v1915, %v2408
        %v2427 = vld [vmem:[%s14] sm:$0xff]
        %v2428 = vld [vmem:[%s14 + $0x8] sm:$0xff]
        %v2429 = vld [vmem:[%s14 + $0x10] sm:$0xff]
        %v2430 = vld [vmem:[%s14 + $0x18] sm:$0xff]
        %v2431 = vld [vmem:[%s14 + $0x20] sm:$0xff]
        %v2432 = vld [vmem:[%s14 + $0x28] sm:$0xff]
        %v2433 = vld [vmem:[%s14 + $0x30] sm:$0xff]
        %v2434 = vld [vmem:[%s14 + $0x38] sm:$0xff]
        %v2435 = vld [vmem:[%s14 + $0x40] sm:$0xff]
        %v2436 = vld [vmem:[%s14 + $0x48] sm:$0xff]
        %v2437 = vld [vmem:[%s14 + $0x50] sm:$0xff]
        %v2438 = vld [vmem:[%s14 + $0x58] sm:$0xff]
        %v2439 = vld [vmem:[%s14 + $0x60] sm:$0xff]
        %v2440 = vld [vmem:[%s14 + $0x68] sm:$0xff]
        %v2441 = vld [vmem:[%s14 + $0x70] sm:$0xff]
        %v2442 = vld [vmem:[%s14 + $0x78] sm:$0xff]
        %v2443 = vadd.f32 %v2411, %v2427
        %v2444 = vadd.f32 %v2412, %v2428
        %v2445 = vadd.f32 %v2413, %v2429
        %v2446 = vadd.f32 %v2414, %v2430
        %v2447 = vadd.f32 %v2415, %v2431
        %v2448 = vadd.f32 %v2416, %v2432
        %v2449 = vadd.f32 %v2417, %v2433
        %v2450 = vadd.f32 %v2418, %v2434
        %v2451 = vadd.f32 %v2419, %v2435
        %v2452 = vadd.f32 %v2420, %v2436
        %v2453 = vadd.f32 %v2421, %v2437
        %v2454 = vadd.f32 %v2422, %v2438
        %v2455 = vadd.f32 %v2423, %v2439
        %v2456 = vadd.f32 %v2424, %v2440
        %v2457 = vadd.f32 %v2425, %v2441
        %v2458 = vadd.f32 %v2426, %v2442
        %v2459 = vmax.f32 %v2443, 0.0
        %v2460 = vmax.f32 %v2444, 0.0
        %v2461 = vmax.f32 %v2445, 0.0
        %v2462 = vmax.f32 %v2446, 0.0
        %v2463 = vmax.f32 %v2447, 0.0
        %v2464 = vmax.f32 %v2448, 0.0
        %v2465 = vmax.f32 %v2449, 0.0
        %v2466 = vmax.f32 %v2450, 0.0
        %v2467 = vmax.f32 %v2451, 0.0
        %v2468 = vmax.f32 %v2452, 0.0
        %v2469 = vmax.f32 %v2453, 0.0
        %v2470 = vmax.f32 %v2454, 0.0
        %v2471 = vmax.f32 %v2455, 0.0
        %v2472 = vmax.f32 %v2456, 0.0
        %v2473 = vmax.f32 %v2457, 0.0
        %v2474 = vmax.f32 %v2458, 0.0
        %2475 = vst [vmem:[%s15] sm:$0xff] %v2459
        %2476 = vst [vmem:[%s15 + $0x8] sm:$0xff] %v2460
        %2477 = vst [vmem:[%s15 + $0x10] sm:$0xff] %v2461
        %2478 = vst [vmem:[%s15 + $0x18] sm:$0xff] %v2462
        %2479 = vst [vmem:[%s15 + $0x20] sm:$0xff] %v2463
        %2480 = vst [vmem:[%s15 + $0x28] sm:$0xff] %v2464
        %2481 = vst [vmem:[%s15 + $0x30] sm:$0xff] %v2465
        %2482 = vst [vmem:[%s15 + $0x38] sm:$0xff] %v2466
        %2483 = vst [vmem:[%s15 + $0x40] sm:$0xff] %v2467
        %2484 = vst [vmem:[%s15 + $0x48] sm:$0xff] %v2468
        %2485 = vst [vmem:[%s15 + $0x50] sm:$0xff] %v2469
        %2486 = vst [vmem:[%s15 + $0x58] sm:$0xff] %v2470
        %2487 = vst [vmem:[%s15 + $0x60] sm:$0xff] %v2471
        %2488 = vst [vmem:[%s15 + $0x68] sm:$0xff] %v2472
        %2489 = vst [vmem:[%s15 + $0x70] sm:$0xff] %v2473
        %2490 = vst [vmem:[%s15 + $0x78] sm:$0xff] %v2474
      $region88: #{inres_forward.7} parent=79 // pred_fallthru
        _
      // Predicated region
      $region89: #{inres_forward.7} parent=79 // pred_check
        %p2491 = pneg %p366
      $region90: #{inres_forward.7} parent=79 // pred_check_branch
        %2493 = sbr.rel (%p2491) target = $region92
      $region91: #{inres_forward.7} parent=79 // pred_region
        _
      $region92: #{inres_forward.7} parent=79 // pred_fallthru
        _
      // Predicated region
      $region93: #{inres_forward.7} parent=79 // pred_check
        %p2494 = pneg %p366
      $region94: #{inres_forward.7} parent=79 // pred_check_branch
        %2496 = sbr.rel (%p2494) target = $region96
      $region95: #{inres_forward.7} parent=79 // pred_region
        _
      $region96: #{inres_forward.7} parent=79 // pred_fallthru
        _
    $region80: #{inres_forward.7} parent=5 // pred_fallthru
      _
    %p2497 = scmp.le.s32.totalorder 2, %s23
    // Predicated region
    $region97: #{inres_forward.7} parent=5 // pred_check
      %p2498 = pneg %p2497
    $region98: #{inres_forward.7} parent=5 // pred_check_branch
      %2500 = sbr.rel (%p2498) target = $region100
    $region99: #{inres_forward.7} parent=5 // pred_region
      %s2501 = ssub.s32 %s23, 2
    $region100: #{inres_forward.7} parent=5 // pred_fallthru
      _
  $region6: #{inres_forward.7} parent=0 // loop_footer
    %s27 = sadd.s32 1, %s23
  $region7: #{inres_forward.7} parent=0 // loop_footer_branch
    %22 = sbr.rel target = $region3
  $region8: #{inres_forward.7} parent=0 // loop_exit
    _

</llo_original>
